<compile_context>
chip_gen: v6e
topology: v6e:2x2x1
jax: 0.10.0
libtpu: 0.0.40
codegen_flags: <defaults>
</compile_context>

<pallas_src>
import functools

import jax
import jax.numpy as jnp
from jax.experimental import pallas as pl
from jax.experimental.pallas import tpu as pltpu


def _round_up(x, m):
    return (x + m - 1) // m * m


# Tile sizes: 256 is the native v6e/v7x MXU width and a multiple of the v5e
# 128-wide MXU; per-step VMEM (double-buffered bf16 inputs + f32 acc/out) stays
# ~1.5 MiB, comfortably inside the v7x 32 MiB scoped budget.
_TM = 256
_TN = 256
_TK = 256
_VMEM_LIMIT = 32 * 1024 * 1024


# ----------------------------------------------------------------------------
# Pallas kernel 1: tiled matmul + fused bias (+ optional ReLU), K-grid
# accumulation into an f32 VMEM scratch.
# ----------------------------------------------------------------------------
def _matmul_bias_kernel(x_ref, w_ref, b_ref, o_ref, acc_ref, *, relu):
    @pl.when(pl.program_id(2) == 0)
    def _():
        acc_ref[...] = jnp.zeros_like(acc_ref)

    acc_ref[...] += jnp.dot(
        x_ref[...], w_ref[...], preferred_element_type=jnp.float32
    )

    @pl.when(pl.program_id(2) == pl.num_programs(2) - 1)
    def _():
        out = acc_ref[...] + b_ref[...]
        if relu:
            out = jnp.maximum(out, 0.0)
        o_ref[...] = out


def matmul_bias(x, w, b, relu):
    """(M,K) @ (K,N) + b with fused ReLU.  bf16 MXU inputs, f32 accumulation.

    Returns the padded (Mp, Np) lane-dense slab plus its padded dims; the
    caller slices (keeps pallas stores unmasked / lane-dense)."""
    M, K = x.shape
    K2, N = w.shape
    assert K == K2

    tm = _TM if M >= _TM else _round_up(M, 8)
    tk = _TK if K >= _TK else _round_up(K, 128)
    tn = _TN if N >= _TN else _round_up(N, 128)
    Mp, Kp, Np = _round_up(M, tm), _round_up(K, tk), _round_up(N, tn)

    xp = jnp.pad(x.astype(jnp.bfloat16), ((0, Mp - M), (0, Kp - K)))
    wp = jnp.pad(w.astype(jnp.bfloat16), ((0, Kp - K), (0, Np - N)))
    bp = jnp.pad(b.astype(jnp.float32), (0, Np - N)).reshape(1, Np)

    out = pl.pallas_call(
        functools.partial(_matmul_bias_kernel, relu=relu),
        out_shape=jax.ShapeDtypeStruct((Mp, Np), jnp.float32),
        grid_spec=pltpu.PrefetchScalarGridSpec(
            num_scalar_prefetch=0,
            grid=(Mp // tm, Np // tn, Kp // tk),
            in_specs=[
                pl.BlockSpec((tm, tk), lambda i, j, k: (i, k)),
                pl.BlockSpec((tk, tn), lambda i, j, k: (k, j)),
                pl.BlockSpec((1, tn), lambda i, j, k: (0, j)),
            ],
            out_specs=pl.BlockSpec((tm, tn), lambda i, j, k: (i, j)),
            scratch_shapes=[pltpu.VMEM((tm, tn), jnp.float32)],
        ),
        compiler_params=pltpu.CompilerParams(
            dimension_semantics=("parallel", "parallel", "arbitrary"),
            vmem_limit_bytes=_VMEM_LIMIT,
        ),
    )(xp, wp, bp)
    return out, Mp, Np


# ----------------------------------------------------------------------------
# Pallas kernel 2: two-operand matmul accumulating over the K grid axis.
# Implements the CSP-neck fuse conv without materializing concat([a, br]).
# ----------------------------------------------------------------------------
def _matmul2_bias_kernel(xa_ref, xb_ref, w_ref, b_ref, o_ref, acc_ref, *, relu):
    k = pl.program_id(2)

    @pl.when(k == 0)
    def _():
        acc_ref[...] = jnp.dot(
            xa_ref[...], w_ref[...], preferred_element_type=jnp.float32
        )

    @pl.when(k == 1)
    def _():
        acc = acc_ref[...] + jnp.dot(
            xb_ref[...], w_ref[...], preferred_element_type=jnp.float32
        )
        out = acc + b_ref[...]
        if relu:
            out = jnp.maximum(out, 0.0)
        o_ref[...] = out


def concat_matmul_bias(xa, xb, w, b, relu):
    """Equivalent to concat([xa, xb], -1) @ w + b, without the HBM concat."""
    M, Ka = xa.shape
    M2, Kb = xb.shape
    Kt, N = w.shape
    assert M == M2 and Ka == Kb and Ka + Kb == Kt and Ka % 128 == 0

    tm = _TM if M >= _TM else _round_up(M, 8)
    tn = _TN if N >= _TN else _round_up(N, 128)
    Mp, Np = _round_up(M, tm), _round_up(N, tn)

    xap = jnp.pad(xa.astype(jnp.bfloat16), ((0, Mp - M), (0, 0)))
    xbp = jnp.pad(xb.astype(jnp.bfloat16), ((0, Mp - M), (0, 0)))
    wp = jnp.pad(w.astype(jnp.bfloat16), ((0, 0), (0, Np - N)))
    bp = jnp.pad(b.astype(jnp.float32), (0, Np - N)).reshape(1, Np)

    out = pl.pallas_call(
        functools.partial(_matmul2_bias_kernel, relu=relu),
        out_shape=jax.ShapeDtypeStruct((Mp, Np), jnp.float32),
        grid_spec=pltpu.PrefetchScalarGridSpec(
            num_scalar_prefetch=0,
            grid=(Mp // tm, Np // tn, 2),
            in_specs=[
                pl.BlockSpec((tm, Ka), lambda i, j, k: (i, 0)),
                pl.BlockSpec((tm, Kb), lambda i, j, k: (i, 0)),
                pl.BlockSpec((Ka, tn), lambda i, j, k: (k, j)),
                pl.BlockSpec((1, tn), lambda i, j, k: (0, j)),
            ],
            out_specs=pl.BlockSpec((tm, tn), lambda i, j, k: (i, j)),
            scratch_shapes=[pltpu.VMEM((tm, tn), jnp.float32)],
        ),
        compiler_params=pltpu.CompilerParams(
            dimension_semantics=("parallel", "parallel", "arbitrary"),
            vmem_limit_bytes=_VMEM_LIMIT,
        ),
    )(xap, xbp, wp, bp)
    return out[:M, :N]


# ----------------------------------------------------------------------------
# im2col glue (plain JAX, bf16) + conv wrapper.
# ----------------------------------------------------------------------------
def im2col(x, kh, kw, stride, pad):
    # x: (N, H, W, C) -> (N*Ho*Wo, kh*kw*C)
    if pad:
        x = jnp.pad(x, ((0, 0), (pad, pad), (pad, pad), (0, 0)))
    N, H, W, C = x.shape
    Ho = (H - kh) // stride + 1
    Wo = (W - kw) // stride + 1
    cols = []
    for i in range(kh):
        for j in range(kw):
            cols.append(
                x[:, i : i + (Ho - 1) * stride + 1 : stride,
                  j : j + (Wo - 1) * stride + 1 : stride, :]
            )
    cols = jnp.concatenate(cols, axis=-1)  # (N, Ho, Wo, kh*kw*C)
    return cols.reshape(N * Ho * Wo, kh * kw * C), N, Ho, Wo


def conv2d(x, w, b, stride=1, pad=0, relu=True, keep_padded_cout=False):
    # w: (kh, kw, Cin, Cout)
    kh, kw, cin, cout = w.shape
    x = x.astype(jnp.bfloat16)  # bf16 before im2col: halves cols HBM traffic
    if kh == 1 and kw == 1 and stride == 1 and pad == 0:
        N, H, W, C = x.shape
        cols = x.reshape(N * H * W, C)
        Ho, Wo = H, W
    else:
        # TODO(synk): k>1 convs still materialize the (now bf16) im2col matrix
        # in HBM; a halo-blocked direct-conv kernel needs Element-indexed /
        # manual-DMA BlockSpecs and is left out of this version.
        cols, N, Ho, Wo = im2col(x, kh, kw, stride, pad)
    y, _, Np = matmul_bias(cols, w.reshape(kh * kw * cin, cout), b, relu)
    M = N * Ho * Wo
    if keep_padded_cout:
        return y[:M].reshape(N, Ho, Wo, Np), Np
    return y[:M, :cout].reshape(N, Ho, Wo, cout)


# ----------------------------------------------------------------------------
# Pallas kernel 3: YOLO-v1 post-process decode with a packed lane-dense output.
#   out[..., :C]      = sigmoid(obj) * softmax(cls)
#   out[..., C:C+4]   = (x1, y1, x2, y2) decoded boxes
# ----------------------------------------------------------------------------
def _decode_kernel(pred_ref, grid_ref, out_ref, *, num_classes, stride):
    pred = pred_ref[...]                               # (B, HW, Dp) f32
    obj = pl.reciprocal(1.0 + jnp.exp(-pred[..., 0:1]), approx=True)

    cls_logits = pred[..., 1 : 1 + num_classes]
    cls_logits = cls_logits - jnp.max(cls_logits, axis=-1, keepdims=True)
    e = jnp.exp(cls_logits)
    cls = e * pl.reciprocal(jnp.sum(e, axis=-1, keepdims=True), approx=True)
    scores = obj * cls

    txty = pred[..., 1 + num_classes : 3 + num_classes]
    twth = pred[..., 3 + num_classes : 5 + num_classes]
    sig_txty = pl.reciprocal(1.0 + jnp.exp(-txty), approx=True)
    cxcy = (grid_ref[...] + sig_txty) * stride          # grid broadcast over B
    wh = jnp.exp(twth) * stride
    boxes = jnp.concatenate([cxcy - 0.5 * wh, cxcy + 0.5 * wh], axis=-1)

    pad_w = out_ref.shape[-1] - (num_classes + 4)
    pieces = [scores, boxes]
    if pad_w > 0:
        pieces.append(jnp.zeros(scores.shape[:-1] + (pad_w,), jnp.float32))
    out_ref[...] = jnp.concatenate(pieces, axis=-1)     # one unmasked store


def decode(pred_map_padded, num_classes, stride):
    # pred_map_padded: (N, H, W, Dp) with true channels = 1 + C + 4 (rest zero)
    N, H, W, Dp = pred_map_padded.shape
    HW = H * W
    gy, gx = jnp.meshgrid(
        jnp.arange(H, dtype=jnp.float32),
        jnp.arange(W, dtype=jnp.float32),
        indexing="ij",
    )
    grid_xy = jnp.stack([gx, gy], axis=-1).reshape(1, HW, 2)
    pred = pred_map_padded.reshape(N, HW, Dp)
    out_p = _round_up(num_classes + 4, 128)
    packed = pl.pallas_call(
        functools.partial(
            _decode_kernel, num_classes=num_classes, stride=float(stride)
        ),
        out_shape=jax.ShapeDtypeStruct((N, HW, out_p), jnp.float32),
    )(pred, grid_xy)
    scores = packed[..., :num_classes]
    boxes = packed[..., num_classes : num_classes + 4]
    return scores, boxes


# ----------------------------------------------------------------------------
# Parameters (deterministic init) and forward pass.
# ----------------------------------------------------------------------------
def _conv_param(key, kh, kw, cin, cout):
    w = jax.random.normal(key, (kh, kw, cin, cout), jnp.float32)
    w = w * (1.0 / jnp.sqrt(float(kh * kw * cin)))
    b = jnp.zeros((cout,), jnp.float32)
    return w, b


def init_params(num_classes, key):
    # TODO(synk): resnet18 residual blocks simplified to a stride-32 conv stack
    # with the same output channel count (512); CSPNeck/Yolov1Head modeled as
    # their canonical conv compositions.
    specs = [
        # backbone (stride 32 total, final channels = 512, like resnet18)
        ("stem",      3, 3,   3,  64),
        ("b1",        3, 3,  64,  64),
        ("b2",        3, 3,  64, 128),
        ("b3",        3, 3, 128, 256),
        ("b4",        3, 3, 256, 512),
        # CSPNeck(512, 256): two 256-ch branches, concat -> 512, fuse
        ("neck_a",    1, 1, 512, 256),
        ("neck_b1",   1, 1, 512, 256),
        ("neck_b2",   3, 3, 256, 256),
        ("neck_out",  1, 1, 512, 512),
        # Yolov1Head(512, num_classes): conv + prediction conv (1 + C + 4)
        ("head_conv", 3, 3, 512, 256),
        ("head_pred", 1, 1, 256, 1 + num_classes + 4),
    ]
    keys = jax.random.split(key, len(specs))
    return {name: _conv_param(k, kh, kw, cin, cout)
            for k, (name, kh, kw, cin, cout) in zip(keys, specs)}


def forward(params, x_nchw, num_classes, stride):
    x = jnp.transpose(x_nchw, (0, 2, 3, 1))  # NCHW -> NHWC

    # backbone
    for name in ("stem", "b1", "b2", "b3", "b4"):
        w, b = params[name]
        x = conv2d(x, w, b, stride=2, pad=1, relu=True)

    # neck (CSP style) — the 512-ch concat is never materialized: neck_out's
    # 1x1 conv consumes the two branches as two K-chunks in one pallas_call.
    wa, ba = params["neck_a"]
    a = conv2d(x, wa, ba, stride=1, pad=0, relu=True)
    wb1, bb1 = params["neck_b1"]
    br = conv2d(x, wb1, bb1, stride=1, pad=0, relu=True)
    wb2, bb2 = params["neck_b2"]
    br = conv2d(br, wb2, bb2, stride=1, pad=1, relu=True)

    wo, bo = params["neck_out"]
    Nb, Hn, Wn, Ca = a.shape
    M = Nb * Hn * Wn
    fused = concat_matmul_bias(
        a.reshape(M, Ca),
        br.reshape(M, br.shape[-1]),
        wo.reshape(wo.shape[2], wo.shape[3]),
        bo,
        relu=True,
    )
    x = fused.reshape(Nb, Hn, Wn, -1)

    # head
    wh_, bh_ = params["head_conv"]
    x = conv2d(x, wh_, bh_, stride=1, pad=1, relu=True)
    wp, bp = params["head_pred"]
    pred_pad, _ = conv2d(x, wp, bp, stride=1, pad=0, relu=False,
                         keep_padded_cout=True)  # lane-dense (N,H,W,128)

    # post-process decode (obj/cls scores + box decode) in Pallas
    scores, boxes = decode(pred_pad, num_classes, stride)
    # TODO(synk): score thresholding + NMS produce variable-length,
    # data-dependent outputs with no clean Pallas equivalent; dense per-cell
    # scores and decoded boxes are returned instead.
    return scores, boxes


if __name__ == "__main__":
    num_classes = 20
    stride = 32

    key = jax.random.PRNGKey(0)
    k_param, k_in = jax.random.split(key)
    params = init_params(num_classes, k_param)

    # small input consistent with the module: NCHW image batch
    x = jax.random.normal(k_in, (2, 3, 64, 64), jnp.float32)

    fwd = jax.jit(
        functools.partial(forward, num_classes=num_classes, stride=stride)
    )
    scores, boxes = fwd(params, x)
    jax.block_until_ready((scores, boxes))

    assert scores.shape == (2, 4, num_classes)
    assert boxes.shape == (2, 4, 4)
    print("KERNEL_OK")
</pallas_src>

<mosaic_0001>
module attributes {stable_mosaic.version = 11 : i64} {
  func.func @_matmul_bias_kernel(%arg0: i32, %arg1: i32, %arg2: i32, %arg3: memref<256x128xbf16, #tpu.memory_space<vmem>>, %arg4: memref<128x128xbf16, #tpu.memory_space<vmem>>, %arg5: memref<1x128xf32, #tpu.memory_space<vmem>>, %arg6: memref<256x128xf32, #tpu.memory_space<vmem>>, %arg7: memref<256x128xf32, #tpu.memory_space<vmem>>) attributes {dimension_semantics = [#tpu.dimension_semantics<parallel>, #tpu.dimension_semantics<parallel>, #tpu.dimension_semantics<arbitrary>], iteration_bounds = array<i64: 8, 1, 1>, scalar_prefetch = 0 : i64, scratch_operands = 1 : i64, tpu.core_type = #tpu.core_type<tc>, window_params = [{transform_indices = @transform_0, window_bounds = array<i64: 256, 128>}, {transform_indices = @transform_1, window_bounds = array<i64: 128, 128>}, {transform_indices = @transform_2, window_bounds = array<i64: 1, 128>}, {transform_indices = @transform_3, window_bounds = array<i64: 256, 128>}]} {
    %c0_i32 = arith.constant 0 : i32
    %0 = arith.cmpi eq, %arg2, %c0_i32 : i32
    %1 = arith.extui %0 : i1 to i32
    %c0_i32_0 = arith.constant 0 : i32
    %2 = arith.cmpi ne, %1, %c0_i32_0 : i32
    scf.if %2 {
      %cst_10 = arith.constant 0.000000e+00 : f32
      %12 = vector.broadcast %cst_10 : f32 to vector<256x128xf32>
      %c0_11 = arith.constant 0 : index
      %c0_12 = arith.constant 0 : index
      %13 = vector.load %arg7[%c0_11, %c0_12] : memref<256x128xf32, #tpu.memory_space<vmem>>, vector<256x128xf32>
      tpu.vector_store %arg7[%c0_11, %c0_12], %12 {strides = array<i32>} : memref<256x128xf32, #tpu.memory_space<vmem>>, vector<256x128xf32>,
    } else {
    }
    %c0 = arith.constant 0 : index
    %c0_1 = arith.constant 0 : index
    %3 = vector.load %arg7[%c0, %c0_1] : memref<256x128xf32, #tpu.memory_space<vmem>>, vector<256x128xf32>
    %c0_2 = arith.constant 0 : index
    %c0_3 = arith.constant 0 : index
    %4 = vector.load %arg3[%c0_2, %c0_3] : memref<256x128xbf16, #tpu.memory_space<vmem>>, vector<256x128xbf16>
    %c0_4 = arith.constant 0 : index
    %c0_5 = arith.constant 0 : index
    %5 = vector.load %arg4[%c0_4, %c0_5] : memref<128x128xbf16, #tpu.memory_space<vmem>>, vector<128x128xbf16>
    %cst = arith.constant dense<0.000000e+00> : vector<256x128xf32>
    %6 = tpu.matmul %4, %5, %cst {dimension_numbers = #tpu.dot_dimension_numbers<[1], [0], [0], [1], [0, 0, 1, 1], [], []>} : vector<256x128xbf16>, vector<128x128xbf16>, vector<256x128xf32> -> vector<256x128xf32>
    %7 = arith.addf %3, %6 : vector<256x128xf32>
    %c0_6 = arith.constant 0 : index
    %c0_7 = arith.constant 0 : index
    %8 = vector.load %arg7[%c0_6, %c0_7] : memref<256x128xf32, #tpu.memory_space<vmem>>, vector<256x128xf32>
    tpu.vector_store %arg7[%c0_6, %c0_7], %7 {strides = array<i32>} : memref<256x128xf32, #tpu.memory_space<vmem>>, vector<256x128xf32>,
    %c0_i32_8 = arith.constant 0 : i32
    %9 = arith.cmpi eq, %arg2, %c0_i32_8 : i32
    %10 = arith.extui %9 : i1 to i32
    %c0_i32_9 = arith.constant 0 : i32
    %11 = arith.cmpi ne, %10, %c0_i32_9 : i32
    scf.if %11 {
      %c0_10 = arith.constant 0 : index
      %c0_11 = arith.constant 0 : index
      %12 = vector.load %arg7[%c0_10, %c0_11] : memref<256x128xf32, #tpu.memory_space<vmem>>, vector<256x128xf32>
      %c0_12 = arith.constant 0 : index
      %c0_13 = arith.constant 0 : index
      %13 = vector.load %arg5[%c0_12, %c0_13] : memref<1x128xf32, #tpu.memory_space<vmem>>, vector<1x128xf32>
      %14 = vector.broadcast %13 : vector<1x128xf32> to vector<256x128xf32>
      %15 = arith.addf %12, %14 : vector<256x128xf32>
      %cst_14 = arith.constant 0.000000e+00 : f32
      %16 = vector.broadcast %cst_14 : f32 to vector<256x128xf32>
      %17 = arith.maximumf %15, %16 : vector<256x128xf32>
      %c0_15 = arith.constant 0 : index
      %c0_16 = arith.constant 0 : index
      %18 = vector.load %arg6[%c0_15, %c0_16] : memref<256x128xf32, #tpu.memory_space<vmem>>, vector<256x128xf32>
      tpu.vector_store %arg6[%c0_15, %c0_16], %17 {strides = array<i32>} : memref<256x128xf32, #tpu.memory_space<vmem>>, vector<256x128xf32>,
    } else {
    }
    return
  }
  func.func @transform_0(%arg0: i32, %arg1: i32, %arg2: i32) -> (i32, i32) {
    %c0_i32 = arith.constant 0 : i32
    return %arg0, %arg2 : i32, i32
  }
  func.func @transform_1(%arg0: i32, %arg1: i32, %arg2: i32) -> (i32, i32) {
    %c0_i32 = arith.constant 0 : i32
    return %arg2, %arg1 : i32, i32
  }
  func.func @transform_2(%arg0: i32, %arg1: i32, %arg2: i32) -> (i32, i32) {
    %c0_i32 = arith.constant 0 : i32
    %c0_i32_0 = arith.constant 0 : i32
    return %c0_i32, %arg1 : i32, i32
  }
  func.func @transform_3(%arg0: i32, %arg1: i32, %arg2: i32) -> (i32, i32) {
    %c0_i32 = arith.constant 0 : i32
    return %arg0, %arg1 : i32, i32
  }
}

module attributes {stable_mosaic.version = 11 : i64} {
  func.func @_matmul_bias_kernel(%arg0: i32, %arg1: i32, %arg2: i32, %arg3: memref<256x256xbf16, #tpu.memory_space<vmem>>, %arg4: memref<256x128xbf16, #tpu.memory_space<vmem>>, %arg5: memref<1x128xf32, #tpu.memory_space<vmem>>, %arg6: memref<256x128xf32, #tpu.memory_space<vmem>>, %arg7: memref<256x128xf32, #tpu.memory_space<vmem>>) attributes {dimension_semantics = [#tpu.dimension_semantics<parallel>, #tpu.dimension_semantics<parallel>, #tpu.dimension_semantics<arbitrary>], iteration_bounds = array<i64: 2, 1, 3>, scalar_prefetch = 0 : i64, scratch_operands = 1 : i64, tpu.core_type = #tpu.core_type<tc>, window_params = [{transform_indices = @transform_0, window_bounds = array<i64: 256, 256>}, {transform_indices = @transform_1, window_bounds = array<i64: 256, 128>}, {transform_indices = @transform_2, window_bounds = array<i64: 1, 128>}, {transform_indices = @transform_3, window_bounds = array<i64: 256, 128>}]} {
    %c0_i32 = arith.constant 0 : i32
    %0 = arith.cmpi eq, %arg2, %c0_i32 : i32
    %1 = arith.extui %0 : i1 to i32
    %c0_i32_0 = arith.constant 0 : i32
    %2 = arith.cmpi ne, %1, %c0_i32_0 : i32
    scf.if %2 {
      %cst_9 = arith.constant 0.000000e+00 : f32
      %12 = vector.broadcast %cst_9 : f32 to vector<256x128xf32>
      %c0_10 = arith.constant 0 : index
      %c0_11 = arith.constant 0 : index
      %13 = vector.load %arg7[%c0_10, %c0_11] : memref<256x128xf32, #tpu.memory_space<vmem>>, vector<256x128xf32>
      tpu.vector_store %arg7[%c0_10, %c0_11], %12 {strides = array<i32>} : memref<256x128xf32, #tpu.memory_space<vmem>>, vector<256x128xf32>,
    } else {
    }
    %c0 = arith.constant 0 : index
    %c0_1 = arith.constant 0 : index
    %3 = vector.load %arg7[%c0, %c0_1] : memref<256x128xf32, #tpu.memory_space<vmem>>, vector<256x128xf32>
    %c0_2 = arith.constant 0 : index
    %c0_3 = arith.constant 0 : index
    %4 = vector.load %arg3[%c0_2, %c0_3] : memref<256x256xbf16, #tpu.memory_space<vmem>>, vector<256x256xbf16>
    %c0_4 = arith.constant 0 : index
    %c0_5 = arith.constant 0 : index
    %5 = vector.load %arg4[%c0_4, %c0_5] : memref<256x128xbf16, #tpu.memory_space<vmem>>, vector<256x128xbf16>
    %cst = arith.constant dense<0.000000e+00> : vector<256x128xf32>
    %6 = tpu.matmul %4, %5, %cst {dimension_numbers = #tpu.dot_dimension_numbers<[1], [0], [0], [1], [0, 0, 1, 1], [], []>} : vector<256x256xbf16>, vector<256x128xbf16>, vector<256x128xf32> -> vector<256x128xf32>
    %7 = arith.addf %3, %6 : vector<256x128xf32>
    %c0_6 = arith.constant 0 : index
    %c0_7 = arith.constant 0 : index
    %8 = vector.load %arg7[%c0_6, %c0_7] : memref<256x128xf32, #tpu.memory_space<vmem>>, vector<256x128xf32>
    tpu.vector_store %arg7[%c0_6, %c0_7], %7 {strides = array<i32>} : memref<256x128xf32, #tpu.memory_space<vmem>>, vector<256x128xf32>,
    %c2_i32 = arith.constant 2 : i32
    %9 = arith.cmpi eq, %arg2, %c2_i32 : i32
    %10 = arith.extui %9 : i1 to i32
    %c0_i32_8 = arith.constant 0 : i32
    %11 = arith.cmpi ne, %10, %c0_i32_8 : i32
    scf.if %11 {
      %c0_9 = arith.constant 0 : index
      %c0_10 = arith.constant 0 : index
      %12 = vector.load %arg7[%c0_9, %c0_10] : memref<256x128xf32, #tpu.memory_space<vmem>>, vector<256x128xf32>
      %c0_11 = arith.constant 0 : index
      %c0_12 = arith.constant 0 : index
      %13 = vector.load %arg5[%c0_11, %c0_12] : memref<1x128xf32, #tpu.memory_space<vmem>>, vector<1x128xf32>
      %14 = vector.broadcast %13 : vector<1x128xf32> to vector<256x128xf32>
      %15 = arith.addf %12, %14 : vector<256x128xf32>
      %cst_13 = arith.constant 0.000000e+00 : f32
      %16 = vector.broadcast %cst_13 : f32 to vector<256x128xf32>
      %17 = arith.maximumf %15, %16 : vector<256x128xf32>
      %c0_14 = arith.constant 0 : index
      %c0_15 = arith.constant 0 : index
      %18 = vector.load %arg6[%c0_14, %c0_15] : memref<256x128xf32, #tpu.memory_space<vmem>>, vector<256x128xf32>
      tpu.vector_store %arg6[%c0_14, %c0_15], %17 {strides = array<i32>} : memref<256x128xf32, #tpu.memory_space<vmem>>, vector<256x128xf32>,
    } else {
    }
    return
  }
  func.func @transform_0(%arg0: i32, %arg1: i32, %arg2: i32) -> (i32, i32) {
    %c0_i32 = arith.constant 0 : i32
    return %arg0, %arg2 : i32, i32
  }
  func.func @transform_1(%arg0: i32, %arg1: i32, %arg2: i32) -> (i32, i32) {
    %c0_i32 = arith.constant 0 : i32
    return %arg2, %arg1 : i32, i32
  }
  func.func @transform_2(%arg0: i32, %arg1: i32, %arg2: i32) -> (i32, i32) {
    %c0_i32 = arith.constant 0 : i32
    %c0_i32_0 = arith.constant 0 : i32
    return %c0_i32, %arg1 : i32, i32
  }
  func.func @transform_3(%arg0: i32, %arg1: i32, %arg2: i32) -> (i32, i32) {
    %c0_i32 = arith.constant 0 : i32
    return %arg0, %arg1 : i32, i32
  }
}

module attributes {stable_mosaic.version = 11 : i64} {
  func.func @_matmul_bias_kernel(%arg0: i32, %arg1: i32, %arg2: i32, %arg3: memref<128x256xbf16, #tpu.memory_space<vmem>>, %arg4: memref<256x128xbf16, #tpu.memory_space<vmem>>, %arg5: memref<1x128xf32, #tpu.memory_space<vmem>>, %arg6: memref<128x128xf32, #tpu.memory_space<vmem>>, %arg7: memref<128x128xf32, #tpu.memory_space<vmem>>) attributes {dimension_semantics = [#tpu.dimension_semantics<parallel>, #tpu.dimension_semantics<parallel>, #tpu.dimension_semantics<arbitrary>], iteration_bounds = array<i64: 1, 1, 3>, scalar_prefetch = 0 : i64, scratch_operands = 1 : i64, tpu.core_type = #tpu.core_type<tc>, window_params = [{transform_indices = @transform_0, window_bounds = array<i64: 128, 256>}, {transform_indices = @transform_1, window_bounds = array<i64: 256, 128>}, {transform_indices = @transform_2, window_bounds = array<i64: 1, 128>}, {transform_indices = @transform_3, window_bounds = array<i64: 128, 128>}]} {
    %c0_i32 = arith.constant 0 : i32
    %0 = arith.cmpi eq, %arg2, %c0_i32 : i32
    %1 = arith.extui %0 : i1 to i32
    %c0_i32_0 = arith.constant 0 : i32
    %2 = arith.cmpi ne, %1, %c0_i32_0 : i32
    scf.if %2 {
      %cst_9 = arith.constant 0.000000e+00 : f32
      %12 = vector.broadcast %cst_9 : f32 to vector<128x128xf32>
      %c0_10 = arith.constant 0 : index
      %c0_11 = arith.constant 0 : index
      %13 = vector.load %arg7[%c0_10, %c0_11] : memref<128x128xf32, #tpu.memory_space<vmem>>, vector<128x128xf32>
      tpu.vector_store %arg7[%c0_10, %c0_11], %12 {strides = array<i32>} : memref<128x128xf32, #tpu.memory_space<vmem>>, vector<128x128xf32>,
    } else {
    }
    %c0 = arith.constant 0 : index
    %c0_1 = arith.constant 0 : index
    %3 = vector.load %arg7[%c0, %c0_1] : memref<128x128xf32, #tpu.memory_space<vmem>>, vector<128x128xf32>
    %c0_2 = arith.constant 0 : index
    %c0_3 = arith.constant 0 : index
    %4 = vector.load %arg3[%c0_2, %c0_3] : memref<128x256xbf16, #tpu.memory_space<vmem>>, vector<128x256xbf16>
    %c0_4 = arith.constant 0 : index
    %c0_5 = arith.constant 0 : index
    %5 = vector.load %arg4[%c0_4, %c0_5] : memref<256x128xbf16, #tpu.memory_space<vmem>>, vector<256x128xbf16>
    %cst = arith.constant dense<0.000000e+00> : vector<128x128xf32>
    %6 = tpu.matmul %4, %5, %cst {dimension_numbers = #tpu.dot_dimension_numbers<[1], [0], [0], [1], [0, 0, 1, 1], [], []>} : vector<128x256xbf16>, vector<256x128xbf16>, vector<128x128xf32> -> vector<128x128xf32>
    %7 = arith.addf %3, %6 : vector<128x128xf32>
    %c0_6 = arith.constant 0 : index
    %c0_7 = arith.constant 0 : index
    %8 = vector.load %arg7[%c0_6, %c0_7] : memref<128x128xf32, #tpu.memory_space<vmem>>, vector<128x128xf32>
    tpu.vector_store %arg7[%c0_6, %c0_7], %7 {strides = array<i32>} : memref<128x128xf32, #tpu.memory_space<vmem>>, vector<128x128xf32>,
    %c2_i32 = arith.constant 2 : i32
    %9 = arith.cmpi eq, %arg2, %c2_i32 : i32
    %10 = arith.extui %9 : i1 to i32
    %c0_i32_8 = arith.constant 0 : i32
    %11 = arith.cmpi ne, %10, %c0_i32_8 : i32
    scf.if %11 {
      %c0_9 = arith.constant 0 : index
      %c0_10 = arith.constant 0 : index
      %12 = vector.load %arg7[%c0_9, %c0_10] : memref<128x128xf32, #tpu.memory_space<vmem>>, vector<128x128xf32>
      %c0_11 = arith.constant 0 : index
      %c0_12 = arith.constant 0 : index
      %13 = vector.load %arg5[%c0_11, %c0_12] : memref<1x128xf32, #tpu.memory_space<vmem>>, vector<1x128xf32>
      %14 = vector.broadcast %13 : vector<1x128xf32> to vector<128x128xf32>
      %15 = arith.addf %12, %14 : vector<128x128xf32>
      %cst_13 = arith.constant 0.000000e+00 : f32
      %16 = vector.broadcast %cst_13 : f32 to vector<128x128xf32>
      %17 = arith.maximumf %15, %16 : vector<128x128xf32>
      %c0_14 = arith.constant 0 : index
      %c0_15 = arith.constant 0 : index
      %18 = vector.load %arg6[%c0_14, %c0_15] : memref<128x128xf32, #tpu.memory_space<vmem>>, vector<128x128xf32>
      tpu.vector_store %arg6[%c0_14, %c0_15], %17 {strides = array<i32>} : memref<128x128xf32, #tpu.memory_space<vmem>>, vector<128x128xf32>,
    } else {
    }
    return
  }
  func.func @transform_0(%arg0: i32, %arg1: i32, %arg2: i32) -> (i32, i32) {
    %c0_i32 = arith.constant 0 : i32
    return %arg0, %arg2 : i32, i32
  }
  func.func @transform_1(%arg0: i32, %arg1: i32, %arg2: i32) -> (i32, i32) {
    %c0_i32 = arith.constant 0 : i32
    return %arg2, %arg1 : i32, i32
  }
  func.func @transform_2(%arg0: i32, %arg1: i32, %arg2: i32) -> (i32, i32) {
    %c0_i32 = arith.constant 0 : i32
    %c0_i32_0 = arith.constant 0 : i32
    return %c0_i32, %arg1 : i32, i32
  }
  func.func @transform_3(%arg0: i32, %arg1: i32, %arg2: i32) -> (i32, i32) {
    %c0_i32 = arith.constant 0 : i32
    return %arg0, %arg1 : i32, i32
  }
}

module attributes {stable_mosaic.version = 11 : i64} {
  func.func @_matmul_bias_kernel(%arg0: i32, %arg1: i32, %arg2: i32, %arg3: memref<32x256xbf16, #tpu.memory_space<vmem>>, %arg4: memref<256x256xbf16, #tpu.memory_space<vmem>>, %arg5: memref<1x256xf32, #tpu.memory_space<vmem>>, %arg6: memref<32x256xf32, #tpu.memory_space<vmem>>, %arg7: memref<32x256xf32, #tpu.memory_space<vmem>>) attributes {dimension_semantics = [#tpu.dimension_semantics<parallel>, #tpu.dimension_semantics<parallel>, #tpu.dimension_semantics<arbitrary>], iteration_bounds = array<i64: 1, 1, 5>, scalar_prefetch = 0 : i64, scratch_operands = 1 : i64, tpu.core_type = #tpu.core_type<tc>, window_params = [{transform_indices = @transform_0, window_bounds = array<i64: 32, 256>}, {transform_indices = @transform_1, window_bounds = array<i64: 256, 256>}, {transform_indices = @transform_2, window_bounds = array<i64: 1, 256>}, {transform_indices = @transform_3, window_bounds = array<i64: 32, 256>}]} {
    %c0_i32 = arith.constant 0 : i32
    %0 = arith.cmpi eq, %arg2, %c0_i32 : i32
    %1 = arith.extui %0 : i1 to i32
    %c0_i32_0 = arith.constant 0 : i32
    %2 = arith.cmpi ne, %1, %c0_i32_0 : i32
    scf.if %2 {
      %cst_9 = arith.constant 0.000000e+00 : f32
      %12 = vector.broadcast %cst_9 : f32 to vector<32x256xf32>
      %c0_10 = arith.constant 0 : index
      %c0_11 = arith.constant 0 : index
      %13 = vector.load %arg7[%c0_10, %c0_11] : memref<32x256xf32, #tpu.memory_space<vmem>>, vector<32x256xf32>
      tpu.vector_store %arg7[%c0_10, %c0_11], %12 {strides = array<i32>} : memref<32x256xf32, #tpu.memory_space<vmem>>, vector<32x256xf32>,
    } else {
    }
    %c0 = arith.constant 0 : index
    %c0_1 = arith.constant 0 : index
    %3 = vector.load %arg7[%c0, %c0_1] : memref<32x256xf32, #tpu.memory_space<vmem>>, vector<32x256xf32>
    %c0_2 = arith.constant 0 : index
    %c0_3 = arith.constant 0 : index
    %4 = vector.load %arg3[%c0_2, %c0_3] : memref<32x256xbf16, #tpu.memory_space<vmem>>, vector<32x256xbf16>
    %c0_4 = arith.constant 0 : index
    %c0_5 = arith.constant 0 : index
    %5 = vector.load %arg4[%c0_4, %c0_5] : memref<256x256xbf16, #tpu.memory_space<vmem>>, vector<256x256xbf16>
    %cst = arith.constant dense<0.000000e+00> : vector<32x256xf32>
    %6 = tpu.matmul %4, %5, %cst {dimension_numbers = #tpu.dot_dimension_numbers<[1], [0], [0], [1], [0, 0, 1, 1], [], []>} : vector<32x256xbf16>, vector<256x256xbf16>, vector<32x256xf32> -> vector<32x256xf32>
    %7 = arith.addf %3, %6 : vector<32x256xf32>
    %c0_6 = arith.constant 0 : index
    %c0_7 = arith.constant 0 : index
    %8 = vector.load %arg7[%c0_6, %c0_7] : memref<32x256xf32, #tpu.memory_space<vmem>>, vector<32x256xf32>
    tpu.vector_store %arg7[%c0_6, %c0_7], %7 {strides = array<i32>} : memref<32x256xf32, #tpu.memory_space<vmem>>, vector<32x256xf32>,
    %c4_i32 = arith.constant 4 : i32
    %9 = arith.cmpi eq, %arg2, %c4_i32 : i32
    %10 = arith.extui %9 : i1 to i32
    %c0_i32_8 = arith.constant 0 : i32
    %11 = arith.cmpi ne, %10, %c0_i32_8 : i32
    scf.if %11 {
      %c0_9 = arith.constant 0 : index
      %c0_10 = arith.constant 0 : index
      %12 = vector.load %arg7[%c0_9, %c0_10] : memref<32x256xf32, #tpu.memory_space<vmem>>, vector<32x256xf32>
      %c0_11 = arith.constant 0 : index
      %c0_12 = arith.constant 0 : index
      %13 = vector.load %arg5[%c0_11, %c0_12] : memref<1x256xf32, #tpu.memory_space<vmem>>, vector<1x256xf32>
      %14 = vector.broadcast %13 : vector<1x256xf32> to vector<32x256xf32>
      %15 = arith.addf %12, %14 : vector<32x256xf32>
      %cst_13 = arith.constant 0.000000e+00 : f32
      %16 = vector.broadcast %cst_13 : f32 to vector<32x256xf32>
      %17 = arith.maximumf %15, %16 : vector<32x256xf32>
      %c0_14 = arith.constant 0 : index
      %c0_15 = arith.constant 0 : index
      %18 = vector.load %arg6[%c0_14, %c0_15] : memref<32x256xf32, #tpu.memory_space<vmem>>, vector<32x256xf32>
      tpu.vector_store %arg6[%c0_14, %c0_15], %17 {strides = array<i32>} : memref<32x256xf32, #tpu.memory_space<vmem>>, vector<32x256xf32>,
    } else {
    }
    return
  }
  func.func @transform_0(%arg0: i32, %arg1: i32, %arg2: i32) -> (i32, i32) {
    %c0_i32 = arith.constant 0 : i32
    return %arg0, %arg2 : i32, i32
  }
  func.func @transform_1(%arg0: i32, %arg1: i32, %arg2: i32) -> (i32, i32) {
    %c0_i32 = arith.constant 0 : i32
    return %arg2, %arg1 : i32, i32
  }
  func.func @transform_2(%arg0: i32, %arg1: i32, %arg2: i32) -> (i32, i32) {
    %c0_i32 = arith.constant 0 : i32
    %c0_i32_0 = arith.constant 0 : i32
    return %c0_i32, %arg1 : i32, i32
  }
  func.func @transform_3(%arg0: i32, %arg1: i32, %arg2: i32) -> (i32, i32) {
    %c0_i32 = arith.constant 0 : i32
    return %arg0, %arg1 : i32, i32
  }
}

module attributes {stable_mosaic.version = 11 : i64} {
  func.func @_matmul_bias_kernel(%arg0: i32, %arg1: i32, %arg2: i32, %arg3: memref<8x256xbf16, #tpu.memory_space<vmem>>, %arg4: memref<256x256xbf16, #tpu.memory_space<vmem>>, %arg5: memref<1x256xf32, #tpu.memory_space<vmem>>, %arg6: memref<8x256xf32, #tpu.memory_space<vmem>>, %arg7: memref<8x256xf32, #tpu.memory_space<vmem>>) attributes {dimension_semantics = [#tpu.dimension_semantics<parallel>, #tpu.dimension_semantics<parallel>, #tpu.dimension_semantics<arbitrary>], iteration_bounds = array<i64: 1, 2, 9>, scalar_prefetch = 0 : i64, scratch_operands = 1 : i64, tpu.core_type = #tpu.core_type<tc>, window_params = [{transform_indices = @transform_0, window_bounds = array<i64: 8, 256>}, {transform_indices = @transform_1, window_bounds = array<i64: 256, 256>}, {transform_indices = @transform_2, window_bounds = array<i64: 1, 256>}, {transform_indices = @transform_3, window_bounds = array<i64: 8, 256>}]} {
    %c0_i32 = arith.constant 0 : i32
    %0 = arith.cmpi eq, %arg2, %c0_i32 : i32
    %1 = arith.extui %0 : i1 to i32
    %c0_i32_0 = arith.constant 0 : i32
    %2 = arith.cmpi ne, %1, %c0_i32_0 : i32
    scf.if %2 {
      %cst_9 = arith.constant 0.000000e+00 : f32
      %12 = vector.broadcast %cst_9 : f32 to vector<8x256xf32>
      %c0_10 = arith.constant 0 : index
      %c0_11 = arith.constant 0 : index
      %13 = vector.load %arg7[%c0_10, %c0_11] : memref<8x256xf32, #tpu.memory_space<vmem>>, vector<8x256xf32>
      tpu.vector_store %arg7[%c0_10, %c0_11], %12 {strides = array<i32>} : memref<8x256xf32, #tpu.memory_space<vmem>>, vector<8x256xf32>,
    } else {
    }
    %c0 = arith.constant 0 : index
    %c0_1 = arith.constant 0 : index
    %3 = vector.load %arg7[%c0, %c0_1] : memref<8x256xf32, #tpu.memory_space<vmem>>, vector<8x256xf32>
    %c0_2 = arith.constant 0 : index
    %c0_3 = arith.constant 0 : index
    %4 = vector.load %arg3[%c0_2, %c0_3] : memref<8x256xbf16, #tpu.memory_space<vmem>>, vector<8x256xbf16>
    %c0_4 = arith.constant 0 : index
    %c0_5 = arith.constant 0 : index
    %5 = vector.load %arg4[%c0_4, %c0_5] : memref<256x256xbf16, #tpu.memory_space<vmem>>, vector<256x256xbf16>
    %cst = arith.constant dense<0.000000e+00> : vector<8x256xf32>
    %6 = tpu.matmul %4, %5, %cst {dimension_numbers = #tpu.dot_dimension_numbers<[1], [0], [0], [1], [0, 0, 1, 1], [], []>} : vector<8x256xbf16>, vector<256x256xbf16>, vector<8x256xf32> -> vector<8x256xf32>
    %7 = arith.addf %3, %6 : vector<8x256xf32>
    %c0_6 = arith.constant 0 : index
    %c0_7 = arith.constant 0 : index
    %8 = vector.load %arg7[%c0_6, %c0_7] : memref<8x256xf32, #tpu.memory_space<vmem>>, vector<8x256xf32>
    tpu.vector_store %arg7[%c0_6, %c0_7], %7 {strides = array<i32>} : memref<8x256xf32, #tpu.memory_space<vmem>>, vector<8x256xf32>,
    %c8_i32 = arith.constant 8 : i32
    %9 = arith.cmpi eq, %arg2, %c8_i32 : i32
    %10 = arith.extui %9 : i1 to i32
    %c0_i32_8 = arith.constant 0 : i32
    %11 = arith.cmpi ne, %10, %c0_i32_8 : i32
    scf.if %11 {
      %c0_9 = arith.constant 0 : index
      %c0_10 = arith.constant 0 : index
      %12 = vector.load %arg7[%c0_9, %c0_10] : memref<8x256xf32, #tpu.memory_space<vmem>>, vector<8x256xf32>
      %c0_11 = arith.constant 0 : index
      %c0_12 = arith.constant 0 : index
      %13 = vector.load %arg5[%c0_11, %c0_12] : memref<1x256xf32, #tpu.memory_space<vmem>>, vector<1x256xf32>
      %14 = vector.broadcast %13 : vector<1x256xf32> to vector<8x256xf32>
      %15 = arith.addf %12, %14 : vector<8x256xf32>
      %cst_13 = arith.constant 0.000000e+00 : f32
      %16 = vector.broadcast %cst_13 : f32 to vector<8x256xf32>
      %17 = arith.maximumf %15, %16 : vector<8x256xf32>
      %c0_14 = arith.constant 0 : index
      %c0_15 = arith.constant 0 : index
      %18 = vector.load %arg6[%c0_14, %c0_15] : memref<8x256xf32, #tpu.memory_space<vmem>>, vector<8x256xf32>
      tpu.vector_store %arg6[%c0_14, %c0_15], %17 {strides = array<i32>} : memref<8x256xf32, #tpu.memory_space<vmem>>, vector<8x256xf32>,
    } else {
    }
    return
  }
  func.func @transform_0(%arg0: i32, %arg1: i32, %arg2: i32) -> (i32, i32) {
    %c0_i32 = arith.constant 0 : i32
    return %arg0, %arg2 : i32, i32
  }
  func.func @transform_1(%arg0: i32, %arg1: i32, %arg2: i32) -> (i32, i32) {
    %c0_i32 = arith.constant 0 : i32
    return %arg2, %arg1 : i32, i32
  }
  func.func @transform_2(%arg0: i32, %arg1: i32, %arg2: i32) -> (i32, i32) {
    %c0_i32 = arith.constant 0 : i32
    %c0_i32_0 = arith.constant 0 : i32
    return %c0_i32, %arg1 : i32, i32
  }
  func.func @transform_3(%arg0: i32, %arg1: i32, %arg2: i32) -> (i32, i32) {
    %c0_i32 = arith.constant 0 : i32
    return %arg0, %arg1 : i32, i32
  }
}

module attributes {stable_mosaic.version = 11 : i64} {
  func.func @_matmul_bias_kernel(%arg0: i32, %arg1: i32, %arg2: i32, %arg3: memref<8x256xbf16, #tpu.memory_space<vmem>>, %arg4: memref<256x256xbf16, #tpu.memory_space<vmem>>, %arg5: memref<1x256xf32, #tpu.memory_space<vmem>>, %arg6: memref<8x256xf32, #tpu.memory_space<vmem>>, %arg7: memref<8x256xf32, #tpu.memory_space<vmem>>) attributes {dimension_semantics = [#tpu.dimension_semantics<parallel>, #tpu.dimension_semantics<parallel>, #tpu.dimension_semantics<arbitrary>], iteration_bounds = array<i64: 1, 1, 2>, scalar_prefetch = 0 : i64, scratch_operands = 1 : i64, tpu.core_type = #tpu.core_type<tc>, window_params = [{transform_indices = @transform_0, window_bounds = array<i64: 8, 256>}, {transform_indices = @transform_1, window_bounds = array<i64: 256, 256>}, {transform_indices = @transform_2, window_bounds = array<i64: 1, 256>}, {transform_indices = @transform_3, window_bounds = array<i64: 8, 256>}]} {
    %c0_i32 = arith.constant 0 : i32
    %0 = arith.cmpi eq, %arg2, %c0_i32 : i32
    %1 = arith.extui %0 : i1 to i32
    %c0_i32_0 = arith.constant 0 : i32
    %2 = arith.cmpi ne, %1, %c0_i32_0 : i32
    scf.if %2 {
      %cst_9 = arith.constant 0.000000e+00 : f32
      %12 = vector.broadcast %cst_9 : f32 to vector<8x256xf32>
      %c0_10 = arith.constant 0 : index
      %c0_11 = arith.constant 0 : index
      %13 = vector.load %arg7[%c0_10, %c0_11] : memref<8x256xf32, #tpu.memory_space<vmem>>, vector<8x256xf32>
      tpu.vector_store %arg7[%c0_10, %c0_11], %12 {strides = array<i32>} : memref<8x256xf32, #tpu.memory_space<vmem>>, vector<8x256xf32>,
    } else {
    }
    %c0 = arith.constant 0 : index
    %c0_1 = arith.constant 0 : index
    %3 = vector.load %arg7[%c0, %c0_1] : memref<8x256xf32, #tpu.memory_space<vmem>>, vector<8x256xf32>
    %c0_2 = arith.constant 0 : index
    %c0_3 = arith.constant 0 : index
    %4 = vector.load %arg3[%c0_2, %c0_3] : memref<8x256xbf16, #tpu.memory_space<vmem>>, vector<8x256xbf16>
    %c0_4 = arith.constant 0 : index
    %c0_5 = arith.constant 0 : index
    %5 = vector.load %arg4[%c0_4, %c0_5] : memref<256x256xbf16, #tpu.memory_space<vmem>>, vector<256x256xbf16>
    %cst = arith.constant dense<0.000000e+00> : vector<8x256xf32>
    %6 = tpu.matmul %4, %5, %cst {dimension_numbers = #tpu.dot_dimension_numbers<[1], [0], [0], [1], [0, 0, 1, 1], [], []>} : vector<8x256xbf16>, vector<256x256xbf16>, vector<8x256xf32> -> vector<8x256xf32>
    %7 = arith.addf %3, %6 : vector<8x256xf32>
    %c0_6 = arith.constant 0 : index
    %c0_7 = arith.constant 0 : index
    %8 = vector.load %arg7[%c0_6, %c0_7] : memref<8x256xf32, #tpu.memory_space<vmem>>, vector<8x256xf32>
    tpu.vector_store %arg7[%c0_6, %c0_7], %7 {strides = array<i32>} : memref<8x256xf32, #tpu.memory_space<vmem>>, vector<8x256xf32>,
    %c1_i32 = arith.constant 1 : i32
    %9 = arith.cmpi eq, %arg2, %c1_i32 : i32
    %10 = arith.extui %9 : i1 to i32
    %c0_i32_8 = arith.constant 0 : i32
    %11 = arith.cmpi ne, %10, %c0_i32_8 : i32
    scf.if %11 {
      %c0_9 = arith.constant 0 : index
      %c0_10 = arith.constant 0 : index
      %12 = vector.load %arg7[%c0_9, %c0_10] : memref<8x256xf32, #tpu.memory_space<vmem>>, vector<8x256xf32>
      %c0_11 = arith.constant 0 : index
      %c0_12 = arith.constant 0 : index
      %13 = vector.load %arg5[%c0_11, %c0_12] : memref<1x256xf32, #tpu.memory_space<vmem>>, vector<1x256xf32>
      %14 = vector.broadcast %13 : vector<1x256xf32> to vector<8x256xf32>
      %15 = arith.addf %12, %14 : vector<8x256xf32>
      %cst_13 = arith.constant 0.000000e+00 : f32
      %16 = vector.broadcast %cst_13 : f32 to vector<8x256xf32>
      %17 = arith.maximumf %15, %16 : vector<8x256xf32>
      %c0_14 = arith.constant 0 : index
      %c0_15 = arith.constant 0 : index
      %18 = vector.load %arg6[%c0_14, %c0_15] : memref<8x256xf32, #tpu.memory_space<vmem>>, vector<8x256xf32>
      tpu.vector_store %arg6[%c0_14, %c0_15], %17 {strides = array<i32>} : memref<8x256xf32, #tpu.memory_space<vmem>>, vector<8x256xf32>,
    } else {
    }
    return
  }
  func.func @transform_0(%arg0: i32, %arg1: i32, %arg2: i32) -> (i32, i32) {
    %c0_i32 = arith.constant 0 : i32
    return %arg0, %arg2 : i32, i32
  }
  func.func @transform_1(%arg0: i32, %arg1: i32, %arg2: i32) -> (i32, i32) {
    %c0_i32 = arith.constant 0 : i32
    return %arg2, %arg1 : i32, i32
  }
  func.func @transform_2(%arg0: i32, %arg1: i32, %arg2: i32) -> (i32, i32) {
    %c0_i32 = arith.constant 0 : i32
    %c0_i32_0 = arith.constant 0 : i32
    return %c0_i32, %arg1 : i32, i32
  }
  func.func @transform_3(%arg0: i32, %arg1: i32, %arg2: i32) -> (i32, i32) {
    %c0_i32 = arith.constant 0 : i32
    return %arg0, %arg1 : i32, i32
  }
}

module attributes {stable_mosaic.version = 11 : i64} {
  func.func @_matmul_bias_kernel(%arg0: i32, %arg1: i32, %arg2: i32, %arg3: memref<8x256xbf16, #tpu.memory_space<vmem>>, %arg4: memref<256x256xbf16, #tpu.memory_space<vmem>>, %arg5: memref<1x256xf32, #tpu.memory_space<vmem>>, %arg6: memref<8x256xf32, #tpu.memory_space<vmem>>, %arg7: memref<8x256xf32, #tpu.memory_space<vmem>>) attributes {dimension_semantics = [#tpu.dimension_semantics<parallel>, #tpu.dimension_semantics<parallel>, #tpu.dimension_semantics<arbitrary>], iteration_bounds = array<i64: 1, 1, 9>, scalar_prefetch = 0 : i64, scratch_operands = 1 : i64, tpu.core_type = #tpu.core_type<tc>, window_params = [{transform_indices = @transform_0, window_bounds = array<i64: 8, 256>}, {transform_indices = @transform_1, window_bounds = array<i64: 256, 256>}, {transform_indices = @transform_2, window_bounds = array<i64: 1, 256>}, {transform_indices = @transform_3, window_bounds = array<i64: 8, 256>}]} {
    %c0_i32 = arith.constant 0 : i32
    %0 = arith.cmpi eq, %arg2, %c0_i32 : i32
    %1 = arith.extui %0 : i1 to i32
    %c0_i32_0 = arith.constant 0 : i32
    %2 = arith.cmpi ne, %1, %c0_i32_0 : i32
    scf.if %2 {
      %cst_9 = arith.constant 0.000000e+00 : f32
      %12 = vector.broadcast %cst_9 : f32 to vector<8x256xf32>
      %c0_10 = arith.constant 0 : index
      %c0_11 = arith.constant 0 : index
      %13 = vector.load %arg7[%c0_10, %c0_11] : memref<8x256xf32, #tpu.memory_space<vmem>>, vector<8x256xf32>
      tpu.vector_store %arg7[%c0_10, %c0_11], %12 {strides = array<i32>} : memref<8x256xf32, #tpu.memory_space<vmem>>, vector<8x256xf32>,
    } else {
    }
    %c0 = arith.constant 0 : index
    %c0_1 = arith.constant 0 : index
    %3 = vector.load %arg7[%c0, %c0_1] : memref<8x256xf32, #tpu.memory_space<vmem>>, vector<8x256xf32>
    %c0_2 = arith.constant 0 : index
    %c0_3 = arith.constant 0 : index
    %4 = vector.load %arg3[%c0_2, %c0_3] : memref<8x256xbf16, #tpu.memory_space<vmem>>, vector<8x256xbf16>
    %c0_4 = arith.constant 0 : index
    %c0_5 = arith.constant 0 : index
    %5 = vector.load %arg4[%c0_4, %c0_5] : memref<256x256xbf16, #tpu.memory_space<vmem>>, vector<256x256xbf16>
    %cst = arith.constant dense<0.000000e+00> : vector<8x256xf32>
    %6 = tpu.matmul %4, %5, %cst {dimension_numbers = #tpu.dot_dimension_numbers<[1], [0], [0], [1], [0, 0, 1, 1], [], []>} : vector<8x256xbf16>, vector<256x256xbf16>, vector<8x256xf32> -> vector<8x256xf32>
    %7 = arith.addf %3, %6 : vector<8x256xf32>
    %c0_6 = arith.constant 0 : index
    %c0_7 = arith.constant 0 : index
    %8 = vector.load %arg7[%c0_6, %c0_7] : memref<8x256xf32, #tpu.memory_space<vmem>>, vector<8x256xf32>
    tpu.vector_store %arg7[%c0_6, %c0_7], %7 {strides = array<i32>} : memref<8x256xf32, #tpu.memory_space<vmem>>, vector<8x256xf32>,
    %c8_i32 = arith.constant 8 : i32
    %9 = arith.cmpi eq, %arg2, %c8_i32 : i32
    %10 = arith.extui %9 : i1 to i32
    %c0_i32_8 = arith.constant 0 : i32
    %11 = arith.cmpi ne, %10, %c0_i32_8 : i32
    scf.if %11 {
      %c0_9 = arith.constant 0 : index
      %c0_10 = arith.constant 0 : index
      %12 = vector.load %arg7[%c0_9, %c0_10] : memref<8x256xf32, #tpu.memory_space<vmem>>, vector<8x256xf32>
      %c0_11 = arith.constant 0 : index
      %c0_12 = arith.constant 0 : index
      %13 = vector.load %arg5[%c0_11, %c0_12] : memref<1x256xf32, #tpu.memory_space<vmem>>, vector<1x256xf32>
      %14 = vector.broadcast %13 : vector<1x256xf32> to vector<8x256xf32>
      %15 = arith.addf %12, %14 : vector<8x256xf32>
      %cst_13 = arith.constant 0.000000e+00 : f32
      %16 = vector.broadcast %cst_13 : f32 to vector<8x256xf32>
      %17 = arith.maximumf %15, %16 : vector<8x256xf32>
      %c0_14 = arith.constant 0 : index
      %c0_15 = arith.constant 0 : index
      %18 = vector.load %arg6[%c0_14, %c0_15] : memref<8x256xf32, #tpu.memory_space<vmem>>, vector<8x256xf32>
      tpu.vector_store %arg6[%c0_14, %c0_15], %17 {strides = array<i32>} : memref<8x256xf32, #tpu.memory_space<vmem>>, vector<8x256xf32>,
    } else {
    }
    return
  }
  func.func @transform_0(%arg0: i32, %arg1: i32, %arg2: i32) -> (i32, i32) {
    %c0_i32 = arith.constant 0 : i32
    return %arg0, %arg2 : i32, i32
  }
  func.func @transform_1(%arg0: i32, %arg1: i32, %arg2: i32) -> (i32, i32) {
    %c0_i32 = arith.constant 0 : i32
    return %arg2, %arg1 : i32, i32
  }
  func.func @transform_2(%arg0: i32, %arg1: i32, %arg2: i32) -> (i32, i32) {
    %c0_i32 = arith.constant 0 : i32
    %c0_i32_0 = arith.constant 0 : i32
    return %c0_i32, %arg1 : i32, i32
  }
  func.func @transform_3(%arg0: i32, %arg1: i32, %arg2: i32) -> (i32, i32) {
    %c0_i32 = arith.constant 0 : i32
    return %arg0, %arg1 : i32, i32
  }
}

module attributes {stable_mosaic.version = 11 : i64} {
  func.func @_matmul2_bias_kernel(%arg0: i32, %arg1: i32, %arg2: i32, %arg3: memref<8x256xbf16, #tpu.memory_space<vmem>>, %arg4: memref<8x256xbf16, #tpu.memory_space<vmem>>, %arg5: memref<256x256xbf16, #tpu.memory_space<vmem>>, %arg6: memref<1x256xf32, #tpu.memory_space<vmem>>, %arg7: memref<8x256xf32, #tpu.memory_space<vmem>>, %arg8: memref<8x256xf32, #tpu.memory_space<vmem>>) attributes {dimension_semantics = [#tpu.dimension_semantics<parallel>, #tpu.dimension_semantics<parallel>, #tpu.dimension_semantics<arbitrary>], iteration_bounds = array<i64: 1, 2, 2>, scalar_prefetch = 0 : i64, scratch_operands = 1 : i64, tpu.core_type = #tpu.core_type<tc>, window_params = [{transform_indices = @transform_0, window_bounds = array<i64: 8, 256>}, {transform_indices = @transform_1, window_bounds = array<i64: 8, 256>}, {transform_indices = @transform_2, window_bounds = array<i64: 256, 256>}, {transform_indices = @transform_3, window_bounds = array<i64: 1, 256>}, {transform_indices = @transform_4, window_bounds = array<i64: 8, 256>}]} {
    %c0_i32 = arith.constant 0 : i32
    %0 = arith.cmpi eq, %arg2, %c0_i32 : i32
    %1 = arith.extui %0 : i1 to i32
    %c0_i32_0 = arith.constant 0 : i32
    %2 = arith.cmpi ne, %1, %c0_i32_0 : i32
    scf.if %2 {
      %c0 = arith.constant 0 : index
      %c0_2 = arith.constant 0 : index
      %6 = vector.load %arg3[%c0, %c0_2] : memref<8x256xbf16, #tpu.memory_space<vmem>>, vector<8x256xbf16>
      %c0_3 = arith.constant 0 : index
      %c0_4 = arith.constant 0 : index
      %7 = vector.load %arg5[%c0_3, %c0_4] : memref<256x256xbf16, #tpu.memory_space<vmem>>, vector<256x256xbf16>
      %cst = arith.constant dense<0.000000e+00> : vector<8x256xf32>
      %8 = tpu.matmul %6, %7, %cst {dimension_numbers = #tpu.dot_dimension_numbers<[1], [0], [0], [1], [0, 0, 1, 1], [], []>} : vector<8x256xbf16>, vector<256x256xbf16>, vector<8x256xf32> -> vector<8x256xf32>
      %c0_5 = arith.constant 0 : index
      %c0_6 = arith.constant 0 : index
      %9 = vector.load %arg8[%c0_5, %c0_6] : memref<8x256xf32, #tpu.memory_space<vmem>>, vector<8x256xf32>
      tpu.vector_store %arg8[%c0_5, %c0_6], %8 {strides = array<i32>} : memref<8x256xf32, #tpu.memory_space<vmem>>, vector<8x256xf32>,
    } else {
    }
    %c1_i32 = arith.constant 1 : i32
    %3 = arith.cmpi eq, %arg2, %c1_i32 : i32
    %4 = arith.extui %3 : i1 to i32
    %c0_i32_1 = arith.constant 0 : i32
    %5 = arith.cmpi ne, %4, %c0_i32_1 : i32
    scf.if %5 {
      %c0 = arith.constant 0 : index
      %c0_2 = arith.constant 0 : index
      %6 = vector.load %arg8[%c0, %c0_2] : memref<8x256xf32, #tpu.memory_space<vmem>>, vector<8x256xf32>
      %c0_3 = arith.constant 0 : index
      %c0_4 = arith.constant 0 : index
      %7 = vector.load %arg4[%c0_3, %c0_4] : memref<8x256xbf16, #tpu.memory_space<vmem>>, vector<8x256xbf16>
      %c0_5 = arith.constant 0 : index
      %c0_6 = arith.constant 0 : index
      %8 = vector.load %arg5[%c0_5, %c0_6] : memref<256x256xbf16, #tpu.memory_space<vmem>>, vector<256x256xbf16>
      %cst = arith.constant dense<0.000000e+00> : vector<8x256xf32>
      %9 = tpu.matmul %7, %8, %cst {dimension_numbers = #tpu.dot_dimension_numbers<[1], [0], [0], [1], [0, 0, 1, 1], [], []>} : vector<8x256xbf16>, vector<256x256xbf16>, vector<8x256xf32> -> vector<8x256xf32>
      %10 = arith.addf %6, %9 : vector<8x256xf32>
      %c0_7 = arith.constant 0 : index
      %c0_8 = arith.constant 0 : index
      %11 = vector.load %arg6[%c0_7, %c0_8] : memref<1x256xf32, #tpu.memory_space<vmem>>, vector<1x256xf32>
      %12 = vector.broadcast %11 : vector<1x256xf32> to vector<8x256xf32>
      %13 = arith.addf %10, %12 : vector<8x256xf32>
      %cst_9 = arith.constant 0.000000e+00 : f32
      %14 = vector.broadcast %cst_9 : f32 to vector<8x256xf32>
      %15 = arith.maximumf %13, %14 : vector<8x256xf32>
      %c0_10 = arith.constant 0 : index
      %c0_11 = arith.constant 0 : index
      %16 = vector.load %arg7[%c0_10, %c0_11] : memref<8x256xf32, #tpu.memory_space<vmem>>, vector<8x256xf32>
      tpu.vector_store %arg7[%c0_10, %c0_11], %15 {strides = array<i32>} : memref<8x256xf32, #tpu.memory_space<vmem>>, vector<8x256xf32>,
    } else {
    }
    return
  }
  func.func @transform_0(%arg0: i32, %arg1: i32, %arg2: i32) -> (i32, i32) {
    %c0_i32 = arith.constant 0 : i32
    %c0_i32_0 = arith.constant 0 : i32
    return %arg0, %c0_i32 : i32, i32
  }
  func.func @transform_1(%arg0: i32, %arg1: i32, %arg2: i32) -> (i32, i32) {
    %c0_i32 = arith.constant 0 : i32
    %c0_i32_0 = arith.constant 0 : i32
    return %arg0, %c0_i32 : i32, i32
  }
  func.func @transform_2(%arg0: i32, %arg1: i32, %arg2: i32) -> (i32, i32) {
    %c0_i32 = arith.constant 0 : i32
    return %arg2, %arg1 : i32, i32
  }
  func.func @transform_3(%arg0: i32, %arg1: i32, %arg2: i32) -> (i32, i32) {
    %c0_i32 = arith.constant 0 : i32
    %c0_i32_0 = arith.constant 0 : i32
    return %c0_i32, %arg1 : i32, i32
  }
  func.func @transform_4(%arg0: i32, %arg1: i32, %arg2: i32) -> (i32, i32) {
    %c0_i32 = arith.constant 0 : i32
    return %arg0, %arg1 : i32, i32
  }
}

module attributes {stable_mosaic.version = 11 : i64} {
  func.func @_matmul_bias_kernel(%arg0: i32, %arg1: i32, %arg2: i32, %arg3: memref<8x256xbf16, #tpu.memory_space<vmem>>, %arg4: memref<256x256xbf16, #tpu.memory_space<vmem>>, %arg5: memref<1x256xf32, #tpu.memory_space<vmem>>, %arg6: memref<8x256xf32, #tpu.memory_space<vmem>>, %arg7: memref<8x256xf32, #tpu.memory_space<vmem>>) attributes {dimension_semantics = [#tpu.dimension_semantics<parallel>, #tpu.dimension_semantics<parallel>, #tpu.dimension_semantics<arbitrary>], iteration_bounds = array<i64: 1, 1, 18>, scalar_prefetch = 0 : i64, scratch_operands = 1 : i64, tpu.core_type = #tpu.core_type<tc>, window_params = [{transform_indices = @transform_0, window_bounds = array<i64: 8, 256>}, {transform_indices = @transform_1, window_bounds = array<i64: 256, 256>}, {transform_indices = @transform_2, window_bounds = array<i64: 1, 256>}, {transform_indices = @transform_3, window_bounds = array<i64: 8, 256>}]} {
    %c0_i32 = arith.constant 0 : i32
    %0 = arith.cmpi eq, %arg2, %c0_i32 : i32
    %1 = arith.extui %0 : i1 to i32
    %c0_i32_0 = arith.constant 0 : i32
    %2 = arith.cmpi ne, %1, %c0_i32_0 : i32
    scf.if %2 {
      %cst_9 = arith.constant 0.000000e+00 : f32
      %12 = vector.broadcast %cst_9 : f32 to vector<8x256xf32>
      %c0_10 = arith.constant 0 : index
      %c0_11 = arith.constant 0 : index
      %13 = vector.load %arg7[%c0_10, %c0_11] : memref<8x256xf32, #tpu.memory_space<vmem>>, vector<8x256xf32>
      tpu.vector_store %arg7[%c0_10, %c0_11], %12 {strides = array<i32>} : memref<8x256xf32, #tpu.memory_space<vmem>>, vector<8x256xf32>,
    } else {
    }
    %c0 = arith.constant 0 : index
    %c0_1 = arith.constant 0 : index
    %3 = vector.load %arg7[%c0, %c0_1] : memref<8x256xf32, #tpu.memory_space<vmem>>, vector<8x256xf32>
    %c0_2 = arith.constant 0 : index
    %c0_3 = arith.constant 0 : index
    %4 = vector.load %arg3[%c0_2, %c0_3] : memref<8x256xbf16, #tpu.memory_space<vmem>>, vector<8x256xbf16>
    %c0_4 = arith.constant 0 : index
    %c0_5 = arith.constant 0 : index
    %5 = vector.load %arg4[%c0_4, %c0_5] : memref<256x256xbf16, #tpu.memory_space<vmem>>, vector<256x256xbf16>
    %cst = arith.constant dense<0.000000e+00> : vector<8x256xf32>
    %6 = tpu.matmul %4, %5, %cst {dimension_numbers = #tpu.dot_dimension_numbers<[1], [0], [0], [1], [0, 0, 1, 1], [], []>} : vector<8x256xbf16>, vector<256x256xbf16>, vector<8x256xf32> -> vector<8x256xf32>
    %7 = arith.addf %3, %6 : vector<8x256xf32>
    %c0_6 = arith.constant 0 : index
    %c0_7 = arith.constant 0 : index
    %8 = vector.load %arg7[%c0_6, %c0_7] : memref<8x256xf32, #tpu.memory_space<vmem>>, vector<8x256xf32>
    tpu.vector_store %arg7[%c0_6, %c0_7], %7 {strides = array<i32>} : memref<8x256xf32, #tpu.memory_space<vmem>>, vector<8x256xf32>,
    %c17_i32 = arith.constant 17 : i32
    %9 = arith.cmpi eq, %arg2, %c17_i32 : i32
    %10 = arith.extui %9 : i1 to i32
    %c0_i32_8 = arith.constant 0 : i32
    %11 = arith.cmpi ne, %10, %c0_i32_8 : i32
    scf.if %11 {
      %c0_9 = arith.constant 0 : index
      %c0_10 = arith.constant 0 : index
      %12 = vector.load %arg7[%c0_9, %c0_10] : memref<8x256xf32, #tpu.memory_space<vmem>>, vector<8x256xf32>
      %c0_11 = arith.constant 0 : index
      %c0_12 = arith.constant 0 : index
      %13 = vector.load %arg5[%c0_11, %c0_12] : memref<1x256xf32, #tpu.memory_space<vmem>>, vector<1x256xf32>
      %14 = vector.broadcast %13 : vector<1x256xf32> to vector<8x256xf32>
      %15 = arith.addf %12, %14 : vector<8x256xf32>
      %cst_13 = arith.constant 0.000000e+00 : f32
      %16 = vector.broadcast %cst_13 : f32 to vector<8x256xf32>
      %17 = arith.maximumf %15, %16 : vector<8x256xf32>
      %c0_14 = arith.constant 0 : index
      %c0_15 = arith.constant 0 : index
      %18 = vector.load %arg6[%c0_14, %c0_15] : memref<8x256xf32, #tpu.memory_space<vmem>>, vector<8x256xf32>
      tpu.vector_store %arg6[%c0_14, %c0_15], %17 {strides = array<i32>} : memref<8x256xf32, #tpu.memory_space<vmem>>, vector<8x256xf32>,
    } else {
    }
    return
  }
  func.func @transform_0(%arg0: i32, %arg1: i32, %arg2: i32) -> (i32, i32) {
    %c0_i32 = arith.constant 0 : i32
    return %arg0, %arg2 : i32, i32
  }
  func.func @transform_1(%arg0: i32, %arg1: i32, %arg2: i32) -> (i32, i32) {
    %c0_i32 = arith.constant 0 : i32
    return %arg2, %arg1 : i32, i32
  }
  func.func @transform_2(%arg0: i32, %arg1: i32, %arg2: i32) -> (i32, i32) {
    %c0_i32 = arith.constant 0 : i32
    %c0_i32_0 = arith.constant 0 : i32
    return %c0_i32, %arg1 : i32, i32
  }
  func.func @transform_3(%arg0: i32, %arg1: i32, %arg2: i32) -> (i32, i32) {
    %c0_i32 = arith.constant 0 : i32
    return %arg0, %arg1 : i32, i32
  }
}

module attributes {stable_mosaic.version = 11 : i64} {
  func.func @_matmul_bias_kernel(%arg0: i32, %arg1: i32, %arg2: i32, %arg3: memref<8x256xbf16, #tpu.memory_space<vmem>>, %arg4: memref<256x128xbf16, #tpu.memory_space<vmem>>, %arg5: memref<1x128xf32, #tpu.memory_space<vmem>>, %arg6: memref<8x128xf32, #tpu.memory_space<vmem>>, %arg7: memref<8x128xf32, #tpu.memory_space<vmem>>) attributes {dimension_semantics = [#tpu.dimension_semantics<parallel>, #tpu.dimension_semantics<parallel>, #tpu.dimension_semantics<arbitrary>], iteration_bounds = array<i64: 1, 1, 1>, scalar_prefetch = 0 : i64, scratch_operands = 1 : i64, tpu.core_type = #tpu.core_type<tc>, window_params = [{transform_indices = @transform_0, window_bounds = array<i64: 8, 256>}, {transform_indices = @transform_1, window_bounds = array<i64: 256, 128>}, {transform_indices = @transform_2, window_bounds = array<i64: 1, 128>}, {transform_indices = @transform_3, window_bounds = array<i64: 8, 128>}]} {
    %c0_i32 = arith.constant 0 : i32
    %0 = arith.cmpi eq, %arg2, %c0_i32 : i32
    %1 = arith.extui %0 : i1 to i32
    %c0_i32_0 = arith.constant 0 : i32
    %2 = arith.cmpi ne, %1, %c0_i32_0 : i32
    scf.if %2 {
      %cst_10 = arith.constant 0.000000e+00 : f32
      %12 = vector.broadcast %cst_10 : f32 to vector<8x128xf32>
      %c0_11 = arith.constant 0 : index
      %c0_12 = arith.constant 0 : index
      %13 = vector.load %arg7[%c0_11, %c0_12] : memref<8x128xf32, #tpu.memory_space<vmem>>, vector<8x128xf32>
      tpu.vector_store %arg7[%c0_11, %c0_12], %12 {strides = array<i32>} : memref<8x128xf32, #tpu.memory_space<vmem>>, vector<8x128xf32>,
    } else {
    }
    %c0 = arith.constant 0 : index
    %c0_1 = arith.constant 0 : index
    %3 = vector.load %arg7[%c0, %c0_1] : memref<8x128xf32, #tpu.memory_space<vmem>>, vector<8x128xf32>
    %c0_2 = arith.constant 0 : index
    %c0_3 = arith.constant 0 : index
    %4 = vector.load %arg3[%c0_2, %c0_3] : memref<8x256xbf16, #tpu.memory_space<vmem>>, vector<8x256xbf16>
    %c0_4 = arith.constant 0 : index
    %c0_5 = arith.constant 0 : index
    %5 = vector.load %arg4[%c0_4, %c0_5] : memref<256x128xbf16, #tpu.memory_space<vmem>>, vector<256x128xbf16>
    %cst = arith.constant dense<0.000000e+00> : vector<8x128xf32>
    %6 = tpu.matmul %4, %5, %cst {dimension_numbers = #tpu.dot_dimension_numbers<[1], [0], [0], [1], [0, 0, 1, 1], [], []>} : vector<8x256xbf16>, vector<256x128xbf16>, vector<8x128xf32> -> vector<8x128xf32>
    %7 = arith.addf %3, %6 : vector<8x128xf32>
    %c0_6 = arith.constant 0 : index
    %c0_7 = arith.constant 0 : index
    %8 = vector.load %arg7[%c0_6, %c0_7] : memref<8x128xf32, #tpu.memory_space<vmem>>, vector<8x128xf32>
    tpu.vector_store %arg7[%c0_6, %c0_7], %7 {strides = array<i32>} : memref<8x128xf32, #tpu.memory_space<vmem>>, vector<8x128xf32>,
    %c0_i32_8 = arith.constant 0 : i32
    %9 = arith.cmpi eq, %arg2, %c0_i32_8 : i32
    %10 = arith.extui %9 : i1 to i32
    %c0_i32_9 = arith.constant 0 : i32
    %11 = arith.cmpi ne, %10, %c0_i32_9 : i32
    scf.if %11 {
      %c0_10 = arith.constant 0 : index
      %c0_11 = arith.constant 0 : index
      %12 = vector.load %arg7[%c0_10, %c0_11] : memref<8x128xf32, #tpu.memory_space<vmem>>, vector<8x128xf32>
      %c0_12 = arith.constant 0 : index
      %c0_13 = arith.constant 0 : index
      %13 = vector.load %arg5[%c0_12, %c0_13] : memref<1x128xf32, #tpu.memory_space<vmem>>, vector<1x128xf32>
      %14 = vector.broadcast %13 : vector<1x128xf32> to vector<8x128xf32>
      %15 = arith.addf %12, %14 : vector<8x128xf32>
      %c0_14 = arith.constant 0 : index
      %c0_15 = arith.constant 0 : index
      %16 = vector.load %arg6[%c0_14, %c0_15] : memref<8x128xf32, #tpu.memory_space<vmem>>, vector<8x128xf32>
      tpu.vector_store %arg6[%c0_14, %c0_15], %15 {strides = array<i32>} : memref<8x128xf32, #tpu.memory_space<vmem>>, vector<8x128xf32>,
    } else {
    }
    return
  }
  func.func @transform_0(%arg0: i32, %arg1: i32, %arg2: i32) -> (i32, i32) {
    %c0_i32 = arith.constant 0 : i32
    return %arg0, %arg2 : i32, i32
  }
  func.func @transform_1(%arg0: i32, %arg1: i32, %arg2: i32) -> (i32, i32) {
    %c0_i32 = arith.constant 0 : i32
    return %arg2, %arg1 : i32, i32
  }
  func.func @transform_2(%arg0: i32, %arg1: i32, %arg2: i32) -> (i32, i32) {
    %c0_i32 = arith.constant 0 : i32
    %c0_i32_0 = arith.constant 0 : i32
    return %c0_i32, %arg1 : i32, i32
  }
  func.func @transform_3(%arg0: i32, %arg1: i32, %arg2: i32) -> (i32, i32) {
    %c0_i32 = arith.constant 0 : i32
    return %arg0, %arg1 : i32, i32
  }
}

module attributes {stable_mosaic.version = 11 : i64} {
  func.func @_decode_kernel(%arg0: memref<2x4x128xf32, #tpu.memory_space<vmem>>, %arg1: memref<1x4x2xf32, #tpu.memory_space<vmem>>, %arg2: memref<2x4x128xf32, #tpu.memory_space<vmem>>) attributes {dimension_semantics = [], scalar_prefetch = 0 : i64, scratch_operands = 0 : i64, tpu.core_type = #tpu.core_type<tc>} {
    %c0 = arith.constant 0 : index
    %c0_0 = arith.constant 0 : index
    %c0_1 = arith.constant 0 : index
    %0 = vector.load %arg0[%c0, %c0_0, %c0_1] : memref<2x4x128xf32, #tpu.memory_space<vmem>>, vector<2x4x128xf32>
    %1 = vector.extract_strided_slice %0 {offsets = [0, 0, 0], sizes = [2, 4, 1], strides = [1, 1, 1]} : vector<2x4x128xf32> to vector<2x4x1xf32>
    %cst = arith.constant 0.000000e+00 : f32
    %2 = vector.broadcast %cst : f32 to vector<2x4x1xf32>
    %3 = arith.subf %2, %1 : vector<2x4x1xf32>
    %4 = math.exp %3 : vector<2x4x1xf32>
    %cst_2 = arith.constant 1.000000e+00 : f32
    %5 = vector.broadcast %cst_2 : f32 to vector<2x4x1xf32>
    %6 = arith.addf %5, %4 : vector<2x4x1xf32>
    %7 = tpu.reciprocal %6 {approx = true} : vector<2x4x1xf32> -> vector<2x4x1xf32>
    %8 = vector.extract_strided_slice %0 {offsets = [0, 0, 1], sizes = [2, 4, 20], strides = [1, 1, 1]} : vector<2x4x128xf32> to vector<2x4x20xf32>
    %cst_3 = arith.constant dense<0xFF800000> : vector<2x4xf32>
    %9 = vector.multi_reduction <maximumf>, %8, %cst_3 [2] : vector<2x4x20xf32> to vector<2x4xf32>
    %10 = vector.shape_cast %9 : vector<2x4xf32> to vector<2x4x1xf32>
    %11 = vector.broadcast %10 : vector<2x4x1xf32> to vector<2x4x20xf32>
    %12 = arith.subf %8, %11 : vector<2x4x20xf32>
    %13 = math.exp %12 : vector<2x4x20xf32>
    %cst_4 = arith.constant dense<0.000000e+00> : vector<2x4xf32>
    %14 = vector.multi_reduction <add>, %13, %cst_4 [2] : vector<2x4x20xf32> to vector<2x4xf32>
    %15 = vector.shape_cast %14 : vector<2x4xf32> to vector<2x4x1xf32>
    %16 = tpu.reciprocal %15 {approx = true} : vector<2x4x1xf32> -> vector<2x4x1xf32>
    %17 = vector.broadcast %16 : vector<2x4x1xf32> to vector<2x4x20xf32>
    %18 = arith.mulf %13, %17 : vector<2x4x20xf32>
    %19 = vector.broadcast %7 : vector<2x4x1xf32> to vector<2x4x20xf32>
    %20 = arith.mulf %19, %18 : vector<2x4x20xf32>
    %21 = vector.extract_strided_slice %0 {offsets = [0, 0, 21], sizes = [2, 4, 2], strides = [1, 1, 1]} : vector<2x4x128xf32> to vector<2x4x2xf32>
    %22 = vector.extract_strided_slice %0 {offsets = [0, 0, 23], sizes = [2, 4, 2], strides = [1, 1, 1]} : vector<2x4x128xf32> to vector<2x4x2xf32>
    %cst_5 = arith.constant 0.000000e+00 : f32
    %23 = vector.broadcast %cst_5 : f32 to vector<2x4x2xf32>
    %24 = arith.subf %23, %21 : vector<2x4x2xf32>
    %25 = math.exp %24 : vector<2x4x2xf32>
    %cst_6 = arith.constant 1.000000e+00 : f32
    %26 = vector.broadcast %cst_6 : f32 to vector<2x4x2xf32>
    %27 = arith.addf %26, %25 : vector<2x4x2xf32>
    %28 = tpu.reciprocal %27 {approx = true} : vector<2x4x2xf32> -> vector<2x4x2xf32>
    %c0_7 = arith.constant 0 : index
    %c0_8 = arith.constant 0 : index
    %c0_9 = arith.constant 0 : index
    %29 = vector.load %arg1[%c0_7, %c0_8, %c0_9] : memref<1x4x2xf32, #tpu.memory_space<vmem>>, vector<1x4x2xf32>
    %30 = vector.broadcast %29 : vector<1x4x2xf32> to vector<2x4x2xf32>
    %31 = arith.addf %30, %28 : vector<2x4x2xf32>
    %cst_10 = arith.constant 3.200000e+01 : f32
    %32 = vector.broadcast %cst_10 : f32 to vector<2x4x2xf32>
    %33 = arith.mulf %31, %32 : vector<2x4x2xf32>
    %34 = math.exp %22 : vector<2x4x2xf32>
    %cst_11 = arith.constant 3.200000e+01 : f32
    %35 = vector.broadcast %cst_11 : f32 to vector<2x4x2xf32>
    %36 = arith.mulf %34, %35 : vector<2x4x2xf32>
    %cst_12 = arith.constant 5.000000e-01 : f32
    %37 = vector.broadcast %cst_12 : f32 to vector<2x4x2xf32>
    %38 = arith.mulf %37, %36 : vector<2x4x2xf32>
    %39 = arith.subf %33, %38 : vector<2x4x2xf32>
    %cst_13 = arith.constant 5.000000e-01 : f32
    %40 = vector.broadcast %cst_13 : f32 to vector<2x4x2xf32>
    %41 = arith.mulf %40, %36 : vector<2x4x2xf32>
    %42 = arith.addf %33, %41 : vector<2x4x2xf32>
    %43 = tpu.concatenate %39, %42 in 2 : vector<2x4x2xf32>, vector<2x4x2xf32> -> vector<2x4x4xf32>
    %cst_14 = arith.constant 0.000000e+00 : f32
    %44 = vector.broadcast %cst_14 : f32 to vector<2x4x104xf32>
    %45 = tpu.concatenate %20, %43, %44 in 2 : vector<2x4x20xf32>, vector<2x4x4xf32>, vector<2x4x104xf32> -> vector<2x4x128xf32>
    %c0_15 = arith.constant 0 : index
    %c0_16 = arith.constant 0 : index
    %c0_17 = arith.constant 0 : index
    %46 = vector.load %arg2[%c0_15, %c0_16, %c0_17] : memref<2x4x128xf32, #tpu.memory_space<vmem>>, vector<2x4x128xf32>
    tpu.vector_store %arg2[%c0_15, %c0_16, %c0_17], %45 {strides = array<i32>} : memref<2x4x128xf32, #tpu.memory_space<vmem>>, vector<2x4x128xf32>,
    return
  }
}

</mosaic_0001>

<llo_original>
// kernel: forward.12
$region0: #{forward.12}
  #allocation0 [shape = 'u32[]', space=smem, size = 0x4, offset = 0x4, fixed_abs, tag = 'smem constant byte address 0x4 - core index']
  #allocation1 [shape = 'u32[144,128]{1,0:T(1,128)}', space=vmem, size = 0x12000, scoped, tag = 'internal scratch']
  #allocation2 [shape = 'f32[256,128]{1,0:T(8,128)}', space=vmem, size = 0x20000, scoped, tag = 'scratch operand']
  %s0 = inlined_call_operand.vmem [shape: bf16[2048,128], index: 0, kind: input, shape index: {}]
  %s1 = inlined_call_operand.vmem [shape: bf16[128,128], index: 1, kind: input, shape index: {}]
  %s2 = inlined_call_operand.vmem [shape: f32[1,128], index: 2, kind: input, shape index: {}]
  %s3 = inlined_call_operand.vmem [shape: f32[2048,128], index: 3, kind: output, shape index: {}]
  %s4 = sld [smem:[#allocation0]]
  $region53: #{forward.12} parent=0
    _
  %s6 = ssub.s32 1, %s4
  %s7 = scalar_select 0, %s6, %s4
  loop: start=0, step=1, limit=10
  $region2: #{forward.12} parent=0 // loop_pre_header
    _
  $region3: #{forward.12} parent=0 // loop_header
    %s9 = sphi 0, %s13
    %p10 = scmp.ge.s32.totalorder %s9, 10
    %s16 = sphi 0, %s35
    %s17 = sphi 0, %s31
    %s18 = sphi 0, %s27
    %s19 = sphi 0, %s16
    %s20 = sphi 0, %s17
    %s21 = sphi 0, %s18
    %s22 = sphi 0, %s19
    %s23 = sphi 0, %s20
    %s24 = sphi 0, %s21
    %s40 = sphi 0, %s42
    %s43 = sphi 0, %s40
    %s44 = sphi 0, %s43
    %s60 = sphi 0, %s44
    %s68 = sphi 0, %s70
    %s71 = sphi 0, %s68
    %s72 = sphi 0, %s71
    %s88 = sphi 0, %s72
    %s94 = sphi 0, %s96
    %s97 = sphi 0, %s94
    %s98 = sphi 0, %s97
    %s114 = sphi 0, %s98
    %s122 = sphi 0, %s124
    %s125 = sphi 0, %s122
    %s126 = sphi 0, %s125
    %s142 = sphi 0, %s126
  $region4: #{forward.12} parent=0 // loop_header_branch
    %12 = sbr.rel (%p10) target = $region8
  $region5: #{forward.12} parent=0 // loop_body
    %s14 = ssub.s32 %s9, 1
    %s15 = ssub.s32 %s9, 2
    %s25 = sadd.s32 1, %s18
    %p26 = scmp.ge.s32.totalorder %s25, 1
    %s27 = scalar_select %p26, 0, %s25
    %s28 = sadd.s32 1, %s17
    %s29 = scalar_select %p26, %s28, %s17
    %p30 = scmp.ge.s32.totalorder %s29, 1
    %s31 = scalar_select %p30, 0, %s29
    %s32 = sadd.s32 1, %s16
    %s33 = scalar_select %p30, %s32, %s16
    %p34 = scmp.ge.s32.totalorder %s33, 8
    %s35 = scalar_select %p34, 0, %s33
    %s36 = ssub.s32 %s16, %s35
    %s37 = ssub.s32 %s18, %s27
    %s38 = sor.u32 %s36, %s37
    %p39 = scmp.eq.s32.totalorder %s38, 0
    %s41 = sadd.s32 %s40, 1
    %s42 = scalar_select %p39, %s40, %s41
    %p45 = pneg %p39
    %p46 = scmp.eq.s32.totalorder %s9, 7
    %p47 = por %p45, %p46
    %p48 = scmp.ne.s32.totalorder %s40, %s43
    %p49 = scmp.eq.s32.totalorder %s9, 0
    %p50 = por %p48, %p49
    %p51 = scmp.ne.s32.totalorder %s40, %s43
    %p52 = scmp.eq.s32.totalorder %s14, 7
    %p53 = por %p51, %p52
    %p54 = scmp.ne.s32.totalorder %s43, %s44
    %p55 = scmp.eq.s32.totalorder %s14, 0
    %p56 = por %p54, %p55
    %p57 = scmp.ne.s32.totalorder %s43, %s44
    %p58 = scmp.eq.s32.totalorder %s15, 7
    %p59 = por %p57, %p58
    %p61 = scmp.ne.s32.totalorder %s44, %s60
    %p62 = scmp.eq.s32.totalorder %s15, 0
    %p63 = por %p61, %p62
    %s64 = ssub.s32 %s18, %s27
    %s65 = ssub.s32 %s17, %s31
    %s66 = sor.u32 %s64, %s65
    %p67 = scmp.eq.s32.totalorder %s66, 0
    %s69 = sadd.s32 %s68, 1
    %s70 = scalar_select %p67, %s68, %s69
    %p73 = pneg %p67
    %p74 = scmp.eq.s32.totalorder %s9, 7
    %p75 = por %p73, %p74
    %p76 = scmp.ne.s32.totalorder %s68, %s71
    %p77 = scmp.eq.s32.totalorder %s9, 0
    %p78 = por %p76, %p77
    %p79 = scmp.ne.s32.totalorder %s68, %s71
    %p80 = scmp.eq.s32.totalorder %s14, 7
    %p81 = por %p79, %p80
    %p82 = scmp.ne.s32.totalorder %s71, %s72
    %p83 = scmp.eq.s32.totalorder %s14, 0
    %p84 = por %p82, %p83
    %p85 = scmp.ne.s32.totalorder %s71, %s72
    %p86 = scmp.eq.s32.totalorder %s15, 7
    %p87 = por %p85, %p86
    %p89 = scmp.ne.s32.totalorder %s72, %s88
    %p90 = scmp.eq.s32.totalorder %s15, 0
    %p91 = por %p89, %p90
    %s92 = ssub.s32 %s17, %s31
    %p93 = scmp.eq.s32.totalorder %s92, 0
    %s95 = sadd.s32 %s94, 1
    %s96 = scalar_select %p93, %s94, %s95
    %p99 = pneg %p93
    %p100 = scmp.eq.s32.totalorder %s9, 7
    %p101 = por %p99, %p100
    %p102 = scmp.ne.s32.totalorder %s94, %s97
    %p103 = scmp.eq.s32.totalorder %s9, 0
    %p104 = por %p102, %p103
    %p105 = scmp.ne.s32.totalorder %s94, %s97
    %p106 = scmp.eq.s32.totalorder %s14, 7
    %p107 = por %p105, %p106
    %p108 = scmp.ne.s32.totalorder %s97, %s98
    %p109 = scmp.eq.s32.totalorder %s14, 0
    %p110 = por %p108, %p109
    %p111 = scmp.ne.s32.totalorder %s97, %s98
    %p112 = scmp.eq.s32.totalorder %s15, 7
    %p113 = por %p111, %p112
    %p115 = scmp.ne.s32.totalorder %s98, %s114
    %p116 = scmp.eq.s32.totalorder %s15, 0
    %p117 = por %p115, %p116
    %s118 = ssub.s32 %s16, %s35
    %s119 = ssub.s32 %s17, %s31
    %s120 = sor.u32 %s118, %s119
    %p121 = scmp.eq.s32.totalorder %s120, 0
    %s123 = sadd.s32 %s122, 1
    %s124 = scalar_select %p121, %s122, %s123
    %p127 = pneg %p121
    %p128 = scmp.eq.s32.totalorder %s9, 7
    %p129 = por %p127, %p128
    %p130 = scmp.ne.s32.totalorder %s122, %s125
    %p131 = scmp.eq.s32.totalorder %s9, 0
    %p132 = por %p130, %p131
    %p133 = scmp.ne.s32.totalorder %s122, %s125
    %p134 = scmp.eq.s32.totalorder %s14, 7
    %p135 = por %p133, %p134
    %p136 = scmp.ne.s32.totalorder %s125, %s126
    %p137 = scmp.eq.s32.totalorder %s14, 0
    %p138 = por %p136, %p137
    %p139 = scmp.ne.s32.totalorder %s125, %s126
    %p140 = scmp.eq.s32.totalorder %s15, 7
    %p141 = por %p139, %p140
    %p143 = scmp.ne.s32.totalorder %s126, %s142
    %p144 = scmp.eq.s32.totalorder %s15, 0
    %p145 = por %p143, %p144
    %p146 = scmp.le.s32.totalorder 1, %s9
    %p147 = scmp.lt.s32.totalorder %s9, 9
    %p148 = pnand %p146, %p147
    %p149 = pneg %p148
    // Predicated region
    $region9: #{forward.12} parent=5 // pred_check
      _
    $region10: #{forward.12} parent=5 // pred_check_branch
      %151 = sbr.rel (%p148) target = $region12
    $region11: #{forward.12} parent=5 // pred_region
      %s152 = ssub.s32 %s9, 1
      // Predicated region
      $region13: #{forward.12} parent=11 // pred_check
        %p153 = pneg %p84
      $region14: #{forward.12} parent=11 // pred_check_branch
        %155 = sbr.rel (%p153) target = $region16
      $region15: #{forward.12} parent=11 // pred_region
        %s156 = smul.u32 16, %s21
        %p157 = scmp.lt.s32.totalorder %s156, 15
        %s158 = scalar_select %p157, %s156, 15
        %p159 = scmp.lt.s32.totalorder %s20, 0
        %s160 = scalar_select %p159, %s20, 0
        %s161 = sadd.s32 %s160, %s158
        %s162 = smul.addr %s161, 4
        %s163 = scalar_lea.vmem %s1, %s162
        %s164 = smul.u32 16, %s21
      $region16: #{forward.12} parent=11 // pred_fallthru
        _
      // Predicated region
      $region17: #{forward.12} parent=11 // pred_check
        %p165 = pneg %p110
      $region18: #{forward.12} parent=11 // pred_check_branch
        %167 = sbr.rel (%p165) target = $region20
      $region19: #{forward.12} parent=11 // pred_region
        %p168 = scmp.lt.s32.totalorder %s20, 0
        %s169 = scalar_select %p168, %s20, 0
        %s170 = scalar_lea.vmem %s2, %s169
      $region20: #{forward.12} parent=11 // pred_fallthru
        _
    $region12: #{forward.12} parent=5 // pred_fallthru
      _
    %p171 = scmp.lt.s32.totalorder %s9, 8
    // Predicated region
    $region21: #{forward.12} parent=5 // pred_check
      %p172 = pneg %p171
    $region22: #{forward.12} parent=5 // pred_check_branch
      %174 = sbr.rel (%p172) target = $region24
    $region23: #{forward.12} parent=5 // pred_region
      // Predicated region
      $region25: #{forward.12} parent=23 // pred_check
        %p175 = pneg %p50
      $region26: #{forward.12} parent=23 // pred_check_branch
        %177 = sbr.rel (%p175) target = $region28
      $region27: #{forward.12} parent=23 // pred_region
        %s178 = smul.u32 32, %s16
        %p179 = scmp.lt.s32.totalorder %s178, 255
        %s180 = scalar_select %p179, %s178, 255
        %p181 = scmp.lt.s32.totalorder %s18, 0
        %s182 = scalar_select %p181, %s18, 0
        %s183 = sadd.s32 %s182, %s180
        %s184 = smul.addr %s183, 4
        %s185 = scalar_lea.vmem %s0, %s184
        %s186 = smul.u32 32, %s16
      $region28: #{forward.12} parent=23 // pred_fallthru
        _
    $region24: #{forward.12} parent=5 // pred_fallthru
      _
    %p187 = scmp.le.s32.totalorder 1, %s9
    %p188 = scmp.lt.s32.totalorder %s9, 9
    %p189 = pnand %p187, %p188
    %p190 = pneg %p189
    // Predicated region
    $region29: #{forward.12} parent=5 // pred_check
      _
    $region30: #{forward.12} parent=5 // pred_check_branch
      %192 = sbr.rel (%p189) target = $region32
    $region31: #{forward.12} parent=5 // pred_region
      %s193 = ssub.s32 %s9, 1
      %s194 = smul.u32 32, %s19
      %p195 = scmp.lt.s32.totalorder %s194, 255
      %s196 = scalar_select %p195, %s194, 255
      %p197 = scmp.lt.s32.totalorder %s21, 0
      %s198 = scalar_select %p197, %s21, 0
      %s199 = sadd.s32 %s198, %s196
      %s200 = smul.addr %s199, 4
      %s201 = scalar_lea.vmem %s0, %s200
      %p202 = pneg %p56
      %p203 = pneg %p53
      %s204 = smul.u32 16, %s21
      %p205 = scmp.lt.s32.totalorder %s204, 15
      %s206 = scalar_select %p205, %s204, 15
      %p207 = scmp.lt.s32.totalorder %s20, 0
      %s208 = scalar_select %p207, %s20, 0
      %s209 = sadd.s32 %s208, %s206
      %s210 = smul.addr %s209, 4
      %s211 = scalar_lea.vmem %s1, %s210
      %p212 = pneg %p84
      %p213 = pneg %p81
      %p214 = scmp.lt.s32.totalorder %s20, 0
      %s215 = scalar_select %p214, %s20, 0
      %s216 = scalar_lea.vmem %s2, %s215
      %p217 = pneg %p110
      %p218 = pneg %p107
      %p219 = pneg %p138
      %p220 = pneg %p135
      %s221 = smul.u32 32, %s19
      %p222 = scmp.lt.s32.totalorder %s221, 255
      %s223 = scalar_select %p222, %s221, 255
      %p224 = scmp.lt.s32.totalorder %s20, 0
      %s225 = scalar_select %p224, %s20, 0
      %s226 = sadd.s32 %s225, %s223
      %s227 = smul.addr %s226, 8
      %s228 = scalar_lea.vmem %s3, %s227
      %s229 = smul.u32 32, %s19
      %p230 = scmp.lt.s32.totalorder %s229, 255
      %s231 = scalar_select %p230, %s229, 255
      %p232 = scmp.lt.s32.totalorder %s21, 0
      %s233 = scalar_select %p232, %s21, 0
      %s234 = sadd.s32 %s233, %s231
      %s235 = smul.addr %s234, 4
      %s236 = scalar_lea.vmem %s0, %s235
      %s237 = smul.u32 32, %s19
      %s238 = smul.u32 16, %s21
      %p239 = scmp.lt.s32.totalorder %s238, 15
      %s240 = scalar_select %p239, %s238, 15
      %p241 = scmp.lt.s32.totalorder %s20, 0
      %s242 = scalar_select %p241, %s20, 0
      %s243 = sadd.s32 %s242, %s240
      %s244 = smul.addr %s243, 4
      %s245 = scalar_lea.vmem %s1, %s244
      %s246 = smul.u32 16, %s21
      %p247 = scmp.lt.s32.totalorder %s20, 0
      %s248 = scalar_select %p247, %s20, 0
      %s249 = scalar_lea.vmem %s2, %s248
      %s250 = smul.u32 32, %s19
      %p251 = scmp.lt.s32.totalorder %s250, 255
      %s252 = scalar_select %p251, %s250, 255
      %p253 = scmp.lt.s32.totalorder %s20, 0
      %s254 = scalar_select %p253, %s20, 0
      %s255 = sadd.s32 %s254, %s252
      %s256 = smul.addr %s255, 8
      %s257 = scalar_lea.vmem %s3, %s256
      %s258 = smul.u32 32, %s19
      %p260 = scmp.eq.s32.totalorder %s21, 0
      // Predicated region
      $region33: #{forward.12} parent=31 // pred_check
        %p261 = pneg %p260
      $region34: #{forward.12} parent=31 // pred_check_branch
        %263 = sbr.rel (%p261) target = $region36
      $region35: #{forward.12} parent=31 // pred_region
        %264 = vst [vmem:[#allocation2] sm:$0xff] 0.0
        %265 = vst [vmem:[#allocation2 + $0x8] sm:$0xff] 0.0
        %266 = vst [vmem:[#allocation2 + $0x10] sm:$0xff] 0.0
        %267 = vst [vmem:[#allocation2 + $0x18] sm:$0xff] 0.0
        %268 = vst [vmem:[#allocation2 + $0x20] sm:$0xff] 0.0
        %269 = vst [vmem:[#allocation2 + $0x28] sm:$0xff] 0.0
        %270 = vst [vmem:[#allocation2 + $0x30] sm:$0xff] 0.0
        %271 = vst [vmem:[#allocation2 + $0x38] sm:$0xff] 0.0
        %272 = vst [vmem:[#allocation2 + $0x40] sm:$0xff] 0.0
        %273 = vst [vmem:[#allocation2 + $0x48] sm:$0xff] 0.0
        %274 = vst [vmem:[#allocation2 + $0x50] sm:$0xff] 0.0
        %275 = vst [vmem:[#allocation2 + $0x58] sm:$0xff] 0.0
        %276 = vst [vmem:[#allocation2 + $0x60] sm:$0xff] 0.0
        %277 = vst [vmem:[#allocation2 + $0x68] sm:$0xff] 0.0
        %278 = vst [vmem:[#allocation2 + $0x70] sm:$0xff] 0.0
        %279 = vst [vmem:[#allocation2 + $0x78] sm:$0xff] 0.0
        %280 = vst [vmem:[#allocation2 + $0x80] sm:$0xff] 0.0
        %281 = vst [vmem:[#allocation2 + $0x88] sm:$0xff] 0.0
        %282 = vst [vmem:[#allocation2 + $0x90] sm:$0xff] 0.0
        %283 = vst [vmem:[#allocation2 + $0x98] sm:$0xff] 0.0
        %284 = vst [vmem:[#allocation2 + $0xa0] sm:$0xff] 0.0
        %285 = vst [vmem:[#allocation2 + $0xa8] sm:$0xff] 0.0
        %286 = vst [vmem:[#allocation2 + $0xb0] sm:$0xff] 0.0
        %287 = vst [vmem:[#allocation2 + $0xb8] sm:$0xff] 0.0
        %288 = vst [vmem:[#allocation2 + $0xc0] sm:$0xff] 0.0
        %289 = vst [vmem:[#allocation2 + $0xc8] sm:$0xff] 0.0
        %290 = vst [vmem:[#allocation2 + $0xd0] sm:$0xff] 0.0
        %291 = vst [vmem:[#allocation2 + $0xd8] sm:$0xff] 0.0
        %292 = vst [vmem:[#allocation2 + $0xe0] sm:$0xff] 0.0
        %293 = vst [vmem:[#allocation2 + $0xe8] sm:$0xff] 0.0
        %294 = vst [vmem:[#allocation2 + $0xf0] sm:$0xff] 0.0
        %295 = vst [vmem:[#allocation2 + $0xf8] sm:$0xff] 0.0
      $region36: #{forward.12} parent=31 // pred_fallthru
        _
      %v296 = vld [vmem:[#allocation2] sm:$0xff]
      %v297 = vld [vmem:[#allocation2 + $0x8] sm:$0xff]
      %v298 = vld [vmem:[#allocation2 + $0x10] sm:$0xff]
      %v299 = vld [vmem:[#allocation2 + $0x18] sm:$0xff]
      %v300 = vld [vmem:[#allocation2 + $0x20] sm:$0xff]
      %v301 = vld [vmem:[#allocation2 + $0x28] sm:$0xff]
      %v302 = vld [vmem:[#allocation2 + $0x30] sm:$0xff]
      %v303 = vld [vmem:[#allocation2 + $0x38] sm:$0xff]
      %v304 = vld [vmem:[#allocation2 + $0x40] sm:$0xff]
      %v305 = vld [vmem:[#allocation2 + $0x48] sm:$0xff]
      %v306 = vld [vmem:[#allocation2 + $0x50] sm:$0xff]
      %v307 = vld [vmem:[#allocation2 + $0x58] sm:$0xff]
      %v308 = vld [vmem:[#allocation2 + $0x60] sm:$0xff]
      %v309 = vld [vmem:[#allocation2 + $0x68] sm:$0xff]
      %v310 = vld [vmem:[#allocation2 + $0x70] sm:$0xff]
      %v311 = vld [vmem:[#allocation2 + $0x78] sm:$0xff]
      %v312 = vld [vmem:[#allocation2 + $0x80] sm:$0xff]
      %v313 = vld [vmem:[#allocation2 + $0x88] sm:$0xff]
      %v314 = vld [vmem:[#allocation2 + $0x90] sm:$0xff]
      %v315 = vld [vmem:[#allocation2 + $0x98] sm:$0xff]
      %v316 = vld [vmem:[#allocation2 + $0xa0] sm:$0xff]
      %v317 = vld [vmem:[#allocation2 + $0xa8] sm:$0xff]
      %v318 = vld [vmem:[#allocation2 + $0xb0] sm:$0xff]
      %v319 = vld [vmem:[#allocation2 + $0xb8] sm:$0xff]
      %v320 = vld [vmem:[#allocation2 + $0xc0] sm:$0xff]
      %v321 = vld [vmem:[#allocation2 + $0xc8] sm:$0xff]
      %v322 = vld [vmem:[#allocation2 + $0xd0] sm:$0xff]
      %v323 = vld [vmem:[#allocation2 + $0xd8] sm:$0xff]
      %v324 = vld [vmem:[#allocation2 + $0xe0] sm:$0xff]
      %v325 = vld [vmem:[#allocation2 + $0xe8] sm:$0xff]
      %v326 = vld [vmem:[#allocation2 + $0xf0] sm:$0xff]
      %v327 = vld [vmem:[#allocation2 + $0xf8] sm:$0xff]
      %v328 = vld [vmem:[%s236] sm:$0xf]
      %v329 = vld [vmem:[%s236 + $0x4] sm:$0xf]
      %v330 = vld [vmem:[%s236 + $0x8] sm:$0xf]
      %v331 = vld [vmem:[%s236 + $0xc] sm:$0xf]
      %v332 = vld [vmem:[%s236 + $0x10] sm:$0xf]
      %v333 = vld [vmem:[%s236 + $0x14] sm:$0xf]
      %v334 = vld [vmem:[%s236 + $0x18] sm:$0xf]
      %v335 = vld [vmem:[%s236 + $0x1c] sm:$0xf]
      %v336 = vld [vmem:[%s236 + $0x20] sm:$0xf]
      %v337 = vld [vmem:[%s236 + $0x24] sm:$0xf]
      %v338 = vld [vmem:[%s236 + $0x28] sm:$0xf]
      %v339 = vld [vmem:[%s236 + $0x2c] sm:$0xf]
      %v340 = vld [vmem:[%s236 + $0x30] sm:$0xf]
      %v341 = vld [vmem:[%s236 + $0x34] sm:$0xf]
      %v342 = vld [vmem:[%s236 + $0x38] sm:$0xf]
      %v343 = vld [vmem:[%s236 + $0x3c] sm:$0xf]
      %v344 = vld [vmem:[%s236 + $0x40] sm:$0xf]
      %v345 = vld [vmem:[%s236 + $0x44] sm:$0xf]
      %v346 = vld [vmem:[%s236 + $0x48] sm:$0xf]
      %v347 = vld [vmem:[%s236 + $0x4c] sm:$0xf]
      %v348 = vld [vmem:[%s236 + $0x50] sm:$0xf]
      %v349 = vld [vmem:[%s236 + $0x54] sm:$0xf]
      %v350 = vld [vmem:[%s236 + $0x58] sm:$0xf]
      %v351 = vld [vmem:[%s236 + $0x5c] sm:$0xf]
      %v352 = vld [vmem:[%s236 + $0x60] sm:$0xf]
      %v353 = vld [vmem:[%s236 + $0x64] sm:$0xf]
      %v354 = vld [vmem:[%s236 + $0x68] sm:$0xf]
      %v355 = vld [vmem:[%s236 + $0x6c] sm:$0xf]
      %v356 = vld [vmem:[%s236 + $0x70] sm:$0xf]
      %v357 = vld [vmem:[%s236 + $0x74] sm:$0xf]
      %v358 = vld [vmem:[%s236 + $0x78] sm:$0xf]
      %v359 = vld [vmem:[%s236 + $0x7c] sm:$0xf]
      %v360 = vld [vmem:[%s245] sm:$0xf]
      %v361 = vld [vmem:[%s245 + $0x4] sm:$0xf]
      %v362 = vld [vmem:[%s245 + $0x8] sm:$0xf]
      %v363 = vld [vmem:[%s245 + $0xc] sm:$0xf]
      %v364 = vld [vmem:[%s245 + $0x10] sm:$0xf]
      %v365 = vld [vmem:[%s245 + $0x14] sm:$0xf]
      %v366 = vld [vmem:[%s245 + $0x18] sm:$0xf]
      %v367 = vld [vmem:[%s245 + $0x1c] sm:$0xf]
      %v368 = vld [vmem:[%s245 + $0x20] sm:$0xf]
      %v369 = vld [vmem:[%s245 + $0x24] sm:$0xf]
      %v370 = vld [vmem:[%s245 + $0x28] sm:$0xf]
      %v371 = vld [vmem:[%s245 + $0x2c] sm:$0xf]
      %v372 = vld [vmem:[%s245 + $0x30] sm:$0xf]
      %v373 = vld [vmem:[%s245 + $0x34] sm:$0xf]
      %v374 = vld [vmem:[%s245 + $0x38] sm:$0xf]
      %v375 = vld [vmem:[%s245 + $0x3c] sm:$0xf]
      %v408 = vunpack.c.l.b16 %v328
      %v409 = vunpack.c.l.b16 %v329
      %v410 = vunpack.c.l.b16 %v330
      %v411 = vunpack.c.l.b16 %v331
      %v412 = vunpack.c.l.b16 %v332
      %v413 = vunpack.c.l.b16 %v333
      %v414 = vunpack.c.l.b16 %v334
      %v415 = vunpack.c.l.b16 %v335
      %v416 = vunpack.c.l.b16 %v336
      %v417 = vunpack.c.l.b16 %v337
      %v418 = vunpack.c.l.b16 %v338
      %v419 = vunpack.c.l.b16 %v339
      %v420 = vunpack.c.l.b16 %v340
      %v421 = vunpack.c.l.b16 %v341
      %v422 = vunpack.c.l.b16 %v342
      %v423 = vunpack.c.l.b16 %v343
      %v424 = vunpack.c.l.b16 %v344
      %v425 = vunpack.c.l.b16 %v345
      %v426 = vunpack.c.l.b16 %v346
      %v427 = vunpack.c.l.b16 %v347
      %v428 = vunpack.c.l.b16 %v348
      %v429 = vunpack.c.l.b16 %v349
      %v430 = vunpack.c.l.b16 %v350
      %v431 = vunpack.c.l.b16 %v351
      %v432 = vunpack.c.l.b16 %v352
      %v433 = vunpack.c.l.b16 %v353
      %v434 = vunpack.c.l.b16 %v354
      %v435 = vunpack.c.l.b16 %v355
      %v436 = vunpack.c.l.b16 %v356
      %v437 = vunpack.c.l.b16 %v357
      %v438 = vunpack.c.l.b16 %v358
      %v439 = vunpack.c.l.b16 %v359
      %v440 = vpack.c.b16 %v409, %v408
      %v441 = vpack.c.b16 %v411, %v410
      %v442 = vpack.c.b16 %v413, %v412
      %v443 = vpack.c.b16 %v415, %v414
      %v444 = vpack.c.b16 %v417, %v416
      %v445 = vpack.c.b16 %v419, %v418
      %v446 = vpack.c.b16 %v421, %v420
      %v447 = vpack.c.b16 %v423, %v422
      %v448 = vpack.c.b16 %v425, %v424
      %v449 = vpack.c.b16 %v427, %v426
      %v450 = vpack.c.b16 %v429, %v428
      %v451 = vpack.c.b16 %v431, %v430
      %v452 = vpack.c.b16 %v433, %v432
      %v453 = vpack.c.b16 %v435, %v434
      %v454 = vpack.c.b16 %v437, %v436
      %v455 = vpack.c.b16 %v439, %v438
      %v488 = vunpack.c.l.b16 %v360
      %v489 = vunpack.c.l.b16 %v361
      %v490 = vunpack.c.l.b16 %v362
      %v491 = vunpack.c.l.b16 %v363
      %v492 = vunpack.c.l.b16 %v364
      %v493 = vunpack.c.l.b16 %v365
      %v494 = vunpack.c.l.b16 %v366
      %v495 = vunpack.c.l.b16 %v367
      %v496 = vunpack.c.l.b16 %v368
      %v497 = vunpack.c.l.b16 %v369
      %v498 = vunpack.c.l.b16 %v370
      %v499 = vunpack.c.l.b16 %v371
      %v500 = vunpack.c.l.b16 %v372
      %v501 = vunpack.c.l.b16 %v373
      %v502 = vunpack.c.l.b16 %v374
      %v503 = vunpack.c.l.b16 %v375
      %v504 = vpack.c.b16 %v489, %v488
      %v505 = vpack.c.b16 %v491, %v490
      %v506 = vpack.c.b16 %v493, %v492
      %v507 = vpack.c.b16 %v495, %v494
      %v508 = vpack.c.b16 %v497, %v496
      %v509 = vpack.c.b16 %v499, %v498
      %v510 = vpack.c.b16 %v501, %v500
      %v511 = vpack.c.b16 %v503, %v502
      %520 = vmatprep.subr.bf16.mxu0 0
      %521 = vmatpush1.bf16.msra.mxu0 %v511
      %522 = vmatprep.subr.bf16.mxu0 0
      %523 = vmatpush1.bf16.msra.mxu0 %v510
      %524 = vmatprep.subr.bf16.mxu0 0
      %525 = vmatpush1.bf16.msra.mxu0 %v509
      %526 = vmatprep.subr.bf16.mxu0 0
      %527 = vmatpush1.bf16.msra.mxu0 %v508
      %528 = vmatprep.subr.bf16.mxu0 0
      %529 = vmatpush1.bf16.msra.mxu0 %v507
      %530 = vmatprep.subr.bf16.mxu0 0
      %531 = vmatpush1.bf16.msra.mxu0 %v506
      %532 = vmatprep.subr.bf16.mxu0 0
      %533 = vmatpush1.bf16.msra.mxu0 %v505
      %534 = vmatprep.subr.bf16.mxu0 0
      %535 = vmatpush1.bf16.msra.mxu0 %v504
      %536 = vmatprep.subr.bf16.mxu0 0
      %537 = vmatpush2.bf16.msra.mxu0 0
      %538 = vmatprep.subr.bf16.mxu0 0
      %539 = vmatpush2.bf16.msra.mxu0 0
      %540 = vmatprep.subr.bf16.mxu0 0
      %541 = vmatpush2.bf16.msra.mxu0 0
      %542 = vmatprep.subr.bf16.mxu0 0
      %543 = vmatpush2.bf16.msra.mxu0 0
      %544 = vmatprep.subr.bf16.mxu0 0
      %545 = vmatpush2.bf16.msra.mxu0 0
      %546 = vmatprep.subr.bf16.mxu0 0
      %547 = vmatpush2.bf16.msra.mxu0 0
      %548 = vmatprep.subr.bf16.mxu0 0
      %549 = vmatpush2.bf16.msra.mxu0 0
      %550 = vmatprep.subr.bf16.mxu0 0
      %551 = vmatpush2.bf16.msra.mxu0 0
      %552 = vmatprep.mubr.bf16.mxu0 0
      %553 = vmatmul.mubr.bf16.gmra.mxu0 %v440
      %v554 = vpop.f32.mrf.mxu0
      %v555 = vadd.f32 0.0, %v554
      %v556 = vpop.f32.mrf.mxu0
      %v557 = vpop.f32.mrf.mxu0
      %v558 = vadd.f32 0.0, %v557
      %v559 = vpop.f32.mrf.mxu0
      %560 = vmatprep.mubr.bf16.mxu0 0
      %561 = vmatmul.mubr.bf16.gmra.mxu0 %v441
      %v562 = vpop.f32.mrf.mxu0
      %v563 = vadd.f32 0.0, %v562
      %v564 = vpop.f32.mrf.mxu0
      %v565 = vpop.f32.mrf.mxu0
      %v566 = vadd.f32 0.0, %v565
      %v567 = vpop.f32.mrf.mxu0
      %568 = vmatprep.mubr.bf16.mxu0 0
      %569 = vmatmul.mubr.bf16.gmra.mxu0 %v442
      %v570 = vpop.f32.mrf.mxu0
      %v571 = vadd.f32 0.0, %v570
      %v572 = vpop.f32.mrf.mxu0
      %v573 = vpop.f32.mrf.mxu0
      %v574 = vadd.f32 0.0, %v573
      %v575 = vpop.f32.mrf.mxu0
      %576 = vmatprep.mubr.bf16.mxu0 0
      %577 = vmatmul.mubr.bf16.gmra.mxu0 %v443
      %v578 = vpop.f32.mrf.mxu0
      %v579 = vadd.f32 0.0, %v578
      %v580 = vpop.f32.mrf.mxu0
      %v581 = vpop.f32.mrf.mxu0
      %v582 = vadd.f32 0.0, %v581
      %v583 = vpop.f32.mrf.mxu0
      %584 = vmatprep.mubr.bf16.mxu0 0
      %585 = vmatmul.mubr.bf16.gmra.mxu0 %v444
      %v586 = vpop.f32.mrf.mxu0
      %v587 = vadd.f32 0.0, %v586
      %v588 = vpop.f32.mrf.mxu0
      %v589 = vpop.f32.mrf.mxu0
      %v590 = vadd.f32 0.0, %v589
      %v591 = vpop.f32.mrf.mxu0
      %592 = vmatprep.mubr.bf16.mxu0 0
      %593 = vmatmul.mubr.bf16.gmra.mxu0 %v445
      %v594 = vpop.f32.mrf.mxu0
      %v595 = vadd.f32 0.0, %v594
      %v596 = vpop.f32.mrf.mxu0
      %v597 = vpop.f32.mrf.mxu0
      %v598 = vadd.f32 0.0, %v597
      %v599 = vpop.f32.mrf.mxu0
      %600 = vmatprep.mubr.bf16.mxu0 0
      %601 = vmatmul.mubr.bf16.gmra.mxu0 %v446
      %v602 = vpop.f32.mrf.mxu0
      %v603 = vadd.f32 0.0, %v602
      %v604 = vpop.f32.mrf.mxu0
      %v605 = vpop.f32.mrf.mxu0
      %v606 = vadd.f32 0.0, %v605
      %v607 = vpop.f32.mrf.mxu0
      %608 = vmatprep.mubr.bf16.mxu0 0
      %609 = vmatmul.mubr.bf16.gmra.mxu0 %v447
      %v610 = vpop.f32.mrf.mxu0
      %v611 = vadd.f32 0.0, %v610
      %v612 = vpop.f32.mrf.mxu0
      %v613 = vpop.f32.mrf.mxu0
      %v614 = vadd.f32 0.0, %v613
      %v615 = vpop.f32.mrf.mxu0
      %616 = vmatprep.mubr.bf16.mxu0 0
      %617 = vmatmul.mubr.bf16.gmra.mxu0 %v448
      %v618 = vpop.f32.mrf.mxu0
      %v619 = vadd.f32 0.0, %v618
      %v620 = vpop.f32.mrf.mxu0
      %v621 = vpop.f32.mrf.mxu0
      %v622 = vadd.f32 0.0, %v621
      %v623 = vpop.f32.mrf.mxu0
      %624 = vmatprep.mubr.bf16.mxu0 0
      %625 = vmatmul.mubr.bf16.gmra.mxu0 %v449
      %v626 = vpop.f32.mrf.mxu0
      %v627 = vadd.f32 0.0, %v626
      %v628 = vpop.f32.mrf.mxu0
      %v629 = vpop.f32.mrf.mxu0
      %v630 = vadd.f32 0.0, %v629
      %v631 = vpop.f32.mrf.mxu0
      %632 = vmatprep.mubr.bf16.mxu0 0
      %633 = vmatmul.mubr.bf16.gmra.mxu0 %v450
      %v634 = vpop.f32.mrf.mxu0
      %v635 = vadd.f32 0.0, %v634
      %v636 = vpop.f32.mrf.mxu0
      %v637 = vpop.f32.mrf.mxu0
      %v638 = vadd.f32 0.0, %v637
      %v639 = vpop.f32.mrf.mxu0
      %640 = vmatprep.mubr.bf16.mxu0 0
      %641 = vmatmul.mubr.bf16.gmra.mxu0 %v451
      %v642 = vpop.f32.mrf.mxu0
      %v643 = vadd.f32 0.0, %v642
      %v644 = vpop.f32.mrf.mxu0
      %v645 = vpop.f32.mrf.mxu0
      %v646 = vadd.f32 0.0, %v645
      %v647 = vpop.f32.mrf.mxu0
      %648 = vmatprep.mubr.bf16.mxu0 0
      %649 = vmatmul.mubr.bf16.gmra.mxu0 %v452
      %v650 = vpop.f32.mrf.mxu0
      %v651 = vadd.f32 0.0, %v650
      %v652 = vpop.f32.mrf.mxu0
      %v653 = vpop.f32.mrf.mxu0
      %v654 = vadd.f32 0.0, %v653
      %v655 = vpop.f32.mrf.mxu0
      %656 = vmatprep.mubr.bf16.mxu0 0
      %657 = vmatmul.mubr.bf16.gmra.mxu0 %v453
      %v658 = vpop.f32.mrf.mxu0
      %v659 = vadd.f32 0.0, %v658
      %v660 = vpop.f32.mrf.mxu0
      %v661 = vpop.f32.mrf.mxu0
      %v662 = vadd.f32 0.0, %v661
      %v663 = vpop.f32.mrf.mxu0
      %664 = vmatprep.mubr.bf16.mxu0 0
      %665 = vmatmul.mubr.bf16.gmra.mxu0 %v454
      %v666 = vpop.f32.mrf.mxu0
      %v667 = vadd.f32 0.0, %v666
      %v668 = vpop.f32.mrf.mxu0
      %v669 = vpop.f32.mrf.mxu0
      %v670 = vadd.f32 0.0, %v669
      %v671 = vpop.f32.mrf.mxu0
      %672 = vmatprep.mubr.bf16.mxu0 0
      %673 = vmatmul.mubr.bf16.gmra.mxu0 %v455
      %v674 = vpop.f32.mrf.mxu0
      %v675 = vadd.f32 0.0, %v674
      %v676 = vpop.f32.mrf.mxu0
      %v677 = vpop.f32.mrf.mxu0
      %v678 = vadd.f32 0.0, %v677
      %v679 = vpop.f32.mrf.mxu0
      %680 = vdwg.mxu0
      %v681 = vadd.f32 %v296, %v555
      %v682 = vadd.f32 %v297, %v558
      %v683 = vadd.f32 %v298, %v563
      %v684 = vadd.f32 %v299, %v566
      %v685 = vadd.f32 %v300, %v571
      %v686 = vadd.f32 %v301, %v574
      %v687 = vadd.f32 %v302, %v579
      %v688 = vadd.f32 %v303, %v582
      %v689 = vadd.f32 %v304, %v587
      %v690 = vadd.f32 %v305, %v590
      %v691 = vadd.f32 %v306, %v595
      %v692 = vadd.f32 %v307, %v598
      %v693 = vadd.f32 %v308, %v603
      %v694 = vadd.f32 %v309, %v606
      %v695 = vadd.f32 %v310, %v611
      %v696 = vadd.f32 %v311, %v614
      %v697 = vadd.f32 %v312, %v619
      %v698 = vadd.f32 %v313, %v622
      %v699 = vadd.f32 %v314, %v627
      %v700 = vadd.f32 %v315, %v630
      %v701 = vadd.f32 %v316, %v635
      %v702 = vadd.f32 %v317, %v638
      %v703 = vadd.f32 %v318, %v643
      %v704 = vadd.f32 %v319, %v646
      %v705 = vadd.f32 %v320, %v651
      %v706 = vadd.f32 %v321, %v654
      %v707 = vadd.f32 %v322, %v659
      %v708 = vadd.f32 %v323, %v662
      %v709 = vadd.f32 %v324, %v667
      %v710 = vadd.f32 %v325, %v670
      %v711 = vadd.f32 %v326, %v675
      %v712 = vadd.f32 %v327, %v678
      %713 = vst [vmem:[#allocation2] sm:$0xff] %v681
      %714 = vst [vmem:[#allocation2 + $0x8] sm:$0xff] %v682
      %715 = vst [vmem:[#allocation2 + $0x10] sm:$0xff] %v683
      %716 = vst [vmem:[#allocation2 + $0x18] sm:$0xff] %v684
      %717 = vst [vmem:[#allocation2 + $0x20] sm:$0xff] %v685
      %718 = vst [vmem:[#allocation2 + $0x28] sm:$0xff] %v686
      %719 = vst [vmem:[#allocation2 + $0x30] sm:$0xff] %v687
      %720 = vst [vmem:[#allocation2 + $0x38] sm:$0xff] %v688
      %721 = vst [vmem:[#allocation2 + $0x40] sm:$0xff] %v689
      %722 = vst [vmem:[#allocation2 + $0x48] sm:$0xff] %v690
      %723 = vst [vmem:[#allocation2 + $0x50] sm:$0xff] %v691
      %724 = vst [vmem:[#allocation2 + $0x58] sm:$0xff] %v692
      %725 = vst [vmem:[#allocation2 + $0x60] sm:$0xff] %v693
      %726 = vst [vmem:[#allocation2 + $0x68] sm:$0xff] %v694
      %727 = vst [vmem:[#allocation2 + $0x70] sm:$0xff] %v695
      %728 = vst [vmem:[#allocation2 + $0x78] sm:$0xff] %v696
      %729 = vst [vmem:[#allocation2 + $0x80] sm:$0xff] %v697
      %730 = vst [vmem:[#allocation2 + $0x88] sm:$0xff] %v698
      %731 = vst [vmem:[#allocation2 + $0x90] sm:$0xff] %v699
      %732 = vst [vmem:[#allocation2 + $0x98] sm:$0xff] %v700
      %733 = vst [vmem:[#allocation2 + $0xa0] sm:$0xff] %v701
      %734 = vst [vmem:[#allocation2 + $0xa8] sm:$0xff] %v702
      %735 = vst [vmem:[#allocation2 + $0xb0] sm:$0xff] %v703
      %736 = vst [vmem:[#allocation2 + $0xb8] sm:$0xff] %v704
      %737 = vst [vmem:[#allocation2 + $0xc0] sm:$0xff] %v705
      %738 = vst [vmem:[#allocation2 + $0xc8] sm:$0xff] %v706
      %739 = vst [vmem:[#allocation2 + $0xd0] sm:$0xff] %v707
      %740 = vst [vmem:[#allocation2 + $0xd8] sm:$0xff] %v708
      %741 = vst [vmem:[#allocation2 + $0xe0] sm:$0xff] %v709
      %742 = vst [vmem:[#allocation2 + $0xe8] sm:$0xff] %v710
      %743 = vst [vmem:[#allocation2 + $0xf0] sm:$0xff] %v711
      %744 = vst [vmem:[#allocation2 + $0xf8] sm:$0xff] %v712
      // Predicated region
      $region37: #{forward.12} parent=31 // pred_check
        %p745 = pneg %p260
      $region38: #{forward.12} parent=31 // pred_check_branch
        %747 = sbr.rel (%p745) target = $region40
      $region39: #{forward.12} parent=31 // pred_region
        %v748 = vld [vmem:[#allocation2] sm:$0xff]
        %v749 = vld [vmem:[#allocation2 + $0x8] sm:$0xff]
        %v750 = vld [vmem:[#allocation2 + $0x10] sm:$0xff]
        %v751 = vld [vmem:[#allocation2 + $0x18] sm:$0xff]
        %v752 = vld [vmem:[#allocation2 + $0x20] sm:$0xff]
        %v753 = vld [vmem:[#allocation2 + $0x28] sm:$0xff]
        %v754 = vld [vmem:[#allocation2 + $0x30] sm:$0xff]
        %v755 = vld [vmem:[#allocation2 + $0x38] sm:$0xff]
        %v756 = vld [vmem:[#allocation2 + $0x40] sm:$0xff]
        %v757 = vld [vmem:[#allocation2 + $0x48] sm:$0xff]
        %v758 = vld [vmem:[#allocation2 + $0x50] sm:$0xff]
        %v759 = vld [vmem:[#allocation2 + $0x58] sm:$0xff]
        %v760 = vld [vmem:[#allocation2 + $0x60] sm:$0xff]
        %v761 = vld [vmem:[#allocation2 + $0x68] sm:$0xff]
        %v762 = vld [vmem:[#allocation2 + $0x70] sm:$0xff]
        %v763 = vld [vmem:[#allocation2 + $0x78] sm:$0xff]
        %v764 = vld [vmem:[#allocation2 + $0x80] sm:$0xff]
        %v765 = vld [vmem:[#allocation2 + $0x88] sm:$0xff]
        %v766 = vld [vmem:[#allocation2 + $0x90] sm:$0xff]
        %v767 = vld [vmem:[#allocation2 + $0x98] sm:$0xff]
        %v768 = vld [vmem:[#allocation2 + $0xa0] sm:$0xff]
        %v769 = vld [vmem:[#allocation2 + $0xa8] sm:$0xff]
        %v770 = vld [vmem:[#allocation2 + $0xb0] sm:$0xff]
        %v771 = vld [vmem:[#allocation2 + $0xb8] sm:$0xff]
        %v772 = vld [vmem:[#allocation2 + $0xc0] sm:$0xff]
        %v773 = vld [vmem:[#allocation2 + $0xc8] sm:$0xff]
        %v774 = vld [vmem:[#allocation2 + $0xd0] sm:$0xff]
        %v775 = vld [vmem:[#allocation2 + $0xd8] sm:$0xff]
        %v776 = vld [vmem:[#allocation2 + $0xe0] sm:$0xff]
        %v777 = vld [vmem:[#allocation2 + $0xe8] sm:$0xff]
        %v778 = vld [vmem:[#allocation2 + $0xf0] sm:$0xff]
        %v779 = vld [vmem:[#allocation2 + $0xf8] sm:$0xff]
        %v780 = vld [vmem:[%s249] sm:$0x1]
        %v782 = vlaneseq
        %v783 = vshrl.u32 %v782, 7
        %v784 = vsub.s32 0, %v783
        %v785 = vrot.slane %v780, %v784
        %v787 = vadd.f32 %v748, %v785
        %v788 = vadd.f32 %v749, %v785
        %v789 = vadd.f32 %v750, %v785
        %v790 = vadd.f32 %v751, %v785
        %v791 = vadd.f32 %v752, %v785
        %v792 = vadd.f32 %v753, %v785
        %v793 = vadd.f32 %v754, %v785
        %v794 = vadd.f32 %v755, %v785
        %v795 = vadd.f32 %v756, %v785
        %v796 = vadd.f32 %v757, %v785
        %v797 = vadd.f32 %v758, %v785
        %v798 = vadd.f32 %v759, %v785
        %v799 = vadd.f32 %v760, %v785
        %v800 = vadd.f32 %v761, %v785
        %v801 = vadd.f32 %v762, %v785
        %v802 = vadd.f32 %v763, %v785
        %v803 = vadd.f32 %v764, %v785
        %v804 = vadd.f32 %v765, %v785
        %v805 = vadd.f32 %v766, %v785
        %v806 = vadd.f32 %v767, %v785
        %v807 = vadd.f32 %v768, %v785
        %v808 = vadd.f32 %v769, %v785
        %v809 = vadd.f32 %v770, %v785
        %v810 = vadd.f32 %v771, %v785
        %v811 = vadd.f32 %v772, %v785
        %v812 = vadd.f32 %v773, %v785
        %v813 = vadd.f32 %v774, %v785
        %v814 = vadd.f32 %v775, %v785
        %v815 = vadd.f32 %v776, %v785
        %v816 = vadd.f32 %v777, %v785
        %v817 = vadd.f32 %v778, %v785
        %v818 = vadd.f32 %v779, %v785
        %v819 = vmax.f32 %v787, 0.0
        %v820 = vmax.f32 %v788, 0.0
        %v821 = vmax.f32 %v789, 0.0
        %v822 = vmax.f32 %v790, 0.0
        %v823 = vmax.f32 %v791, 0.0
        %v824 = vmax.f32 %v792, 0.0
        %v825 = vmax.f32 %v793, 0.0
        %v826 = vmax.f32 %v794, 0.0
        %v827 = vmax.f32 %v795, 0.0
        %v828 = vmax.f32 %v796, 0.0
        %v829 = vmax.f32 %v797, 0.0
        %v830 = vmax.f32 %v798, 0.0
        %v831 = vmax.f32 %v799, 0.0
        %v832 = vmax.f32 %v800, 0.0
        %v833 = vmax.f32 %v801, 0.0
        %v834 = vmax.f32 %v802, 0.0
        %v835 = vmax.f32 %v803, 0.0
        %v836 = vmax.f32 %v804, 0.0
        %v837 = vmax.f32 %v805, 0.0
        %v838 = vmax.f32 %v806, 0.0
        %v839 = vmax.f32 %v807, 0.0
        %v840 = vmax.f32 %v808, 0.0
        %v841 = vmax.f32 %v809, 0.0
        %v842 = vmax.f32 %v810, 0.0
        %v843 = vmax.f32 %v811, 0.0
        %v844 = vmax.f32 %v812, 0.0
        %v845 = vmax.f32 %v813, 0.0
        %v846 = vmax.f32 %v814, 0.0
        %v847 = vmax.f32 %v815, 0.0
        %v848 = vmax.f32 %v816, 0.0
        %v849 = vmax.f32 %v817, 0.0
        %v850 = vmax.f32 %v818, 0.0
        %851 = vst [vmem:[%s257] sm:$0xff] %v819
        %852 = vst [vmem:[%s257 + $0x8] sm:$0xff] %v820
        %853 = vst [vmem:[%s257 + $0x10] sm:$0xff] %v821
        %854 = vst [vmem:[%s257 + $0x18] sm:$0xff] %v822
        %855 = vst [vmem:[%s257 + $0x20] sm:$0xff] %v823
        %856 = vst [vmem:[%s257 + $0x28] sm:$0xff] %v824
        %857 = vst [vmem:[%s257 + $0x30] sm:$0xff] %v825
        %858 = vst [vmem:[%s257 + $0x38] sm:$0xff] %v826
        %859 = vst [vmem:[%s257 + $0x40] sm:$0xff] %v827
        %860 = vst [vmem:[%s257 + $0x48] sm:$0xff] %v828
        %861 = vst [vmem:[%s257 + $0x50] sm:$0xff] %v829
        %862 = vst [vmem:[%s257 + $0x58] sm:$0xff] %v830
        %863 = vst [vmem:[%s257 + $0x60] sm:$0xff] %v831
        %864 = vst [vmem:[%s257 + $0x68] sm:$0xff] %v832
        %865 = vst [vmem:[%s257 + $0x70] sm:$0xff] %v833
        %866 = vst [vmem:[%s257 + $0x78] sm:$0xff] %v834
        %867 = vst [vmem:[%s257 + $0x80] sm:$0xff] %v835
        %868 = vst [vmem:[%s257 + $0x88] sm:$0xff] %v836
        %869 = vst [vmem:[%s257 + $0x90] sm:$0xff] %v837
        %870 = vst [vmem:[%s257 + $0x98] sm:$0xff] %v838
        %871 = vst [vmem:[%s257 + $0xa0] sm:$0xff] %v839
        %872 = vst [vmem:[%s257 + $0xa8] sm:$0xff] %v840
        %873 = vst [vmem:[%s257 + $0xb0] sm:$0xff] %v841
        %874 = vst [vmem:[%s257 + $0xb8] sm:$0xff] %v842
        %875 = vst [vmem:[%s257 + $0xc0] sm:$0xff] %v843
        %876 = vst [vmem:[%s257 + $0xc8] sm:$0xff] %v844
        %877 = vst [vmem:[%s257 + $0xd0] sm:$0xff] %v845
        %878 = vst [vmem:[%s257 + $0xd8] sm:$0xff] %v846
        %879 = vst [vmem:[%s257 + $0xe0] sm:$0xff] %v847
        %880 = vst [vmem:[%s257 + $0xe8] sm:$0xff] %v848
        %881 = vst [vmem:[%s257 + $0xf0] sm:$0xff] %v849
        %882 = vst [vmem:[%s257 + $0xf8] sm:$0xff] %v850
      $region40: #{forward.12} parent=31 // pred_fallthru
        _
      %s883 = smul.u32 32, %s19
      %p884 = scmp.lt.s32.totalorder %s883, 255
      %s885 = scalar_select %p884, %s883, 255
      %p886 = scmp.lt.s32.totalorder %s20, 0
      %s887 = scalar_select %p886, %s20, 0
      %s888 = sadd.s32 %s887, %s885
      %s889 = smul.addr %s888, 8
      %s890 = scalar_lea.vmem %s3, %s889
      // Predicated region
      $region41: #{forward.12} parent=31 // pred_check
        %p891 = pneg %p135
      $region42: #{forward.12} parent=31 // pred_check_branch
        %893 = sbr.rel (%p891) target = $region44
      $region43: #{forward.12} parent=31 // pred_region
        %s894 = smul.u32 32, %s19
      $region44: #{forward.12} parent=31 // pred_fallthru
        _
    $region32: #{forward.12} parent=5 // pred_fallthru
      _
    %p895 = scmp.le.s32.totalorder 2, %s9
    // Predicated region
    $region45: #{forward.12} parent=5 // pred_check
      %p896 = pneg %p895
    $region46: #{forward.12} parent=5 // pred_check_branch
      %898 = sbr.rel (%p896) target = $region48
    $region47: #{forward.12} parent=5 // pred_region
      %s899 = ssub.s32 %s9, 2
      // Predicated region
      $region49: #{forward.12} parent=47 // pred_check
        %p900 = pneg %p141
      $region50: #{forward.12} parent=47 // pred_check_branch
        %902 = sbr.rel (%p900) target = $region52
      $region51: #{forward.12} parent=47 // pred_region
        %s903 = smul.u32 32, %s22
        %p904 = scmp.lt.s32.totalorder %s903, 255
        %s905 = scalar_select %p904, %s903, 255
        %p906 = scmp.lt.s32.totalorder %s23, 0
        %s907 = scalar_select %p906, %s23, 0
        %s908 = sadd.s32 %s907, %s905
        %s909 = smul.addr %s908, 8
        %s910 = scalar_lea.vmem %s3, %s909
      $region52: #{forward.12} parent=47 // pred_fallthru
        _
    $region48: #{forward.12} parent=5 // pred_fallthru
      _
  $region6: #{forward.12} parent=0 // loop_footer
    %s13 = sadd.s32 1, %s9
  $region7: #{forward.12} parent=0 // loop_footer_branch
    %8 = sbr.rel target = $region3
  $region8: #{forward.12} parent=0 // loop_exit
    _

// kernel: forward.13
$region0: #{forward.13}
  #allocation0 [shape = 'u32[]', space=smem, size = 0x4, offset = 0x4, fixed_abs, tag = 'smem constant byte address 0x4 - core index']
  #allocation1 [shape = 'u32[144,128]{1,0:T(1,128)}', space=vmem, size = 0x12000, scoped, tag = 'internal scratch']
  #allocation2 [shape = 'f32[256,128]{1,0:T(8,128)}', space=vmem, size = 0x20000, scoped, tag = 'scratch operand']
  %s0 = inlined_call_operand.vmem [shape: bf16[512,768], index: 0, kind: input, shape index: {}]
  %s1 = inlined_call_operand.vmem [shape: bf16[768,128], index: 1, kind: input, shape index: {}]
  %s2 = inlined_call_operand.vmem [shape: f32[1,128], index: 2, kind: input, shape index: {}]
  %s3 = inlined_call_operand.vmem [shape: f32[512,128], index: 3, kind: output, shape index: {}]
  %s4 = sld [smem:[#allocation0]]
  $region91: #{forward.13} parent=0
    _
  %s6 = ssub.s32 1, %s4
  %s7 = scalar_select 0, %s6, %s4
  $region1: #{forward.13} parent=0
    #allocation3 [shape = 'u8[262144]{0}', space=vmem, size = 0x40000, scoped, tag = 'input window, operand 0']
    loop: start=0, step=1, limit=8
    $region2: #{forward.13} parent=1 // loop_pre_header
      _
    $region3: #{forward.13} parent=1 // loop_header
      %s9 = sphi 0, %s13
      %p10 = scmp.ge.s32.totalorder %s9, 8
      %s16 = sphi 0, %s35
      %s17 = sphi 0, %s31
      %s18 = sphi 0, %s27
      %s19 = sphi 0, %s16
      %s20 = sphi 0, %s17
      %s21 = sphi 0, %s18
      %s22 = sphi 0, %s19
      %s23 = sphi 0, %s20
      %s24 = sphi 0, %s21
      %s40 = sphi 0, %s42
      %s43 = sphi 0, %s40
      %s44 = sphi 0, %s43
      %s60 = sphi 0, %s44
      %s68 = sphi 0, %s70
      %s71 = sphi 0, %s68
      %s72 = sphi 0, %s71
      %s88 = sphi 0, %s72
      %s94 = sphi 0, %s96
      %s97 = sphi 0, %s94
      %s98 = sphi 0, %s97
      %s114 = sphi 0, %s98
      %s122 = sphi 0, %s124
      %s125 = sphi 0, %s122
      %s126 = sphi 0, %s125
      %s142 = sphi 0, %s126
    $region4: #{forward.13} parent=1 // loop_header_branch
      %12 = sbr.rel (%p10) target = $region8
    $region5: #{forward.13} parent=1 // loop_body
      %s14 = ssub.s32 %s9, 1
      %s15 = ssub.s32 %s9, 2
      %s25 = sadd.s32 1, %s18
      %p26 = scmp.ge.s32.totalorder %s25, 3
      %s27 = scalar_select %p26, 0, %s25
      %s28 = sadd.s32 1, %s17
      %s29 = scalar_select %p26, %s28, %s17
      %p30 = scmp.ge.s32.totalorder %s29, 1
      %s31 = scalar_select %p30, 0, %s29
      %s32 = sadd.s32 1, %s16
      %s33 = scalar_select %p30, %s32, %s16
      %p34 = scmp.ge.s32.totalorder %s33, 2
      %s35 = scalar_select %p34, 0, %s33
      %s36 = ssub.s32 %s16, %s35
      %s37 = ssub.s32 %s18, %s27
      %s38 = sor.u32 %s36, %s37
      %p39 = scmp.eq.s32.totalorder %s38, 0
      %s41 = sadd.s32 %s40, 1
      %s42 = scalar_select %p39, %s40, %s41
      %p45 = pneg %p39
      %p46 = scmp.eq.s32.totalorder %s9, 5
      %p47 = por %p45, %p46
      %p48 = scmp.ne.s32.totalorder %s40, %s43
      %p49 = scmp.eq.s32.totalorder %s9, 0
      %p50 = por %p48, %p49
      %p51 = scmp.ne.s32.totalorder %s40, %s43
      %p52 = scmp.eq.s32.totalorder %s14, 5
      %p53 = por %p51, %p52
      %p54 = scmp.ne.s32.totalorder %s43, %s44
      %p55 = scmp.eq.s32.totalorder %s14, 0
      %p56 = por %p54, %p55
      %p57 = scmp.ne.s32.totalorder %s43, %s44
      %p58 = scmp.eq.s32.totalorder %s15, 5
      %p59 = por %p57, %p58
      %p61 = scmp.ne.s32.totalorder %s44, %s60
      %p62 = scmp.eq.s32.totalorder %s15, 0
      %p63 = por %p61, %p62
      %s64 = ssub.s32 %s18, %s27
      %s65 = ssub.s32 %s17, %s31
      %s66 = sor.u32 %s64, %s65
      %p67 = scmp.eq.s32.totalorder %s66, 0
      %s69 = sadd.s32 %s68, 1
      %s70 = scalar_select %p67, %s68, %s69
      %p73 = pneg %p67
      %p74 = scmp.eq.s32.totalorder %s9, 5
      %p75 = por %p73, %p74
      %p76 = scmp.ne.s32.totalorder %s68, %s71
      %p77 = scmp.eq.s32.totalorder %s9, 0
      %p78 = por %p76, %p77
      %p79 = scmp.ne.s32.totalorder %s68, %s71
      %p80 = scmp.eq.s32.totalorder %s14, 5
      %p81 = por %p79, %p80
      %p82 = scmp.ne.s32.totalorder %s71, %s72
      %p83 = scmp.eq.s32.totalorder %s14, 0
      %p84 = por %p82, %p83
      %p85 = scmp.ne.s32.totalorder %s71, %s72
      %p86 = scmp.eq.s32.totalorder %s15, 5
      %p87 = por %p85, %p86
      %p89 = scmp.ne.s32.totalorder %s72, %s88
      %p90 = scmp.eq.s32.totalorder %s15, 0
      %p91 = por %p89, %p90
      %s92 = ssub.s32 %s17, %s31
      %p93 = scmp.eq.s32.totalorder %s92, 0
      %s95 = sadd.s32 %s94, 1
      %s96 = scalar_select %p93, %s94, %s95
      %p99 = pneg %p93
      %p100 = scmp.eq.s32.totalorder %s9, 5
      %p101 = por %p99, %p100
      %p102 = scmp.ne.s32.totalorder %s94, %s97
      %p103 = scmp.eq.s32.totalorder %s9, 0
      %p104 = por %p102, %p103
      %p105 = scmp.ne.s32.totalorder %s94, %s97
      %p106 = scmp.eq.s32.totalorder %s14, 5
      %p107 = por %p105, %p106
      %p108 = scmp.ne.s32.totalorder %s97, %s98
      %p109 = scmp.eq.s32.totalorder %s14, 0
      %p110 = por %p108, %p109
      %p111 = scmp.ne.s32.totalorder %s97, %s98
      %p112 = scmp.eq.s32.totalorder %s15, 5
      %p113 = por %p111, %p112
      %p115 = scmp.ne.s32.totalorder %s98, %s114
      %p116 = scmp.eq.s32.totalorder %s15, 0
      %p117 = por %p115, %p116
      %s118 = ssub.s32 %s16, %s35
      %s119 = ssub.s32 %s17, %s31
      %s120 = sor.u32 %s118, %s119
      %p121 = scmp.eq.s32.totalorder %s120, 0
      %s123 = sadd.s32 %s122, 1
      %s124 = scalar_select %p121, %s122, %s123
      %p127 = pneg %p121
      %p128 = scmp.eq.s32.totalorder %s9, 5
      %p129 = por %p127, %p128
      %p130 = scmp.ne.s32.totalorder %s122, %s125
      %p131 = scmp.eq.s32.totalorder %s9, 0
      %p132 = por %p130, %p131
      %p133 = scmp.ne.s32.totalorder %s122, %s125
      %p134 = scmp.eq.s32.totalorder %s14, 5
      %p135 = por %p133, %p134
      %p136 = scmp.ne.s32.totalorder %s125, %s126
      %p137 = scmp.eq.s32.totalorder %s14, 0
      %p138 = por %p136, %p137
      %p139 = scmp.ne.s32.totalorder %s125, %s126
      %p140 = scmp.eq.s32.totalorder %s15, 5
      %p141 = por %p139, %p140
      %p143 = scmp.ne.s32.totalorder %s126, %s142
      %p144 = scmp.eq.s32.totalorder %s15, 0
      %p145 = por %p143, %p144
      %p146 = scmp.le.s32.totalorder 1, %s9
      %p147 = scmp.lt.s32.totalorder %s9, 7
      %p148 = pnand %p146, %p147
      %p149 = pneg %p148
      // Predicated region
      $region9: #{forward.13} parent=5 // pred_check
        _
      $region10: #{forward.13} parent=5 // pred_check_branch
        %151 = sbr.rel (%p148) target = $region12
      $region11: #{forward.13} parent=5 // pred_region
        %s152 = ssub.s32 %s9, 1
        // Predicated region
        $region13: #{forward.13} parent=11 // pred_check
          %p153 = pneg %p110
        $region14: #{forward.13} parent=11 // pred_check_branch
          %155 = sbr.rel (%p153) target = $region16
        $region15: #{forward.13} parent=11 // pred_region
          %p156 = scmp.lt.s32.totalorder %s20, 0
          %s157 = scalar_select %p156, %s20, 0
          %s158 = scalar_lea.vmem %s2, %s157
        $region16: #{forward.13} parent=11 // pred_fallthru
          _
      $region12: #{forward.13} parent=5 // pred_fallthru
        _
      %p159 = scmp.lt.s32.totalorder %s9, 6
      // Predicated region
      $region17: #{forward.13} parent=5 // pred_check
        %p160 = pneg %p159
      $region18: #{forward.13} parent=5 // pred_check_branch
        %162 = sbr.rel (%p160) target = $region20
      $region19: #{forward.13} parent=5 // pred_region
        // Predicated region
        $region21: #{forward.13} parent=19 // pred_check
          %p163 = pneg %p50
        $region22: #{forward.13} parent=19 // pred_check_branch
          %165 = sbr.rel (%p163) target = $region24
        $region23: #{forward.13} parent=19 // pred_region
          %s166 = sand.u32 %s40, 1
          %s167 = sand.u32 %s40, 1
          %s168 = smul.addr %s167, 256
          %s169 = scalar_lea.vmem [#allocation3], %s168
          %s170 = smul.u32 32, %s16
          %s171 = smul.u32 2, %s18
          %s172 = smul.addr %s170, 6
          %s173 = sadd.s32 %s171, %s172
          %s174 = smul.addr %s173, 4
          %s175 = scalar_lea.vmem %s0, %s174
          // Predicated region
          $region25: #{forward.13} parent=23 // pred_check
            _
          $region26: #{forward.13} parent=23 // pred_check_branch
            %177 = sbr.rel (0) target = $region28
          $region27: #{forward.13} parent=23 // pred_region
            // Predicated region
            $region29: #{forward.13} parent=27 // pred_check
              _
            $region30: #{forward.13} parent=27 // pred_check_branch
              %179 = sbr.rel (0) target = $region32
            $region31: #{forward.13} parent=27 // pred_region
              // Predicated region
              $region44: #{forward.13} parent=31 // pred_check
                _
              $region45: #{forward.13} parent=31 // pred_check_branch
                %257 = sbr.rel (0) target = $region47
              $region46: #{forward.13} parent=31 // pred_region
                loop: start=0, step=1, limit=1
                $region48: #{forward.13} parent=46 // loop_pre_header
                  _
                $region49: #{forward.13} parent=46 // loop_header
                  %s259 = sphi 0, %s263
                  %p260 = scmp.ge.s32.totalorder %s259, 1
                  %s264 = sphi %s175, %s175
                  %s265 = sphi %s169, %s169
                $region50: #{forward.13} parent=46 // loop_header_branch
                  %262 = sbr.rel (%p260) target = $region54
                $region51: #{forward.13} parent=46 // loop_body
                  %v266 = vld [vmem:[%s264] sm:$0xff]
                  %267 = vst [vmem:[%s265] sm:$0xff] %v266
                  %v268 = vld [vmem:[%s264 + $0x18] sm:$0xff]
                  %269 = vst [vmem:[%s265 + $0x8] sm:$0xff] %v268
                  %v270 = vld [vmem:[%s264 + $0x30] sm:$0xff]
                  %271 = vst [vmem:[%s265 + $0x10] sm:$0xff] %v270
                  %v272 = vld [vmem:[%s264 + $0x48] sm:$0xff]
                  %273 = vst [vmem:[%s265 + $0x18] sm:$0xff] %v272
                  %v274 = vld [vmem:[%s264 + $0x60] sm:$0xff]
                  %275 = vst [vmem:[%s265 + $0x20] sm:$0xff] %v274
                  %v276 = vld [vmem:[%s264 + $0x78] sm:$0xff]
                  %277 = vst [vmem:[%s265 + $0x28] sm:$0xff] %v276
                  %v278 = vld [vmem:[%s264 + $0x90] sm:$0xff]
                  %279 = vst [vmem:[%s265 + $0x30] sm:$0xff] %v278
                  %v280 = vld [vmem:[%s264 + $0xa8] sm:$0xff]
                  %281 = vst [vmem:[%s265 + $0x38] sm:$0xff] %v280
                  %v282 = vld [vmem:[%s264 + $0xc0] sm:$0xff]
                  %283 = vst [vmem:[%s265 + $0x40] sm:$0xff] %v282
                  %v284 = vld [vmem:[%s264 + $0xd8] sm:$0xff]
                  %285 = vst [vmem:[%s265 + $0x48] sm:$0xff] %v284
                  %v286 = vld [vmem:[%s264 + $0xf0] sm:$0xff]
                  %287 = vst [vmem:[%s265 + $0x50] sm:$0xff] %v286
                  %v288 = vld [vmem:[%s264 + $0x108] sm:$0xff]
                  %289 = vst [vmem:[%s265 + $0x58] sm:$0xff] %v288
                  %v290 = vld [vmem:[%s264 + $0x120] sm:$0xff]
                  %291 = vst [vmem:[%s265 + $0x60] sm:$0xff] %v290
                  %v292 = vld [vmem:[%s264 + $0x138] sm:$0xff]
                  %293 = vst [vmem:[%s265 + $0x68] sm:$0xff] %v292
                  %v294 = vld [vmem:[%s264 + $0x150] sm:$0xff]
                  %295 = vst [vmem:[%s265 + $0x70] sm:$0xff] %v294
                  %v296 = vld [vmem:[%s264 + $0x168] sm:$0xff]
                  %297 = vst [vmem:[%s265 + $0x78] sm:$0xff] %v296
                  %v298 = vld [vmem:[%s264 + $0x180] sm:$0xff]
                  %299 = vst [vmem:[%s265 + $0x80] sm:$0xff] %v298
                  %v300 = vld [vmem:[%s264 + $0x198] sm:$0xff]
                  %301 = vst [vmem:[%s265 + $0x88] sm:$0xff] %v300
                  %v302 = vld [vmem:[%s264 + $0x1b0] sm:$0xff]
                  %303 = vst [vmem:[%s265 + $0x90] sm:$0xff] %v302
                  %v304 = vld [vmem:[%s264 + $0x1c8] sm:$0xff]
                  %305 = vst [vmem:[%s265 + $0x98] sm:$0xff] %v304
                  %v306 = vld [vmem:[%s264 + $0x1e0] sm:$0xff]
                  %307 = vst [vmem:[%s265 + $0xa0] sm:$0xff] %v306
                  %v308 = vld [vmem:[%s264 + $0x1f8] sm:$0xff]
                  %309 = vst [vmem:[%s265 + $0xa8] sm:$0xff] %v308
                  %v310 = vld [vmem:[%s264 + $0x210] sm:$0xff]
                  %311 = vst [vmem:[%s265 + $0xb0] sm:$0xff] %v310
                  %v312 = vld [vmem:[%s264 + $0x228] sm:$0xff]
                  %313 = vst [vmem:[%s265 + $0xb8] sm:$0xff] %v312
                  %v314 = vld [vmem:[%s264 + $0x240] sm:$0xff]
                  %315 = vst [vmem:[%s265 + $0xc0] sm:$0xff] %v314
                  %v316 = vld [vmem:[%s264 + $0x258] sm:$0xff]
                  %317 = vst [vmem:[%s265 + $0xc8] sm:$0xff] %v316
                  %v318 = vld [vmem:[%s264 + $0x270] sm:$0xff]
                  %319 = vst [vmem:[%s265 + $0xd0] sm:$0xff] %v318
                  %v320 = vld [vmem:[%s264 + $0x288] sm:$0xff]
                  %321 = vst [vmem:[%s265 + $0xd8] sm:$0xff] %v320
                  %v322 = vld [vmem:[%s264 + $0x2a0] sm:$0xff]
                  %323 = vst [vmem:[%s265 + $0xe0] sm:$0xff] %v322
                  %v324 = vld [vmem:[%s264 + $0x2b8] sm:$0xff]
                  %325 = vst [vmem:[%s265 + $0xe8] sm:$0xff] %v324
                  %v326 = vld [vmem:[%s264 + $0x2d0] sm:$0xff]
                  %327 = vst [vmem:[%s265 + $0xf0] sm:$0xff] %v326
                  %v328 = vld [vmem:[%s264 + $0x2e8] sm:$0xff]
                  %329 = vst [vmem:[%s265 + $0xf8] sm:$0xff] %v328
                $region52: #{forward.13} parent=46 // loop_footer
                  %s263 = sadd.s32 1, %s259
                $region53: #{forward.13} parent=46 // loop_footer_branch
                  %258 = sbr.rel target = $region49
                $region54: #{forward.13} parent=46 // loop_exit
                  _
              $region47: #{forward.13} parent=31 // pred_fallthru
                _
              // Predicated region
              $region55: #{forward.13} parent=31 // pred_check
                _
              $region56: #{forward.13} parent=31 // pred_check_branch
                %331 = sbr.rel target = $region58
              $region57: #{forward.13} parent=31 // pred_region
                _
              $region58: #{forward.13} parent=31 // pred_fallthru
                _
            $region32: #{forward.13} parent=27 // pred_fallthru
              _
            // Predicated region
            $region33: #{forward.13} parent=27 // pred_check
              _
            $region34: #{forward.13} parent=27 // pred_check_branch
              %181 = sbr.rel target = $region36
            $region35: #{forward.13} parent=27 // pred_region
              %s183 = ssub.s32 256, 1
              loop: start=0, step=1, limit=1
              $region37: #{forward.13} parent=35 // loop_pre_header
                _
              $region38: #{forward.13} parent=35 // loop_header
                %s185 = sphi 0, %s189
                %p186 = scmp.ge.s32.totalorder %s185, 1
                %s190 = sphi %s175, %s175
                %s191 = sphi %s169, %s169
              $region39: #{forward.13} parent=35 // loop_header_branch
                %188 = sbr.rel (%p186) target = $region43
              $region40: #{forward.13} parent=35 // loop_body
                %v192 = vld [vmem:[%s190] sm:%s183]
                %193 = vst [vmem:[%s191] sm:%s183] %v192
                %v194 = vld [vmem:[%s190 + $0x18] sm:%s183]
                %195 = vst [vmem:[%s191 + $0x8] sm:%s183] %v194
                %v196 = vld [vmem:[%s190 + $0x30] sm:%s183]
                %197 = vst [vmem:[%s191 + $0x10] sm:%s183] %v196
                %v198 = vld [vmem:[%s190 + $0x48] sm:%s183]
                %199 = vst [vmem:[%s191 + $0x18] sm:%s183] %v198
                %v200 = vld [vmem:[%s190 + $0x60] sm:%s183]
                %201 = vst [vmem:[%s191 + $0x20] sm:%s183] %v200
                %v202 = vld [vmem:[%s190 + $0x78] sm:%s183]
                %203 = vst [vmem:[%s191 + $0x28] sm:%s183] %v202
                %v204 = vld [vmem:[%s190 + $0x90] sm:%s183]
                %205 = vst [vmem:[%s191 + $0x30] sm:%s183] %v204
                %v206 = vld [vmem:[%s190 + $0xa8] sm:%s183]
                %207 = vst [vmem:[%s191 + $0x38] sm:%s183] %v206
                %v208 = vld [vmem:[%s190 + $0xc0] sm:%s183]
                %209 = vst [vmem:[%s191 + $0x40] sm:%s183] %v208
                %v210 = vld [vmem:[%s190 + $0xd8] sm:%s183]
                %211 = vst [vmem:[%s191 + $0x48] sm:%s183] %v210
                %v212 = vld [vmem:[%s190 + $0xf0] sm:%s183]
                %213 = vst [vmem:[%s191 + $0x50] sm:%s183] %v212
                %v214 = vld [vmem:[%s190 + $0x108] sm:%s183]
                %215 = vst [vmem:[%s191 + $0x58] sm:%s183] %v214
                %v216 = vld [vmem:[%s190 + $0x120] sm:%s183]
                %217 = vst [vmem:[%s191 + $0x60] sm:%s183] %v216
                %v218 = vld [vmem:[%s190 + $0x138] sm:%s183]
                %219 = vst [vmem:[%s191 + $0x68] sm:%s183] %v218
                %v220 = vld [vmem:[%s190 + $0x150] sm:%s183]
                %221 = vst [vmem:[%s191 + $0x70] sm:%s183] %v220
                %v222 = vld [vmem:[%s190 + $0x168] sm:%s183]
                %223 = vst [vmem:[%s191 + $0x78] sm:%s183] %v222
                %v224 = vld [vmem:[%s190 + $0x180] sm:%s183]
                %225 = vst [vmem:[%s191 + $0x80] sm:%s183] %v224
                %v226 = vld [vmem:[%s190 + $0x198] sm:%s183]
                %227 = vst [vmem:[%s191 + $0x88] sm:%s183] %v226
                %v228 = vld [vmem:[%s190 + $0x1b0] sm:%s183]
                %229 = vst [vmem:[%s191 + $0x90] sm:%s183] %v228
                %v230 = vld [vmem:[%s190 + $0x1c8] sm:%s183]
                %231 = vst [vmem:[%s191 + $0x98] sm:%s183] %v230
                %v232 = vld [vmem:[%s190 + $0x1e0] sm:%s183]
                %233 = vst [vmem:[%s191 + $0xa0] sm:%s183] %v232
                %v234 = vld [vmem:[%s190 + $0x1f8] sm:%s183]
                %235 = vst [vmem:[%s191 + $0xa8] sm:%s183] %v234
                %v236 = vld [vmem:[%s190 + $0x210] sm:%s183]
                %237 = vst [vmem:[%s191 + $0xb0] sm:%s183] %v236
                %v238 = vld [vmem:[%s190 + $0x228] sm:%s183]
                %239 = vst [vmem:[%s191 + $0xb8] sm:%s183] %v238
                %v240 = vld [vmem:[%s190 + $0x240] sm:%s183]
                %241 = vst [vmem:[%s191 + $0xc0] sm:%s183] %v240
                %v242 = vld [vmem:[%s190 + $0x258] sm:%s183]
                %243 = vst [vmem:[%s191 + $0xc8] sm:%s183] %v242
                %v244 = vld [vmem:[%s190 + $0x270] sm:%s183]
                %245 = vst [vmem:[%s191 + $0xd0] sm:%s183] %v244
                %v246 = vld [vmem:[%s190 + $0x288] sm:%s183]
                %247 = vst [vmem:[%s191 + $0xd8] sm:%s183] %v246
                %v248 = vld [vmem:[%s190 + $0x2a0] sm:%s183]
                %249 = vst [vmem:[%s191 + $0xe0] sm:%s183] %v248
                %v250 = vld [vmem:[%s190 + $0x2b8] sm:%s183]
                %251 = vst [vmem:[%s191 + $0xe8] sm:%s183] %v250
                %v252 = vld [vmem:[%s190 + $0x2d0] sm:%s183]
                %253 = vst [vmem:[%s191 + $0xf0] sm:%s183] %v252
                %v254 = vld [vmem:[%s190 + $0x2e8] sm:%s183]
                %255 = vst [vmem:[%s191 + $0xf8] sm:%s183] %v254
              $region41: #{forward.13} parent=35 // loop_footer
                %s189 = sadd.s32 1, %s185
              $region42: #{forward.13} parent=35 // loop_footer_branch
                %184 = sbr.rel target = $region38
              $region43: #{forward.13} parent=35 // loop_exit
                _
            $region36: #{forward.13} parent=27 // pred_fallthru
              _
          $region28: #{forward.13} parent=23 // pred_fallthru
            _
          %332 = vnop
        $region24: #{forward.13} parent=19 // pred_fallthru
          _
        // Predicated region
        $region59: #{forward.13} parent=19 // pred_check
          %p333 = pneg %p78
        $region60: #{forward.13} parent=19 // pred_check_branch
          %335 = sbr.rel (%p333) target = $region62
        $region61: #{forward.13} parent=19 // pred_region
          %s336 = smul.u32 32, %s18
          %p337 = scmp.lt.s32.totalorder %s336, 95
          %s338 = scalar_select %p337, %s336, 95
          %p339 = scmp.lt.s32.totalorder %s17, 0
          %s340 = scalar_select %p339, %s17, 0
          %s341 = sadd.s32 %s340, %s338
          %s342 = smul.addr %s341, 4
          %s343 = scalar_lea.vmem %s1, %s342
          %s344 = smul.u32 32, %s18
        $region62: #{forward.13} parent=19 // pred_fallthru
          _
      $region20: #{forward.13} parent=5 // pred_fallthru
        _
      %p345 = scmp.le.s32.totalorder 1, %s9
      %p346 = scmp.lt.s32.totalorder %s9, 7
      %p347 = pnand %p345, %p346
      %p348 = pneg %p347
      // Predicated region
      $region63: #{forward.13} parent=5 // pred_check
        _
      $region64: #{forward.13} parent=5 // pred_check_branch
        %350 = sbr.rel (%p347) target = $region66
      $region65: #{forward.13} parent=5 // pred_region
        %s351 = ssub.s32 %s9, 1
        %s352 = sand.u32 %s43, 1
        %s353 = sand.u32 %s43, 1
        %s354 = smul.addr %s353, 256
        %s355 = scalar_lea.vmem [#allocation3], %s354
        // Predicated region
        $region67: #{forward.13} parent=65 // pred_check
          %p356 = pneg %p56
        $region68: #{forward.13} parent=65 // pred_check_branch
          %358 = sbr.rel (%p356) target = $region70
        $region69: #{forward.13} parent=65 // pred_region
          _
        $region70: #{forward.13} parent=65 // pred_fallthru
          _
        %s359 = sand.u32 %s43, 1
        %s360 = sand.u32 %s43, 1
        %s361 = smul.addr %s360, 256
        %s362 = scalar_lea.vmem [#allocation3], %s361
        %p363 = pneg %p56
        %p364 = pneg %p53
        %s365 = smul.u32 32, %s21
        %p366 = scmp.lt.s32.totalorder %s365, 95
        %s367 = scalar_select %p366, %s365, 95
        %p368 = scmp.lt.s32.totalorder %s20, 0
        %s369 = scalar_select %p368, %s20, 0
        %s370 = sadd.s32 %s369, %s367
        %s371 = smul.addr %s370, 4
        %s372 = scalar_lea.vmem %s1, %s371
        %p373 = pneg %p84
        %p374 = pneg %p81
        %p375 = scmp.lt.s32.totalorder %s20, 0
        %s376 = scalar_select %p375, %s20, 0
        %s377 = scalar_lea.vmem %s2, %s376
        %p378 = pneg %p110
        %p379 = pneg %p107
        %p380 = pneg %p138
        %p381 = pneg %p135
        %s382 = smul.u32 32, %s19
        %p383 = scmp.lt.s32.totalorder %s382, 63
        %s384 = scalar_select %p383, %s382, 63
        %p385 = scmp.lt.s32.totalorder %s20, 0
        %s386 = scalar_select %p385, %s20, 0
        %s387 = sadd.s32 %s386, %s384
        %s388 = smul.addr %s387, 8
        %s389 = scalar_lea.vmem %s3, %s388
        %s390 = smul.u32 32, %s19
        %s391 = smul.u32 2, %s21
        %s392 = smul.u32 32, %s21
        %p393 = scmp.lt.s32.totalorder %s392, 95
        %s394 = scalar_select %p393, %s392, 95
        %p395 = scmp.lt.s32.totalorder %s20, 0
        %s396 = scalar_select %p395, %s20, 0
        %s397 = sadd.s32 %s396, %s394
        %s398 = smul.addr %s397, 4
        %s399 = scalar_lea.vmem %s1, %s398
        %s400 = smul.u32 32, %s21
        %p401 = scmp.lt.s32.totalorder %s20, 0
        %s402 = scalar_select %p401, %s20, 0
        %s403 = scalar_lea.vmem %s2, %s402
        %s404 = smul.u32 32, %s19
        %p405 = scmp.lt.s32.totalorder %s404, 63
        %s406 = scalar_select %p405, %s404, 63
        %p407 = scmp.lt.s32.totalorder %s20, 0
        %s408 = scalar_select %p407, %s20, 0
        %s409 = sadd.s32 %s408, %s406
        %s410 = smul.addr %s409, 8
        %s411 = scalar_lea.vmem %s3, %s410
        %s412 = smul.u32 32, %s19
        %p414 = scmp.eq.s32.totalorder %s21, 0
        // Predicated region
        $region71: #{forward.13} parent=65 // pred_check
          %p415 = pneg %p414
        $region72: #{forward.13} parent=65 // pred_check_branch
          %417 = sbr.rel (%p415) target = $region74
        $region73: #{forward.13} parent=65 // pred_region
          %418 = vst [vmem:[#allocation2] sm:$0xff] 0.0
          %419 = vst [vmem:[#allocation2 + $0x8] sm:$0xff] 0.0
          %420 = vst [vmem:[#allocation2 + $0x10] sm:$0xff] 0.0
          %421 = vst [vmem:[#allocation2 + $0x18] sm:$0xff] 0.0
          %422 = vst [vmem:[#allocation2 + $0x20] sm:$0xff] 0.0
          %423 = vst [vmem:[#allocation2 + $0x28] sm:$0xff] 0.0
          %424 = vst [vmem:[#allocation2 + $0x30] sm:$0xff] 0.0
          %425 = vst [vmem:[#allocation2 + $0x38] sm:$0xff] 0.0
          %426 = vst [vmem:[#allocation2 + $0x40] sm:$0xff] 0.0
          %427 = vst [vmem:[#allocation2 + $0x48] sm:$0xff] 0.0
          %428 = vst [vmem:[#allocation2 + $0x50] sm:$0xff] 0.0
          %429 = vst [vmem:[#allocation2 + $0x58] sm:$0xff] 0.0
          %430 = vst [vmem:[#allocation2 + $0x60] sm:$0xff] 0.0
          %431 = vst [vmem:[#allocation2 + $0x68] sm:$0xff] 0.0
          %432 = vst [vmem:[#allocation2 + $0x70] sm:$0xff] 0.0
          %433 = vst [vmem:[#allocation2 + $0x78] sm:$0xff] 0.0
          %434 = vst [vmem:[#allocation2 + $0x80] sm:$0xff] 0.0
          %435 = vst [vmem:[#allocation2 + $0x88] sm:$0xff] 0.0
          %436 = vst [vmem:[#allocation2 + $0x90] sm:$0xff] 0.0
          %437 = vst [vmem:[#allocation2 + $0x98] sm:$0xff] 0.0
          %438 = vst [vmem:[#allocation2 + $0xa0] sm:$0xff] 0.0
          %439 = vst [vmem:[#allocation2 + $0xa8] sm:$0xff] 0.0
          %440 = vst [vmem:[#allocation2 + $0xb0] sm:$0xff] 0.0
          %441 = vst [vmem:[#allocation2 + $0xb8] sm:$0xff] 0.0
          %442 = vst [vmem:[#allocation2 + $0xc0] sm:$0xff] 0.0
          %443 = vst [vmem:[#allocation2 + $0xc8] sm:$0xff] 0.0
          %444 = vst [vmem:[#allocation2 + $0xd0] sm:$0xff] 0.0
          %445 = vst [vmem:[#allocation2 + $0xd8] sm:$0xff] 0.0
          %446 = vst [vmem:[#allocation2 + $0xe0] sm:$0xff] 0.0
          %447 = vst [vmem:[#allocation2 + $0xe8] sm:$0xff] 0.0
          %448 = vst [vmem:[#allocation2 + $0xf0] sm:$0xff] 0.0
          %449 = vst [vmem:[#allocation2 + $0xf8] sm:$0xff] 0.0
        $region74: #{forward.13} parent=65 // pred_fallthru
          _
        %v450 = vld [vmem:[#allocation2] sm:$0xff]
        %v451 = vld [vmem:[#allocation2 + $0x8] sm:$0xff]
        %v452 = vld [vmem:[#allocation2 + $0x10] sm:$0xff]
        %v453 = vld [vmem:[#allocation2 + $0x18] sm:$0xff]
        %v454 = vld [vmem:[#allocation2 + $0x20] sm:$0xff]
        %v455 = vld [vmem:[#allocation2 + $0x28] sm:$0xff]
        %v456 = vld [vmem:[#allocation2 + $0x30] sm:$0xff]
        %v457 = vld [vmem:[#allocation2 + $0x38] sm:$0xff]
        %v458 = vld [vmem:[#allocation2 + $0x40] sm:$0xff]
        %v459 = vld [vmem:[#allocation2 + $0x48] sm:$0xff]
        %v460 = vld [vmem:[#allocation2 + $0x50] sm:$0xff]
        %v461 = vld [vmem:[#allocation2 + $0x58] sm:$0xff]
        %v462 = vld [vmem:[#allocation2 + $0x60] sm:$0xff]
        %v463 = vld [vmem:[#allocation2 + $0x68] sm:$0xff]
        %v464 = vld [vmem:[#allocation2 + $0x70] sm:$0xff]
        %v465 = vld [vmem:[#allocation2 + $0x78] sm:$0xff]
        %v466 = vld [vmem:[#allocation2 + $0x80] sm:$0xff]
        %v467 = vld [vmem:[#allocation2 + $0x88] sm:$0xff]
        %v468 = vld [vmem:[#allocation2 + $0x90] sm:$0xff]
        %v469 = vld [vmem:[#allocation2 + $0x98] sm:$0xff]
        %v470 = vld [vmem:[#allocation2 + $0xa0] sm:$0xff]
        %v471 = vld [vmem:[#allocation2 + $0xa8] sm:$0xff]
        %v472 = vld [vmem:[#allocation2 + $0xb0] sm:$0xff]
        %v473 = vld [vmem:[#allocation2 + $0xb8] sm:$0xff]
        %v474 = vld [vmem:[#allocation2 + $0xc0] sm:$0xff]
        %v475 = vld [vmem:[#allocation2 + $0xc8] sm:$0xff]
        %v476 = vld [vmem:[#allocation2 + $0xd0] sm:$0xff]
        %v477 = vld [vmem:[#allocation2 + $0xd8] sm:$0xff]
        %v478 = vld [vmem:[#allocation2 + $0xe0] sm:$0xff]
        %v479 = vld [vmem:[#allocation2 + $0xe8] sm:$0xff]
        %v480 = vld [vmem:[#allocation2 + $0xf0] sm:$0xff]
        %v481 = vld [vmem:[#allocation2 + $0xf8] sm:$0xff]
        %v482 = vld [vmem:[%s355] sm:$0xff]
        %v483 = vld [vmem:[%s355 + $0x8] sm:$0xff]
        %v484 = vld [vmem:[%s355 + $0x10] sm:$0xff]
        %v485 = vld [vmem:[%s355 + $0x18] sm:$0xff]
        %v486 = vld [vmem:[%s355 + $0x20] sm:$0xff]
        %v487 = vld [vmem:[%s355 + $0x28] sm:$0xff]
        %v488 = vld [vmem:[%s355 + $0x30] sm:$0xff]
        %v489 = vld [vmem:[%s355 + $0x38] sm:$0xff]
        %v490 = vld [vmem:[%s355 + $0x40] sm:$0xff]
        %v491 = vld [vmem:[%s355 + $0x48] sm:$0xff]
        %v492 = vld [vmem:[%s355 + $0x50] sm:$0xff]
        %v493 = vld [vmem:[%s355 + $0x58] sm:$0xff]
        %v494 = vld [vmem:[%s355 + $0x60] sm:$0xff]
        %v495 = vld [vmem:[%s355 + $0x68] sm:$0xff]
        %v496 = vld [vmem:[%s355 + $0x70] sm:$0xff]
        %v497 = vld [vmem:[%s355 + $0x78] sm:$0xff]
        %v498 = vld [vmem:[%s355 + $0x80] sm:$0xff]
        %v499 = vld [vmem:[%s355 + $0x88] sm:$0xff]
        %v500 = vld [vmem:[%s355 + $0x90] sm:$0xff]
        %v501 = vld [vmem:[%s355 + $0x98] sm:$0xff]
        %v502 = vld [vmem:[%s355 + $0xa0] sm:$0xff]
        %v503 = vld [vmem:[%s355 + $0xa8] sm:$0xff]
        %v504 = vld [vmem:[%s355 + $0xb0] sm:$0xff]
        %v505 = vld [vmem:[%s355 + $0xb8] sm:$0xff]
        %v506 = vld [vmem:[%s355 + $0xc0] sm:$0xff]
        %v507 = vld [vmem:[%s355 + $0xc8] sm:$0xff]
        %v508 = vld [vmem:[%s355 + $0xd0] sm:$0xff]
        %v509 = vld [vmem:[%s355 + $0xd8] sm:$0xff]
        %v510 = vld [vmem:[%s355 + $0xe0] sm:$0xff]
        %v511 = vld [vmem:[%s355 + $0xe8] sm:$0xff]
        %v512 = vld [vmem:[%s355 + $0xf0] sm:$0xff]
        %v513 = vld [vmem:[%s355 + $0xf8] sm:$0xff]
        %v514 = vld [vmem:[%s399] sm:$0xf]
        %v515 = vld [vmem:[%s399 + $0x4] sm:$0xf]
        %v516 = vld [vmem:[%s399 + $0x8] sm:$0xf]
        %v517 = vld [vmem:[%s399 + $0xc] sm:$0xf]
        %v518 = vld [vmem:[%s399 + $0x10] sm:$0xf]
        %v519 = vld [vmem:[%s399 + $0x14] sm:$0xf]
        %v520 = vld [vmem:[%s399 + $0x18] sm:$0xf]
        %v521 = vld [vmem:[%s399 + $0x1c] sm:$0xf]
        %v522 = vld [vmem:[%s399 + $0x20] sm:$0xf]
        %v523 = vld [vmem:[%s399 + $0x24] sm:$0xf]
        %v524 = vld [vmem:[%s399 + $0x28] sm:$0xf]
        %v525 = vld [vmem:[%s399 + $0x2c] sm:$0xf]
        %v526 = vld [vmem:[%s399 + $0x30] sm:$0xf]
        %v527 = vld [vmem:[%s399 + $0x34] sm:$0xf]
        %v528 = vld [vmem:[%s399 + $0x38] sm:$0xf]
        %v529 = vld [vmem:[%s399 + $0x3c] sm:$0xf]
        %v530 = vld [vmem:[%s399 + $0x40] sm:$0xf]
        %v531 = vld [vmem:[%s399 + $0x44] sm:$0xf]
        %v532 = vld [vmem:[%s399 + $0x48] sm:$0xf]
        %v533 = vld [vmem:[%s399 + $0x4c] sm:$0xf]
        %v534 = vld [vmem:[%s399 + $0x50] sm:$0xf]
        %v535 = vld [vmem:[%s399 + $0x54] sm:$0xf]
        %v536 = vld [vmem:[%s399 + $0x58] sm:$0xf]
        %v537 = vld [vmem:[%s399 + $0x5c] sm:$0xf]
        %v538 = vld [vmem:[%s399 + $0x60] sm:$0xf]
        %v539 = vld [vmem:[%s399 + $0x64] sm:$0xf]
        %v540 = vld [vmem:[%s399 + $0x68] sm:$0xf]
        %v541 = vld [vmem:[%s399 + $0x6c] sm:$0xf]
        %v542 = vld [vmem:[%s399 + $0x70] sm:$0xf]
        %v543 = vld [vmem:[%s399 + $0x74] sm:$0xf]
        %v544 = vld [vmem:[%s399 + $0x78] sm:$0xf]
        %v545 = vld [vmem:[%s399 + $0x7c] sm:$0xf]
        %v578 = vunpack.c.l.b16 %v482
        %v579 = vunpack.c.h.b16 %v482
        %v580 = vunpack.c.l.b16 %v483
        %v581 = vunpack.c.h.b16 %v483
        %v582 = vunpack.c.l.b16 %v484
        %v583 = vunpack.c.h.b16 %v484
        %v584 = vunpack.c.l.b16 %v485
        %v585 = vunpack.c.h.b16 %v485
        %v586 = vunpack.c.l.b16 %v486
        %v587 = vunpack.c.h.b16 %v486
        %v588 = vunpack.c.l.b16 %v487
        %v589 = vunpack.c.h.b16 %v487
        %v590 = vunpack.c.l.b16 %v488
        %v591 = vunpack.c.h.b16 %v488
        %v592 = vunpack.c.l.b16 %v489
        %v593 = vunpack.c.h.b16 %v489
        %v594 = vunpack.c.l.b16 %v490
        %v595 = vunpack.c.h.b16 %v490
        %v596 = vunpack.c.l.b16 %v491
        %v597 = vunpack.c.h.b16 %v491
        %v598 = vunpack.c.l.b16 %v492
        %v599 = vunpack.c.h.b16 %v492
        %v600 = vunpack.c.l.b16 %v493
        %v601 = vunpack.c.h.b16 %v493
        %v602 = vunpack.c.l.b16 %v494
        %v603 = vunpack.c.h.b16 %v494
        %v604 = vunpack.c.l.b16 %v495
        %v605 = vunpack.c.h.b16 %v495
        %v606 = vunpack.c.l.b16 %v496
        %v607 = vunpack.c.h.b16 %v496
        %v608 = vunpack.c.l.b16 %v497
        %v609 = vunpack.c.h.b16 %v497
        %v610 = vunpack.c.l.b16 %v498
        %v611 = vunpack.c.h.b16 %v498
        %v612 = vunpack.c.l.b16 %v499
        %v613 = vunpack.c.h.b16 %v499
        %v614 = vunpack.c.l.b16 %v500
        %v615 = vunpack.c.h.b16 %v500
        %v616 = vunpack.c.l.b16 %v501
        %v617 = vunpack.c.h.b16 %v501
        %v618 = vunpack.c.l.b16 %v502
        %v619 = vunpack.c.h.b16 %v502
        %v620 = vunpack.c.l.b16 %v503
        %v621 = vunpack.c.h.b16 %v503
        %v622 = vunpack.c.l.b16 %v504
        %v623 = vunpack.c.h.b16 %v504
        %v624 = vunpack.c.l.b16 %v505
        %v625 = vunpack.c.h.b16 %v505
        %v626 = vunpack.c.l.b16 %v506
        %v627 = vunpack.c.h.b16 %v506
        %v628 = vunpack.c.l.b16 %v507
        %v629 = vunpack.c.h.b16 %v507
        %v630 = vunpack.c.l.b16 %v508
        %v631 = vunpack.c.h.b16 %v508
        %v632 = vunpack.c.l.b16 %v509
        %v633 = vunpack.c.h.b16 %v509
        %v634 = vunpack.c.l.b16 %v510
        %v635 = vunpack.c.h.b16 %v510
        %v636 = vunpack.c.l.b16 %v511
        %v637 = vunpack.c.h.b16 %v511
        %v638 = vunpack.c.l.b16 %v512
        %v639 = vunpack.c.h.b16 %v512
        %v640 = vunpack.c.l.b16 %v513
        %v641 = vunpack.c.h.b16 %v513
        %v642 = vpack.c.b16 %v580, %v578
        %v643 = vpack.c.b16 %v581, %v579
        %v644 = vpack.c.b16 %v584, %v582
        %v645 = vpack.c.b16 %v585, %v583
        %v646 = vpack.c.b16 %v588, %v586
        %v647 = vpack.c.b16 %v589, %v587
        %v648 = vpack.c.b16 %v592, %v590
        %v649 = vpack.c.b16 %v593, %v591
        %v650 = vpack.c.b16 %v596, %v594
        %v651 = vpack.c.b16 %v597, %v595
        %v652 = vpack.c.b16 %v600, %v598
        %v653 = vpack.c.b16 %v601, %v599
        %v654 = vpack.c.b16 %v604, %v602
        %v655 = vpack.c.b16 %v605, %v603
        %v656 = vpack.c.b16 %v608, %v606
        %v657 = vpack.c.b16 %v609, %v607
        %v658 = vpack.c.b16 %v612, %v610
        %v659 = vpack.c.b16 %v613, %v611
        %v660 = vpack.c.b16 %v616, %v614
        %v661 = vpack.c.b16 %v617, %v615
        %v662 = vpack.c.b16 %v620, %v618
        %v663 = vpack.c.b16 %v621, %v619
        %v664 = vpack.c.b16 %v624, %v622
        %v665 = vpack.c.b16 %v625, %v623
        %v666 = vpack.c.b16 %v628, %v626
        %v667 = vpack.c.b16 %v629, %v627
        %v668 = vpack.c.b16 %v632, %v630
        %v669 = vpack.c.b16 %v633, %v631
        %v670 = vpack.c.b16 %v636, %v634
        %v671 = vpack.c.b16 %v637, %v635
        %v672 = vpack.c.b16 %v640, %v638
        %v673 = vpack.c.b16 %v641, %v639
        %v738 = vunpack.c.l.b16 %v514
        %v739 = vunpack.c.l.b16 %v515
        %v740 = vunpack.c.l.b16 %v516
        %v741 = vunpack.c.l.b16 %v517
        %v742 = vunpack.c.l.b16 %v518
        %v743 = vunpack.c.l.b16 %v519
        %v744 = vunpack.c.l.b16 %v520
        %v745 = vunpack.c.l.b16 %v521
        %v746 = vunpack.c.l.b16 %v522
        %v747 = vunpack.c.l.b16 %v523
        %v748 = vunpack.c.l.b16 %v524
        %v749 = vunpack.c.l.b16 %v525
        %v750 = vunpack.c.l.b16 %v526
        %v751 = vunpack.c.l.b16 %v527
        %v752 = vunpack.c.l.b16 %v528
        %v753 = vunpack.c.l.b16 %v529
        %v754 = vunpack.c.l.b16 %v530
        %v755 = vunpack.c.l.b16 %v531
        %v756 = vunpack.c.l.b16 %v532
        %v757 = vunpack.c.l.b16 %v533
        %v758 = vunpack.c.l.b16 %v534
        %v759 = vunpack.c.l.b16 %v535
        %v760 = vunpack.c.l.b16 %v536
        %v761 = vunpack.c.l.b16 %v537
        %v762 = vunpack.c.l.b16 %v538
        %v763 = vunpack.c.l.b16 %v539
        %v764 = vunpack.c.l.b16 %v540
        %v765 = vunpack.c.l.b16 %v541
        %v766 = vunpack.c.l.b16 %v542
        %v767 = vunpack.c.l.b16 %v543
        %v768 = vunpack.c.l.b16 %v544
        %v769 = vunpack.c.l.b16 %v545
        %v770 = vpack.c.b16 %v739, %v738
        %v771 = vpack.c.b16 %v741, %v740
        %v772 = vpack.c.b16 %v743, %v742
        %v773 = vpack.c.b16 %v745, %v744
        %v774 = vpack.c.b16 %v747, %v746
        %v775 = vpack.c.b16 %v749, %v748
        %v776 = vpack.c.b16 %v751, %v750
        %v777 = vpack.c.b16 %v753, %v752
        %v778 = vpack.c.b16 %v755, %v754
        %v779 = vpack.c.b16 %v757, %v756
        %v780 = vpack.c.b16 %v759, %v758
        %v781 = vpack.c.b16 %v761, %v760
        %v782 = vpack.c.b16 %v763, %v762
        %v783 = vpack.c.b16 %v765, %v764
        %v784 = vpack.c.b16 %v767, %v766
        %v785 = vpack.c.b16 %v769, %v768
        %802 = vmatprep.subr.bf16.mxu0 0
        %803 = vmatpush1.bf16.msra.mxu0 %v777
        %804 = vmatprep.subr.bf16.mxu0 0
        %805 = vmatpush1.bf16.msra.mxu0 %v776
        %806 = vmatprep.subr.bf16.mxu0 0
        %807 = vmatpush1.bf16.msra.mxu0 %v775
        %808 = vmatprep.subr.bf16.mxu0 0
        %809 = vmatpush1.bf16.msra.mxu0 %v774
        %810 = vmatprep.subr.bf16.mxu0 0
        %811 = vmatpush1.bf16.msra.mxu0 %v773
        %812 = vmatprep.subr.bf16.mxu0 0
        %813 = vmatpush1.bf16.msra.mxu0 %v772
        %814 = vmatprep.subr.bf16.mxu0 0
        %815 = vmatpush1.bf16.msra.mxu0 %v771
        %816 = vmatprep.subr.bf16.mxu0 0
        %817 = vmatpush1.bf16.msra.mxu0 %v770
        %818 = vmatprep.subr.bf16.mxu0 0
        %819 = vmatpush2.bf16.msra.mxu0 %v785
        %820 = vmatprep.subr.bf16.mxu0 0
        %821 = vmatpush2.bf16.msra.mxu0 %v784
        %822 = vmatprep.subr.bf16.mxu0 0
        %823 = vmatpush2.bf16.msra.mxu0 %v783
        %824 = vmatprep.subr.bf16.mxu0 0
        %825 = vmatpush2.bf16.msra.mxu0 %v782
        %826 = vmatprep.subr.bf16.mxu0 0
        %827 = vmatpush2.bf16.msra.mxu0 %v781
        %828 = vmatprep.subr.bf16.mxu0 0
        %829 = vmatpush2.bf16.msra.mxu0 %v780
        %830 = vmatprep.subr.bf16.mxu0 0
        %831 = vmatpush2.bf16.msra.mxu0 %v779
        %832 = vmatprep.subr.bf16.mxu0 0
        %833 = vmatpush2.bf16.msra.mxu0 %v778
        %834 = vmatprep.mubr.bf16.mxu0 %v643
        %835 = vmatmul.mubr.bf16.gmra.mxu0 %v642
        %v836 = vpop.f32.mrf.mxu0
        %v837 = vadd.f32 0.0, %v836
        %v838 = vpop.f32.mrf.mxu0
        %v839 = vpop.f32.mrf.mxu0
        %v840 = vadd.f32 0.0, %v839
        %v841 = vpop.f32.mrf.mxu0
        %842 = vmatprep.mubr.bf16.mxu0 %v645
        %843 = vmatmul.mubr.bf16.gmra.mxu0 %v644
        %v844 = vpop.f32.mrf.mxu0
        %v845 = vadd.f32 0.0, %v844
        %v846 = vpop.f32.mrf.mxu0
        %v847 = vpop.f32.mrf.mxu0
        %v848 = vadd.f32 0.0, %v847
        %v849 = vpop.f32.mrf.mxu0
        %850 = vmatprep.mubr.bf16.mxu0 %v647
        %851 = vmatmul.mubr.bf16.gmra.mxu0 %v646
        %v852 = vpop.f32.mrf.mxu0
        %v853 = vadd.f32 0.0, %v852
        %v854 = vpop.f32.mrf.mxu0
        %v855 = vpop.f32.mrf.mxu0
        %v856 = vadd.f32 0.0, %v855
        %v857 = vpop.f32.mrf.mxu0
        %858 = vmatprep.mubr.bf16.mxu0 %v649
        %859 = vmatmul.mubr.bf16.gmra.mxu0 %v648
        %v860 = vpop.f32.mrf.mxu0
        %v861 = vadd.f32 0.0, %v860
        %v862 = vpop.f32.mrf.mxu0
        %v863 = vpop.f32.mrf.mxu0
        %v864 = vadd.f32 0.0, %v863
        %v865 = vpop.f32.mrf.mxu0
        %866 = vmatprep.mubr.bf16.mxu0 %v651
        %867 = vmatmul.mubr.bf16.gmra.mxu0 %v650
        %v868 = vpop.f32.mrf.mxu0
        %v869 = vadd.f32 0.0, %v868
        %v870 = vpop.f32.mrf.mxu0
        %v871 = vpop.f32.mrf.mxu0
        %v872 = vadd.f32 0.0, %v871
        %v873 = vpop.f32.mrf.mxu0
        %874 = vmatprep.mubr.bf16.mxu0 %v653
        %875 = vmatmul.mubr.bf16.gmra.mxu0 %v652
        %v876 = vpop.f32.mrf.mxu0
        %v877 = vadd.f32 0.0, %v876
        %v878 = vpop.f32.mrf.mxu0
        %v879 = vpop.f32.mrf.mxu0
        %v880 = vadd.f32 0.0, %v879
        %v881 = vpop.f32.mrf.mxu0
        %882 = vmatprep.mubr.bf16.mxu0 %v655
        %883 = vmatmul.mubr.bf16.gmra.mxu0 %v654
        %v884 = vpop.f32.mrf.mxu0
        %v885 = vadd.f32 0.0, %v884
        %v886 = vpop.f32.mrf.mxu0
        %v887 = vpop.f32.mrf.mxu0
        %v888 = vadd.f32 0.0, %v887
        %v889 = vpop.f32.mrf.mxu0
        %890 = vmatprep.mubr.bf16.mxu0 %v657
        %891 = vmatmul.mubr.bf16.gmra.mxu0 %v656
        %v892 = vpop.f32.mrf.mxu0
        %v893 = vadd.f32 0.0, %v892
        %v894 = vpop.f32.mrf.mxu0
        %v895 = vpop.f32.mrf.mxu0
        %v896 = vadd.f32 0.0, %v895
        %v897 = vpop.f32.mrf.mxu0
        %898 = vmatprep.mubr.bf16.mxu0 %v659
        %899 = vmatmul.mubr.bf16.gmra.mxu0 %v658
        %v900 = vpop.f32.mrf.mxu0
        %v901 = vadd.f32 0.0, %v900
        %v902 = vpop.f32.mrf.mxu0
        %v903 = vpop.f32.mrf.mxu0
        %v904 = vadd.f32 0.0, %v903
        %v905 = vpop.f32.mrf.mxu0
        %906 = vmatprep.mubr.bf16.mxu0 %v661
        %907 = vmatmul.mubr.bf16.gmra.mxu0 %v660
        %v908 = vpop.f32.mrf.mxu0
        %v909 = vadd.f32 0.0, %v908
        %v910 = vpop.f32.mrf.mxu0
        %v911 = vpop.f32.mrf.mxu0
        %v912 = vadd.f32 0.0, %v911
        %v913 = vpop.f32.mrf.mxu0
        %914 = vmatprep.mubr.bf16.mxu0 %v663
        %915 = vmatmul.mubr.bf16.gmra.mxu0 %v662
        %v916 = vpop.f32.mrf.mxu0
        %v917 = vadd.f32 0.0, %v916
        %v918 = vpop.f32.mrf.mxu0
        %v919 = vpop.f32.mrf.mxu0
        %v920 = vadd.f32 0.0, %v919
        %v921 = vpop.f32.mrf.mxu0
        %922 = vmatprep.mubr.bf16.mxu0 %v665
        %923 = vmatmul.mubr.bf16.gmra.mxu0 %v664
        %v924 = vpop.f32.mrf.mxu0
        %v925 = vadd.f32 0.0, %v924
        %v926 = vpop.f32.mrf.mxu0
        %v927 = vpop.f32.mrf.mxu0
        %v928 = vadd.f32 0.0, %v927
        %v929 = vpop.f32.mrf.mxu0
        %930 = vmatprep.mubr.bf16.mxu0 %v667
        %931 = vmatmul.mubr.bf16.gmra.mxu0 %v666
        %v932 = vpop.f32.mrf.mxu0
        %v933 = vadd.f32 0.0, %v932
        %v934 = vpop.f32.mrf.mxu0
        %v935 = vpop.f32.mrf.mxu0
        %v936 = vadd.f32 0.0, %v935
        %v937 = vpop.f32.mrf.mxu0
        %938 = vmatprep.mubr.bf16.mxu0 %v669
        %939 = vmatmul.mubr.bf16.gmra.mxu0 %v668
        %v940 = vpop.f32.mrf.mxu0
        %v941 = vadd.f32 0.0, %v940
        %v942 = vpop.f32.mrf.mxu0
        %v943 = vpop.f32.mrf.mxu0
        %v944 = vadd.f32 0.0, %v943
        %v945 = vpop.f32.mrf.mxu0
        %946 = vmatprep.mubr.bf16.mxu0 %v671
        %947 = vmatmul.mubr.bf16.gmra.mxu0 %v670
        %v948 = vpop.f32.mrf.mxu0
        %v949 = vadd.f32 0.0, %v948
        %v950 = vpop.f32.mrf.mxu0
        %v951 = vpop.f32.mrf.mxu0
        %v952 = vadd.f32 0.0, %v951
        %v953 = vpop.f32.mrf.mxu0
        %954 = vmatprep.mubr.bf16.mxu0 %v673
        %955 = vmatmul.mubr.bf16.gmra.mxu0 %v672
        %v956 = vpop.f32.mrf.mxu0
        %v957 = vadd.f32 0.0, %v956
        %v958 = vpop.f32.mrf.mxu0
        %v959 = vpop.f32.mrf.mxu0
        %v960 = vadd.f32 0.0, %v959
        %v961 = vpop.f32.mrf.mxu0
        %962 = vdwg.mxu0
        %v963 = vadd.f32 %v450, %v837
        %v964 = vadd.f32 %v451, %v840
        %v965 = vadd.f32 %v452, %v845
        %v966 = vadd.f32 %v453, %v848
        %v967 = vadd.f32 %v454, %v853
        %v968 = vadd.f32 %v455, %v856
        %v969 = vadd.f32 %v456, %v861
        %v970 = vadd.f32 %v457, %v864
        %v971 = vadd.f32 %v458, %v869
        %v972 = vadd.f32 %v459, %v872
        %v973 = vadd.f32 %v460, %v877
        %v974 = vadd.f32 %v461, %v880
        %v975 = vadd.f32 %v462, %v885
        %v976 = vadd.f32 %v463, %v888
        %v977 = vadd.f32 %v464, %v893
        %v978 = vadd.f32 %v465, %v896
        %v979 = vadd.f32 %v466, %v901
        %v980 = vadd.f32 %v467, %v904
        %v981 = vadd.f32 %v468, %v909
        %v982 = vadd.f32 %v469, %v912
        %v983 = vadd.f32 %v470, %v917
        %v984 = vadd.f32 %v471, %v920
        %v985 = vadd.f32 %v472, %v925
        %v986 = vadd.f32 %v473, %v928
        %v987 = vadd.f32 %v474, %v933
        %v988 = vadd.f32 %v475, %v936
        %v989 = vadd.f32 %v476, %v941
        %v990 = vadd.f32 %v477, %v944
        %v991 = vadd.f32 %v478, %v949
        %v992 = vadd.f32 %v479, %v952
        %v993 = vadd.f32 %v480, %v957
        %v994 = vadd.f32 %v481, %v960
        %995 = vst [vmem:[#allocation2] sm:$0xff] %v963
        %996 = vst [vmem:[#allocation2 + $0x8] sm:$0xff] %v964
        %997 = vst [vmem:[#allocation2 + $0x10] sm:$0xff] %v965
        %998 = vst [vmem:[#allocation2 + $0x18] sm:$0xff] %v966
        %999 = vst [vmem:[#allocation2 + $0x20] sm:$0xff] %v967
        %1000 = vst [vmem:[#allocation2 + $0x28] sm:$0xff] %v968
        %1001 = vst [vmem:[#allocation2 + $0x30] sm:$0xff] %v969
        %1002 = vst [vmem:[#allocation2 + $0x38] sm:$0xff] %v970
        %1003 = vst [vmem:[#allocation2 + $0x40] sm:$0xff] %v971
        %1004 = vst [vmem:[#allocation2 + $0x48] sm:$0xff] %v972
        %1005 = vst [vmem:[#allocation2 + $0x50] sm:$0xff] %v973
        %1006 = vst [vmem:[#allocation2 + $0x58] sm:$0xff] %v974
        %1007 = vst [vmem:[#allocation2 + $0x60] sm:$0xff] %v975
        %1008 = vst [vmem:[#allocation2 + $0x68] sm:$0xff] %v976
        %1009 = vst [vmem:[#allocation2 + $0x70] sm:$0xff] %v977
        %1010 = vst [vmem:[#allocation2 + $0x78] sm:$0xff] %v978
        %1011 = vst [vmem:[#allocation2 + $0x80] sm:$0xff] %v979
        %1012 = vst [vmem:[#allocation2 + $0x88] sm:$0xff] %v980
        %1013 = vst [vmem:[#allocation2 + $0x90] sm:$0xff] %v981
        %1014 = vst [vmem:[#allocation2 + $0x98] sm:$0xff] %v982
        %1015 = vst [vmem:[#allocation2 + $0xa0] sm:$0xff] %v983
        %1016 = vst [vmem:[#allocation2 + $0xa8] sm:$0xff] %v984
        %1017 = vst [vmem:[#allocation2 + $0xb0] sm:$0xff] %v985
        %1018 = vst [vmem:[#allocation2 + $0xb8] sm:$0xff] %v986
        %1019 = vst [vmem:[#allocation2 + $0xc0] sm:$0xff] %v987
        %1020 = vst [vmem:[#allocation2 + $0xc8] sm:$0xff] %v988
        %1021 = vst [vmem:[#allocation2 + $0xd0] sm:$0xff] %v989
        %1022 = vst [vmem:[#allocation2 + $0xd8] sm:$0xff] %v990
        %1023 = vst [vmem:[#allocation2 + $0xe0] sm:$0xff] %v991
        %1024 = vst [vmem:[#allocation2 + $0xe8] sm:$0xff] %v992
        %1025 = vst [vmem:[#allocation2 + $0xf0] sm:$0xff] %v993
        %1026 = vst [vmem:[#allocation2 + $0xf8] sm:$0xff] %v994
        %p1027 = scmp.eq.s32.totalorder %s21, 2
        // Predicated region
        $region75: #{forward.13} parent=65 // pred_check
          %p1028 = pneg %p1027
        $region76: #{forward.13} parent=65 // pred_check_branch
          %1030 = sbr.rel (%p1028) target = $region78
        $region77: #{forward.13} parent=65 // pred_region
          %v1031 = vld [vmem:[#allocation2] sm:$0xff]
          %v1032 = vld [vmem:[#allocation2 + $0x8] sm:$0xff]
          %v1033 = vld [vmem:[#allocation2 + $0x10] sm:$0xff]
          %v1034 = vld [vmem:[#allocation2 + $0x18] sm:$0xff]
          %v1035 = vld [vmem:[#allocation2 + $0x20] sm:$0xff]
          %v1036 = vld [vmem:[#allocation2 + $0x28] sm:$0xff]
          %v1037 = vld [vmem:[#allocation2 + $0x30] sm:$0xff]
          %v1038 = vld [vmem:[#allocation2 + $0x38] sm:$0xff]
          %v1039 = vld [vmem:[#allocation2 + $0x40] sm:$0xff]
          %v1040 = vld [vmem:[#allocation2 + $0x48] sm:$0xff]
          %v1041 = vld [vmem:[#allocation2 + $0x50] sm:$0xff]
          %v1042 = vld [vmem:[#allocation2 + $0x58] sm:$0xff]
          %v1043 = vld [vmem:[#allocation2 + $0x60] sm:$0xff]
          %v1044 = vld [vmem:[#allocation2 + $0x68] sm:$0xff]
          %v1045 = vld [vmem:[#allocation2 + $0x70] sm:$0xff]
          %v1046 = vld [vmem:[#allocation2 + $0x78] sm:$0xff]
          %v1047 = vld [vmem:[#allocation2 + $0x80] sm:$0xff]
          %v1048 = vld [vmem:[#allocation2 + $0x88] sm:$0xff]
          %v1049 = vld [vmem:[#allocation2 + $0x90] sm:$0xff]
          %v1050 = vld [vmem:[#allocation2 + $0x98] sm:$0xff]
          %v1051 = vld [vmem:[#allocation2 + $0xa0] sm:$0xff]
          %v1052 = vld [vmem:[#allocation2 + $0xa8] sm:$0xff]
          %v1053 = vld [vmem:[#allocation2 + $0xb0] sm:$0xff]
          %v1054 = vld [vmem:[#allocation2 + $0xb8] sm:$0xff]
          %v1055 = vld [vmem:[#allocation2 + $0xc0] sm:$0xff]
          %v1056 = vld [vmem:[#allocation2 + $0xc8] sm:$0xff]
          %v1057 = vld [vmem:[#allocation2 + $0xd0] sm:$0xff]
          %v1058 = vld [vmem:[#allocation2 + $0xd8] sm:$0xff]
          %v1059 = vld [vmem:[#allocation2 + $0xe0] sm:$0xff]
          %v1060 = vld [vmem:[#allocation2 + $0xe8] sm:$0xff]
          %v1061 = vld [vmem:[#allocation2 + $0xf0] sm:$0xff]
          %v1062 = vld [vmem:[#allocation2 + $0xf8] sm:$0xff]
          %v1063 = vld [vmem:[%s403] sm:$0x1]
          %v1065 = vlaneseq
          %v1066 = vshrl.u32 %v1065, 7
          %v1067 = vsub.s32 0, %v1066
          %v1068 = vrot.slane %v1063, %v1067
          %v1070 = vadd.f32 %v1031, %v1068
          %v1071 = vadd.f32 %v1032, %v1068
          %v1072 = vadd.f32 %v1033, %v1068
          %v1073 = vadd.f32 %v1034, %v1068
          %v1074 = vadd.f32 %v1035, %v1068
          %v1075 = vadd.f32 %v1036, %v1068
          %v1076 = vadd.f32 %v1037, %v1068
          %v1077 = vadd.f32 %v1038, %v1068
          %v1078 = vadd.f32 %v1039, %v1068
          %v1079 = vadd.f32 %v1040, %v1068
          %v1080 = vadd.f32 %v1041, %v1068
          %v1081 = vadd.f32 %v1042, %v1068
          %v1082 = vadd.f32 %v1043, %v1068
          %v1083 = vadd.f32 %v1044, %v1068
          %v1084 = vadd.f32 %v1045, %v1068
          %v1085 = vadd.f32 %v1046, %v1068
          %v1086 = vadd.f32 %v1047, %v1068
          %v1087 = vadd.f32 %v1048, %v1068
          %v1088 = vadd.f32 %v1049, %v1068
          %v1089 = vadd.f32 %v1050, %v1068
          %v1090 = vadd.f32 %v1051, %v1068
          %v1091 = vadd.f32 %v1052, %v1068
          %v1092 = vadd.f32 %v1053, %v1068
          %v1093 = vadd.f32 %v1054, %v1068
          %v1094 = vadd.f32 %v1055, %v1068
          %v1095 = vadd.f32 %v1056, %v1068
          %v1096 = vadd.f32 %v1057, %v1068
          %v1097 = vadd.f32 %v1058, %v1068
          %v1098 = vadd.f32 %v1059, %v1068
          %v1099 = vadd.f32 %v1060, %v1068
          %v1100 = vadd.f32 %v1061, %v1068
          %v1101 = vadd.f32 %v1062, %v1068
          %v1102 = vmax.f32 %v1070, 0.0
          %v1103 = vmax.f32 %v1071, 0.0
          %v1104 = vmax.f32 %v1072, 0.0
          %v1105 = vmax.f32 %v1073, 0.0
          %v1106 = vmax.f32 %v1074, 0.0
          %v1107 = vmax.f32 %v1075, 0.0
          %v1108 = vmax.f32 %v1076, 0.0
          %v1109 = vmax.f32 %v1077, 0.0
          %v1110 = vmax.f32 %v1078, 0.0
          %v1111 = vmax.f32 %v1079, 0.0
          %v1112 = vmax.f32 %v1080, 0.0
          %v1113 = vmax.f32 %v1081, 0.0
          %v1114 = vmax.f32 %v1082, 0.0
          %v1115 = vmax.f32 %v1083, 0.0
          %v1116 = vmax.f32 %v1084, 0.0
          %v1117 = vmax.f32 %v1085, 0.0
          %v1118 = vmax.f32 %v1086, 0.0
          %v1119 = vmax.f32 %v1087, 0.0
          %v1120 = vmax.f32 %v1088, 0.0
          %v1121 = vmax.f32 %v1089, 0.0
          %v1122 = vmax.f32 %v1090, 0.0
          %v1123 = vmax.f32 %v1091, 0.0
          %v1124 = vmax.f32 %v1092, 0.0
          %v1125 = vmax.f32 %v1093, 0.0
          %v1126 = vmax.f32 %v1094, 0.0
          %v1127 = vmax.f32 %v1095, 0.0
          %v1128 = vmax.f32 %v1096, 0.0
          %v1129 = vmax.f32 %v1097, 0.0
          %v1130 = vmax.f32 %v1098, 0.0
          %v1131 = vmax.f32 %v1099, 0.0
          %v1132 = vmax.f32 %v1100, 0.0
          %v1133 = vmax.f32 %v1101, 0.0
          %1134 = vst [vmem:[%s411] sm:$0xff] %v1102
          %1135 = vst [vmem:[%s411 + $0x8] sm:$0xff] %v1103
          %1136 = vst [vmem:[%s411 + $0x10] sm:$0xff] %v1104
          %1137 = vst [vmem:[%s411 + $0x18] sm:$0xff] %v1105
          %1138 = vst [vmem:[%s411 + $0x20] sm:$0xff] %v1106
          %1139 = vst [vmem:[%s411 + $0x28] sm:$0xff] %v1107
          %1140 = vst [vmem:[%s411 + $0x30] sm:$0xff] %v1108
          %1141 = vst [vmem:[%s411 + $0x38] sm:$0xff] %v1109
          %1142 = vst [vmem:[%s411 + $0x40] sm:$0xff] %v1110
          %1143 = vst [vmem:[%s411 + $0x48] sm:$0xff] %v1111
          %1144 = vst [vmem:[%s411 + $0x50] sm:$0xff] %v1112
          %1145 = vst [vmem:[%s411 + $0x58] sm:$0xff] %v1113
          %1146 = vst [vmem:[%s411 + $0x60] sm:$0xff] %v1114
          %1147 = vst [vmem:[%s411 + $0x68] sm:$0xff] %v1115
          %1148 = vst [vmem:[%s411 + $0x70] sm:$0xff] %v1116
          %1149 = vst [vmem:[%s411 + $0x78] sm:$0xff] %v1117
          %1150 = vst [vmem:[%s411 + $0x80] sm:$0xff] %v1118
          %1151 = vst [vmem:[%s411 + $0x88] sm:$0xff] %v1119
          %1152 = vst [vmem:[%s411 + $0x90] sm:$0xff] %v1120
          %1153 = vst [vmem:[%s411 + $0x98] sm:$0xff] %v1121
          %1154 = vst [vmem:[%s411 + $0xa0] sm:$0xff] %v1122
          %1155 = vst [vmem:[%s411 + $0xa8] sm:$0xff] %v1123
          %1156 = vst [vmem:[%s411 + $0xb0] sm:$0xff] %v1124
          %1157 = vst [vmem:[%s411 + $0xb8] sm:$0xff] %v1125
          %1158 = vst [vmem:[%s411 + $0xc0] sm:$0xff] %v1126
          %1159 = vst [vmem:[%s411 + $0xc8] sm:$0xff] %v1127
          %1160 = vst [vmem:[%s411 + $0xd0] sm:$0xff] %v1128
          %1161 = vst [vmem:[%s411 + $0xd8] sm:$0xff] %v1129
          %1162 = vst [vmem:[%s411 + $0xe0] sm:$0xff] %v1130
          %1163 = vst [vmem:[%s411 + $0xe8] sm:$0xff] %v1131
          %1164 = vst [vmem:[%s411 + $0xf0] sm:$0xff] %v1132
          %1165 = vst [vmem:[%s411 + $0xf8] sm:$0xff] %v1133
        $region78: #{forward.13} parent=65 // pred_fallthru
          _
        %s1166 = smul.u32 32, %s19
        %p1167 = scmp.lt.s32.totalorder %s1166, 63
        %s1168 = scalar_select %p1167, %s1166, 63
        %p1169 = scmp.lt.s32.totalorder %s20, 0
        %s1170 = scalar_select %p1169, %s20, 0
        %s1171 = sadd.s32 %s1170, %s1168
        %s1172 = smul.addr %s1171, 8
        %s1173 = scalar_lea.vmem %s3, %s1172
        // Predicated region
        $region79: #{forward.13} parent=65 // pred_check
          %p1174 = pneg %p135
        $region80: #{forward.13} parent=65 // pred_check_branch
          %1176 = sbr.rel (%p1174) target = $region82
        $region81: #{forward.13} parent=65 // pred_region
          %s1177 = smul.u32 32, %s19
        $region82: #{forward.13} parent=65 // pred_fallthru
          _
      $region66: #{forward.13} parent=5 // pred_fallthru
        _
      %p1178 = scmp.le.s32.totalorder 2, %s9
      // Predicated region
      $region83: #{forward.13} parent=5 // pred_check
        %p1179 = pneg %p1178
      $region84: #{forward.13} parent=5 // pred_check_branch
        %1181 = sbr.rel (%p1179) target = $region86
      $region85: #{forward.13} parent=5 // pred_region
        %s1182 = ssub.s32 %s9, 2
        // Predicated region
        $region87: #{forward.13} parent=85 // pred_check
          %p1183 = pneg %p141
        $region88: #{forward.13} parent=85 // pred_check_branch
          %1185 = sbr.rel (%p1183) target = $region90
        $region89: #{forward.13} parent=85 // pred_region
          %s1186 = smul.u32 32, %s22
          %p1187 = scmp.lt.s32.totalorder %s1186, 63
          %s1188 = scalar_select %p1187, %s1186, 63
          %p1189 = scmp.lt.s32.totalorder %s23, 0
          %s1190 = scalar_select %p1189, %s23, 0
          %s1191 = sadd.s32 %s1190, %s1188
          %s1192 = smul.addr %s1191, 8
          %s1193 = scalar_lea.vmem %s3, %s1192
        $region90: #{forward.13} parent=85 // pred_fallthru
          _
      $region86: #{forward.13} parent=5 // pred_fallthru
        _
    $region6: #{forward.13} parent=1 // loop_footer
      %s13 = sadd.s32 1, %s9
    $region7: #{forward.13} parent=1 // loop_footer_branch
      %8 = sbr.rel target = $region3
    $region8: #{forward.13} parent=1 // loop_exit
      _

// kernel: forward.14
$region0: #{forward.14}
  #allocation0 [shape = 'u32[]', space=smem, size = 0x4, offset = 0x4, fixed_abs, tag = 'smem constant byte address 0x4 - core index']
  #allocation1 [shape = 'u32[144,128]{1,0:T(1,128)}', space=vmem, size = 0x12000, scoped, tag = 'internal scratch']
  #allocation2 [shape = 'f32[128,128]{1,0:T(8,128)}', space=vmem, size = 0x10000, scoped, tag = 'scratch operand']
  %s0 = inlined_call_operand.vmem [shape: bf16[128,768], index: 0, kind: input, shape index: {}]
  %s1 = inlined_call_operand.vmem [shape: bf16[768,128], index: 1, kind: input, shape index: {}]
  %s2 = inlined_call_operand.vmem [shape: f32[1,128], index: 2, kind: input, shape index: {}]
  %s3 = inlined_call_operand.vmem [shape: f32[128,128], index: 3, kind: output, shape index: {}]
  %s4 = sld [smem:[#allocation0]]
  $region91: #{forward.14} parent=0
    _
  %s6 = ssub.s32 1, %s4
  %s7 = scalar_select 0, %s6, %s4
  $region1: #{forward.14} parent=0
    #allocation3 [shape = 'u8[131072]{0}', space=vmem, size = 0x20000, scoped, tag = 'input window, operand 0']
    loop: start=0, step=1, limit=5
    $region2: #{forward.14} parent=1 // loop_pre_header
      _
    $region3: #{forward.14} parent=1 // loop_header
      %s9 = sphi 0, %s13
      %p10 = scmp.ge.s32.totalorder %s9, 5
      %s16 = sphi 0, %s35
      %s17 = sphi 0, %s31
      %s18 = sphi 0, %s27
      %s19 = sphi 0, %s16
      %s20 = sphi 0, %s17
      %s21 = sphi 0, %s18
      %s22 = sphi 0, %s19
      %s23 = sphi 0, %s20
      %s24 = sphi 0, %s21
      %s40 = sphi 0, %s42
      %s43 = sphi 0, %s40
      %s44 = sphi 0, %s43
      %s60 = sphi 0, %s44
      %s68 = sphi 0, %s70
      %s71 = sphi 0, %s68
      %s72 = sphi 0, %s71
      %s88 = sphi 0, %s72
      %s94 = sphi 0, %s96
      %s97 = sphi 0, %s94
      %s98 = sphi 0, %s97
      %s114 = sphi 0, %s98
      %s122 = sphi 0, %s124
      %s125 = sphi 0, %s122
      %s126 = sphi 0, %s125
      %s142 = sphi 0, %s126
    $region4: #{forward.14} parent=1 // loop_header_branch
      %12 = sbr.rel (%p10) target = $region8
    $region5: #{forward.14} parent=1 // loop_body
      %s14 = ssub.s32 %s9, 1
      %s15 = ssub.s32 %s9, 2
      %s25 = sadd.s32 1, %s18
      %p26 = scmp.ge.s32.totalorder %s25, 3
      %s27 = scalar_select %p26, 0, %s25
      %s28 = sadd.s32 1, %s17
      %s29 = scalar_select %p26, %s28, %s17
      %p30 = scmp.ge.s32.totalorder %s29, 1
      %s31 = scalar_select %p30, 0, %s29
      %s32 = sadd.s32 1, %s16
      %s33 = scalar_select %p30, %s32, %s16
      %p34 = scmp.ge.s32.totalorder %s33, 1
      %s35 = scalar_select %p34, 0, %s33
      %s36 = ssub.s32 %s16, %s35
      %s37 = ssub.s32 %s18, %s27
      %s38 = sor.u32 %s36, %s37
      %p39 = scmp.eq.s32.totalorder %s38, 0
      %s41 = sadd.s32 %s40, 1
      %s42 = scalar_select %p39, %s40, %s41
      %p45 = pneg %p39
      %p46 = scmp.eq.s32.totalorder %s9, 2
      %p47 = por %p45, %p46
      %p48 = scmp.ne.s32.totalorder %s40, %s43
      %p49 = scmp.eq.s32.totalorder %s9, 0
      %p50 = por %p48, %p49
      %p51 = scmp.ne.s32.totalorder %s40, %s43
      %p52 = scmp.eq.s32.totalorder %s14, 2
      %p53 = por %p51, %p52
      %p54 = scmp.ne.s32.totalorder %s43, %s44
      %p55 = scmp.eq.s32.totalorder %s14, 0
      %p56 = por %p54, %p55
      %p57 = scmp.ne.s32.totalorder %s43, %s44
      %p58 = scmp.eq.s32.totalorder %s15, 2
      %p59 = por %p57, %p58
      %p61 = scmp.ne.s32.totalorder %s44, %s60
      %p62 = scmp.eq.s32.totalorder %s15, 0
      %p63 = por %p61, %p62
      %s64 = ssub.s32 %s18, %s27
      %s65 = ssub.s32 %s17, %s31
      %s66 = sor.u32 %s64, %s65
      %p67 = scmp.eq.s32.totalorder %s66, 0
      %s69 = sadd.s32 %s68, 1
      %s70 = scalar_select %p67, %s68, %s69
      %p73 = pneg %p67
      %p74 = scmp.eq.s32.totalorder %s9, 2
      %p75 = por %p73, %p74
      %p76 = scmp.ne.s32.totalorder %s68, %s71
      %p77 = scmp.eq.s32.totalorder %s9, 0
      %p78 = por %p76, %p77
      %p79 = scmp.ne.s32.totalorder %s68, %s71
      %p80 = scmp.eq.s32.totalorder %s14, 2
      %p81 = por %p79, %p80
      %p82 = scmp.ne.s32.totalorder %s71, %s72
      %p83 = scmp.eq.s32.totalorder %s14, 0
      %p84 = por %p82, %p83
      %p85 = scmp.ne.s32.totalorder %s71, %s72
      %p86 = scmp.eq.s32.totalorder %s15, 2
      %p87 = por %p85, %p86
      %p89 = scmp.ne.s32.totalorder %s72, %s88
      %p90 = scmp.eq.s32.totalorder %s15, 0
      %p91 = por %p89, %p90
      %s92 = ssub.s32 %s17, %s31
      %p93 = scmp.eq.s32.totalorder %s92, 0
      %s95 = sadd.s32 %s94, 1
      %s96 = scalar_select %p93, %s94, %s95
      %p99 = pneg %p93
      %p100 = scmp.eq.s32.totalorder %s9, 2
      %p101 = por %p99, %p100
      %p102 = scmp.ne.s32.totalorder %s94, %s97
      %p103 = scmp.eq.s32.totalorder %s9, 0
      %p104 = por %p102, %p103
      %p105 = scmp.ne.s32.totalorder %s94, %s97
      %p106 = scmp.eq.s32.totalorder %s14, 2
      %p107 = por %p105, %p106
      %p108 = scmp.ne.s32.totalorder %s97, %s98
      %p109 = scmp.eq.s32.totalorder %s14, 0
      %p110 = por %p108, %p109
      %p111 = scmp.ne.s32.totalorder %s97, %s98
      %p112 = scmp.eq.s32.totalorder %s15, 2
      %p113 = por %p111, %p112
      %p115 = scmp.ne.s32.totalorder %s98, %s114
      %p116 = scmp.eq.s32.totalorder %s15, 0
      %p117 = por %p115, %p116
      %s118 = ssub.s32 %s16, %s35
      %s119 = ssub.s32 %s17, %s31
      %s120 = sor.u32 %s118, %s119
      %p121 = scmp.eq.s32.totalorder %s120, 0
      %s123 = sadd.s32 %s122, 1
      %s124 = scalar_select %p121, %s122, %s123
      %p127 = pneg %p121
      %p128 = scmp.eq.s32.totalorder %s9, 2
      %p129 = por %p127, %p128
      %p130 = scmp.ne.s32.totalorder %s122, %s125
      %p131 = scmp.eq.s32.totalorder %s9, 0
      %p132 = por %p130, %p131
      %p133 = scmp.ne.s32.totalorder %s122, %s125
      %p134 = scmp.eq.s32.totalorder %s14, 2
      %p135 = por %p133, %p134
      %p136 = scmp.ne.s32.totalorder %s125, %s126
      %p137 = scmp.eq.s32.totalorder %s14, 0
      %p138 = por %p136, %p137
      %p139 = scmp.ne.s32.totalorder %s125, %s126
      %p140 = scmp.eq.s32.totalorder %s15, 2
      %p141 = por %p139, %p140
      %p143 = scmp.ne.s32.totalorder %s126, %s142
      %p144 = scmp.eq.s32.totalorder %s15, 0
      %p145 = por %p143, %p144
      %p146 = scmp.le.s32.totalorder 1, %s9
      %p147 = scmp.lt.s32.totalorder %s9, 4
      %p148 = pnand %p146, %p147
      %p149 = pneg %p148
      // Predicated region
      $region9: #{forward.14} parent=5 // pred_check
        _
      $region10: #{forward.14} parent=5 // pred_check_branch
        %151 = sbr.rel (%p148) target = $region12
      $region11: #{forward.14} parent=5 // pred_region
        %s152 = ssub.s32 %s9, 1
        // Predicated region
        $region13: #{forward.14} parent=11 // pred_check
          %p153 = pneg %p110
        $region14: #{forward.14} parent=11 // pred_check_branch
          %155 = sbr.rel (%p153) target = $region16
        $region15: #{forward.14} parent=11 // pred_region
          %p156 = scmp.lt.s32.totalorder %s20, 0
          %s157 = scalar_select %p156, %s20, 0
          %s158 = scalar_lea.vmem %s2, %s157
        $region16: #{forward.14} parent=11 // pred_fallthru
          _
      $region12: #{forward.14} parent=5 // pred_fallthru
        _
      %p159 = scmp.lt.s32.totalorder %s9, 3
      // Predicated region
      $region17: #{forward.14} parent=5 // pred_check
        %p160 = pneg %p159
      $region18: #{forward.14} parent=5 // pred_check_branch
        %162 = sbr.rel (%p160) target = $region20
      $region19: #{forward.14} parent=5 // pred_region
        // Predicated region
        $region21: #{forward.14} parent=19 // pred_check
          %p163 = pneg %p50
        $region22: #{forward.14} parent=19 // pred_check_branch
          %165 = sbr.rel (%p163) target = $region24
        $region23: #{forward.14} parent=19 // pred_region
          %s166 = sand.u32 %s40, 1
          %s167 = sand.u32 %s40, 1
          %s168 = smul.addr %s167, 128
          %s169 = scalar_lea.vmem [#allocation3], %s168
          %s170 = smul.u32 16, %s16
          %s171 = smul.u32 2, %s18
          %s172 = smul.addr %s170, 6
          %s173 = sadd.s32 %s171, %s172
          %s174 = smul.addr %s173, 4
          %s175 = scalar_lea.vmem %s0, %s174
          // Predicated region
          $region25: #{forward.14} parent=23 // pred_check
            _
          $region26: #{forward.14} parent=23 // pred_check_branch
            %177 = sbr.rel (0) target = $region28
          $region27: #{forward.14} parent=23 // pred_region
            // Predicated region
            $region29: #{forward.14} parent=27 // pred_check
              _
            $region30: #{forward.14} parent=27 // pred_check_branch
              %179 = sbr.rel (0) target = $region32
            $region31: #{forward.14} parent=27 // pred_region
              // Predicated region
              $region44: #{forward.14} parent=31 // pred_check
                _
              $region45: #{forward.14} parent=31 // pred_check_branch
                %225 = sbr.rel (0) target = $region47
              $region46: #{forward.14} parent=31 // pred_region
                loop: start=0, step=1, limit=1
                $region48: #{forward.14} parent=46 // loop_pre_header
                  _
                $region49: #{forward.14} parent=46 // loop_header
                  %s227 = sphi 0, %s231
                  %p228 = scmp.ge.s32.totalorder %s227, 1
                  %s232 = sphi %s175, %s175
                  %s233 = sphi %s169, %s169
                $region50: #{forward.14} parent=46 // loop_header_branch
                  %230 = sbr.rel (%p228) target = $region54
                $region51: #{forward.14} parent=46 // loop_body
                  %v234 = vld [vmem:[%s232] sm:$0xff]
                  %235 = vst [vmem:[%s233] sm:$0xff] %v234
                  %v236 = vld [vmem:[%s232 + $0x18] sm:$0xff]
                  %237 = vst [vmem:[%s233 + $0x8] sm:$0xff] %v236
                  %v238 = vld [vmem:[%s232 + $0x30] sm:$0xff]
                  %239 = vst [vmem:[%s233 + $0x10] sm:$0xff] %v238
                  %v240 = vld [vmem:[%s232 + $0x48] sm:$0xff]
                  %241 = vst [vmem:[%s233 + $0x18] sm:$0xff] %v240
                  %v242 = vld [vmem:[%s232 + $0x60] sm:$0xff]
                  %243 = vst [vmem:[%s233 + $0x20] sm:$0xff] %v242
                  %v244 = vld [vmem:[%s232 + $0x78] sm:$0xff]
                  %245 = vst [vmem:[%s233 + $0x28] sm:$0xff] %v244
                  %v246 = vld [vmem:[%s232 + $0x90] sm:$0xff]
                  %247 = vst [vmem:[%s233 + $0x30] sm:$0xff] %v246
                  %v248 = vld [vmem:[%s232 + $0xa8] sm:$0xff]
                  %249 = vst [vmem:[%s233 + $0x38] sm:$0xff] %v248
                  %v250 = vld [vmem:[%s232 + $0xc0] sm:$0xff]
                  %251 = vst [vmem:[%s233 + $0x40] sm:$0xff] %v250
                  %v252 = vld [vmem:[%s232 + $0xd8] sm:$0xff]
                  %253 = vst [vmem:[%s233 + $0x48] sm:$0xff] %v252
                  %v254 = vld [vmem:[%s232 + $0xf0] sm:$0xff]
                  %255 = vst [vmem:[%s233 + $0x50] sm:$0xff] %v254
                  %v256 = vld [vmem:[%s232 + $0x108] sm:$0xff]
                  %257 = vst [vmem:[%s233 + $0x58] sm:$0xff] %v256
                  %v258 = vld [vmem:[%s232 + $0x120] sm:$0xff]
                  %259 = vst [vmem:[%s233 + $0x60] sm:$0xff] %v258
                  %v260 = vld [vmem:[%s232 + $0x138] sm:$0xff]
                  %261 = vst [vmem:[%s233 + $0x68] sm:$0xff] %v260
                  %v262 = vld [vmem:[%s232 + $0x150] sm:$0xff]
                  %263 = vst [vmem:[%s233 + $0x70] sm:$0xff] %v262
                  %v264 = vld [vmem:[%s232 + $0x168] sm:$0xff]
                  %265 = vst [vmem:[%s233 + $0x78] sm:$0xff] %v264
                $region52: #{forward.14} parent=46 // loop_footer
                  %s231 = sadd.s32 1, %s227
                $region53: #{forward.14} parent=46 // loop_footer_branch
                  %226 = sbr.rel target = $region49
                $region54: #{forward.14} parent=46 // loop_exit
                  _
              $region47: #{forward.14} parent=31 // pred_fallthru
                _
              // Predicated region
              $region55: #{forward.14} parent=31 // pred_check
                _
              $region56: #{forward.14} parent=31 // pred_check_branch
                %267 = sbr.rel target = $region58
              $region57: #{forward.14} parent=31 // pred_region
                _
              $region58: #{forward.14} parent=31 // pred_fallthru
                _
            $region32: #{forward.14} parent=27 // pred_fallthru
              _
            // Predicated region
            $region33: #{forward.14} parent=27 // pred_check
              _
            $region34: #{forward.14} parent=27 // pred_check_branch
              %181 = sbr.rel target = $region36
            $region35: #{forward.14} parent=27 // pred_region
              %s183 = ssub.s32 256, 1
              loop: start=0, step=1, limit=1
              $region37: #{forward.14} parent=35 // loop_pre_header
                _
              $region38: #{forward.14} parent=35 // loop_header
                %s185 = sphi 0, %s189
                %p186 = scmp.ge.s32.totalorder %s185, 1
                %s190 = sphi %s175, %s175
                %s191 = sphi %s169, %s169
              $region39: #{forward.14} parent=35 // loop_header_branch
                %188 = sbr.rel (%p186) target = $region43
              $region40: #{forward.14} parent=35 // loop_body
                %v192 = vld [vmem:[%s190] sm:%s183]
                %193 = vst [vmem:[%s191] sm:%s183] %v192
                %v194 = vld [vmem:[%s190 + $0x18] sm:%s183]
                %195 = vst [vmem:[%s191 + $0x8] sm:%s183] %v194
                %v196 = vld [vmem:[%s190 + $0x30] sm:%s183]
                %197 = vst [vmem:[%s191 + $0x10] sm:%s183] %v196
                %v198 = vld [vmem:[%s190 + $0x48] sm:%s183]
                %199 = vst [vmem:[%s191 + $0x18] sm:%s183] %v198
                %v200 = vld [vmem:[%s190 + $0x60] sm:%s183]
                %201 = vst [vmem:[%s191 + $0x20] sm:%s183] %v200
                %v202 = vld [vmem:[%s190 + $0x78] sm:%s183]
                %203 = vst [vmem:[%s191 + $0x28] sm:%s183] %v202
                %v204 = vld [vmem:[%s190 + $0x90] sm:%s183]
                %205 = vst [vmem:[%s191 + $0x30] sm:%s183] %v204
                %v206 = vld [vmem:[%s190 + $0xa8] sm:%s183]
                %207 = vst [vmem:[%s191 + $0x38] sm:%s183] %v206
                %v208 = vld [vmem:[%s190 + $0xc0] sm:%s183]
                %209 = vst [vmem:[%s191 + $0x40] sm:%s183] %v208
                %v210 = vld [vmem:[%s190 + $0xd8] sm:%s183]
                %211 = vst [vmem:[%s191 + $0x48] sm:%s183] %v210
                %v212 = vld [vmem:[%s190 + $0xf0] sm:%s183]
                %213 = vst [vmem:[%s191 + $0x50] sm:%s183] %v212
                %v214 = vld [vmem:[%s190 + $0x108] sm:%s183]
                %215 = vst [vmem:[%s191 + $0x58] sm:%s183] %v214
                %v216 = vld [vmem:[%s190 + $0x120] sm:%s183]
                %217 = vst [vmem:[%s191 + $0x60] sm:%s183] %v216
                %v218 = vld [vmem:[%s190 + $0x138] sm:%s183]
                %219 = vst [vmem:[%s191 + $0x68] sm:%s183] %v218
                %v220 = vld [vmem:[%s190 + $0x150] sm:%s183]
                %221 = vst [vmem:[%s191 + $0x70] sm:%s183] %v220
                %v222 = vld [vmem:[%s190 + $0x168] sm:%s183]
                %223 = vst [vmem:[%s191 + $0x78] sm:%s183] %v222
              $region41: #{forward.14} parent=35 // loop_footer
                %s189 = sadd.s32 1, %s185
              $region42: #{forward.14} parent=35 // loop_footer_branch
                %184 = sbr.rel target = $region38
              $region43: #{forward.14} parent=35 // loop_exit
                _
            $region36: #{forward.14} parent=27 // pred_fallthru
              _
          $region28: #{forward.14} parent=23 // pred_fallthru
            _
          %268 = vnop
        $region24: #{forward.14} parent=19 // pred_fallthru
          _
        // Predicated region
        $region59: #{forward.14} parent=19 // pred_check
          %p269 = pneg %p78
        $region60: #{forward.14} parent=19 // pred_check_branch
          %271 = sbr.rel (%p269) target = $region62
        $region61: #{forward.14} parent=19 // pred_region
          %s272 = smul.u32 32, %s18
          %p273 = scmp.lt.s32.totalorder %s272, 95
          %s274 = scalar_select %p273, %s272, 95
          %p275 = scmp.lt.s32.totalorder %s17, 0
          %s276 = scalar_select %p275, %s17, 0
          %s277 = sadd.s32 %s276, %s274
          %s278 = smul.addr %s277, 4
          %s279 = scalar_lea.vmem %s1, %s278
          %s280 = smul.u32 32, %s18
        $region62: #{forward.14} parent=19 // pred_fallthru
          _
      $region20: #{forward.14} parent=5 // pred_fallthru
        _
      %p281 = scmp.le.s32.totalorder 1, %s9
      %p282 = scmp.lt.s32.totalorder %s9, 4
      %p283 = pnand %p281, %p282
      %p284 = pneg %p283
      // Predicated region
      $region63: #{forward.14} parent=5 // pred_check
        _
      $region64: #{forward.14} parent=5 // pred_check_branch
        %286 = sbr.rel (%p283) target = $region66
      $region65: #{forward.14} parent=5 // pred_region
        %s287 = ssub.s32 %s9, 1
        %s288 = sand.u32 %s43, 1
        %s289 = sand.u32 %s43, 1
        %s290 = smul.addr %s289, 128
        %s291 = scalar_lea.vmem [#allocation3], %s290
        // Predicated region
        $region67: #{forward.14} parent=65 // pred_check
          %p292 = pneg %p56
        $region68: #{forward.14} parent=65 // pred_check_branch
          %294 = sbr.rel (%p292) target = $region70
        $region69: #{forward.14} parent=65 // pred_region
          _
        $region70: #{forward.14} parent=65 // pred_fallthru
          _
        %s295 = sand.u32 %s43, 1
        %s296 = sand.u32 %s43, 1
        %s297 = smul.addr %s296, 128
        %s298 = scalar_lea.vmem [#allocation3], %s297
        %p299 = pneg %p56
        %p300 = pneg %p53
        %s301 = smul.u32 32, %s21
        %p302 = scmp.lt.s32.totalorder %s301, 95
        %s303 = scalar_select %p302, %s301, 95
        %p304 = scmp.lt.s32.totalorder %s20, 0
        %s305 = scalar_select %p304, %s20, 0
        %s306 = sadd.s32 %s305, %s303
        %s307 = smul.addr %s306, 4
        %s308 = scalar_lea.vmem %s1, %s307
        %p309 = pneg %p84
        %p310 = pneg %p81
        %p311 = scmp.lt.s32.totalorder %s20, 0
        %s312 = scalar_select %p311, %s20, 0
        %s313 = scalar_lea.vmem %s2, %s312
        %p314 = pneg %p110
        %p315 = pneg %p107
        %p316 = pneg %p138
        %p317 = pneg %p135
        %s318 = smul.u32 16, %s19
        %p319 = scmp.lt.s32.totalorder %s318, 15
        %s320 = scalar_select %p319, %s318, 15
        %p321 = scmp.lt.s32.totalorder %s20, 0
        %s322 = scalar_select %p321, %s20, 0
        %s323 = sadd.s32 %s322, %s320
        %s324 = smul.addr %s323, 8
        %s325 = scalar_lea.vmem %s3, %s324
        %s326 = smul.u32 16, %s19
        %s327 = smul.u32 2, %s21
        %s328 = smul.u32 32, %s21
        %p329 = scmp.lt.s32.totalorder %s328, 95
        %s330 = scalar_select %p329, %s328, 95
        %p331 = scmp.lt.s32.totalorder %s20, 0
        %s332 = scalar_select %p331, %s20, 0
        %s333 = sadd.s32 %s332, %s330
        %s334 = smul.addr %s333, 4
        %s335 = scalar_lea.vmem %s1, %s334
        %s336 = smul.u32 32, %s21
        %p337 = scmp.lt.s32.totalorder %s20, 0
        %s338 = scalar_select %p337, %s20, 0
        %s339 = scalar_lea.vmem %s2, %s338
        %s340 = smul.u32 16, %s19
        %p341 = scmp.lt.s32.totalorder %s340, 15
        %s342 = scalar_select %p341, %s340, 15
        %p343 = scmp.lt.s32.totalorder %s20, 0
        %s344 = scalar_select %p343, %s20, 0
        %s345 = sadd.s32 %s344, %s342
        %s346 = smul.addr %s345, 8
        %s347 = scalar_lea.vmem %s3, %s346
        %s348 = smul.u32 16, %s19
        %p350 = scmp.eq.s32.totalorder %s21, 0
        // Predicated region
        $region71: #{forward.14} parent=65 // pred_check
          %p351 = pneg %p350
        $region72: #{forward.14} parent=65 // pred_check_branch
          %353 = sbr.rel (%p351) target = $region74
        $region73: #{forward.14} parent=65 // pred_region
          %354 = vst [vmem:[#allocation2] sm:$0xff] 0.0
          %355 = vst [vmem:[#allocation2 + $0x8] sm:$0xff] 0.0
          %356 = vst [vmem:[#allocation2 + $0x10] sm:$0xff] 0.0
          %357 = vst [vmem:[#allocation2 + $0x18] sm:$0xff] 0.0
          %358 = vst [vmem:[#allocation2 + $0x20] sm:$0xff] 0.0
          %359 = vst [vmem:[#allocation2 + $0x28] sm:$0xff] 0.0
          %360 = vst [vmem:[#allocation2 + $0x30] sm:$0xff] 0.0
          %361 = vst [vmem:[#allocation2 + $0x38] sm:$0xff] 0.0
          %362 = vst [vmem:[#allocation2 + $0x40] sm:$0xff] 0.0
          %363 = vst [vmem:[#allocation2 + $0x48] sm:$0xff] 0.0
          %364 = vst [vmem:[#allocation2 + $0x50] sm:$0xff] 0.0
          %365 = vst [vmem:[#allocation2 + $0x58] sm:$0xff] 0.0
          %366 = vst [vmem:[#allocation2 + $0x60] sm:$0xff] 0.0
          %367 = vst [vmem:[#allocation2 + $0x68] sm:$0xff] 0.0
          %368 = vst [vmem:[#allocation2 + $0x70] sm:$0xff] 0.0
          %369 = vst [vmem:[#allocation2 + $0x78] sm:$0xff] 0.0
        $region74: #{forward.14} parent=65 // pred_fallthru
          _
        %v370 = vld [vmem:[#allocation2] sm:$0xff]
        %v371 = vld [vmem:[#allocation2 + $0x8] sm:$0xff]
        %v372 = vld [vmem:[#allocation2 + $0x10] sm:$0xff]
        %v373 = vld [vmem:[#allocation2 + $0x18] sm:$0xff]
        %v374 = vld [vmem:[#allocation2 + $0x20] sm:$0xff]
        %v375 = vld [vmem:[#allocation2 + $0x28] sm:$0xff]
        %v376 = vld [vmem:[#allocation2 + $0x30] sm:$0xff]
        %v377 = vld [vmem:[#allocation2 + $0x38] sm:$0xff]
        %v378 = vld [vmem:[#allocation2 + $0x40] sm:$0xff]
        %v379 = vld [vmem:[#allocation2 + $0x48] sm:$0xff]
        %v380 = vld [vmem:[#allocation2 + $0x50] sm:$0xff]
        %v381 = vld [vmem:[#allocation2 + $0x58] sm:$0xff]
        %v382 = vld [vmem:[#allocation2 + $0x60] sm:$0xff]
        %v383 = vld [vmem:[#allocation2 + $0x68] sm:$0xff]
        %v384 = vld [vmem:[#allocation2 + $0x70] sm:$0xff]
        %v385 = vld [vmem:[#allocation2 + $0x78] sm:$0xff]
        %v386 = vld [vmem:[%s291] sm:$0xff]
        %v387 = vld [vmem:[%s291 + $0x8] sm:$0xff]
        %v388 = vld [vmem:[%s291 + $0x10] sm:$0xff]
        %v389 = vld [vmem:[%s291 + $0x18] sm:$0xff]
        %v390 = vld [vmem:[%s291 + $0x20] sm:$0xff]
        %v391 = vld [vmem:[%s291 + $0x28] sm:$0xff]
        %v392 = vld [vmem:[%s291 + $0x30] sm:$0xff]
        %v393 = vld [vmem:[%s291 + $0x38] sm:$0xff]
        %v394 = vld [vmem:[%s291 + $0x40] sm:$0xff]
        %v395 = vld [vmem:[%s291 + $0x48] sm:$0xff]
        %v396 = vld [vmem:[%s291 + $0x50] sm:$0xff]
        %v397 = vld [vmem:[%s291 + $0x58] sm:$0xff]
        %v398 = vld [vmem:[%s291 + $0x60] sm:$0xff]
        %v399 = vld [vmem:[%s291 + $0x68] sm:$0xff]
        %v400 = vld [vmem:[%s291 + $0x70] sm:$0xff]
        %v401 = vld [vmem:[%s291 + $0x78] sm:$0xff]
        %v402 = vld [vmem:[%s335] sm:$0xf]
        %v403 = vld [vmem:[%s335 + $0x4] sm:$0xf]
        %v404 = vld [vmem:[%s335 + $0x8] sm:$0xf]
        %v405 = vld [vmem:[%s335 + $0xc] sm:$0xf]
        %v406 = vld [vmem:[%s335 + $0x10] sm:$0xf]
        %v407 = vld [vmem:[%s335 + $0x14] sm:$0xf]
        %v408 = vld [vmem:[%s335 + $0x18] sm:$0xf]
        %v409 = vld [vmem:[%s335 + $0x1c] sm:$0xf]
        %v410 = vld [vmem:[%s335 + $0x20] sm:$0xf]
        %v411 = vld [vmem:[%s335 + $0x24] sm:$0xf]
        %v412 = vld [vmem:[%s335 + $0x28] sm:$0xf]
        %v413 = vld [vmem:[%s335 + $0x2c] sm:$0xf]
        %v414 = vld [vmem:[%s335 + $0x30] sm:$0xf]
        %v415 = vld [vmem:[%s335 + $0x34] sm:$0xf]
        %v416 = vld [vmem:[%s335 + $0x38] sm:$0xf]
        %v417 = vld [vmem:[%s335 + $0x3c] sm:$0xf]
        %v418 = vld [vmem:[%s335 + $0x40] sm:$0xf]
        %v419 = vld [vmem:[%s335 + $0x44] sm:$0xf]
        %v420 = vld [vmem:[%s335 + $0x48] sm:$0xf]
        %v421 = vld [vmem:[%s335 + $0x4c] sm:$0xf]
        %v422 = vld [vmem:[%s335 + $0x50] sm:$0xf]
        %v423 = vld [vmem:[%s335 + $0x54] sm:$0xf]
        %v424 = vld [vmem:[%s335 + $0x58] sm:$0xf]
        %v425 = vld [vmem:[%s335 + $0x5c] sm:$0xf]
        %v426 = vld [vmem:[%s335 + $0x60] sm:$0xf]
        %v427 = vld [vmem:[%s335 + $0x64] sm:$0xf]
        %v428 = vld [vmem:[%s335 + $0x68] sm:$0xf]
        %v429 = vld [vmem:[%s335 + $0x6c] sm:$0xf]
        %v430 = vld [vmem:[%s335 + $0x70] sm:$0xf]
        %v431 = vld [vmem:[%s335 + $0x74] sm:$0xf]
        %v432 = vld [vmem:[%s335 + $0x78] sm:$0xf]
        %v433 = vld [vmem:[%s335 + $0x7c] sm:$0xf]
        %v450 = vunpack.c.l.b16 %v386
        %v451 = vunpack.c.h.b16 %v386
        %v452 = vunpack.c.l.b16 %v387
        %v453 = vunpack.c.h.b16 %v387
        %v454 = vunpack.c.l.b16 %v388
        %v455 = vunpack.c.h.b16 %v388
        %v456 = vunpack.c.l.b16 %v389
        %v457 = vunpack.c.h.b16 %v389
        %v458 = vunpack.c.l.b16 %v390
        %v459 = vunpack.c.h.b16 %v390
        %v460 = vunpack.c.l.b16 %v391
        %v461 = vunpack.c.h.b16 %v391
        %v462 = vunpack.c.l.b16 %v392
        %v463 = vunpack.c.h.b16 %v392
        %v464 = vunpack.c.l.b16 %v393
        %v465 = vunpack.c.h.b16 %v393
        %v466 = vunpack.c.l.b16 %v394
        %v467 = vunpack.c.h.b16 %v394
        %v468 = vunpack.c.l.b16 %v395
        %v469 = vunpack.c.h.b16 %v395
        %v470 = vunpack.c.l.b16 %v396
        %v471 = vunpack.c.h.b16 %v396
        %v472 = vunpack.c.l.b16 %v397
        %v473 = vunpack.c.h.b16 %v397
        %v474 = vunpack.c.l.b16 %v398
        %v475 = vunpack.c.h.b16 %v398
        %v476 = vunpack.c.l.b16 %v399
        %v477 = vunpack.c.h.b16 %v399
        %v478 = vunpack.c.l.b16 %v400
        %v479 = vunpack.c.h.b16 %v400
        %v480 = vunpack.c.l.b16 %v401
        %v481 = vunpack.c.h.b16 %v401
        %v482 = vpack.c.b16 %v452, %v450
        %v483 = vpack.c.b16 %v453, %v451
        %v484 = vpack.c.b16 %v456, %v454
        %v485 = vpack.c.b16 %v457, %v455
        %v486 = vpack.c.b16 %v460, %v458
        %v487 = vpack.c.b16 %v461, %v459
        %v488 = vpack.c.b16 %v464, %v462
        %v489 = vpack.c.b16 %v465, %v463
        %v490 = vpack.c.b16 %v468, %v466
        %v491 = vpack.c.b16 %v469, %v467
        %v492 = vpack.c.b16 %v472, %v470
        %v493 = vpack.c.b16 %v473, %v471
        %v494 = vpack.c.b16 %v476, %v474
        %v495 = vpack.c.b16 %v477, %v475
        %v496 = vpack.c.b16 %v480, %v478
        %v497 = vpack.c.b16 %v481, %v479
        %v546 = vunpack.c.l.b16 %v402
        %v547 = vunpack.c.l.b16 %v403
        %v548 = vunpack.c.l.b16 %v404
        %v549 = vunpack.c.l.b16 %v405
        %v550 = vunpack.c.l.b16 %v406
        %v551 = vunpack.c.l.b16 %v407
        %v552 = vunpack.c.l.b16 %v408
        %v553 = vunpack.c.l.b16 %v409
        %v554 = vunpack.c.l.b16 %v410
        %v555 = vunpack.c.l.b16 %v411
        %v556 = vunpack.c.l.b16 %v412
        %v557 = vunpack.c.l.b16 %v413
        %v558 = vunpack.c.l.b16 %v414
        %v559 = vunpack.c.l.b16 %v415
        %v560 = vunpack.c.l.b16 %v416
        %v561 = vunpack.c.l.b16 %v417
        %v562 = vunpack.c.l.b16 %v418
        %v563 = vunpack.c.l.b16 %v419
        %v564 = vunpack.c.l.b16 %v420
        %v565 = vunpack.c.l.b16 %v421
        %v566 = vunpack.c.l.b16 %v422
        %v567 = vunpack.c.l.b16 %v423
        %v568 = vunpack.c.l.b16 %v424
        %v569 = vunpack.c.l.b16 %v425
        %v570 = vunpack.c.l.b16 %v426
        %v571 = vunpack.c.l.b16 %v427
        %v572 = vunpack.c.l.b16 %v428
        %v573 = vunpack.c.l.b16 %v429
        %v574 = vunpack.c.l.b16 %v430
        %v575 = vunpack.c.l.b16 %v431
        %v576 = vunpack.c.l.b16 %v432
        %v577 = vunpack.c.l.b16 %v433
        %v578 = vpack.c.b16 %v547, %v546
        %v579 = vpack.c.b16 %v549, %v548
        %v580 = vpack.c.b16 %v551, %v550
        %v581 = vpack.c.b16 %v553, %v552
        %v582 = vpack.c.b16 %v555, %v554
        %v583 = vpack.c.b16 %v557, %v556
        %v584 = vpack.c.b16 %v559, %v558
        %v585 = vpack.c.b16 %v561, %v560
        %v586 = vpack.c.b16 %v563, %v562
        %v587 = vpack.c.b16 %v565, %v564
        %v588 = vpack.c.b16 %v567, %v566
        %v589 = vpack.c.b16 %v569, %v568
        %v590 = vpack.c.b16 %v571, %v570
        %v591 = vpack.c.b16 %v573, %v572
        %v592 = vpack.c.b16 %v575, %v574
        %v593 = vpack.c.b16 %v577, %v576
        %610 = vmatprep.subr.bf16.mxu0 0
        %611 = vmatpush1.bf16.msra.mxu0 %v585
        %612 = vmatprep.subr.bf16.mxu0 0
        %613 = vmatpush1.bf16.msra.mxu0 %v584
        %614 = vmatprep.subr.bf16.mxu0 0
        %615 = vmatpush1.bf16.msra.mxu0 %v583
        %616 = vmatprep.subr.bf16.mxu0 0
        %617 = vmatpush1.bf16.msra.mxu0 %v582
        %618 = vmatprep.subr.bf16.mxu0 0
        %619 = vmatpush1.bf16.msra.mxu0 %v581
        %620 = vmatprep.subr.bf16.mxu0 0
        %621 = vmatpush1.bf16.msra.mxu0 %v580
        %622 = vmatprep.subr.bf16.mxu0 0
        %623 = vmatpush1.bf16.msra.mxu0 %v579
        %624 = vmatprep.subr.bf16.mxu0 0
        %625 = vmatpush1.bf16.msra.mxu0 %v578
        %626 = vmatprep.subr.bf16.mxu0 0
        %627 = vmatpush2.bf16.msra.mxu0 %v593
        %628 = vmatprep.subr.bf16.mxu0 0
        %629 = vmatpush2.bf16.msra.mxu0 %v592
        %630 = vmatprep.subr.bf16.mxu0 0
        %631 = vmatpush2.bf16.msra.mxu0 %v591
        %632 = vmatprep.subr.bf16.mxu0 0
        %633 = vmatpush2.bf16.msra.mxu0 %v590
        %634 = vmatprep.subr.bf16.mxu0 0
        %635 = vmatpush2.bf16.msra.mxu0 %v589
        %636 = vmatprep.subr.bf16.mxu0 0
        %637 = vmatpush2.bf16.msra.mxu0 %v588
        %638 = vmatprep.subr.bf16.mxu0 0
        %639 = vmatpush2.bf16.msra.mxu0 %v587
        %640 = vmatprep.subr.bf16.mxu0 0
        %641 = vmatpush2.bf16.msra.mxu0 %v586
        %642 = vmatprep.mubr.bf16.mxu0 %v483
        %643 = vmatmul.mubr.bf16.gmra.mxu0 %v482
        %v644 = vpop.f32.mrf.mxu0
        %v645 = vadd.f32 0.0, %v644
        %v646 = vpop.f32.mrf.mxu0
        %v647 = vpop.f32.mrf.mxu0
        %v648 = vadd.f32 0.0, %v647
        %v649 = vpop.f32.mrf.mxu0
        %650 = vmatprep.mubr.bf16.mxu0 %v485
        %651 = vmatmul.mubr.bf16.gmra.mxu0 %v484
        %v652 = vpop.f32.mrf.mxu0
        %v653 = vadd.f32 0.0, %v652
        %v654 = vpop.f32.mrf.mxu0
        %v655 = vpop.f32.mrf.mxu0
        %v656 = vadd.f32 0.0, %v655
        %v657 = vpop.f32.mrf.mxu0
        %658 = vmatprep.mubr.bf16.mxu0 %v487
        %659 = vmatmul.mubr.bf16.gmra.mxu0 %v486
        %v660 = vpop.f32.mrf.mxu0
        %v661 = vadd.f32 0.0, %v660
        %v662 = vpop.f32.mrf.mxu0
        %v663 = vpop.f32.mrf.mxu0
        %v664 = vadd.f32 0.0, %v663
        %v665 = vpop.f32.mrf.mxu0
        %666 = vmatprep.mubr.bf16.mxu0 %v489
        %667 = vmatmul.mubr.bf16.gmra.mxu0 %v488
        %v668 = vpop.f32.mrf.mxu0
        %v669 = vadd.f32 0.0, %v668
        %v670 = vpop.f32.mrf.mxu0
        %v671 = vpop.f32.mrf.mxu0
        %v672 = vadd.f32 0.0, %v671
        %v673 = vpop.f32.mrf.mxu0
        %674 = vmatprep.mubr.bf16.mxu0 %v491
        %675 = vmatmul.mubr.bf16.gmra.mxu0 %v490
        %v676 = vpop.f32.mrf.mxu0
        %v677 = vadd.f32 0.0, %v676
        %v678 = vpop.f32.mrf.mxu0
        %v679 = vpop.f32.mrf.mxu0
        %v680 = vadd.f32 0.0, %v679
        %v681 = vpop.f32.mrf.mxu0
        %682 = vmatprep.mubr.bf16.mxu0 %v493
        %683 = vmatmul.mubr.bf16.gmra.mxu0 %v492
        %v684 = vpop.f32.mrf.mxu0
        %v685 = vadd.f32 0.0, %v684
        %v686 = vpop.f32.mrf.mxu0
        %v687 = vpop.f32.mrf.mxu0
        %v688 = vadd.f32 0.0, %v687
        %v689 = vpop.f32.mrf.mxu0
        %690 = vmatprep.mubr.bf16.mxu0 %v495
        %691 = vmatmul.mubr.bf16.gmra.mxu0 %v494
        %v692 = vpop.f32.mrf.mxu0
        %v693 = vadd.f32 0.0, %v692
        %v694 = vpop.f32.mrf.mxu0
        %v695 = vpop.f32.mrf.mxu0
        %v696 = vadd.f32 0.0, %v695
        %v697 = vpop.f32.mrf.mxu0
        %698 = vmatprep.mubr.bf16.mxu0 %v497
        %699 = vmatmul.mubr.bf16.gmra.mxu0 %v496
        %v700 = vpop.f32.mrf.mxu0
        %v701 = vadd.f32 0.0, %v700
        %v702 = vpop.f32.mrf.mxu0
        %v703 = vpop.f32.mrf.mxu0
        %v704 = vadd.f32 0.0, %v703
        %v705 = vpop.f32.mrf.mxu0
        %706 = vdwg.mxu0
        %v707 = vadd.f32 %v370, %v645
        %v708 = vadd.f32 %v371, %v648
        %v709 = vadd.f32 %v372, %v653
        %v710 = vadd.f32 %v373, %v656
        %v711 = vadd.f32 %v374, %v661
        %v712 = vadd.f32 %v375, %v664
        %v713 = vadd.f32 %v376, %v669
        %v714 = vadd.f32 %v377, %v672
        %v715 = vadd.f32 %v378, %v677
        %v716 = vadd.f32 %v379, %v680
        %v717 = vadd.f32 %v380, %v685
        %v718 = vadd.f32 %v381, %v688
        %v719 = vadd.f32 %v382, %v693
        %v720 = vadd.f32 %v383, %v696
        %v721 = vadd.f32 %v384, %v701
        %v722 = vadd.f32 %v385, %v704
        %723 = vst [vmem:[#allocation2] sm:$0xff] %v707
        %724 = vst [vmem:[#allocation2 + $0x8] sm:$0xff] %v708
        %725 = vst [vmem:[#allocation2 + $0x10] sm:$0xff] %v709
        %726 = vst [vmem:[#allocation2 + $0x18] sm:$0xff] %v710
        %727 = vst [vmem:[#allocation2 + $0x20] sm:$0xff] %v711
        %728 = vst [vmem:[#allocation2 + $0x28] sm:$0xff] %v712
        %729 = vst [vmem:[#allocation2 + $0x30] sm:$0xff] %v713
        %730 = vst [vmem:[#allocation2 + $0x38] sm:$0xff] %v714
        %731 = vst [vmem:[#allocation2 + $0x40] sm:$0xff] %v715
        %732 = vst [vmem:[#allocation2 + $0x48] sm:$0xff] %v716
        %733 = vst [vmem:[#allocation2 + $0x50] sm:$0xff] %v717
        %734 = vst [vmem:[#allocation2 + $0x58] sm:$0xff] %v718
        %735 = vst [vmem:[#allocation2 + $0x60] sm:$0xff] %v719
        %736 = vst [vmem:[#allocation2 + $0x68] sm:$0xff] %v720
        %737 = vst [vmem:[#allocation2 + $0x70] sm:$0xff] %v721
        %738 = vst [vmem:[#allocation2 + $0x78] sm:$0xff] %v722
        %p739 = scmp.eq.s32.totalorder %s21, 2
        // Predicated region
        $region75: #{forward.14} parent=65 // pred_check
          %p740 = pneg %p739
        $region76: #{forward.14} parent=65 // pred_check_branch
          %742 = sbr.rel (%p740) target = $region78
        $region77: #{forward.14} parent=65 // pred_region
          %v743 = vld [vmem:[#allocation2] sm:$0xff]
          %v744 = vld [vmem:[#allocation2 + $0x8] sm:$0xff]
          %v745 = vld [vmem:[#allocation2 + $0x10] sm:$0xff]
          %v746 = vld [vmem:[#allocation2 + $0x18] sm:$0xff]
          %v747 = vld [vmem:[#allocation2 + $0x20] sm:$0xff]
          %v748 = vld [vmem:[#allocation2 + $0x28] sm:$0xff]
          %v749 = vld [vmem:[#allocation2 + $0x30] sm:$0xff]
          %v750 = vld [vmem:[#allocation2 + $0x38] sm:$0xff]
          %v751 = vld [vmem:[#allocation2 + $0x40] sm:$0xff]
          %v752 = vld [vmem:[#allocation2 + $0x48] sm:$0xff]
          %v753 = vld [vmem:[#allocation2 + $0x50] sm:$0xff]
          %v754 = vld [vmem:[#allocation2 + $0x58] sm:$0xff]
          %v755 = vld [vmem:[#allocation2 + $0x60] sm:$0xff]
          %v756 = vld [vmem:[#allocation2 + $0x68] sm:$0xff]
          %v757 = vld [vmem:[#allocation2 + $0x70] sm:$0xff]
          %v758 = vld [vmem:[#allocation2 + $0x78] sm:$0xff]
          %v759 = vld [vmem:[%s339] sm:$0x1]
          %v761 = vlaneseq
          %v762 = vshrl.u32 %v761, 7
          %v763 = vsub.s32 0, %v762
          %v764 = vrot.slane %v759, %v763
          %v766 = vadd.f32 %v743, %v764
          %v767 = vadd.f32 %v744, %v764
          %v768 = vadd.f32 %v745, %v764
          %v769 = vadd.f32 %v746, %v764
          %v770 = vadd.f32 %v747, %v764
          %v771 = vadd.f32 %v748, %v764
          %v772 = vadd.f32 %v749, %v764
          %v773 = vadd.f32 %v750, %v764
          %v774 = vadd.f32 %v751, %v764
          %v775 = vadd.f32 %v752, %v764
          %v776 = vadd.f32 %v753, %v764
          %v777 = vadd.f32 %v754, %v764
          %v778 = vadd.f32 %v755, %v764
          %v779 = vadd.f32 %v756, %v764
          %v780 = vadd.f32 %v757, %v764
          %v781 = vadd.f32 %v758, %v764
          %v782 = vmax.f32 %v766, 0.0
          %v783 = vmax.f32 %v767, 0.0
          %v784 = vmax.f32 %v768, 0.0
          %v785 = vmax.f32 %v769, 0.0
          %v786 = vmax.f32 %v770, 0.0
          %v787 = vmax.f32 %v771, 0.0
          %v788 = vmax.f32 %v772, 0.0
          %v789 = vmax.f32 %v773, 0.0
          %v790 = vmax.f32 %v774, 0.0
          %v791 = vmax.f32 %v775, 0.0
          %v792 = vmax.f32 %v776, 0.0
          %v793 = vmax.f32 %v777, 0.0
          %v794 = vmax.f32 %v778, 0.0
          %v795 = vmax.f32 %v779, 0.0
          %v796 = vmax.f32 %v780, 0.0
          %v797 = vmax.f32 %v781, 0.0
          %798 = vst [vmem:[%s347] sm:$0xff] %v782
          %799 = vst [vmem:[%s347 + $0x8] sm:$0xff] %v783
          %800 = vst [vmem:[%s347 + $0x10] sm:$0xff] %v784
          %801 = vst [vmem:[%s347 + $0x18] sm:$0xff] %v785
          %802 = vst [vmem:[%s347 + $0x20] sm:$0xff] %v786
          %803 = vst [vmem:[%s347 + $0x28] sm:$0xff] %v787
          %804 = vst [vmem:[%s347 + $0x30] sm:$0xff] %v788
          %805 = vst [vmem:[%s347 + $0x38] sm:$0xff] %v789
          %806 = vst [vmem:[%s347 + $0x40] sm:$0xff] %v790
          %807 = vst [vmem:[%s347 + $0x48] sm:$0xff] %v791
          %808 = vst [vmem:[%s347 + $0x50] sm:$0xff] %v792
          %809 = vst [vmem:[%s347 + $0x58] sm:$0xff] %v793
          %810 = vst [vmem:[%s347 + $0x60] sm:$0xff] %v794
          %811 = vst [vmem:[%s347 + $0x68] sm:$0xff] %v795
          %812 = vst [vmem:[%s347 + $0x70] sm:$0xff] %v796
          %813 = vst [vmem:[%s347 + $0x78] sm:$0xff] %v797
        $region78: #{forward.14} parent=65 // pred_fallthru
          _
        %s814 = smul.u32 16, %s19
        %p815 = scmp.lt.s32.totalorder %s814, 15
        %s816 = scalar_select %p815, %s814, 15
        %p817 = scmp.lt.s32.totalorder %s20, 0
        %s818 = scalar_select %p817, %s20, 0
        %s819 = sadd.s32 %s818, %s816
        %s820 = smul.addr %s819, 8
        %s821 = scalar_lea.vmem %s3, %s820
        // Predicated region
        $region79: #{forward.14} parent=65 // pred_check
          %p822 = pneg %p135
        $region80: #{forward.14} parent=65 // pred_check_branch
          %824 = sbr.rel (%p822) target = $region82
        $region81: #{forward.14} parent=65 // pred_region
          %s825 = smul.u32 16, %s19
        $region82: #{forward.14} parent=65 // pred_fallthru
          _
        // Predicated region
        $region83: #{forward.14} parent=65 // pred_check
          %p826 = pneg %p135
        $region84: #{forward.14} parent=65 // pred_check_branch
          %828 = sbr.rel (%p826) target = $region86
        $region85: #{forward.14} parent=65 // pred_region
          %s829 = smul.u32 16, %s19
          %p830 = scmp.lt.s32.totalorder %s829, 15
          %s831 = scalar_select %p830, %s829, 15
          %p832 = scmp.lt.s32.totalorder %s20, 0
          %s833 = scalar_select %p832, %s20, 0
          %s834 = sadd.s32 %s833, %s831
          %s835 = smul.addr %s834, 8
          %s836 = scalar_lea.vmem %s3, %s835
        $region86: #{forward.14} parent=65 // pred_fallthru
          _
      $region66: #{forward.14} parent=5 // pred_fallthru
        _
      %p837 = scmp.le.s32.totalorder 2, %s9
      // Predicated region
      $region87: #{forward.14} parent=5 // pred_check
        %p838 = pneg %p837
      $region88: #{forward.14} parent=5 // pred_check_branch
        %840 = sbr.rel (%p838) target = $region90
      $region89: #{forward.14} parent=5 // pred_region
        %s841 = ssub.s32 %s9, 2
      $region90: #{forward.14} parent=5 // pred_fallthru
        _
    $region6: #{forward.14} parent=1 // loop_footer
      %s13 = sadd.s32 1, %s9
    $region7: #{forward.14} parent=1 // loop_footer_branch
      %8 = sbr.rel target = $region3
    $region8: #{forward.14} parent=1 // loop_exit
      _

// kernel: forward.15
$region0: #{forward.15}
  #allocation0 [shape = 'u32[]', space=smem, size = 0x4, offset = 0x4, fixed_abs, tag = 'smem constant byte address 0x4 - core index']
  #allocation1 [shape = 'u32[144,128]{1,0:T(1,128)}', space=vmem, size = 0x12000, scoped, tag = 'internal scratch']
  #allocation2 [shape = 'f32[32,256]{1,0:T(8,128)}', space=vmem, size = 0x8000, scoped, tag = 'scratch operand']
  %s0 = inlined_call_operand.vmem [shape: bf16[32,1280], index: 0, kind: input, shape index: {}]
  %s1 = inlined_call_operand.vmem [shape: bf16[1280,256], index: 1, kind: input, shape index: {}]
  %s2 = inlined_call_operand.vmem [shape: f32[1,256], index: 2, kind: input, shape index: {}]
  %s3 = inlined_call_operand.vmem [shape: f32[32,256], index: 3, kind: output, shape index: {}]
  %s4 = sld [smem:[#allocation0]]
  $region91: #{forward.15} parent=0
    _
  %s6 = ssub.s32 1, %s4
  %s7 = scalar_select 0, %s6, %s4
  $region1: #{forward.15} parent=0
    #allocation3 [shape = 'u8[32768]{0}', space=vmem, size = 0x8000, scoped, tag = 'input window, operand 0']
    loop: start=0, step=1, limit=7
    $region2: #{forward.15} parent=1 // loop_pre_header
      _
    $region3: #{forward.15} parent=1 // loop_header
      %s9 = sphi 0, %s13
      %p10 = scmp.ge.s32.totalorder %s9, 7
      %s16 = sphi 0, %s35
      %s17 = sphi 0, %s31
      %s18 = sphi 0, %s27
      %s19 = sphi 0, %s16
      %s20 = sphi 0, %s17
      %s21 = sphi 0, %s18
      %s22 = sphi 0, %s19
      %s23 = sphi 0, %s20
      %s24 = sphi 0, %s21
      %s40 = sphi 0, %s42
      %s43 = sphi 0, %s40
      %s44 = sphi 0, %s43
      %s60 = sphi 0, %s44
      %s68 = sphi 0, %s70
      %s71 = sphi 0, %s68
      %s72 = sphi 0, %s71
      %s88 = sphi 0, %s72
      %s94 = sphi 0, %s96
      %s97 = sphi 0, %s94
      %s98 = sphi 0, %s97
      %s114 = sphi 0, %s98
      %s122 = sphi 0, %s124
      %s125 = sphi 0, %s122
      %s126 = sphi 0, %s125
      %s142 = sphi 0, %s126
    $region4: #{forward.15} parent=1 // loop_header_branch
      %12 = sbr.rel (%p10) target = $region8
    $region5: #{forward.15} parent=1 // loop_body
      %s14 = ssub.s32 %s9, 1
      %s15 = ssub.s32 %s9, 2
      %s25 = sadd.s32 1, %s18
      %p26 = scmp.ge.s32.totalorder %s25, 5
      %s27 = scalar_select %p26, 0, %s25
      %s28 = sadd.s32 1, %s17
      %s29 = scalar_select %p26, %s28, %s17
      %p30 = scmp.ge.s32.totalorder %s29, 1
      %s31 = scalar_select %p30, 0, %s29
      %s32 = sadd.s32 1, %s16
      %s33 = scalar_select %p30, %s32, %s16
      %p34 = scmp.ge.s32.totalorder %s33, 1
      %s35 = scalar_select %p34, 0, %s33
      %s36 = ssub.s32 %s16, %s35
      %s37 = ssub.s32 %s18, %s27
      %s38 = sor.u32 %s36, %s37
      %p39 = scmp.eq.s32.totalorder %s38, 0
      %s41 = sadd.s32 %s40, 1
      %s42 = scalar_select %p39, %s40, %s41
      %p45 = pneg %p39
      %p46 = scmp.eq.s32.totalorder %s9, 4
      %p47 = por %p45, %p46
      %p48 = scmp.ne.s32.totalorder %s40, %s43
      %p49 = scmp.eq.s32.totalorder %s9, 0
      %p50 = por %p48, %p49
      %p51 = scmp.ne.s32.totalorder %s40, %s43
      %p52 = scmp.eq.s32.totalorder %s14, 4
      %p53 = por %p51, %p52
      %p54 = scmp.ne.s32.totalorder %s43, %s44
      %p55 = scmp.eq.s32.totalorder %s14, 0
      %p56 = por %p54, %p55
      %p57 = scmp.ne.s32.totalorder %s43, %s44
      %p58 = scmp.eq.s32.totalorder %s15, 4
      %p59 = por %p57, %p58
      %p61 = scmp.ne.s32.totalorder %s44, %s60
      %p62 = scmp.eq.s32.totalorder %s15, 0
      %p63 = por %p61, %p62
      %s64 = ssub.s32 %s18, %s27
      %s65 = ssub.s32 %s17, %s31
      %s66 = sor.u32 %s64, %s65
      %p67 = scmp.eq.s32.totalorder %s66, 0
      %s69 = sadd.s32 %s68, 1
      %s70 = scalar_select %p67, %s68, %s69
      %p73 = pneg %p67
      %p74 = scmp.eq.s32.totalorder %s9, 4
      %p75 = por %p73, %p74
      %p76 = scmp.ne.s32.totalorder %s68, %s71
      %p77 = scmp.eq.s32.totalorder %s9, 0
      %p78 = por %p76, %p77
      %p79 = scmp.ne.s32.totalorder %s68, %s71
      %p80 = scmp.eq.s32.totalorder %s14, 4
      %p81 = por %p79, %p80
      %p82 = scmp.ne.s32.totalorder %s71, %s72
      %p83 = scmp.eq.s32.totalorder %s14, 0
      %p84 = por %p82, %p83
      %p85 = scmp.ne.s32.totalorder %s71, %s72
      %p86 = scmp.eq.s32.totalorder %s15, 4
      %p87 = por %p85, %p86
      %p89 = scmp.ne.s32.totalorder %s72, %s88
      %p90 = scmp.eq.s32.totalorder %s15, 0
      %p91 = por %p89, %p90
      %s92 = ssub.s32 %s17, %s31
      %p93 = scmp.eq.s32.totalorder %s92, 0
      %s95 = sadd.s32 %s94, 1
      %s96 = scalar_select %p93, %s94, %s95
      %p99 = pneg %p93
      %p100 = scmp.eq.s32.totalorder %s9, 4
      %p101 = por %p99, %p100
      %p102 = scmp.ne.s32.totalorder %s94, %s97
      %p103 = scmp.eq.s32.totalorder %s9, 0
      %p104 = por %p102, %p103
      %p105 = scmp.ne.s32.totalorder %s94, %s97
      %p106 = scmp.eq.s32.totalorder %s14, 4
      %p107 = por %p105, %p106
      %p108 = scmp.ne.s32.totalorder %s97, %s98
      %p109 = scmp.eq.s32.totalorder %s14, 0
      %p110 = por %p108, %p109
      %p111 = scmp.ne.s32.totalorder %s97, %s98
      %p112 = scmp.eq.s32.totalorder %s15, 4
      %p113 = por %p111, %p112
      %p115 = scmp.ne.s32.totalorder %s98, %s114
      %p116 = scmp.eq.s32.totalorder %s15, 0
      %p117 = por %p115, %p116
      %s118 = ssub.s32 %s16, %s35
      %s119 = ssub.s32 %s17, %s31
      %s120 = sor.u32 %s118, %s119
      %p121 = scmp.eq.s32.totalorder %s120, 0
      %s123 = sadd.s32 %s122, 1
      %s124 = scalar_select %p121, %s122, %s123
      %p127 = pneg %p121
      %p128 = scmp.eq.s32.totalorder %s9, 4
      %p129 = por %p127, %p128
      %p130 = scmp.ne.s32.totalorder %s122, %s125
      %p131 = scmp.eq.s32.totalorder %s9, 0
      %p132 = por %p130, %p131
      %p133 = scmp.ne.s32.totalorder %s122, %s125
      %p134 = scmp.eq.s32.totalorder %s14, 4
      %p135 = por %p133, %p134
      %p136 = scmp.ne.s32.totalorder %s125, %s126
      %p137 = scmp.eq.s32.totalorder %s14, 0
      %p138 = por %p136, %p137
      %p139 = scmp.ne.s32.totalorder %s125, %s126
      %p140 = scmp.eq.s32.totalorder %s15, 4
      %p141 = por %p139, %p140
      %p143 = scmp.ne.s32.totalorder %s126, %s142
      %p144 = scmp.eq.s32.totalorder %s15, 0
      %p145 = por %p143, %p144
      %p146 = scmp.le.s32.totalorder 1, %s9
      %p147 = scmp.lt.s32.totalorder %s9, 6
      %p148 = pnand %p146, %p147
      %p149 = pneg %p148
      // Predicated region
      $region9: #{forward.15} parent=5 // pred_check
        _
      $region10: #{forward.15} parent=5 // pred_check_branch
        %151 = sbr.rel (%p148) target = $region12
      $region11: #{forward.15} parent=5 // pred_region
        %s152 = ssub.s32 %s9, 1
        // Predicated region
        $region13: #{forward.15} parent=11 // pred_check
          %p153 = pneg %p110
        $region14: #{forward.15} parent=11 // pred_check_branch
          %155 = sbr.rel (%p153) target = $region16
        $region15: #{forward.15} parent=11 // pred_region
          %s156 = smul.u32 2, %s20
          %p157 = scmp.lt.s32.totalorder %s156, 1
          %s158 = scalar_select %p157, %s156, 1
          %s159 = scalar_lea.vmem %s2, %s158
          %s160 = smul.u32 2, %s20
        $region16: #{forward.15} parent=11 // pred_fallthru
          _
      $region12: #{forward.15} parent=5 // pred_fallthru
        _
      %p161 = scmp.lt.s32.totalorder %s9, 5
      // Predicated region
      $region17: #{forward.15} parent=5 // pred_check
        %p162 = pneg %p161
      $region18: #{forward.15} parent=5 // pred_check_branch
        %164 = sbr.rel (%p162) target = $region20
      $region19: #{forward.15} parent=5 // pred_region
        // Predicated region
        $region21: #{forward.15} parent=19 // pred_check
          %p165 = pneg %p50
        $region22: #{forward.15} parent=19 // pred_check_branch
          %167 = sbr.rel (%p165) target = $region24
        $region23: #{forward.15} parent=19 // pred_region
          %s168 = sand.u32 %s40, 1
          %s169 = sand.u32 %s40, 1
          %s170 = smul.addr %s169, 32
          %s171 = scalar_lea.vmem [#allocation3], %s170
          %s172 = smul.u32 4, %s16
          %s173 = smul.u32 2, %s18
          %s174 = smul.addr %s172, 10
          %s175 = sadd.s32 %s173, %s174
          %s176 = smul.addr %s175, 4
          %s177 = scalar_lea.vmem %s0, %s176
          // Predicated region
          $region25: #{forward.15} parent=23 // pred_check
            _
          $region26: #{forward.15} parent=23 // pred_check_branch
            %179 = sbr.rel (0) target = $region28
          $region27: #{forward.15} parent=23 // pred_region
            // Predicated region
            $region29: #{forward.15} parent=27 // pred_check
              _
            $region30: #{forward.15} parent=27 // pred_check_branch
              %181 = sbr.rel (0) target = $region32
            $region31: #{forward.15} parent=27 // pred_region
              // Predicated region
              $region44: #{forward.15} parent=31 // pred_check
                _
              $region45: #{forward.15} parent=31 // pred_check_branch
                %203 = sbr.rel (0) target = $region47
              $region46: #{forward.15} parent=31 // pred_region
                loop: start=0, step=1, limit=1
                $region48: #{forward.15} parent=46 // loop_pre_header
                  _
                $region49: #{forward.15} parent=46 // loop_header
                  %s205 = sphi 0, %s209
                  %p206 = scmp.ge.s32.totalorder %s205, 1
                  %s210 = sphi %s177, %s177
                  %s211 = sphi %s171, %s171
                $region50: #{forward.15} parent=46 // loop_header_branch
                  %208 = sbr.rel (%p206) target = $region54
                $region51: #{forward.15} parent=46 // loop_body
                  %v212 = vld [vmem:[%s210] sm:$0xff]
                  %213 = vst [vmem:[%s211] sm:$0xff] %v212
                  %v214 = vld [vmem:[%s210 + $0x28] sm:$0xff]
                  %215 = vst [vmem:[%s211 + $0x8] sm:$0xff] %v214
                  %v216 = vld [vmem:[%s210 + $0x50] sm:$0xff]
                  %217 = vst [vmem:[%s211 + $0x10] sm:$0xff] %v216
                  %v218 = vld [vmem:[%s210 + $0x78] sm:$0xff]
                  %219 = vst [vmem:[%s211 + $0x18] sm:$0xff] %v218
                $region52: #{forward.15} parent=46 // loop_footer
                  %s209 = sadd.s32 1, %s205
                $region53: #{forward.15} parent=46 // loop_footer_branch
                  %204 = sbr.rel target = $region49
                $region54: #{forward.15} parent=46 // loop_exit
                  _
              $region47: #{forward.15} parent=31 // pred_fallthru
                _
              // Predicated region
              $region55: #{forward.15} parent=31 // pred_check
                _
              $region56: #{forward.15} parent=31 // pred_check_branch
                %221 = sbr.rel target = $region58
              $region57: #{forward.15} parent=31 // pred_region
                _
              $region58: #{forward.15} parent=31 // pred_fallthru
                _
            $region32: #{forward.15} parent=27 // pred_fallthru
              _
            // Predicated region
            $region33: #{forward.15} parent=27 // pred_check
              _
            $region34: #{forward.15} parent=27 // pred_check_branch
              %183 = sbr.rel target = $region36
            $region35: #{forward.15} parent=27 // pred_region
              %s185 = ssub.s32 256, 1
              loop: start=0, step=1, limit=1
              $region37: #{forward.15} parent=35 // loop_pre_header
                _
              $region38: #{forward.15} parent=35 // loop_header
                %s187 = sphi 0, %s191
                %p188 = scmp.ge.s32.totalorder %s187, 1
                %s192 = sphi %s177, %s177
                %s193 = sphi %s171, %s171
              $region39: #{forward.15} parent=35 // loop_header_branch
                %190 = sbr.rel (%p188) target = $region43
              $region40: #{forward.15} parent=35 // loop_body
                %v194 = vld [vmem:[%s192] sm:%s185]
                %195 = vst [vmem:[%s193] sm:%s185] %v194
                %v196 = vld [vmem:[%s192 + $0x28] sm:%s185]
                %197 = vst [vmem:[%s193 + $0x8] sm:%s185] %v196
                %v198 = vld [vmem:[%s192 + $0x50] sm:%s185]
                %199 = vst [vmem:[%s193 + $0x10] sm:%s185] %v198
                %v200 = vld [vmem:[%s192 + $0x78] sm:%s185]
                %201 = vst [vmem:[%s193 + $0x18] sm:%s185] %v200
              $region41: #{forward.15} parent=35 // loop_footer
                %s191 = sadd.s32 1, %s187
              $region42: #{forward.15} parent=35 // loop_footer_branch
                %186 = sbr.rel target = $region38
              $region43: #{forward.15} parent=35 // loop_exit
                _
            $region36: #{forward.15} parent=27 // pred_fallthru
              _
          $region28: #{forward.15} parent=23 // pred_fallthru
            _
          %222 = vnop
        $region24: #{forward.15} parent=19 // pred_fallthru
          _
        // Predicated region
        $region59: #{forward.15} parent=19 // pred_check
          %p223 = pneg %p78
        $region60: #{forward.15} parent=19 // pred_check_branch
          %225 = sbr.rel (%p223) target = $region62
        $region61: #{forward.15} parent=19 // pred_region
          %s226 = smul.u32 32, %s18
          %s227 = smul.u32 2, %s17
          %p228 = scmp.lt.s32.totalorder %s226, 159
          %s229 = scalar_select %p228, %s226, 159
          %p230 = scmp.lt.s32.totalorder %s227, 1
          %s231 = scalar_select %p230, %s227, 1
          %s232 = smul.addr %s229, 2
          %s233 = sadd.s32 %s231, %s232
          %s234 = smul.addr %s233, 4
          %s235 = scalar_lea.vmem %s1, %s234
          %s236 = smul.u32 32, %s18
          %s237 = smul.u32 2, %s17
        $region62: #{forward.15} parent=19 // pred_fallthru
          _
      $region20: #{forward.15} parent=5 // pred_fallthru
        _
      %p238 = scmp.le.s32.totalorder 1, %s9
      %p239 = scmp.lt.s32.totalorder %s9, 6
      %p240 = pnand %p238, %p239
      %p241 = pneg %p240
      // Predicated region
      $region63: #{forward.15} parent=5 // pred_check
        _
      $region64: #{forward.15} parent=5 // pred_check_branch
        %243 = sbr.rel (%p240) target = $region66
      $region65: #{forward.15} parent=5 // pred_region
        %s244 = ssub.s32 %s9, 1
        %s245 = sand.u32 %s43, 1
        %s246 = sand.u32 %s43, 1
        %s247 = smul.addr %s246, 32
        %s248 = scalar_lea.vmem [#allocation3], %s247
        // Predicated region
        $region67: #{forward.15} parent=65 // pred_check
          %p249 = pneg %p56
        $region68: #{forward.15} parent=65 // pred_check_branch
          %251 = sbr.rel (%p249) target = $region70
        $region69: #{forward.15} parent=65 // pred_region
          _
        $region70: #{forward.15} parent=65 // pred_fallthru
          _
        %s252 = sand.u32 %s43, 1
        %s253 = sand.u32 %s43, 1
        %s254 = smul.addr %s253, 32
        %s255 = scalar_lea.vmem [#allocation3], %s254
        %p256 = pneg %p56
        %p257 = pneg %p53
        %s258 = smul.u32 32, %s21
        %s259 = smul.u32 2, %s20
        %p260 = scmp.lt.s32.totalorder %s258, 159
        %s261 = scalar_select %p260, %s258, 159
        %p262 = scmp.lt.s32.totalorder %s259, 1
        %s263 = scalar_select %p262, %s259, 1
        %s264 = smul.addr %s261, 2
        %s265 = sadd.s32 %s263, %s264
        %s266 = smul.addr %s265, 4
        %s267 = scalar_lea.vmem %s1, %s266
        %p268 = pneg %p84
        %p269 = pneg %p81
        %s270 = smul.u32 2, %s20
        %p271 = scmp.lt.s32.totalorder %s270, 1
        %s272 = scalar_select %p271, %s270, 1
        %s273 = scalar_lea.vmem %s2, %s272
        %p274 = pneg %p110
        %p275 = pneg %p107
        %p276 = pneg %p138
        %p277 = pneg %p135
        %s278 = smul.u32 4, %s19
        %s279 = smul.u32 2, %s20
        %p280 = scmp.lt.s32.totalorder %s278, 3
        %s281 = scalar_select %p280, %s278, 3
        %p282 = scmp.lt.s32.totalorder %s279, 1
        %s283 = scalar_select %p282, %s279, 1
        %s284 = smul.addr %s281, 2
        %s285 = sadd.s32 %s283, %s284
        %s286 = smul.addr %s285, 8
        %s287 = scalar_lea.vmem %s3, %s286
        %s288 = smul.u32 4, %s19
        %s289 = smul.u32 2, %s21
        %s290 = smul.u32 32, %s21
        %s291 = smul.u32 2, %s20
        %p292 = scmp.lt.s32.totalorder %s290, 159
        %s293 = scalar_select %p292, %s290, 159
        %p294 = scmp.lt.s32.totalorder %s291, 1
        %s295 = scalar_select %p294, %s291, 1
        %s296 = smul.addr %s293, 2
        %s297 = sadd.s32 %s295, %s296
        %s298 = smul.addr %s297, 4
        %s299 = scalar_lea.vmem %s1, %s298
        %s300 = smul.u32 32, %s21
        %s301 = smul.u32 2, %s20
        %s302 = smul.u32 2, %s20
        %p303 = scmp.lt.s32.totalorder %s302, 1
        %s304 = scalar_select %p303, %s302, 1
        %s305 = scalar_lea.vmem %s2, %s304
        %s306 = smul.u32 2, %s20
        %s307 = smul.u32 4, %s19
        %s308 = smul.u32 2, %s20
        %p309 = scmp.lt.s32.totalorder %s307, 3
        %s310 = scalar_select %p309, %s307, 3
        %p311 = scmp.lt.s32.totalorder %s308, 1
        %s312 = scalar_select %p311, %s308, 1
        %s313 = smul.addr %s310, 2
        %s314 = sadd.s32 %s312, %s313
        %s315 = smul.addr %s314, 8
        %s316 = scalar_lea.vmem %s3, %s315
        %s317 = smul.u32 4, %s19
        %s318 = smul.u32 2, %s20
        %p319 = scmp.eq.s32.totalorder %s21, 0
        // Predicated region
        $region71: #{forward.15} parent=65 // pred_check
          %p320 = pneg %p319
        $region72: #{forward.15} parent=65 // pred_check_branch
          %322 = sbr.rel (%p320) target = $region74
        $region73: #{forward.15} parent=65 // pred_region
          %323 = vst [vmem:[#allocation2] sm:$0xff] 0.0
          %324 = vst [vmem:[#allocation2 + $0x8] sm:$0xff] 0.0
          %325 = vst [vmem:[#allocation2 + $0x10] sm:$0xff] 0.0
          %326 = vst [vmem:[#allocation2 + $0x18] sm:$0xff] 0.0
          %327 = vst [vmem:[#allocation2 + $0x20] sm:$0xff] 0.0
          %328 = vst [vmem:[#allocation2 + $0x28] sm:$0xff] 0.0
          %329 = vst [vmem:[#allocation2 + $0x30] sm:$0xff] 0.0
          %330 = vst [vmem:[#allocation2 + $0x38] sm:$0xff] 0.0
        $region74: #{forward.15} parent=65 // pred_fallthru
          _
        %v331 = vld [vmem:[#allocation2] sm:$0xff]
        %v332 = vld [vmem:[#allocation2 + $0x8] sm:$0xff]
        %v333 = vld [vmem:[#allocation2 + $0x10] sm:$0xff]
        %v334 = vld [vmem:[#allocation2 + $0x18] sm:$0xff]
        %v335 = vld [vmem:[#allocation2 + $0x20] sm:$0xff]
        %v336 = vld [vmem:[#allocation2 + $0x28] sm:$0xff]
        %v337 = vld [vmem:[#allocation2 + $0x30] sm:$0xff]
        %v338 = vld [vmem:[#allocation2 + $0x38] sm:$0xff]
        %v339 = vld [vmem:[%s248] sm:$0xff]
        %v340 = vld [vmem:[%s248 + $0x8] sm:$0xff]
        %v341 = vld [vmem:[%s248 + $0x10] sm:$0xff]
        %v342 = vld [vmem:[%s248 + $0x18] sm:$0xff]
        %v343 = vld [vmem:[%s299] sm:$0xff]
        %v344 = vld [vmem:[%s299 + $0x8] sm:$0xff]
        %v345 = vld [vmem:[%s299 + $0x10] sm:$0xff]
        %v346 = vld [vmem:[%s299 + $0x18] sm:$0xff]
        %v347 = vld [vmem:[%s299 + $0x20] sm:$0xff]
        %v348 = vld [vmem:[%s299 + $0x28] sm:$0xff]
        %v349 = vld [vmem:[%s299 + $0x30] sm:$0xff]
        %v350 = vld [vmem:[%s299 + $0x38] sm:$0xff]
        %v351 = vld [vmem:[%s299 + $0x40] sm:$0xff]
        %v352 = vld [vmem:[%s299 + $0x48] sm:$0xff]
        %v353 = vld [vmem:[%s299 + $0x50] sm:$0xff]
        %v354 = vld [vmem:[%s299 + $0x58] sm:$0xff]
        %v355 = vld [vmem:[%s299 + $0x60] sm:$0xff]
        %v356 = vld [vmem:[%s299 + $0x68] sm:$0xff]
        %v357 = vld [vmem:[%s299 + $0x70] sm:$0xff]
        %v358 = vld [vmem:[%s299 + $0x78] sm:$0xff]
        %v359 = vld [vmem:[%s299 + $0x80] sm:$0xff]
        %v360 = vld [vmem:[%s299 + $0x88] sm:$0xff]
        %v361 = vld [vmem:[%s299 + $0x90] sm:$0xff]
        %v362 = vld [vmem:[%s299 + $0x98] sm:$0xff]
        %v363 = vld [vmem:[%s299 + $0xa0] sm:$0xff]
        %v364 = vld [vmem:[%s299 + $0xa8] sm:$0xff]
        %v365 = vld [vmem:[%s299 + $0xb0] sm:$0xff]
        %v366 = vld [vmem:[%s299 + $0xb8] sm:$0xff]
        %v367 = vld [vmem:[%s299 + $0xc0] sm:$0xff]
        %v368 = vld [vmem:[%s299 + $0xc8] sm:$0xff]
        %v369 = vld [vmem:[%s299 + $0xd0] sm:$0xff]
        %v370 = vld [vmem:[%s299 + $0xd8] sm:$0xff]
        %v371 = vld [vmem:[%s299 + $0xe0] sm:$0xff]
        %v372 = vld [vmem:[%s299 + $0xe8] sm:$0xff]
        %v373 = vld [vmem:[%s299 + $0xf0] sm:$0xff]
        %v374 = vld [vmem:[%s299 + $0xf8] sm:$0xff]
        %v379 = vunpack.c.l.b16 %v339
        %v380 = vunpack.c.h.b16 %v339
        %v381 = vunpack.c.l.b16 %v340
        %v382 = vunpack.c.h.b16 %v340
        %v383 = vunpack.c.l.b16 %v341
        %v384 = vunpack.c.h.b16 %v341
        %v385 = vunpack.c.l.b16 %v342
        %v386 = vunpack.c.h.b16 %v342
        %v387 = vpack.c.b16 %v381, %v379
        %v388 = vpack.c.b16 %v382, %v380
        %v389 = vpack.c.b16 %v385, %v383
        %v390 = vpack.c.b16 %v386, %v384
        %v427 = vunpack.c.l.b16 %v343
        %v428 = vunpack.c.h.b16 %v343
        %v429 = vunpack.c.l.b16 %v344
        %v430 = vunpack.c.h.b16 %v344
        %v431 = vunpack.c.l.b16 %v345
        %v432 = vunpack.c.h.b16 %v345
        %v433 = vunpack.c.l.b16 %v346
        %v434 = vunpack.c.h.b16 %v346
        %v435 = vunpack.c.l.b16 %v347
        %v436 = vunpack.c.h.b16 %v347
        %v437 = vunpack.c.l.b16 %v348
        %v438 = vunpack.c.h.b16 %v348
        %v439 = vunpack.c.l.b16 %v349
        %v440 = vunpack.c.h.b16 %v349
        %v441 = vunpack.c.l.b16 %v350
        %v442 = vunpack.c.h.b16 %v350
        %v443 = vunpack.c.l.b16 %v351
        %v444 = vunpack.c.h.b16 %v351
        %v445 = vunpack.c.l.b16 %v352
        %v446 = vunpack.c.h.b16 %v352
        %v447 = vunpack.c.l.b16 %v353
        %v448 = vunpack.c.h.b16 %v353
        %v449 = vunpack.c.l.b16 %v354
        %v450 = vunpack.c.h.b16 %v354
        %v451 = vunpack.c.l.b16 %v355
        %v452 = vunpack.c.h.b16 %v355
        %v453 = vunpack.c.l.b16 %v356
        %v454 = vunpack.c.h.b16 %v356
        %v455 = vunpack.c.l.b16 %v357
        %v456 = vunpack.c.h.b16 %v357
        %v457 = vunpack.c.l.b16 %v358
        %v458 = vunpack.c.h.b16 %v358
        %v459 = vunpack.c.l.b16 %v359
        %v460 = vunpack.c.h.b16 %v359
        %v461 = vunpack.c.l.b16 %v360
        %v462 = vunpack.c.h.b16 %v360
        %v463 = vunpack.c.l.b16 %v361
        %v464 = vunpack.c.h.b16 %v361
        %v465 = vunpack.c.l.b16 %v362
        %v466 = vunpack.c.h.b16 %v362
        %v467 = vunpack.c.l.b16 %v363
        %v468 = vunpack.c.h.b16 %v363
        %v469 = vunpack.c.l.b16 %v364
        %v470 = vunpack.c.h.b16 %v364
        %v471 = vunpack.c.l.b16 %v365
        %v472 = vunpack.c.h.b16 %v365
        %v473 = vunpack.c.l.b16 %v366
        %v474 = vunpack.c.h.b16 %v366
        %v475 = vunpack.c.l.b16 %v367
        %v476 = vunpack.c.h.b16 %v367
        %v477 = vunpack.c.l.b16 %v368
        %v478 = vunpack.c.h.b16 %v368
        %v479 = vunpack.c.l.b16 %v369
        %v480 = vunpack.c.h.b16 %v369
        %v481 = vunpack.c.l.b16 %v370
        %v482 = vunpack.c.h.b16 %v370
        %v483 = vunpack.c.l.b16 %v371
        %v484 = vunpack.c.h.b16 %v371
        %v485 = vunpack.c.l.b16 %v372
        %v486 = vunpack.c.h.b16 %v372
        %v487 = vunpack.c.l.b16 %v373
        %v488 = vunpack.c.h.b16 %v373
        %v489 = vunpack.c.l.b16 %v374
        %v490 = vunpack.c.h.b16 %v374
        %v491 = vpack.c.b16 %v429, %v427
        %v492 = vpack.c.b16 %v430, %v428
        %v493 = vpack.c.b16 %v433, %v431
        %v494 = vpack.c.b16 %v434, %v432
        %v495 = vpack.c.b16 %v437, %v435
        %v496 = vpack.c.b16 %v438, %v436
        %v497 = vpack.c.b16 %v441, %v439
        %v498 = vpack.c.b16 %v442, %v440
        %v499 = vpack.c.b16 %v445, %v443
        %v500 = vpack.c.b16 %v446, %v444
        %v501 = vpack.c.b16 %v449, %v447
        %v502 = vpack.c.b16 %v450, %v448
        %v503 = vpack.c.b16 %v453, %v451
        %v504 = vpack.c.b16 %v454, %v452
        %v505 = vpack.c.b16 %v457, %v455
        %v506 = vpack.c.b16 %v458, %v456
        %v507 = vpack.c.b16 %v461, %v459
        %v508 = vpack.c.b16 %v462, %v460
        %v509 = vpack.c.b16 %v465, %v463
        %v510 = vpack.c.b16 %v466, %v464
        %v511 = vpack.c.b16 %v469, %v467
        %v512 = vpack.c.b16 %v470, %v468
        %v513 = vpack.c.b16 %v473, %v471
        %v514 = vpack.c.b16 %v474, %v472
        %v515 = vpack.c.b16 %v477, %v475
        %v516 = vpack.c.b16 %v478, %v476
        %v517 = vpack.c.b16 %v481, %v479
        %v518 = vpack.c.b16 %v482, %v480
        %v519 = vpack.c.b16 %v485, %v483
        %v520 = vpack.c.b16 %v486, %v484
        %v521 = vpack.c.b16 %v489, %v487
        %v522 = vpack.c.b16 %v490, %v488
        %555 = vmatprep.subr.bf16.mxu0 %v506
        %556 = vmatpush1.bf16.msra.mxu0 %v505
        %557 = vmatprep.subr.bf16.mxu0 %v504
        %558 = vmatpush1.bf16.msra.mxu0 %v503
        %559 = vmatprep.subr.bf16.mxu0 %v502
        %560 = vmatpush1.bf16.msra.mxu0 %v501
        %561 = vmatprep.subr.bf16.mxu0 %v500
        %562 = vmatpush1.bf16.msra.mxu0 %v499
        %563 = vmatprep.subr.bf16.mxu0 %v498
        %564 = vmatpush1.bf16.msra.mxu0 %v497
        %565 = vmatprep.subr.bf16.mxu0 %v496
        %566 = vmatpush1.bf16.msra.mxu0 %v495
        %567 = vmatprep.subr.bf16.mxu0 %v494
        %568 = vmatpush1.bf16.msra.mxu0 %v493
        %569 = vmatprep.subr.bf16.mxu0 %v492
        %570 = vmatpush1.bf16.msra.mxu0 %v491
        %571 = vmatprep.subr.bf16.mxu0 %v522
        %572 = vmatpush2.bf16.msra.mxu0 %v521
        %573 = vmatprep.subr.bf16.mxu0 %v520
        %574 = vmatpush2.bf16.msra.mxu0 %v519
        %575 = vmatprep.subr.bf16.mxu0 %v518
        %576 = vmatpush2.bf16.msra.mxu0 %v517
        %577 = vmatprep.subr.bf16.mxu0 %v516
        %578 = vmatpush2.bf16.msra.mxu0 %v515
        %579 = vmatprep.subr.bf16.mxu0 %v514
        %580 = vmatpush2.bf16.msra.mxu0 %v513
        %581 = vmatprep.subr.bf16.mxu0 %v512
        %582 = vmatpush2.bf16.msra.mxu0 %v511
        %583 = vmatprep.subr.bf16.mxu0 %v510
        %584 = vmatpush2.bf16.msra.mxu0 %v509
        %585 = vmatprep.subr.bf16.mxu0 %v508
        %586 = vmatpush2.bf16.msra.mxu0 %v507
        %587 = vmatprep.mubr.bf16.mxu0 %v388
        %588 = vmatmul.mubr.bf16.gmra.mxu0 %v387
        %v589 = vpop.f32.mrf.mxu0
        %v590 = vadd.f32 0.0, %v589
        %v591 = vpop.f32.mrf.mxu0
        %v592 = vadd.f32 0.0, %v591
        %v593 = vpop.f32.mrf.mxu0
        %v594 = vadd.f32 0.0, %v593
        %v595 = vpop.f32.mrf.mxu0
        %v596 = vadd.f32 0.0, %v595
        %597 = vmatprep.mubr.bf16.mxu0 %v390
        %598 = vmatmul.mubr.bf16.gmra.mxu0 %v389
        %v599 = vpop.f32.mrf.mxu0
        %v600 = vadd.f32 0.0, %v599
        %v601 = vpop.f32.mrf.mxu0
        %v602 = vadd.f32 0.0, %v601
        %v603 = vpop.f32.mrf.mxu0
        %v604 = vadd.f32 0.0, %v603
        %v605 = vpop.f32.mrf.mxu0
        %v606 = vadd.f32 0.0, %v605
        %607 = vdwg.mxu0
        %v608 = vadd.f32 %v331, %v590
        %v609 = vadd.f32 %v332, %v592
        %v610 = vadd.f32 %v333, %v594
        %v611 = vadd.f32 %v334, %v596
        %v612 = vadd.f32 %v335, %v600
        %v613 = vadd.f32 %v336, %v602
        %v614 = vadd.f32 %v337, %v604
        %v615 = vadd.f32 %v338, %v606
        %616 = vst [vmem:[#allocation2] sm:$0xff] %v608
        %617 = vst [vmem:[#allocation2 + $0x8] sm:$0xff] %v609
        %618 = vst [vmem:[#allocation2 + $0x10] sm:$0xff] %v610
        %619 = vst [vmem:[#allocation2 + $0x18] sm:$0xff] %v611
        %620 = vst [vmem:[#allocation2 + $0x20] sm:$0xff] %v612
        %621 = vst [vmem:[#allocation2 + $0x28] sm:$0xff] %v613
        %622 = vst [vmem:[#allocation2 + $0x30] sm:$0xff] %v614
        %623 = vst [vmem:[#allocation2 + $0x38] sm:$0xff] %v615
        %p624 = scmp.eq.s32.totalorder %s21, 4
        // Predicated region
        $region75: #{forward.15} parent=65 // pred_check
          %p625 = pneg %p624
        $region76: #{forward.15} parent=65 // pred_check_branch
          %627 = sbr.rel (%p625) target = $region78
        $region77: #{forward.15} parent=65 // pred_region
          %v628 = vld [vmem:[#allocation2] sm:$0xff]
          %v629 = vld [vmem:[#allocation2 + $0x8] sm:$0xff]
          %v630 = vld [vmem:[#allocation2 + $0x10] sm:$0xff]
          %v631 = vld [vmem:[#allocation2 + $0x18] sm:$0xff]
          %v632 = vld [vmem:[#allocation2 + $0x20] sm:$0xff]
          %v633 = vld [vmem:[#allocation2 + $0x28] sm:$0xff]
          %v634 = vld [vmem:[#allocation2 + $0x30] sm:$0xff]
          %v635 = vld [vmem:[#allocation2 + $0x38] sm:$0xff]
          %v636 = vld [vmem:[%s305] sm:$0x3]
          %v638 = vlaneseq
          %v639 = vshrl.u32 %v638, 7
          %v640 = vsub.s32 0, %v639
          %v641 = vrot.slane %v636, %v640
          %v642 = vlaneseq
          %v643 = vshrl.u32 %v642, 7
          %v644 = vsub.s32 1, %v643
          %v645 = vrot.slane %v636, %v644
          %v648 = vadd.f32 %v628, %v641
          %v649 = vadd.f32 %v629, %v645
          %v650 = vadd.f32 %v630, %v641
          %v651 = vadd.f32 %v631, %v645
          %v652 = vadd.f32 %v632, %v641
          %v653 = vadd.f32 %v633, %v645
          %v654 = vadd.f32 %v634, %v641
          %v655 = vadd.f32 %v635, %v645
          %v656 = vmax.f32 %v648, 0.0
          %v657 = vmax.f32 %v649, 0.0
          %v658 = vmax.f32 %v650, 0.0
          %v659 = vmax.f32 %v651, 0.0
          %v660 = vmax.f32 %v652, 0.0
          %v661 = vmax.f32 %v653, 0.0
          %v662 = vmax.f32 %v654, 0.0
          %v663 = vmax.f32 %v655, 0.0
          %664 = vst [vmem:[%s316] sm:$0xff] %v656
          %665 = vst [vmem:[%s316 + $0x8] sm:$0xff] %v657
          %666 = vst [vmem:[%s316 + $0x10] sm:$0xff] %v658
          %667 = vst [vmem:[%s316 + $0x18] sm:$0xff] %v659
          %668 = vst [vmem:[%s316 + $0x20] sm:$0xff] %v660
          %669 = vst [vmem:[%s316 + $0x28] sm:$0xff] %v661
          %670 = vst [vmem:[%s316 + $0x30] sm:$0xff] %v662
          %671 = vst [vmem:[%s316 + $0x38] sm:$0xff] %v663
        $region78: #{forward.15} parent=65 // pred_fallthru
          _
        %s672 = smul.u32 4, %s19
        %s673 = smul.u32 2, %s20
        %p674 = scmp.lt.s32.totalorder %s672, 3
        %s675 = scalar_select %p674, %s672, 3
        %p676 = scmp.lt.s32.totalorder %s673, 1
        %s677 = scalar_select %p676, %s673, 1
        %s678 = smul.addr %s675, 2
        %s679 = sadd.s32 %s677, %s678
        %s680 = smul.addr %s679, 8
        %s681 = scalar_lea.vmem %s3, %s680
        // Predicated region
        $region79: #{forward.15} parent=65 // pred_check
          %p682 = pneg %p135
        $region80: #{forward.15} parent=65 // pred_check_branch
          %684 = sbr.rel (%p682) target = $region82
        $region81: #{forward.15} parent=65 // pred_region
          %s685 = smul.u32 4, %s19
          %s686 = smul.u32 2, %s20
        $region82: #{forward.15} parent=65 // pred_fallthru
          _
        // Predicated region
        $region83: #{forward.15} parent=65 // pred_check
          %p687 = pneg %p135
        $region84: #{forward.15} parent=65 // pred_check_branch
          %689 = sbr.rel (%p687) target = $region86
        $region85: #{forward.15} parent=65 // pred_region
          %s690 = smul.u32 4, %s19
          %s691 = smul.u32 2, %s20
          %p692 = scmp.lt.s32.totalorder %s690, 3
          %s693 = scalar_select %p692, %s690, 3
          %p694 = scmp.lt.s32.totalorder %s691, 1
          %s695 = scalar_select %p694, %s691, 1
          %s696 = smul.addr %s693, 2
          %s697 = sadd.s32 %s695, %s696
          %s698 = smul.addr %s697, 8
          %s699 = scalar_lea.vmem %s3, %s698
        $region86: #{forward.15} parent=65 // pred_fallthru
          _
      $region66: #{forward.15} parent=5 // pred_fallthru
        _
      %p700 = scmp.le.s32.totalorder 2, %s9
      // Predicated region
      $region87: #{forward.15} parent=5 // pred_check
        %p701 = pneg %p700
      $region88: #{forward.15} parent=5 // pred_check_branch
        %703 = sbr.rel (%p701) target = $region90
      $region89: #{forward.15} parent=5 // pred_region
        %s704 = ssub.s32 %s9, 2
      $region90: #{forward.15} parent=5 // pred_fallthru
        _
    $region6: #{forward.15} parent=1 // loop_footer
      %s13 = sadd.s32 1, %s9
    $region7: #{forward.15} parent=1 // loop_footer_branch
      %8 = sbr.rel target = $region3
    $region8: #{forward.15} parent=1 // loop_exit
      _

// kernel: forward.16
$region0: #{forward.16}
  #allocation0 [shape = 'u32[]', space=smem, size = 0x4, offset = 0x4, fixed_abs, tag = 'smem constant byte address 0x4 - core index']
  #allocation1 [shape = 'u32[144,128]{1,0:T(1,128)}', space=vmem, size = 0x12000, scoped, tag = 'internal scratch']
  #allocation2 [shape = 'f32[8,256]{1,0:T(8,128)}', space=vmem, size = 0x2000, scoped, tag = 'scratch operand']
  %s0 = inlined_call_operand.vmem [shape: bf16[8,2304], index: 0, kind: input, shape index: {}]
  %s1 = inlined_call_operand.vmem [shape: bf16[2304,512], index: 1, kind: input, shape index: {}]
  %s2 = inlined_call_operand.vmem [shape: f32[1,512], index: 2, kind: input, shape index: {}]
  %s3 = inlined_call_operand.vmem [shape: f32[8,512], index: 3, kind: output, shape index: {}]
  %s4 = sld [smem:[#allocation0]]
  $region91: #{forward.16} parent=0
    _
  %s6 = ssub.s32 1, %s4
  %s7 = scalar_select 0, %s6, %s4
  $region1: #{forward.16} parent=0
    #allocation3 [shape = 'u8[262144]{0}', space=vmem, size = 0x40000, scoped, tag = 'input window, operand 1']
    loop: start=0, step=1, limit=20
    $region2: #{forward.16} parent=1 // loop_pre_header
      _
    $region3: #{forward.16} parent=1 // loop_header
      %s9 = sphi 0, %s13
      %p10 = scmp.ge.s32.totalorder %s9, 20
      %s16 = sphi 0, %s35
      %s17 = sphi 0, %s31
      %s18 = sphi 0, %s27
      %s19 = sphi 0, %s16
      %s20 = sphi 0, %s17
      %s21 = sphi 0, %s18
      %s22 = sphi 0, %s19
      %s23 = sphi 0, %s20
      %s24 = sphi 0, %s21
      %s40 = sphi 0, %s42
      %s43 = sphi 0, %s40
      %s44 = sphi 0, %s43
      %s60 = sphi 0, %s44
      %s68 = sphi 0, %s70
      %s71 = sphi 0, %s68
      %s72 = sphi 0, %s71
      %s88 = sphi 0, %s72
      %s94 = sphi 0, %s96
      %s97 = sphi 0, %s94
      %s98 = sphi 0, %s97
      %s114 = sphi 0, %s98
      %s122 = sphi 0, %s124
      %s125 = sphi 0, %s122
      %s126 = sphi 0, %s125
      %s142 = sphi 0, %s126
    $region4: #{forward.16} parent=1 // loop_header_branch
      %12 = sbr.rel (%p10) target = $region8
    $region5: #{forward.16} parent=1 // loop_body
      %s14 = ssub.s32 %s9, 1
      %s15 = ssub.s32 %s9, 2
      %s25 = sadd.s32 1, %s18
      %p26 = scmp.ge.s32.totalorder %s25, 9
      %s27 = scalar_select %p26, 0, %s25
      %s28 = sadd.s32 1, %s17
      %s29 = scalar_select %p26, %s28, %s17
      %p30 = scmp.ge.s32.totalorder %s29, 2
      %s31 = scalar_select %p30, 0, %s29
      %s32 = sadd.s32 1, %s16
      %s33 = scalar_select %p30, %s32, %s16
      %p34 = scmp.ge.s32.totalorder %s33, 1
      %s35 = scalar_select %p34, 0, %s33
      %s36 = ssub.s32 %s16, %s35
      %s37 = ssub.s32 %s18, %s27
      %s38 = sor.u32 %s36, %s37
      %p39 = scmp.eq.s32.totalorder %s38, 0
      %s41 = sadd.s32 %s40, 1
      %s42 = scalar_select %p39, %s40, %s41
      %p45 = pneg %p39
      %p46 = scmp.eq.s32.totalorder %s9, 17
      %p47 = por %p45, %p46
      %p48 = scmp.ne.s32.totalorder %s40, %s43
      %p49 = scmp.eq.s32.totalorder %s9, 0
      %p50 = por %p48, %p49
      %p51 = scmp.ne.s32.totalorder %s40, %s43
      %p52 = scmp.eq.s32.totalorder %s14, 17
      %p53 = por %p51, %p52
      %p54 = scmp.ne.s32.totalorder %s43, %s44
      %p55 = scmp.eq.s32.totalorder %s14, 0
      %p56 = por %p54, %p55
      %p57 = scmp.ne.s32.totalorder %s43, %s44
      %p58 = scmp.eq.s32.totalorder %s15, 17
      %p59 = por %p57, %p58
      %p61 = scmp.ne.s32.totalorder %s44, %s60
      %p62 = scmp.eq.s32.totalorder %s15, 0
      %p63 = por %p61, %p62
      %s64 = ssub.s32 %s18, %s27
      %s65 = ssub.s32 %s17, %s31
      %s66 = sor.u32 %s64, %s65
      %p67 = scmp.eq.s32.totalorder %s66, 0
      %s69 = sadd.s32 %s68, 1
      %s70 = scalar_select %p67, %s68, %s69
      %p73 = pneg %p67
      %p74 = scmp.eq.s32.totalorder %s9, 17
      %p75 = por %p73, %p74
      %p76 = scmp.ne.s32.totalorder %s68, %s71
      %p77 = scmp.eq.s32.totalorder %s9, 0
      %p78 = por %p76, %p77
      %p79 = scmp.ne.s32.totalorder %s68, %s71
      %p80 = scmp.eq.s32.totalorder %s14, 17
      %p81 = por %p79, %p80
      %p82 = scmp.ne.s32.totalorder %s71, %s72
      %p83 = scmp.eq.s32.totalorder %s14, 0
      %p84 = por %p82, %p83
      %p85 = scmp.ne.s32.totalorder %s71, %s72
      %p86 = scmp.eq.s32.totalorder %s15, 17
      %p87 = por %p85, %p86
      %p89 = scmp.ne.s32.totalorder %s72, %s88
      %p90 = scmp.eq.s32.totalorder %s15, 0
      %p91 = por %p89, %p90
      %s92 = ssub.s32 %s17, %s31
      %p93 = scmp.eq.s32.totalorder %s92, 0
      %s95 = sadd.s32 %s94, 1
      %s96 = scalar_select %p93, %s94, %s95
      %p99 = pneg %p93
      %p100 = scmp.eq.s32.totalorder %s9, 17
      %p101 = por %p99, %p100
      %p102 = scmp.ne.s32.totalorder %s94, %s97
      %p103 = scmp.eq.s32.totalorder %s9, 0
      %p104 = por %p102, %p103
      %p105 = scmp.ne.s32.totalorder %s94, %s97
      %p106 = scmp.eq.s32.totalorder %s14, 17
      %p107 = por %p105, %p106
      %p108 = scmp.ne.s32.totalorder %s97, %s98
      %p109 = scmp.eq.s32.totalorder %s14, 0
      %p110 = por %p108, %p109
      %p111 = scmp.ne.s32.totalorder %s97, %s98
      %p112 = scmp.eq.s32.totalorder %s15, 17
      %p113 = por %p111, %p112
      %p115 = scmp.ne.s32.totalorder %s98, %s114
      %p116 = scmp.eq.s32.totalorder %s15, 0
      %p117 = por %p115, %p116
      %s118 = ssub.s32 %s16, %s35
      %s119 = ssub.s32 %s17, %s31
      %s120 = sor.u32 %s118, %s119
      %p121 = scmp.eq.s32.totalorder %s120, 0
      %s123 = sadd.s32 %s122, 1
      %s124 = scalar_select %p121, %s122, %s123
      %p127 = pneg %p121
      %p128 = scmp.eq.s32.totalorder %s9, 17
      %p129 = por %p127, %p128
      %p130 = scmp.ne.s32.totalorder %s122, %s125
      %p131 = scmp.eq.s32.totalorder %s9, 0
      %p132 = por %p130, %p131
      %p133 = scmp.ne.s32.totalorder %s122, %s125
      %p134 = scmp.eq.s32.totalorder %s14, 17
      %p135 = por %p133, %p134
      %p136 = scmp.ne.s32.totalorder %s125, %s126
      %p137 = scmp.eq.s32.totalorder %s14, 0
      %p138 = por %p136, %p137
      %p139 = scmp.ne.s32.totalorder %s125, %s126
      %p140 = scmp.eq.s32.totalorder %s15, 17
      %p141 = por %p139, %p140
      %p143 = scmp.ne.s32.totalorder %s126, %s142
      %p144 = scmp.eq.s32.totalorder %s15, 0
      %p145 = por %p143, %p144
      %p146 = scmp.le.s32.totalorder 1, %s9
      %p147 = scmp.lt.s32.totalorder %s9, 19
      %p148 = pnand %p146, %p147
      %p149 = pneg %p148
      // Predicated region
      $region9: #{forward.16} parent=5 // pred_check
        _
      $region10: #{forward.16} parent=5 // pred_check_branch
        %151 = sbr.rel (%p148) target = $region12
      $region11: #{forward.16} parent=5 // pred_region
        %s152 = ssub.s32 %s9, 1
      $region12: #{forward.16} parent=5 // pred_fallthru
        _
      %p153 = scmp.lt.s32.totalorder %s9, 18
      // Predicated region
      $region13: #{forward.16} parent=5 // pred_check
        %p154 = pneg %p153
      $region14: #{forward.16} parent=5 // pred_check_branch
        %156 = sbr.rel (%p154) target = $region16
      $region15: #{forward.16} parent=5 // pred_region
        // Predicated region
        $region17: #{forward.16} parent=15 // pred_check
          %p157 = pneg %p50
        $region18: #{forward.16} parent=15 // pred_check_branch
          %159 = sbr.rel (%p157) target = $region20
        $region19: #{forward.16} parent=15 // pred_region
          %s160 = smul.u32 2, %s18
          %p161 = scmp.lt.s32.totalorder %s16, 0
          %s162 = scalar_select %p161, %s16, 0
          %p163 = scmp.lt.s32.totalorder %s160, 17
          %s164 = scalar_select %p163, %s160, 17
          %s165 = smul.addr %s162, 18
          %s166 = sadd.s32 %s164, %s165
          %s167 = smul.addr %s166, 4
          %s168 = scalar_lea.vmem %s0, %s167
          %s169 = smul.u32 2, %s18
        $region20: #{forward.16} parent=15 // pred_fallthru
          _
        // Predicated region
        $region21: #{forward.16} parent=15 // pred_check
          %p170 = pneg %p78
        $region22: #{forward.16} parent=15 // pred_check_branch
          %172 = sbr.rel (%p170) target = $region24
        $region23: #{forward.16} parent=15 // pred_region
          %s173 = sand.u32 %s68, 1
          %s174 = sand.u32 %s68, 1
          %s175 = smul.addr %s174, 256
          %s176 = scalar_lea.vmem [#allocation3], %s175
          %s177 = smul.u32 32, %s18
          %s178 = smul.u32 2, %s17
          %s179 = smul.addr %s177, 4
          %s180 = sadd.s32 %s178, %s179
          %s181 = smul.addr %s180, 4
          %s182 = scalar_lea.vmem %s1, %s181
          // Predicated region
          $region25: #{forward.16} parent=23 // pred_check
            _
          $region26: #{forward.16} parent=23 // pred_check_branch
            %184 = sbr.rel (0) target = $region28
          $region27: #{forward.16} parent=23 // pred_region
            // Predicated region
            $region29: #{forward.16} parent=27 // pred_check
              _
            $region30: #{forward.16} parent=27 // pred_check_branch
              %186 = sbr.rel (0) target = $region32
            $region31: #{forward.16} parent=27 // pred_region
              // Predicated region
              $region44: #{forward.16} parent=31 // pred_check
                _
              $region45: #{forward.16} parent=31 // pred_check_branch
                %264 = sbr.rel (0) target = $region47
              $region46: #{forward.16} parent=31 // pred_region
                loop: start=0, step=1, limit=1
                $region48: #{forward.16} parent=46 // loop_pre_header
                  _
                $region49: #{forward.16} parent=46 // loop_header
                  %s266 = sphi 0, %s270
                  %p267 = scmp.ge.s32.totalorder %s266, 1
                  %s271 = sphi %s182, %s182
                  %s272 = sphi %s176, %s176
                $region50: #{forward.16} parent=46 // loop_header_branch
                  %269 = sbr.rel (%p267) target = $region54
                $region51: #{forward.16} parent=46 // loop_body
                  %v273 = vld [vmem:[%s271] sm:$0xff]
                  %274 = vst [vmem:[%s272] sm:$0xff] %v273
                  %v275 = vld [vmem:[%s271 + $0x10] sm:$0xff]
                  %276 = vst [vmem:[%s272 + $0x8] sm:$0xff] %v275
                  %v277 = vld [vmem:[%s271 + $0x20] sm:$0xff]
                  %278 = vst [vmem:[%s272 + $0x10] sm:$0xff] %v277
                  %v279 = vld [vmem:[%s271 + $0x30] sm:$0xff]
                  %280 = vst [vmem:[%s272 + $0x18] sm:$0xff] %v279
                  %v281 = vld [vmem:[%s271 + $0x40] sm:$0xff]
                  %282 = vst [vmem:[%s272 + $0x20] sm:$0xff] %v281
                  %v283 = vld [vmem:[%s271 + $0x50] sm:$0xff]
                  %284 = vst [vmem:[%s272 + $0x28] sm:$0xff] %v283
                  %v285 = vld [vmem:[%s271 + $0x60] sm:$0xff]
                  %286 = vst [vmem:[%s272 + $0x30] sm:$0xff] %v285
                  %v287 = vld [vmem:[%s271 + $0x70] sm:$0xff]
                  %288 = vst [vmem:[%s272 + $0x38] sm:$0xff] %v287
                  %v289 = vld [vmem:[%s271 + $0x80] sm:$0xff]
                  %290 = vst [vmem:[%s272 + $0x40] sm:$0xff] %v289
                  %v291 = vld [vmem:[%s271 + $0x90] sm:$0xff]
                  %292 = vst [vmem:[%s272 + $0x48] sm:$0xff] %v291
                  %v293 = vld [vmem:[%s271 + $0xa0] sm:$0xff]
                  %294 = vst [vmem:[%s272 + $0x50] sm:$0xff] %v293
                  %v295 = vld [vmem:[%s271 + $0xb0] sm:$0xff]
                  %296 = vst [vmem:[%s272 + $0x58] sm:$0xff] %v295
                  %v297 = vld [vmem:[%s271 + $0xc0] sm:$0xff]
                  %298 = vst [vmem:[%s272 + $0x60] sm:$0xff] %v297
                  %v299 = vld [vmem:[%s271 + $0xd0] sm:$0xff]
                  %300 = vst [vmem:[%s272 + $0x68] sm:$0xff] %v299
                  %v301 = vld [vmem:[%s271 + $0xe0] sm:$0xff]
                  %302 = vst [vmem:[%s272 + $0x70] sm:$0xff] %v301
                  %v303 = vld [vmem:[%s271 + $0xf0] sm:$0xff]
                  %304 = vst [vmem:[%s272 + $0x78] sm:$0xff] %v303
                  %v305 = vld [vmem:[%s271 + $0x100] sm:$0xff]
                  %306 = vst [vmem:[%s272 + $0x80] sm:$0xff] %v305
                  %v307 = vld [vmem:[%s271 + $0x110] sm:$0xff]
                  %308 = vst [vmem:[%s272 + $0x88] sm:$0xff] %v307
                  %v309 = vld [vmem:[%s271 + $0x120] sm:$0xff]
                  %310 = vst [vmem:[%s272 + $0x90] sm:$0xff] %v309
                  %v311 = vld [vmem:[%s271 + $0x130] sm:$0xff]
                  %312 = vst [vmem:[%s272 + $0x98] sm:$0xff] %v311
                  %v313 = vld [vmem:[%s271 + $0x140] sm:$0xff]
                  %314 = vst [vmem:[%s272 + $0xa0] sm:$0xff] %v313
                  %v315 = vld [vmem:[%s271 + $0x150] sm:$0xff]
                  %316 = vst [vmem:[%s272 + $0xa8] sm:$0xff] %v315
                  %v317 = vld [vmem:[%s271 + $0x160] sm:$0xff]
                  %318 = vst [vmem:[%s272 + $0xb0] sm:$0xff] %v317
                  %v319 = vld [vmem:[%s271 + $0x170] sm:$0xff]
                  %320 = vst [vmem:[%s272 + $0xb8] sm:$0xff] %v319
                  %v321 = vld [vmem:[%s271 + $0x180] sm:$0xff]
                  %322 = vst [vmem:[%s272 + $0xc0] sm:$0xff] %v321
                  %v323 = vld [vmem:[%s271 + $0x190] sm:$0xff]
                  %324 = vst [vmem:[%s272 + $0xc8] sm:$0xff] %v323
                  %v325 = vld [vmem:[%s271 + $0x1a0] sm:$0xff]
                  %326 = vst [vmem:[%s272 + $0xd0] sm:$0xff] %v325
                  %v327 = vld [vmem:[%s271 + $0x1b0] sm:$0xff]
                  %328 = vst [vmem:[%s272 + $0xd8] sm:$0xff] %v327
                  %v329 = vld [vmem:[%s271 + $0x1c0] sm:$0xff]
                  %330 = vst [vmem:[%s272 + $0xe0] sm:$0xff] %v329
                  %v331 = vld [vmem:[%s271 + $0x1d0] sm:$0xff]
                  %332 = vst [vmem:[%s272 + $0xe8] sm:$0xff] %v331
                  %v333 = vld [vmem:[%s271 + $0x1e0] sm:$0xff]
                  %334 = vst [vmem:[%s272 + $0xf0] sm:$0xff] %v333
                  %v335 = vld [vmem:[%s271 + $0x1f0] sm:$0xff]
                  %336 = vst [vmem:[%s272 + $0xf8] sm:$0xff] %v335
                $region52: #{forward.16} parent=46 // loop_footer
                  %s270 = sadd.s32 1, %s266
                $region53: #{forward.16} parent=46 // loop_footer_branch
                  %265 = sbr.rel target = $region49
                $region54: #{forward.16} parent=46 // loop_exit
                  _
              $region47: #{forward.16} parent=31 // pred_fallthru
                _
              // Predicated region
              $region55: #{forward.16} parent=31 // pred_check
                _
              $region56: #{forward.16} parent=31 // pred_check_branch
                %338 = sbr.rel target = $region58
              $region57: #{forward.16} parent=31 // pred_region
                _
              $region58: #{forward.16} parent=31 // pred_fallthru
                _
            $region32: #{forward.16} parent=27 // pred_fallthru
              _
            // Predicated region
            $region33: #{forward.16} parent=27 // pred_check
              _
            $region34: #{forward.16} parent=27 // pred_check_branch
              %188 = sbr.rel target = $region36
            $region35: #{forward.16} parent=27 // pred_region
              %s190 = ssub.s32 256, 1
              loop: start=0, step=1, limit=1
              $region37: #{forward.16} parent=35 // loop_pre_header
                _
              $region38: #{forward.16} parent=35 // loop_header
                %s192 = sphi 0, %s196
                %p193 = scmp.ge.s32.totalorder %s192, 1
                %s197 = sphi %s182, %s182
                %s198 = sphi %s176, %s176
              $region39: #{forward.16} parent=35 // loop_header_branch
                %195 = sbr.rel (%p193) target = $region43
              $region40: #{forward.16} parent=35 // loop_body
                %v199 = vld [vmem:[%s197] sm:%s190]
                %200 = vst [vmem:[%s198] sm:%s190] %v199
                %v201 = vld [vmem:[%s197 + $0x10] sm:%s190]
                %202 = vst [vmem:[%s198 + $0x8] sm:%s190] %v201
                %v203 = vld [vmem:[%s197 + $0x20] sm:%s190]
                %204 = vst [vmem:[%s198 + $0x10] sm:%s190] %v203
                %v205 = vld [vmem:[%s197 + $0x30] sm:%s190]
                %206 = vst [vmem:[%s198 + $0x18] sm:%s190] %v205
                %v207 = vld [vmem:[%s197 + $0x40] sm:%s190]
                %208 = vst [vmem:[%s198 + $0x20] sm:%s190] %v207
                %v209 = vld [vmem:[%s197 + $0x50] sm:%s190]
                %210 = vst [vmem:[%s198 + $0x28] sm:%s190] %v209
                %v211 = vld [vmem:[%s197 + $0x60] sm:%s190]
                %212 = vst [vmem:[%s198 + $0x30] sm:%s190] %v211
                %v213 = vld [vmem:[%s197 + $0x70] sm:%s190]
                %214 = vst [vmem:[%s198 + $0x38] sm:%s190] %v213
                %v215 = vld [vmem:[%s197 + $0x80] sm:%s190]
                %216 = vst [vmem:[%s198 + $0x40] sm:%s190] %v215
                %v217 = vld [vmem:[%s197 + $0x90] sm:%s190]
                %218 = vst [vmem:[%s198 + $0x48] sm:%s190] %v217
                %v219 = vld [vmem:[%s197 + $0xa0] sm:%s190]
                %220 = vst [vmem:[%s198 + $0x50] sm:%s190] %v219
                %v221 = vld [vmem:[%s197 + $0xb0] sm:%s190]
                %222 = vst [vmem:[%s198 + $0x58] sm:%s190] %v221
                %v223 = vld [vmem:[%s197 + $0xc0] sm:%s190]
                %224 = vst [vmem:[%s198 + $0x60] sm:%s190] %v223
                %v225 = vld [vmem:[%s197 + $0xd0] sm:%s190]
                %226 = vst [vmem:[%s198 + $0x68] sm:%s190] %v225
                %v227 = vld [vmem:[%s197 + $0xe0] sm:%s190]
                %228 = vst [vmem:[%s198 + $0x70] sm:%s190] %v227
                %v229 = vld [vmem:[%s197 + $0xf0] sm:%s190]
                %230 = vst [vmem:[%s198 + $0x78] sm:%s190] %v229
                %v231 = vld [vmem:[%s197 + $0x100] sm:%s190]
                %232 = vst [vmem:[%s198 + $0x80] sm:%s190] %v231
                %v233 = vld [vmem:[%s197 + $0x110] sm:%s190]
                %234 = vst [vmem:[%s198 + $0x88] sm:%s190] %v233
                %v235 = vld [vmem:[%s197 + $0x120] sm:%s190]
                %236 = vst [vmem:[%s198 + $0x90] sm:%s190] %v235
                %v237 = vld [vmem:[%s197 + $0x130] sm:%s190]
                %238 = vst [vmem:[%s198 + $0x98] sm:%s190] %v237
                %v239 = vld [vmem:[%s197 + $0x140] sm:%s190]
                %240 = vst [vmem:[%s198 + $0xa0] sm:%s190] %v239
                %v241 = vld [vmem:[%s197 + $0x150] sm:%s190]
                %242 = vst [vmem:[%s198 + $0xa8] sm:%s190] %v241
                %v243 = vld [vmem:[%s197 + $0x160] sm:%s190]
                %244 = vst [vmem:[%s198 + $0xb0] sm:%s190] %v243
                %v245 = vld [vmem:[%s197 + $0x170] sm:%s190]
                %246 = vst [vmem:[%s198 + $0xb8] sm:%s190] %v245
                %v247 = vld [vmem:[%s197 + $0x180] sm:%s190]
                %248 = vst [vmem:[%s198 + $0xc0] sm:%s190] %v247
                %v249 = vld [vmem:[%s197 + $0x190] sm:%s190]
                %250 = vst [vmem:[%s198 + $0xc8] sm:%s190] %v249
                %v251 = vld [vmem:[%s197 + $0x1a0] sm:%s190]
                %252 = vst [vmem:[%s198 + $0xd0] sm:%s190] %v251
                %v253 = vld [vmem:[%s197 + $0x1b0] sm:%s190]
                %254 = vst [vmem:[%s198 + $0xd8] sm:%s190] %v253
                %v255 = vld [vmem:[%s197 + $0x1c0] sm:%s190]
                %256 = vst [vmem:[%s198 + $0xe0] sm:%s190] %v255
                %v257 = vld [vmem:[%s197 + $0x1d0] sm:%s190]
                %258 = vst [vmem:[%s198 + $0xe8] sm:%s190] %v257
                %v259 = vld [vmem:[%s197 + $0x1e0] sm:%s190]
                %260 = vst [vmem:[%s198 + $0xf0] sm:%s190] %v259
                %v261 = vld [vmem:[%s197 + $0x1f0] sm:%s190]
                %262 = vst [vmem:[%s198 + $0xf8] sm:%s190] %v261
              $region41: #{forward.16} parent=35 // loop_footer
                %s196 = sadd.s32 1, %s192
              $region42: #{forward.16} parent=35 // loop_footer_branch
                %191 = sbr.rel target = $region38
              $region43: #{forward.16} parent=35 // loop_exit
                _
            $region36: #{forward.16} parent=27 // pred_fallthru
              _
          $region28: #{forward.16} parent=23 // pred_fallthru
            _
          %339 = vnop
        $region24: #{forward.16} parent=15 // pred_fallthru
          _
        // Predicated region
        $region59: #{forward.16} parent=15 // pred_check
          %p340 = pneg %p104
        $region60: #{forward.16} parent=15 // pred_check_branch
          %342 = sbr.rel (%p340) target = $region62
        $region61: #{forward.16} parent=15 // pred_region
          %s343 = smul.u32 2, %s17
          %p344 = scmp.lt.s32.totalorder %s343, 3
          %s345 = scalar_select %p344, %s343, 3
          %s346 = scalar_lea.vmem %s2, %s345
          %s347 = smul.u32 2, %s17
        $region62: #{forward.16} parent=15 // pred_fallthru
          _
      $region16: #{forward.16} parent=5 // pred_fallthru
        _
      %p348 = scmp.le.s32.totalorder 1, %s9
      %p349 = scmp.lt.s32.totalorder %s9, 19
      %p350 = pnand %p348, %p349
      %p351 = pneg %p350
      // Predicated region
      $region63: #{forward.16} parent=5 // pred_check
        _
      $region64: #{forward.16} parent=5 // pred_check_branch
        %353 = sbr.rel (%p350) target = $region66
      $region65: #{forward.16} parent=5 // pred_region
        %s354 = ssub.s32 %s9, 1
        %s355 = sand.u32 %s71, 1
        %s356 = sand.u32 %s71, 1
        %s357 = smul.addr %s356, 256
        %s358 = scalar_lea.vmem [#allocation3], %s357
        // Predicated region
        $region67: #{forward.16} parent=65 // pred_check
          %p359 = pneg %p84
        $region68: #{forward.16} parent=65 // pred_check_branch
          %361 = sbr.rel (%p359) target = $region70
        $region69: #{forward.16} parent=65 // pred_region
          _
        $region70: #{forward.16} parent=65 // pred_fallthru
          _
        %s362 = smul.u32 2, %s21
        %p363 = scmp.lt.s32.totalorder %s19, 0
        %s364 = scalar_select %p363, %s19, 0
        %p365 = scmp.lt.s32.totalorder %s362, 17
        %s366 = scalar_select %p365, %s362, 17
        %s367 = smul.addr %s364, 18
        %s368 = sadd.s32 %s366, %s367
        %s369 = smul.addr %s368, 4
        %s370 = scalar_lea.vmem %s0, %s369
        %p371 = pneg %p56
        %p372 = pneg %p53
        %s373 = sand.u32 %s71, 1
        %s374 = sand.u32 %s71, 1
        %s375 = smul.addr %s374, 256
        %s376 = scalar_lea.vmem [#allocation3], %s375
        %p377 = pneg %p84
        %p378 = pneg %p81
        %s379 = smul.u32 2, %s20
        %p380 = scmp.lt.s32.totalorder %s379, 3
        %s381 = scalar_select %p380, %s379, 3
        %s382 = scalar_lea.vmem %s2, %s381
        %p383 = pneg %p110
        %p384 = pneg %p107
        %p385 = pneg %p138
        %p386 = pneg %p135
        %s387 = smul.u32 2, %s20
        %p388 = scmp.lt.s32.totalorder %s19, 0
        %s389 = scalar_select %p388, %s19, 0
        %p390 = scmp.lt.s32.totalorder %s387, 3
        %s391 = scalar_select %p390, %s387, 3
        %s392 = smul.addr %s389, 4
        %s393 = sadd.s32 %s391, %s392
        %s394 = smul.addr %s393, 8
        %s395 = scalar_lea.vmem %s3, %s394
        %s396 = smul.u32 2, %s21
        %p397 = scmp.lt.s32.totalorder %s19, 0
        %s398 = scalar_select %p397, %s19, 0
        %p399 = scmp.lt.s32.totalorder %s396, 17
        %s400 = scalar_select %p399, %s396, 17
        %s401 = smul.addr %s398, 18
        %s402 = sadd.s32 %s400, %s401
        %s403 = smul.addr %s402, 4
        %s404 = scalar_lea.vmem %s0, %s403
        %s405 = smul.u32 2, %s21
        %s406 = smul.u32 32, %s21
        %s407 = smul.u32 2, %s20
        %s408 = smul.u32 2, %s20
        %p409 = scmp.lt.s32.totalorder %s408, 3
        %s410 = scalar_select %p409, %s408, 3
        %s411 = scalar_lea.vmem %s2, %s410
        %s412 = smul.u32 2, %s20
        %s413 = smul.u32 2, %s20
        %p414 = scmp.lt.s32.totalorder %s19, 0
        %s415 = scalar_select %p414, %s19, 0
        %p416 = scmp.lt.s32.totalorder %s413, 3
        %s417 = scalar_select %p416, %s413, 3
        %s418 = smul.addr %s415, 4
        %s419 = sadd.s32 %s417, %s418
        %s420 = smul.addr %s419, 8
        %s421 = scalar_lea.vmem %s3, %s420
        %s422 = smul.u32 2, %s20
        %p423 = scmp.eq.s32.totalorder %s21, 0
        // Predicated region
        $region71: #{forward.16} parent=65 // pred_check
          %p424 = pneg %p423
        $region72: #{forward.16} parent=65 // pred_check_branch
          %426 = sbr.rel (%p424) target = $region74
        $region73: #{forward.16} parent=65 // pred_region
          %427 = vst [vmem:[#allocation2] sm:$0xff] 0.0
          %428 = vst [vmem:[#allocation2 + $0x8] sm:$0xff] 0.0
        $region74: #{forward.16} parent=65 // pred_fallthru
          _
        %v429 = vld [vmem:[#allocation2] sm:$0xff]
        %v430 = vld [vmem:[#allocation2 + $0x8] sm:$0xff]
        %v431 = vld [vmem:[%s404] sm:$0xff]
        %v432 = vld [vmem:[%s358] sm:$0xff]
        %v433 = vld [vmem:[%s358 + $0x8] sm:$0xff]
        %v434 = vld [vmem:[%s358 + $0x10] sm:$0xff]
        %v435 = vld [vmem:[%s358 + $0x18] sm:$0xff]
        %v436 = vld [vmem:[%s358 + $0x20] sm:$0xff]
        %v437 = vld [vmem:[%s358 + $0x28] sm:$0xff]
        %v438 = vld [vmem:[%s358 + $0x30] sm:$0xff]
        %v439 = vld [vmem:[%s358 + $0x38] sm:$0xff]
        %v440 = vld [vmem:[%s358 + $0x40] sm:$0xff]
        %v441 = vld [vmem:[%s358 + $0x48] sm:$0xff]
        %v442 = vld [vmem:[%s358 + $0x50] sm:$0xff]
        %v443 = vld [vmem:[%s358 + $0x58] sm:$0xff]
        %v444 = vld [vmem:[%s358 + $0x60] sm:$0xff]
        %v445 = vld [vmem:[%s358 + $0x68] sm:$0xff]
        %v446 = vld [vmem:[%s358 + $0x70] sm:$0xff]
        %v447 = vld [vmem:[%s358 + $0x78] sm:$0xff]
        %v448 = vld [vmem:[%s358 + $0x80] sm:$0xff]
        %v449 = vld [vmem:[%s358 + $0x88] sm:$0xff]
        %v450 = vld [vmem:[%s358 + $0x90] sm:$0xff]
        %v451 = vld [vmem:[%s358 + $0x98] sm:$0xff]
        %v452 = vld [vmem:[%s358 + $0xa0] sm:$0xff]
        %v453 = vld [vmem:[%s358 + $0xa8] sm:$0xff]
        %v454 = vld [vmem:[%s358 + $0xb0] sm:$0xff]
        %v455 = vld [vmem:[%s358 + $0xb8] sm:$0xff]
        %v456 = vld [vmem:[%s358 + $0xc0] sm:$0xff]
        %v457 = vld [vmem:[%s358 + $0xc8] sm:$0xff]
        %v458 = vld [vmem:[%s358 + $0xd0] sm:$0xff]
        %v459 = vld [vmem:[%s358 + $0xd8] sm:$0xff]
        %v460 = vld [vmem:[%s358 + $0xe0] sm:$0xff]
        %v461 = vld [vmem:[%s358 + $0xe8] sm:$0xff]
        %v462 = vld [vmem:[%s358 + $0xf0] sm:$0xff]
        %v463 = vld [vmem:[%s358 + $0xf8] sm:$0xff]
        %v465 = vunpack.c.l.b16 %v431
        %v466 = vunpack.c.h.b16 %v431
        %v467 = vpack.c.b16 %v465, %v465
        %v468 = vpack.c.b16 %v466, %v466
        %v503 = vunpack.c.l.b16 %v432
        %v504 = vunpack.c.h.b16 %v432
        %v505 = vunpack.c.l.b16 %v433
        %v506 = vunpack.c.h.b16 %v433
        %v507 = vunpack.c.l.b16 %v434
        %v508 = vunpack.c.h.b16 %v434
        %v509 = vunpack.c.l.b16 %v435
        %v510 = vunpack.c.h.b16 %v435
        %v511 = vunpack.c.l.b16 %v436
        %v512 = vunpack.c.h.b16 %v436
        %v513 = vunpack.c.l.b16 %v437
        %v514 = vunpack.c.h.b16 %v437
        %v515 = vunpack.c.l.b16 %v438
        %v516 = vunpack.c.h.b16 %v438
        %v517 = vunpack.c.l.b16 %v439
        %v518 = vunpack.c.h.b16 %v439
        %v519 = vunpack.c.l.b16 %v440
        %v520 = vunpack.c.h.b16 %v440
        %v521 = vunpack.c.l.b16 %v441
        %v522 = vunpack.c.h.b16 %v441
        %v523 = vunpack.c.l.b16 %v442
        %v524 = vunpack.c.h.b16 %v442
        %v525 = vunpack.c.l.b16 %v443
        %v526 = vunpack.c.h.b16 %v443
        %v527 = vunpack.c.l.b16 %v444
        %v528 = vunpack.c.h.b16 %v444
        %v529 = vunpack.c.l.b16 %v445
        %v530 = vunpack.c.h.b16 %v445
        %v531 = vunpack.c.l.b16 %v446
        %v532 = vunpack.c.h.b16 %v446
        %v533 = vunpack.c.l.b16 %v447
        %v534 = vunpack.c.h.b16 %v447
        %v535 = vunpack.c.l.b16 %v448
        %v536 = vunpack.c.h.b16 %v448
        %v537 = vunpack.c.l.b16 %v449
        %v538 = vunpack.c.h.b16 %v449
        %v539 = vunpack.c.l.b16 %v450
        %v540 = vunpack.c.h.b16 %v450
        %v541 = vunpack.c.l.b16 %v451
        %v542 = vunpack.c.h.b16 %v451
        %v543 = vunpack.c.l.b16 %v452
        %v544 = vunpack.c.h.b16 %v452
        %v545 = vunpack.c.l.b16 %v453
        %v546 = vunpack.c.h.b16 %v453
        %v547 = vunpack.c.l.b16 %v454
        %v548 = vunpack.c.h.b16 %v454
        %v549 = vunpack.c.l.b16 %v455
        %v550 = vunpack.c.h.b16 %v455
        %v551 = vunpack.c.l.b16 %v456
        %v552 = vunpack.c.h.b16 %v456
        %v553 = vunpack.c.l.b16 %v457
        %v554 = vunpack.c.h.b16 %v457
        %v555 = vunpack.c.l.b16 %v458
        %v556 = vunpack.c.h.b16 %v458
        %v557 = vunpack.c.l.b16 %v459
        %v558 = vunpack.c.h.b16 %v459
        %v559 = vunpack.c.l.b16 %v460
        %v560 = vunpack.c.h.b16 %v460
        %v561 = vunpack.c.l.b16 %v461
        %v562 = vunpack.c.h.b16 %v461
        %v563 = vunpack.c.l.b16 %v462
        %v564 = vunpack.c.h.b16 %v462
        %v565 = vunpack.c.l.b16 %v463
        %v566 = vunpack.c.h.b16 %v463
        %v567 = vpack.c.b16 %v505, %v503
        %v568 = vpack.c.b16 %v506, %v504
        %v569 = vpack.c.b16 %v509, %v507
        %v570 = vpack.c.b16 %v510, %v508
        %v571 = vpack.c.b16 %v513, %v511
        %v572 = vpack.c.b16 %v514, %v512
        %v573 = vpack.c.b16 %v517, %v515
        %v574 = vpack.c.b16 %v518, %v516
        %v575 = vpack.c.b16 %v521, %v519
        %v576 = vpack.c.b16 %v522, %v520
        %v577 = vpack.c.b16 %v525, %v523
        %v578 = vpack.c.b16 %v526, %v524
        %v579 = vpack.c.b16 %v529, %v527
        %v580 = vpack.c.b16 %v530, %v528
        %v581 = vpack.c.b16 %v533, %v531
        %v582 = vpack.c.b16 %v534, %v532
        %v583 = vpack.c.b16 %v537, %v535
        %v584 = vpack.c.b16 %v538, %v536
        %v585 = vpack.c.b16 %v541, %v539
        %v586 = vpack.c.b16 %v542, %v540
        %v587 = vpack.c.b16 %v545, %v543
        %v588 = vpack.c.b16 %v546, %v544
        %v589 = vpack.c.b16 %v549, %v547
        %v590 = vpack.c.b16 %v550, %v548
        %v591 = vpack.c.b16 %v553, %v551
        %v592 = vpack.c.b16 %v554, %v552
        %v593 = vpack.c.b16 %v557, %v555
        %v594 = vpack.c.b16 %v558, %v556
        %v595 = vpack.c.b16 %v561, %v559
        %v596 = vpack.c.b16 %v562, %v560
        %v597 = vpack.c.b16 %v565, %v563
        %v598 = vpack.c.b16 %v566, %v564
        %631 = vmatprep.subr.bf16.mxu0 %v582
        %632 = vmatpush1.bf16.msra.mxu0 %v581
        %633 = vmatprep.subr.bf16.mxu0 %v580
        %634 = vmatpush1.bf16.msra.mxu0 %v579
        %635 = vmatprep.subr.bf16.mxu0 %v578
        %636 = vmatpush1.bf16.msra.mxu0 %v577
        %637 = vmatprep.subr.bf16.mxu0 %v576
        %638 = vmatpush1.bf16.msra.mxu0 %v575
        %639 = vmatprep.subr.bf16.mxu0 %v574
        %640 = vmatpush1.bf16.msra.mxu0 %v573
        %641 = vmatprep.subr.bf16.mxu0 %v572
        %642 = vmatpush1.bf16.msra.mxu0 %v571
        %643 = vmatprep.subr.bf16.mxu0 %v570
        %644 = vmatpush1.bf16.msra.mxu0 %v569
        %645 = vmatprep.subr.bf16.mxu0 %v568
        %646 = vmatpush1.bf16.msra.mxu0 %v567
        %647 = vmatprep.subr.bf16.mxu0 %v598
        %648 = vmatpush2.bf16.msra.mxu0 %v597
        %649 = vmatprep.subr.bf16.mxu0 %v596
        %650 = vmatpush2.bf16.msra.mxu0 %v595
        %651 = vmatprep.subr.bf16.mxu0 %v594
        %652 = vmatpush2.bf16.msra.mxu0 %v593
        %653 = vmatprep.subr.bf16.mxu0 %v592
        %654 = vmatpush2.bf16.msra.mxu0 %v591
        %655 = vmatprep.subr.bf16.mxu0 %v590
        %656 = vmatpush2.bf16.msra.mxu0 %v589
        %657 = vmatprep.subr.bf16.mxu0 %v588
        %658 = vmatpush2.bf16.msra.mxu0 %v587
        %659 = vmatprep.subr.bf16.mxu0 %v586
        %660 = vmatpush2.bf16.msra.mxu0 %v585
        %661 = vmatprep.subr.bf16.mxu0 %v584
        %662 = vmatpush2.bf16.msra.mxu0 %v583
        %663 = vmatprep.mubr.bf16.mxu0 %v468
        %664 = vmatmul.mubr.bf16.gmra.mxu0 %v467
        %v665 = vpop.f32.mrf.mxu0
        %v666 = vadd.f32 0.0, %v665
        %v667 = vpop.f32.mrf.mxu0
        %v668 = vadd.f32 0.0, %v667
        %v669 = vpop.f32.mrf.mxu0
        %v670 = vpop.f32.mrf.mxu0
        %671 = vdwg.mxu0
        %v672 = vadd.f32 %v429, %v666
        %v673 = vadd.f32 %v430, %v668
        %674 = vst [vmem:[#allocation2] sm:$0xff] %v672
        %675 = vst [vmem:[#allocation2 + $0x8] sm:$0xff] %v673
        %p676 = scmp.eq.s32.totalorder %s21, 8
        // Predicated region
        $region75: #{forward.16} parent=65 // pred_check
          %p677 = pneg %p676
        $region76: #{forward.16} parent=65 // pred_check_branch
          %679 = sbr.rel (%p677) target = $region78
        $region77: #{forward.16} parent=65 // pred_region
          %v680 = vld [vmem:[#allocation2] sm:$0xff]
          %v681 = vld [vmem:[#allocation2 + $0x8] sm:$0xff]
          %v682 = vld [vmem:[%s411] sm:$0x3]
          %v684 = vlaneseq
          %v685 = vshrl.u32 %v684, 7
          %v686 = vsub.s32 0, %v685
          %v687 = vrot.slane %v682, %v686
          %v688 = vlaneseq
          %v689 = vshrl.u32 %v688, 7
          %v690 = vsub.s32 1, %v689
          %v691 = vrot.slane %v682, %v690
          %v694 = vadd.f32 %v680, %v687
          %v695 = vadd.f32 %v681, %v691
          %v696 = vmax.f32 %v694, 0.0
          %v697 = vmax.f32 %v695, 0.0
          %698 = vst [vmem:[%s421] sm:$0xff] %v696
          %699 = vst [vmem:[%s421 + $0x8] sm:$0xff] %v697
        $region78: #{forward.16} parent=65 // pred_fallthru
          _
        %s700 = smul.u32 2, %s20
        %p701 = scmp.lt.s32.totalorder %s19, 0
        %s702 = scalar_select %p701, %s19, 0
        %p703 = scmp.lt.s32.totalorder %s700, 3
        %s704 = scalar_select %p703, %s700, 3
        %s705 = smul.addr %s702, 4
        %s706 = sadd.s32 %s704, %s705
        %s707 = smul.addr %s706, 8
        %s708 = scalar_lea.vmem %s3, %s707
        // Predicated region
        $region79: #{forward.16} parent=65 // pred_check
          %p709 = pneg %p135
        $region80: #{forward.16} parent=65 // pred_check_branch
          %711 = sbr.rel (%p709) target = $region82
        $region81: #{forward.16} parent=65 // pred_region
          %s712 = smul.u32 2, %s20
        $region82: #{forward.16} parent=65 // pred_fallthru
          _
      $region66: #{forward.16} parent=5 // pred_fallthru
        _
      %p713 = scmp.le.s32.totalorder 2, %s9
      // Predicated region
      $region83: #{forward.16} parent=5 // pred_check
        %p714 = pneg %p713
      $region84: #{forward.16} parent=5 // pred_check_branch
        %716 = sbr.rel (%p714) target = $region86
      $region85: #{forward.16} parent=5 // pred_region
        %s717 = ssub.s32 %s9, 2
        // Predicated region
        $region87: #{forward.16} parent=85 // pred_check
          %p718 = pneg %p141
        $region88: #{forward.16} parent=85 // pred_check_branch
          %720 = sbr.rel (%p718) target = $region90
        $region89: #{forward.16} parent=85 // pred_region
          %s721 = smul.u32 2, %s23
          %p722 = scmp.lt.s32.totalorder %s22, 0
          %s723 = scalar_select %p722, %s22, 0
          %p724 = scmp.lt.s32.totalorder %s721, 3
          %s725 = scalar_select %p724, %s721, 3
          %s726 = smul.addr %s723, 4
          %s727 = sadd.s32 %s725, %s726
          %s728 = smul.addr %s727, 8
          %s729 = scalar_lea.vmem %s3, %s728
        $region90: #{forward.16} parent=85 // pred_fallthru
          _
      $region86: #{forward.16} parent=5 // pred_fallthru
        _
    $region6: #{forward.16} parent=1 // loop_footer
      %s13 = sadd.s32 1, %s9
    $region7: #{forward.16} parent=1 // loop_footer_branch
      %8 = sbr.rel target = $region3
    $region8: #{forward.16} parent=1 // loop_exit
      _

// kernel: forward.18
$region0: #{forward.18}
  #allocation0 [shape = 'u32[]', space=smem, size = 0x4, offset = 0x4, fixed_abs, tag = 'smem constant byte address 0x4 - core index']
  #allocation1 [shape = 'u32[144,128]{1,0:T(1,128)}', space=vmem, size = 0x12000, scoped, tag = 'internal scratch']
  #allocation2 [shape = 'f32[8,256]{1,0:T(8,128)}', space=vmem, size = 0x2000, scoped, tag = 'scratch operand']
  %s0 = inlined_call_operand.vmem [shape: bf16[8,512], index: 0, kind: input, shape index: {}]
  %s1 = inlined_call_operand.vmem [shape: bf16[512,256], index: 1, kind: input, shape index: {}]
  %s2 = inlined_call_operand.vmem [shape: f32[1,256], index: 2, kind: input, shape index: {}]
  %s3 = inlined_call_operand.vmem [shape: f32[8,256], index: 3, kind: output, shape index: {}]
  %s4 = sld [smem:[#allocation0]]
  $region53: #{forward.18} parent=0
    _
  %s6 = ssub.s32 1, %s4
  %s7 = scalar_select 0, %s6, %s4
  loop: start=0, step=1, limit=4
  $region2: #{forward.18} parent=0 // loop_pre_header
    _
  $region3: #{forward.18} parent=0 // loop_header
    %s9 = sphi 0, %s13
    %p10 = scmp.ge.s32.totalorder %s9, 4
    %s16 = sphi 0, %s35
    %s17 = sphi 0, %s31
    %s18 = sphi 0, %s27
    %s19 = sphi 0, %s16
    %s20 = sphi 0, %s17
    %s21 = sphi 0, %s18
    %s22 = sphi 0, %s19
    %s23 = sphi 0, %s20
    %s24 = sphi 0, %s21
    %s40 = sphi 0, %s42
    %s43 = sphi 0, %s40
    %s44 = sphi 0, %s43
    %s60 = sphi 0, %s44
    %s68 = sphi 0, %s70
    %s71 = sphi 0, %s68
    %s72 = sphi 0, %s71
    %s88 = sphi 0, %s72
    %s94 = sphi 0, %s96
    %s97 = sphi 0, %s94
    %s98 = sphi 0, %s97
    %s114 = sphi 0, %s98
    %s122 = sphi 0, %s124
    %s125 = sphi 0, %s122
    %s126 = sphi 0, %s125
    %s142 = sphi 0, %s126
  $region4: #{forward.18} parent=0 // loop_header_branch
    %12 = sbr.rel (%p10) target = $region8
  $region5: #{forward.18} parent=0 // loop_body
    %s14 = ssub.s32 %s9, 1
    %s15 = ssub.s32 %s9, 2
    %s25 = sadd.s32 1, %s18
    %p26 = scmp.ge.s32.totalorder %s25, 2
    %s27 = scalar_select %p26, 0, %s25
    %s28 = sadd.s32 1, %s17
    %s29 = scalar_select %p26, %s28, %s17
    %p30 = scmp.ge.s32.totalorder %s29, 1
    %s31 = scalar_select %p30, 0, %s29
    %s32 = sadd.s32 1, %s16
    %s33 = scalar_select %p30, %s32, %s16
    %p34 = scmp.ge.s32.totalorder %s33, 1
    %s35 = scalar_select %p34, 0, %s33
    %s36 = ssub.s32 %s16, %s35
    %s37 = ssub.s32 %s18, %s27
    %s38 = sor.u32 %s36, %s37
    %p39 = scmp.eq.s32.totalorder %s38, 0
    %s41 = sadd.s32 %s40, 1
    %s42 = scalar_select %p39, %s40, %s41
    %p45 = pneg %p39
    %p46 = scmp.eq.s32.totalorder %s9, 1
    %p47 = por %p45, %p46
    %p48 = scmp.ne.s32.totalorder %s40, %s43
    %p49 = scmp.eq.s32.totalorder %s9, 0
    %p50 = por %p48, %p49
    %p51 = scmp.ne.s32.totalorder %s40, %s43
    %p52 = scmp.eq.s32.totalorder %s14, 1
    %p53 = por %p51, %p52
    %p54 = scmp.ne.s32.totalorder %s43, %s44
    %p55 = scmp.eq.s32.totalorder %s14, 0
    %p56 = por %p54, %p55
    %p57 = scmp.ne.s32.totalorder %s43, %s44
    %p58 = scmp.eq.s32.totalorder %s15, 1
    %p59 = por %p57, %p58
    %p61 = scmp.ne.s32.totalorder %s44, %s60
    %p62 = scmp.eq.s32.totalorder %s15, 0
    %p63 = por %p61, %p62
    %s64 = ssub.s32 %s18, %s27
    %s65 = ssub.s32 %s17, %s31
    %s66 = sor.u32 %s64, %s65
    %p67 = scmp.eq.s32.totalorder %s66, 0
    %s69 = sadd.s32 %s68, 1
    %s70 = scalar_select %p67, %s68, %s69
    %p73 = pneg %p67
    %p74 = scmp.eq.s32.totalorder %s9, 1
    %p75 = por %p73, %p74
    %p76 = scmp.ne.s32.totalorder %s68, %s71
    %p77 = scmp.eq.s32.totalorder %s9, 0
    %p78 = por %p76, %p77
    %p79 = scmp.ne.s32.totalorder %s68, %s71
    %p80 = scmp.eq.s32.totalorder %s14, 1
    %p81 = por %p79, %p80
    %p82 = scmp.ne.s32.totalorder %s71, %s72
    %p83 = scmp.eq.s32.totalorder %s14, 0
    %p84 = por %p82, %p83
    %p85 = scmp.ne.s32.totalorder %s71, %s72
    %p86 = scmp.eq.s32.totalorder %s15, 1
    %p87 = por %p85, %p86
    %p89 = scmp.ne.s32.totalorder %s72, %s88
    %p90 = scmp.eq.s32.totalorder %s15, 0
    %p91 = por %p89, %p90
    %s92 = ssub.s32 %s17, %s31
    %p93 = scmp.eq.s32.totalorder %s92, 0
    %s95 = sadd.s32 %s94, 1
    %s96 = scalar_select %p93, %s94, %s95
    %p99 = pneg %p93
    %p100 = scmp.eq.s32.totalorder %s9, 1
    %p101 = por %p99, %p100
    %p102 = scmp.ne.s32.totalorder %s94, %s97
    %p103 = scmp.eq.s32.totalorder %s9, 0
    %p104 = por %p102, %p103
    %p105 = scmp.ne.s32.totalorder %s94, %s97
    %p106 = scmp.eq.s32.totalorder %s14, 1
    %p107 = por %p105, %p106
    %p108 = scmp.ne.s32.totalorder %s97, %s98
    %p109 = scmp.eq.s32.totalorder %s14, 0
    %p110 = por %p108, %p109
    %p111 = scmp.ne.s32.totalorder %s97, %s98
    %p112 = scmp.eq.s32.totalorder %s15, 1
    %p113 = por %p111, %p112
    %p115 = scmp.ne.s32.totalorder %s98, %s114
    %p116 = scmp.eq.s32.totalorder %s15, 0
    %p117 = por %p115, %p116
    %s118 = ssub.s32 %s16, %s35
    %s119 = ssub.s32 %s17, %s31
    %s120 = sor.u32 %s118, %s119
    %p121 = scmp.eq.s32.totalorder %s120, 0
    %s123 = sadd.s32 %s122, 1
    %s124 = scalar_select %p121, %s122, %s123
    %p127 = pneg %p121
    %p128 = scmp.eq.s32.totalorder %s9, 1
    %p129 = por %p127, %p128
    %p130 = scmp.ne.s32.totalorder %s122, %s125
    %p131 = scmp.eq.s32.totalorder %s9, 0
    %p132 = por %p130, %p131
    %p133 = scmp.ne.s32.totalorder %s122, %s125
    %p134 = scmp.eq.s32.totalorder %s14, 1
    %p135 = por %p133, %p134
    %p136 = scmp.ne.s32.totalorder %s125, %s126
    %p137 = scmp.eq.s32.totalorder %s14, 0
    %p138 = por %p136, %p137
    %p139 = scmp.ne.s32.totalorder %s125, %s126
    %p140 = scmp.eq.s32.totalorder %s15, 1
    %p141 = por %p139, %p140
    %p143 = scmp.ne.s32.totalorder %s126, %s142
    %p144 = scmp.eq.s32.totalorder %s15, 0
    %p145 = por %p143, %p144
    %p146 = scmp.le.s32.totalorder 1, %s9
    %p147 = scmp.lt.s32.totalorder %s9, 3
    %p148 = pnand %p146, %p147
    %p149 = pneg %p148
    // Predicated region
    $region9: #{forward.18} parent=5 // pred_check
      _
    $region10: #{forward.18} parent=5 // pred_check_branch
      %151 = sbr.rel (%p148) target = $region12
    $region11: #{forward.18} parent=5 // pred_region
      %s152 = ssub.s32 %s9, 1
      // Predicated region
      $region13: #{forward.18} parent=11 // pred_check
        %p153 = pneg %p110
      $region14: #{forward.18} parent=11 // pred_check_branch
        %155 = sbr.rel (%p153) target = $region16
      $region15: #{forward.18} parent=11 // pred_region
        %s156 = smul.u32 2, %s20
        %p157 = scmp.lt.s32.totalorder %s156, 1
        %s158 = scalar_select %p157, %s156, 1
        %s159 = scalar_lea.vmem %s2, %s158
        %s160 = smul.u32 2, %s20
      $region16: #{forward.18} parent=11 // pred_fallthru
        _
    $region12: #{forward.18} parent=5 // pred_fallthru
      _
    %p161 = scmp.lt.s32.totalorder %s9, 2
    // Predicated region
    $region17: #{forward.18} parent=5 // pred_check
      %p162 = pneg %p161
    $region18: #{forward.18} parent=5 // pred_check_branch
      %164 = sbr.rel (%p162) target = $region20
    $region19: #{forward.18} parent=5 // pred_region
      // Predicated region
      $region21: #{forward.18} parent=19 // pred_check
        %p165 = pneg %p50
      $region22: #{forward.18} parent=19 // pred_check_branch
        %167 = sbr.rel (%p165) target = $region24
      $region23: #{forward.18} parent=19 // pred_region
        %s168 = smul.u32 2, %s18
        %p169 = scmp.lt.s32.totalorder %s16, 0
        %s170 = scalar_select %p169, %s16, 0
        %p171 = scmp.lt.s32.totalorder %s168, 3
        %s172 = scalar_select %p171, %s168, 3
        %s173 = smul.addr %s170, 4
        %s174 = sadd.s32 %s172, %s173
        %s175 = smul.addr %s174, 4
        %s176 = scalar_lea.vmem %s0, %s175
        %s177 = smul.u32 2, %s18
      $region24: #{forward.18} parent=19 // pred_fallthru
        _
      // Predicated region
      $region25: #{forward.18} parent=19 // pred_check
        %p178 = pneg %p78
      $region26: #{forward.18} parent=19 // pred_check_branch
        %180 = sbr.rel (%p178) target = $region28
      $region27: #{forward.18} parent=19 // pred_region
        %s181 = smul.u32 32, %s18
        %s182 = smul.u32 2, %s17
        %p183 = scmp.lt.s32.totalorder %s181, 63
        %s184 = scalar_select %p183, %s181, 63
        %p185 = scmp.lt.s32.totalorder %s182, 1
        %s186 = scalar_select %p185, %s182, 1
        %s187 = smul.addr %s184, 2
        %s188 = sadd.s32 %s186, %s187
        %s189 = smul.addr %s188, 4
        %s190 = scalar_lea.vmem %s1, %s189
        %s191 = smul.u32 32, %s18
        %s192 = smul.u32 2, %s17
      $region28: #{forward.18} parent=19 // pred_fallthru
        _
    $region20: #{forward.18} parent=5 // pred_fallthru
      _
    %p193 = scmp.le.s32.totalorder 1, %s9
    %p194 = scmp.lt.s32.totalorder %s9, 3
    %p195 = pnand %p193, %p194
    %p196 = pneg %p195
    // Predicated region
    $region29: #{forward.18} parent=5 // pred_check
      _
    $region30: #{forward.18} parent=5 // pred_check_branch
      %198 = sbr.rel (%p195) target = $region32
    $region31: #{forward.18} parent=5 // pred_region
      %s199 = ssub.s32 %s9, 1
      %s200 = smul.u32 2, %s21
      %p201 = scmp.lt.s32.totalorder %s19, 0
      %s202 = scalar_select %p201, %s19, 0
      %p203 = scmp.lt.s32.totalorder %s200, 3
      %s204 = scalar_select %p203, %s200, 3
      %s205 = smul.addr %s202, 4
      %s206 = sadd.s32 %s204, %s205
      %s207 = smul.addr %s206, 4
      %s208 = scalar_lea.vmem %s0, %s207
      %p209 = pneg %p56
      %p210 = pneg %p53
      %s211 = smul.u32 32, %s21
      %s212 = smul.u32 2, %s20
      %p213 = scmp.lt.s32.totalorder %s211, 63
      %s214 = scalar_select %p213, %s211, 63
      %p215 = scmp.lt.s32.totalorder %s212, 1
      %s216 = scalar_select %p215, %s212, 1
      %s217 = smul.addr %s214, 2
      %s218 = sadd.s32 %s216, %s217
      %s219 = smul.addr %s218, 4
      %s220 = scalar_lea.vmem %s1, %s219
      %p221 = pneg %p84
      %p222 = pneg %p81
      %s223 = smul.u32 2, %s20
      %p224 = scmp.lt.s32.totalorder %s223, 1
      %s225 = scalar_select %p224, %s223, 1
      %s226 = scalar_lea.vmem %s2, %s225
      %p227 = pneg %p110
      %p228 = pneg %p107
      %p229 = pneg %p138
      %p230 = pneg %p135
      %s231 = smul.u32 2, %s20
      %p232 = scmp.lt.s32.totalorder %s19, 0
      %s233 = scalar_select %p232, %s19, 0
      %p234 = scmp.lt.s32.totalorder %s231, 1
      %s235 = scalar_select %p234, %s231, 1
      %s236 = smul.addr %s233, 2
      %s237 = sadd.s32 %s235, %s236
      %s238 = smul.addr %s237, 8
      %s239 = scalar_lea.vmem %s3, %s238
      %s240 = smul.u32 2, %s21
      %p241 = scmp.lt.s32.totalorder %s19, 0
      %s242 = scalar_select %p241, %s19, 0
      %p243 = scmp.lt.s32.totalorder %s240, 3
      %s244 = scalar_select %p243, %s240, 3
      %s245 = smul.addr %s242, 4
      %s246 = sadd.s32 %s244, %s245
      %s247 = smul.addr %s246, 4
      %s248 = scalar_lea.vmem %s0, %s247
      %s249 = smul.u32 2, %s21
      %s250 = smul.u32 32, %s21
      %s251 = smul.u32 2, %s20
      %p252 = scmp.lt.s32.totalorder %s250, 63
      %s253 = scalar_select %p252, %s250, 63
      %p254 = scmp.lt.s32.totalorder %s251, 1
      %s255 = scalar_select %p254, %s251, 1
      %s256 = smul.addr %s253, 2
      %s257 = sadd.s32 %s255, %s256
      %s258 = smul.addr %s257, 4
      %s259 = scalar_lea.vmem %s1, %s258
      %s260 = smul.u32 32, %s21
      %s261 = smul.u32 2, %s20
      %s262 = smul.u32 2, %s20
      %p263 = scmp.lt.s32.totalorder %s262, 1
      %s264 = scalar_select %p263, %s262, 1
      %s265 = scalar_lea.vmem %s2, %s264
      %s266 = smul.u32 2, %s20
      %s267 = smul.u32 2, %s20
      %p268 = scmp.lt.s32.totalorder %s19, 0
      %s269 = scalar_select %p268, %s19, 0
      %p270 = scmp.lt.s32.totalorder %s267, 1
      %s271 = scalar_select %p270, %s267, 1
      %s272 = smul.addr %s269, 2
      %s273 = sadd.s32 %s271, %s272
      %s274 = smul.addr %s273, 8
      %s275 = scalar_lea.vmem %s3, %s274
      %s276 = smul.u32 2, %s20
      %p277 = scmp.eq.s32.totalorder %s21, 0
      // Predicated region
      $region33: #{forward.18} parent=31 // pred_check
        %p278 = pneg %p277
      $region34: #{forward.18} parent=31 // pred_check_branch
        %280 = sbr.rel (%p278) target = $region36
      $region35: #{forward.18} parent=31 // pred_region
        %281 = vst [vmem:[#allocation2] sm:$0xff] 0.0
        %282 = vst [vmem:[#allocation2 + $0x8] sm:$0xff] 0.0
      $region36: #{forward.18} parent=31 // pred_fallthru
        _
      %v283 = vld [vmem:[#allocation2] sm:$0xff]
      %v284 = vld [vmem:[#allocation2 + $0x8] sm:$0xff]
      %v285 = vld [vmem:[%s248] sm:$0xff]
      %v286 = vld [vmem:[%s259] sm:$0xff]
      %v287 = vld [vmem:[%s259 + $0x8] sm:$0xff]
      %v288 = vld [vmem:[%s259 + $0x10] sm:$0xff]
      %v289 = vld [vmem:[%s259 + $0x18] sm:$0xff]
      %v290 = vld [vmem:[%s259 + $0x20] sm:$0xff]
      %v291 = vld [vmem:[%s259 + $0x28] sm:$0xff]
      %v292 = vld [vmem:[%s259 + $0x30] sm:$0xff]
      %v293 = vld [vmem:[%s259 + $0x38] sm:$0xff]
      %v294 = vld [vmem:[%s259 + $0x40] sm:$0xff]
      %v295 = vld [vmem:[%s259 + $0x48] sm:$0xff]
      %v296 = vld [vmem:[%s259 + $0x50] sm:$0xff]
      %v297 = vld [vmem:[%s259 + $0x58] sm:$0xff]
      %v298 = vld [vmem:[%s259 + $0x60] sm:$0xff]
      %v299 = vld [vmem:[%s259 + $0x68] sm:$0xff]
      %v300 = vld [vmem:[%s259 + $0x70] sm:$0xff]
      %v301 = vld [vmem:[%s259 + $0x78] sm:$0xff]
      %v302 = vld [vmem:[%s259 + $0x80] sm:$0xff]
      %v303 = vld [vmem:[%s259 + $0x88] sm:$0xff]
      %v304 = vld [vmem:[%s259 + $0x90] sm:$0xff]
      %v305 = vld [vmem:[%s259 + $0x98] sm:$0xff]
      %v306 = vld [vmem:[%s259 + $0xa0] sm:$0xff]
      %v307 = vld [vmem:[%s259 + $0xa8] sm:$0xff]
      %v308 = vld [vmem:[%s259 + $0xb0] sm:$0xff]
      %v309 = vld [vmem:[%s259 + $0xb8] sm:$0xff]
      %v310 = vld [vmem:[%s259 + $0xc0] sm:$0xff]
      %v311 = vld [vmem:[%s259 + $0xc8] sm:$0xff]
      %v312 = vld [vmem:[%s259 + $0xd0] sm:$0xff]
      %v313 = vld [vmem:[%s259 + $0xd8] sm:$0xff]
      %v314 = vld [vmem:[%s259 + $0xe0] sm:$0xff]
      %v315 = vld [vmem:[%s259 + $0xe8] sm:$0xff]
      %v316 = vld [vmem:[%s259 + $0xf0] sm:$0xff]
      %v317 = vld [vmem:[%s259 + $0xf8] sm:$0xff]
      %v319 = vunpack.c.l.b16 %v285
      %v320 = vunpack.c.h.b16 %v285
      %v321 = vpack.c.b16 %v319, %v319
      %v322 = vpack.c.b16 %v320, %v320
      %v357 = vunpack.c.l.b16 %v286
      %v358 = vunpack.c.h.b16 %v286
      %v359 = vunpack.c.l.b16 %v287
      %v360 = vunpack.c.h.b16 %v287
      %v361 = vunpack.c.l.b16 %v288
      %v362 = vunpack.c.h.b16 %v288
      %v363 = vunpack.c.l.b16 %v289
      %v364 = vunpack.c.h.b16 %v289
      %v365 = vunpack.c.l.b16 %v290
      %v366 = vunpack.c.h.b16 %v290
      %v367 = vunpack.c.l.b16 %v291
      %v368 = vunpack.c.h.b16 %v291
      %v369 = vunpack.c.l.b16 %v292
      %v370 = vunpack.c.h.b16 %v292
      %v371 = vunpack.c.l.b16 %v293
      %v372 = vunpack.c.h.b16 %v293
      %v373 = vunpack.c.l.b16 %v294
      %v374 = vunpack.c.h.b16 %v294
      %v375 = vunpack.c.l.b16 %v295
      %v376 = vunpack.c.h.b16 %v295
      %v377 = vunpack.c.l.b16 %v296
      %v378 = vunpack.c.h.b16 %v296
      %v379 = vunpack.c.l.b16 %v297
      %v380 = vunpack.c.h.b16 %v297
      %v381 = vunpack.c.l.b16 %v298
      %v382 = vunpack.c.h.b16 %v298
      %v383 = vunpack.c.l.b16 %v299
      %v384 = vunpack.c.h.b16 %v299
      %v385 = vunpack.c.l.b16 %v300
      %v386 = vunpack.c.h.b16 %v300
      %v387 = vunpack.c.l.b16 %v301
      %v388 = vunpack.c.h.b16 %v301
      %v389 = vunpack.c.l.b16 %v302
      %v390 = vunpack.c.h.b16 %v302
      %v391 = vunpack.c.l.b16 %v303
      %v392 = vunpack.c.h.b16 %v303
      %v393 = vunpack.c.l.b16 %v304
      %v394 = vunpack.c.h.b16 %v304
      %v395 = vunpack.c.l.b16 %v305
      %v396 = vunpack.c.h.b16 %v305
      %v397 = vunpack.c.l.b16 %v306
      %v398 = vunpack.c.h.b16 %v306
      %v399 = vunpack.c.l.b16 %v307
      %v400 = vunpack.c.h.b16 %v307
      %v401 = vunpack.c.l.b16 %v308
      %v402 = vunpack.c.h.b16 %v308
      %v403 = vunpack.c.l.b16 %v309
      %v404 = vunpack.c.h.b16 %v309
      %v405 = vunpack.c.l.b16 %v310
      %v406 = vunpack.c.h.b16 %v310
      %v407 = vunpack.c.l.b16 %v311
      %v408 = vunpack.c.h.b16 %v311
      %v409 = vunpack.c.l.b16 %v312
      %v410 = vunpack.c.h.b16 %v312
      %v411 = vunpack.c.l.b16 %v313
      %v412 = vunpack.c.h.b16 %v313
      %v413 = vunpack.c.l.b16 %v314
      %v414 = vunpack.c.h.b16 %v314
      %v415 = vunpack.c.l.b16 %v315
      %v416 = vunpack.c.h.b16 %v315
      %v417 = vunpack.c.l.b16 %v316
      %v418 = vunpack.c.h.b16 %v316
      %v419 = vunpack.c.l.b16 %v317
      %v420 = vunpack.c.h.b16 %v317
      %v421 = vpack.c.b16 %v359, %v357
      %v422 = vpack.c.b16 %v360, %v358
      %v423 = vpack.c.b16 %v363, %v361
      %v424 = vpack.c.b16 %v364, %v362
      %v425 = vpack.c.b16 %v367, %v365
      %v426 = vpack.c.b16 %v368, %v366
      %v427 = vpack.c.b16 %v371, %v369
      %v428 = vpack.c.b16 %v372, %v370
      %v429 = vpack.c.b16 %v375, %v373
      %v430 = vpack.c.b16 %v376, %v374
      %v431 = vpack.c.b16 %v379, %v377
      %v432 = vpack.c.b16 %v380, %v378
      %v433 = vpack.c.b16 %v383, %v381
      %v434 = vpack.c.b16 %v384, %v382
      %v435 = vpack.c.b16 %v387, %v385
      %v436 = vpack.c.b16 %v388, %v386
      %v437 = vpack.c.b16 %v391, %v389
      %v438 = vpack.c.b16 %v392, %v390
      %v439 = vpack.c.b16 %v395, %v393
      %v440 = vpack.c.b16 %v396, %v394
      %v441 = vpack.c.b16 %v399, %v397
      %v442 = vpack.c.b16 %v400, %v398
      %v443 = vpack.c.b16 %v403, %v401
      %v444 = vpack.c.b16 %v404, %v402
      %v445 = vpack.c.b16 %v407, %v405
      %v446 = vpack.c.b16 %v408, %v406
      %v447 = vpack.c.b16 %v411, %v409
      %v448 = vpack.c.b16 %v412, %v410
      %v449 = vpack.c.b16 %v415, %v413
      %v450 = vpack.c.b16 %v416, %v414
      %v451 = vpack.c.b16 %v419, %v417
      %v452 = vpack.c.b16 %v420, %v418
      %485 = vmatprep.subr.bf16.mxu0 %v436
      %486 = vmatpush1.bf16.msra.mxu0 %v435
      %487 = vmatprep.subr.bf16.mxu0 %v434
      %488 = vmatpush1.bf16.msra.mxu0 %v433
      %489 = vmatprep.subr.bf16.mxu0 %v432
      %490 = vmatpush1.bf16.msra.mxu0 %v431
      %491 = vmatprep.subr.bf16.mxu0 %v430
      %492 = vmatpush1.bf16.msra.mxu0 %v429
      %493 = vmatprep.subr.bf16.mxu0 %v428
      %494 = vmatpush1.bf16.msra.mxu0 %v427
      %495 = vmatprep.subr.bf16.mxu0 %v426
      %496 = vmatpush1.bf16.msra.mxu0 %v425
      %497 = vmatprep.subr.bf16.mxu0 %v424
      %498 = vmatpush1.bf16.msra.mxu0 %v423
      %499 = vmatprep.subr.bf16.mxu0 %v422
      %500 = vmatpush1.bf16.msra.mxu0 %v421
      %501 = vmatprep.subr.bf16.mxu0 %v452
      %502 = vmatpush2.bf16.msra.mxu0 %v451
      %503 = vmatprep.subr.bf16.mxu0 %v450
      %504 = vmatpush2.bf16.msra.mxu0 %v449
      %505 = vmatprep.subr.bf16.mxu0 %v448
      %506 = vmatpush2.bf16.msra.mxu0 %v447
      %507 = vmatprep.subr.bf16.mxu0 %v446
      %508 = vmatpush2.bf16.msra.mxu0 %v445
      %509 = vmatprep.subr.bf16.mxu0 %v444
      %510 = vmatpush2.bf16.msra.mxu0 %v443
      %511 = vmatprep.subr.bf16.mxu0 %v442
      %512 = vmatpush2.bf16.msra.mxu0 %v441
      %513 = vmatprep.subr.bf16.mxu0 %v440
      %514 = vmatpush2.bf16.msra.mxu0 %v439
      %515 = vmatprep.subr.bf16.mxu0 %v438
      %516 = vmatpush2.bf16.msra.mxu0 %v437
      %517 = vmatprep.mubr.bf16.mxu0 %v322
      %518 = vmatmul.mubr.bf16.gmra.mxu0 %v321
      %v519 = vpop.f32.mrf.mxu0
      %v520 = vadd.f32 0.0, %v519
      %v521 = vpop.f32.mrf.mxu0
      %v522 = vadd.f32 0.0, %v521
      %v523 = vpop.f32.mrf.mxu0
      %v524 = vpop.f32.mrf.mxu0
      %525 = vdwg.mxu0
      %v526 = vadd.f32 %v283, %v520
      %v527 = vadd.f32 %v284, %v522
      %528 = vst [vmem:[#allocation2] sm:$0xff] %v526
      %529 = vst [vmem:[#allocation2 + $0x8] sm:$0xff] %v527
      %p530 = scmp.eq.s32.totalorder %s21, 1
      // Predicated region
      $region37: #{forward.18} parent=31 // pred_check
        %p531 = pneg %p530
      $region38: #{forward.18} parent=31 // pred_check_branch
        %533 = sbr.rel (%p531) target = $region40
      $region39: #{forward.18} parent=31 // pred_region
        %v534 = vld [vmem:[#allocation2] sm:$0xff]
        %v535 = vld [vmem:[#allocation2 + $0x8] sm:$0xff]
        %v536 = vld [vmem:[%s265] sm:$0x3]
        %v538 = vlaneseq
        %v539 = vshrl.u32 %v538, 7
        %v540 = vsub.s32 0, %v539
        %v541 = vrot.slane %v536, %v540
        %v542 = vlaneseq
        %v543 = vshrl.u32 %v542, 7
        %v544 = vsub.s32 1, %v543
        %v545 = vrot.slane %v536, %v544
        %v548 = vadd.f32 %v534, %v541
        %v549 = vadd.f32 %v535, %v545
        %v550 = vmax.f32 %v548, 0.0
        %v551 = vmax.f32 %v549, 0.0
        %552 = vst [vmem:[%s275] sm:$0xff] %v550
        %553 = vst [vmem:[%s275 + $0x8] sm:$0xff] %v551
      $region40: #{forward.18} parent=31 // pred_fallthru
        _
      %s554 = smul.u32 2, %s20
      %p555 = scmp.lt.s32.totalorder %s19, 0
      %s556 = scalar_select %p555, %s19, 0
      %p557 = scmp.lt.s32.totalorder %s554, 1
      %s558 = scalar_select %p557, %s554, 1
      %s559 = smul.addr %s556, 2
      %s560 = sadd.s32 %s558, %s559
      %s561 = smul.addr %s560, 8
      %s562 = scalar_lea.vmem %s3, %s561
      // Predicated region
      $region41: #{forward.18} parent=31 // pred_check
        %p563 = pneg %p135
      $region42: #{forward.18} parent=31 // pred_check_branch
        %565 = sbr.rel (%p563) target = $region44
      $region43: #{forward.18} parent=31 // pred_region
        %s566 = smul.u32 2, %s20
      $region44: #{forward.18} parent=31 // pred_fallthru
        _
      // Predicated region
      $region45: #{forward.18} parent=31 // pred_check
        %p567 = pneg %p135
      $region46: #{forward.18} parent=31 // pred_check_branch
        %569 = sbr.rel (%p567) target = $region48
      $region47: #{forward.18} parent=31 // pred_region
        %s570 = smul.u32 2, %s20
        %p571 = scmp.lt.s32.totalorder %s19, 0
        %s572 = scalar_select %p571, %s19, 0
        %p573 = scmp.lt.s32.totalorder %s570, 1
        %s574 = scalar_select %p573, %s570, 1
        %s575 = smul.addr %s572, 2
        %s576 = sadd.s32 %s574, %s575
        %s577 = smul.addr %s576, 8
        %s578 = scalar_lea.vmem %s3, %s577
      $region48: #{forward.18} parent=31 // pred_fallthru
        _
    $region32: #{forward.18} parent=5 // pred_fallthru
      _
    %p579 = scmp.le.s32.totalorder 2, %s9
    // Predicated region
    $region49: #{forward.18} parent=5 // pred_check
      %p580 = pneg %p579
    $region50: #{forward.18} parent=5 // pred_check_branch
      %582 = sbr.rel (%p580) target = $region52
    $region51: #{forward.18} parent=5 // pred_region
      %s583 = ssub.s32 %s9, 2
    $region52: #{forward.18} parent=5 // pred_fallthru
      _
  $region6: #{forward.18} parent=0 // loop_footer
    %s13 = sadd.s32 1, %s9
  $region7: #{forward.18} parent=0 // loop_footer_branch
    %8 = sbr.rel target = $region3
  $region8: #{forward.18} parent=0 // loop_exit
    _

// kernel: forward.19
$region0: #{forward.19}
  #allocation0 [shape = 'u32[]', space=smem, size = 0x4, offset = 0x4, fixed_abs, tag = 'smem constant byte address 0x4 - core index']
  #allocation1 [shape = 'u32[144,128]{1,0:T(1,128)}', space=vmem, size = 0x12000, scoped, tag = 'internal scratch']
  #allocation2 [shape = 'f32[8,256]{1,0:T(8,128)}', space=vmem, size = 0x2000, scoped, tag = 'scratch operand']
  %s0 = inlined_call_operand.vmem [shape: bf16[8,2304], index: 0, kind: input, shape index: {}]
  %s1 = inlined_call_operand.vmem [shape: bf16[2304,256], index: 1, kind: input, shape index: {}]
  %s2 = inlined_call_operand.vmem [shape: f32[1,256], index: 2, kind: input, shape index: {}]
  %s3 = inlined_call_operand.vmem [shape: f32[8,256], index: 3, kind: output, shape index: {}]
  %s4 = sld [smem:[#allocation0]]
  $region53: #{forward.19} parent=0
    _
  %s6 = ssub.s32 1, %s4
  %s7 = scalar_select 0, %s6, %s4
  loop: start=0, step=1, limit=11
  $region2: #{forward.19} parent=0 // loop_pre_header
    _
  $region3: #{forward.19} parent=0 // loop_header
    %s9 = sphi 0, %s13
    %p10 = scmp.ge.s32.totalorder %s9, 11
    %s16 = sphi 0, %s35
    %s17 = sphi 0, %s31
    %s18 = sphi 0, %s27
    %s19 = sphi 0, %s16
    %s20 = sphi 0, %s17
    %s21 = sphi 0, %s18
    %s22 = sphi 0, %s19
    %s23 = sphi 0, %s20
    %s24 = sphi 0, %s21
    %s40 = sphi 0, %s42
    %s43 = sphi 0, %s40
    %s44 = sphi 0, %s43
    %s60 = sphi 0, %s44
    %s68 = sphi 0, %s70
    %s71 = sphi 0, %s68
    %s72 = sphi 0, %s71
    %s88 = sphi 0, %s72
    %s94 = sphi 0, %s96
    %s97 = sphi 0, %s94
    %s98 = sphi 0, %s97
    %s114 = sphi 0, %s98
    %s122 = sphi 0, %s124
    %s125 = sphi 0, %s122
    %s126 = sphi 0, %s125
    %s142 = sphi 0, %s126
  $region4: #{forward.19} parent=0 // loop_header_branch
    %12 = sbr.rel (%p10) target = $region8
  $region5: #{forward.19} parent=0 // loop_body
    %s14 = ssub.s32 %s9, 1
    %s15 = ssub.s32 %s9, 2
    %s25 = sadd.s32 1, %s18
    %p26 = scmp.ge.s32.totalorder %s25, 9
    %s27 = scalar_select %p26, 0, %s25
    %s28 = sadd.s32 1, %s17
    %s29 = scalar_select %p26, %s28, %s17
    %p30 = scmp.ge.s32.totalorder %s29, 1
    %s31 = scalar_select %p30, 0, %s29
    %s32 = sadd.s32 1, %s16
    %s33 = scalar_select %p30, %s32, %s16
    %p34 = scmp.ge.s32.totalorder %s33, 1
    %s35 = scalar_select %p34, 0, %s33
    %s36 = ssub.s32 %s16, %s35
    %s37 = ssub.s32 %s18, %s27
    %s38 = sor.u32 %s36, %s37
    %p39 = scmp.eq.s32.totalorder %s38, 0
    %s41 = sadd.s32 %s40, 1
    %s42 = scalar_select %p39, %s40, %s41
    %p45 = pneg %p39
    %p46 = scmp.eq.s32.totalorder %s9, 8
    %p47 = por %p45, %p46
    %p48 = scmp.ne.s32.totalorder %s40, %s43
    %p49 = scmp.eq.s32.totalorder %s9, 0
    %p50 = por %p48, %p49
    %p51 = scmp.ne.s32.totalorder %s40, %s43
    %p52 = scmp.eq.s32.totalorder %s14, 8
    %p53 = por %p51, %p52
    %p54 = scmp.ne.s32.totalorder %s43, %s44
    %p55 = scmp.eq.s32.totalorder %s14, 0
    %p56 = por %p54, %p55
    %p57 = scmp.ne.s32.totalorder %s43, %s44
    %p58 = scmp.eq.s32.totalorder %s15, 8
    %p59 = por %p57, %p58
    %p61 = scmp.ne.s32.totalorder %s44, %s60
    %p62 = scmp.eq.s32.totalorder %s15, 0
    %p63 = por %p61, %p62
    %s64 = ssub.s32 %s18, %s27
    %s65 = ssub.s32 %s17, %s31
    %s66 = sor.u32 %s64, %s65
    %p67 = scmp.eq.s32.totalorder %s66, 0
    %s69 = sadd.s32 %s68, 1
    %s70 = scalar_select %p67, %s68, %s69
    %p73 = pneg %p67
    %p74 = scmp.eq.s32.totalorder %s9, 8
    %p75 = por %p73, %p74
    %p76 = scmp.ne.s32.totalorder %s68, %s71
    %p77 = scmp.eq.s32.totalorder %s9, 0
    %p78 = por %p76, %p77
    %p79 = scmp.ne.s32.totalorder %s68, %s71
    %p80 = scmp.eq.s32.totalorder %s14, 8
    %p81 = por %p79, %p80
    %p82 = scmp.ne.s32.totalorder %s71, %s72
    %p83 = scmp.eq.s32.totalorder %s14, 0
    %p84 = por %p82, %p83
    %p85 = scmp.ne.s32.totalorder %s71, %s72
    %p86 = scmp.eq.s32.totalorder %s15, 8
    %p87 = por %p85, %p86
    %p89 = scmp.ne.s32.totalorder %s72, %s88
    %p90 = scmp.eq.s32.totalorder %s15, 0
    %p91 = por %p89, %p90
    %s92 = ssub.s32 %s17, %s31
    %p93 = scmp.eq.s32.totalorder %s92, 0
    %s95 = sadd.s32 %s94, 1
    %s96 = scalar_select %p93, %s94, %s95
    %p99 = pneg %p93
    %p100 = scmp.eq.s32.totalorder %s9, 8
    %p101 = por %p99, %p100
    %p102 = scmp.ne.s32.totalorder %s94, %s97
    %p103 = scmp.eq.s32.totalorder %s9, 0
    %p104 = por %p102, %p103
    %p105 = scmp.ne.s32.totalorder %s94, %s97
    %p106 = scmp.eq.s32.totalorder %s14, 8
    %p107 = por %p105, %p106
    %p108 = scmp.ne.s32.totalorder %s97, %s98
    %p109 = scmp.eq.s32.totalorder %s14, 0
    %p110 = por %p108, %p109
    %p111 = scmp.ne.s32.totalorder %s97, %s98
    %p112 = scmp.eq.s32.totalorder %s15, 8
    %p113 = por %p111, %p112
    %p115 = scmp.ne.s32.totalorder %s98, %s114
    %p116 = scmp.eq.s32.totalorder %s15, 0
    %p117 = por %p115, %p116
    %s118 = ssub.s32 %s16, %s35
    %s119 = ssub.s32 %s17, %s31
    %s120 = sor.u32 %s118, %s119
    %p121 = scmp.eq.s32.totalorder %s120, 0
    %s123 = sadd.s32 %s122, 1
    %s124 = scalar_select %p121, %s122, %s123
    %p127 = pneg %p121
    %p128 = scmp.eq.s32.totalorder %s9, 8
    %p129 = por %p127, %p128
    %p130 = scmp.ne.s32.totalorder %s122, %s125
    %p131 = scmp.eq.s32.totalorder %s9, 0
    %p132 = por %p130, %p131
    %p133 = scmp.ne.s32.totalorder %s122, %s125
    %p134 = scmp.eq.s32.totalorder %s14, 8
    %p135 = por %p133, %p134
    %p136 = scmp.ne.s32.totalorder %s125, %s126
    %p137 = scmp.eq.s32.totalorder %s14, 0
    %p138 = por %p136, %p137
    %p139 = scmp.ne.s32.totalorder %s125, %s126
    %p140 = scmp.eq.s32.totalorder %s15, 8
    %p141 = por %p139, %p140
    %p143 = scmp.ne.s32.totalorder %s126, %s142
    %p144 = scmp.eq.s32.totalorder %s15, 0
    %p145 = por %p143, %p144
    %p146 = scmp.le.s32.totalorder 1, %s9
    %p147 = scmp.lt.s32.totalorder %s9, 10
    %p148 = pnand %p146, %p147
    %p149 = pneg %p148
    // Predicated region
    $region9: #{forward.19} parent=5 // pred_check
      _
    $region10: #{forward.19} parent=5 // pred_check_branch
      %151 = sbr.rel (%p148) target = $region12
    $region11: #{forward.19} parent=5 // pred_region
      %s152 = ssub.s32 %s9, 1
      // Predicated region
      $region13: #{forward.19} parent=11 // pred_check
        %p153 = pneg %p110
      $region14: #{forward.19} parent=11 // pred_check_branch
        %155 = sbr.rel (%p153) target = $region16
      $region15: #{forward.19} parent=11 // pred_region
        %s156 = smul.u32 2, %s20
        %p157 = scmp.lt.s32.totalorder %s156, 1
        %s158 = scalar_select %p157, %s156, 1
        %s159 = scalar_lea.vmem %s2, %s158
        %s160 = smul.u32 2, %s20
      $region16: #{forward.19} parent=11 // pred_fallthru
        _
    $region12: #{forward.19} parent=5 // pred_fallthru
      _
    %p161 = scmp.lt.s32.totalorder %s9, 9
    // Predicated region
    $region17: #{forward.19} parent=5 // pred_check
      %p162 = pneg %p161
    $region18: #{forward.19} parent=5 // pred_check_branch
      %164 = sbr.rel (%p162) target = $region20
    $region19: #{forward.19} parent=5 // pred_region
      // Predicated region
      $region21: #{forward.19} parent=19 // pred_check
        %p165 = pneg %p50
      $region22: #{forward.19} parent=19 // pred_check_branch
        %167 = sbr.rel (%p165) target = $region24
      $region23: #{forward.19} parent=19 // pred_region
        %s168 = smul.u32 2, %s18
        %p169 = scmp.lt.s32.totalorder %s16, 0
        %s170 = scalar_select %p169, %s16, 0
        %p171 = scmp.lt.s32.totalorder %s168, 17
        %s172 = scalar_select %p171, %s168, 17
        %s173 = smul.addr %s170, 18
        %s174 = sadd.s32 %s172, %s173
        %s175 = smul.addr %s174, 4
        %s176 = scalar_lea.vmem %s0, %s175
        %s177 = smul.u32 2, %s18
      $region24: #{forward.19} parent=19 // pred_fallthru
        _
      // Predicated region
      $region25: #{forward.19} parent=19 // pred_check
        %p178 = pneg %p78
      $region26: #{forward.19} parent=19 // pred_check_branch
        %180 = sbr.rel (%p178) target = $region28
      $region27: #{forward.19} parent=19 // pred_region
        %s181 = smul.u32 32, %s18
        %s182 = smul.u32 2, %s17
        %p183 = scmp.lt.s32.totalorder %s181, 287
        %s184 = scalar_select %p183, %s181, 287
        %p185 = scmp.lt.s32.totalorder %s182, 1
        %s186 = scalar_select %p185, %s182, 1
        %s187 = smul.addr %s184, 2
        %s188 = sadd.s32 %s186, %s187
        %s189 = smul.addr %s188, 4
        %s190 = scalar_lea.vmem %s1, %s189
        %s191 = smul.u32 32, %s18
        %s192 = smul.u32 2, %s17
      $region28: #{forward.19} parent=19 // pred_fallthru
        _
    $region20: #{forward.19} parent=5 // pred_fallthru
      _
    %p193 = scmp.le.s32.totalorder 1, %s9
    %p194 = scmp.lt.s32.totalorder %s9, 10
    %p195 = pnand %p193, %p194
    %p196 = pneg %p195
    // Predicated region
    $region29: #{forward.19} parent=5 // pred_check
      _
    $region30: #{forward.19} parent=5 // pred_check_branch
      %198 = sbr.rel (%p195) target = $region32
    $region31: #{forward.19} parent=5 // pred_region
      %s199 = ssub.s32 %s9, 1
      %s200 = smul.u32 2, %s21
      %p201 = scmp.lt.s32.totalorder %s19, 0
      %s202 = scalar_select %p201, %s19, 0
      %p203 = scmp.lt.s32.totalorder %s200, 17
      %s204 = scalar_select %p203, %s200, 17
      %s205 = smul.addr %s202, 18
      %s206 = sadd.s32 %s204, %s205
      %s207 = smul.addr %s206, 4
      %s208 = scalar_lea.vmem %s0, %s207
      %p209 = pneg %p56
      %p210 = pneg %p53
      %s211 = smul.u32 32, %s21
      %s212 = smul.u32 2, %s20
      %p213 = scmp.lt.s32.totalorder %s211, 287
      %s214 = scalar_select %p213, %s211, 287
      %p215 = scmp.lt.s32.totalorder %s212, 1
      %s216 = scalar_select %p215, %s212, 1
      %s217 = smul.addr %s214, 2
      %s218 = sadd.s32 %s216, %s217
      %s219 = smul.addr %s218, 4
      %s220 = scalar_lea.vmem %s1, %s219
      %p221 = pneg %p84
      %p222 = pneg %p81
      %s223 = smul.u32 2, %s20
      %p224 = scmp.lt.s32.totalorder %s223, 1
      %s225 = scalar_select %p224, %s223, 1
      %s226 = scalar_lea.vmem %s2, %s225
      %p227 = pneg %p110
      %p228 = pneg %p107
      %p229 = pneg %p138
      %p230 = pneg %p135
      %s231 = smul.u32 2, %s20
      %p232 = scmp.lt.s32.totalorder %s19, 0
      %s233 = scalar_select %p232, %s19, 0
      %p234 = scmp.lt.s32.totalorder %s231, 1
      %s235 = scalar_select %p234, %s231, 1
      %s236 = smul.addr %s233, 2
      %s237 = sadd.s32 %s235, %s236
      %s238 = smul.addr %s237, 8
      %s239 = scalar_lea.vmem %s3, %s238
      %s240 = smul.u32 2, %s21
      %p241 = scmp.lt.s32.totalorder %s19, 0
      %s242 = scalar_select %p241, %s19, 0
      %p243 = scmp.lt.s32.totalorder %s240, 17
      %s244 = scalar_select %p243, %s240, 17
      %s245 = smul.addr %s242, 18
      %s246 = sadd.s32 %s244, %s245
      %s247 = smul.addr %s246, 4
      %s248 = scalar_lea.vmem %s0, %s247
      %s249 = smul.u32 2, %s21
      %s250 = smul.u32 32, %s21
      %s251 = smul.u32 2, %s20
      %p252 = scmp.lt.s32.totalorder %s250, 287
      %s253 = scalar_select %p252, %s250, 287
      %p254 = scmp.lt.s32.totalorder %s251, 1
      %s255 = scalar_select %p254, %s251, 1
      %s256 = smul.addr %s253, 2
      %s257 = sadd.s32 %s255, %s256
      %s258 = smul.addr %s257, 4
      %s259 = scalar_lea.vmem %s1, %s258
      %s260 = smul.u32 32, %s21
      %s261 = smul.u32 2, %s20
      %s262 = smul.u32 2, %s20
      %p263 = scmp.lt.s32.totalorder %s262, 1
      %s264 = scalar_select %p263, %s262, 1
      %s265 = scalar_lea.vmem %s2, %s264
      %s266 = smul.u32 2, %s20
      %s267 = smul.u32 2, %s20
      %p268 = scmp.lt.s32.totalorder %s19, 0
      %s269 = scalar_select %p268, %s19, 0
      %p270 = scmp.lt.s32.totalorder %s267, 1
      %s271 = scalar_select %p270, %s267, 1
      %s272 = smul.addr %s269, 2
      %s273 = sadd.s32 %s271, %s272
      %s274 = smul.addr %s273, 8
      %s275 = scalar_lea.vmem %s3, %s274
      %s276 = smul.u32 2, %s20
      %p277 = scmp.eq.s32.totalorder %s21, 0
      // Predicated region
      $region33: #{forward.19} parent=31 // pred_check
        %p278 = pneg %p277
      $region34: #{forward.19} parent=31 // pred_check_branch
        %280 = sbr.rel (%p278) target = $region36
      $region35: #{forward.19} parent=31 // pred_region
        %281 = vst [vmem:[#allocation2] sm:$0xff] 0.0
        %282 = vst [vmem:[#allocation2 + $0x8] sm:$0xff] 0.0
      $region36: #{forward.19} parent=31 // pred_fallthru
        _
      %v283 = vld [vmem:[#allocation2] sm:$0xff]
      %v284 = vld [vmem:[#allocation2 + $0x8] sm:$0xff]
      %v285 = vld [vmem:[%s248] sm:$0xff]
      %v286 = vld [vmem:[%s259] sm:$0xff]
      %v287 = vld [vmem:[%s259 + $0x8] sm:$0xff]
      %v288 = vld [vmem:[%s259 + $0x10] sm:$0xff]
      %v289 = vld [vmem:[%s259 + $0x18] sm:$0xff]
      %v290 = vld [vmem:[%s259 + $0x20] sm:$0xff]
      %v291 = vld [vmem:[%s259 + $0x28] sm:$0xff]
      %v292 = vld [vmem:[%s259 + $0x30] sm:$0xff]
      %v293 = vld [vmem:[%s259 + $0x38] sm:$0xff]
      %v294 = vld [vmem:[%s259 + $0x40] sm:$0xff]
      %v295 = vld [vmem:[%s259 + $0x48] sm:$0xff]
      %v296 = vld [vmem:[%s259 + $0x50] sm:$0xff]
      %v297 = vld [vmem:[%s259 + $0x58] sm:$0xff]
      %v298 = vld [vmem:[%s259 + $0x60] sm:$0xff]
      %v299 = vld [vmem:[%s259 + $0x68] sm:$0xff]
      %v300 = vld [vmem:[%s259 + $0x70] sm:$0xff]
      %v301 = vld [vmem:[%s259 + $0x78] sm:$0xff]
      %v302 = vld [vmem:[%s259 + $0x80] sm:$0xff]
      %v303 = vld [vmem:[%s259 + $0x88] sm:$0xff]
      %v304 = vld [vmem:[%s259 + $0x90] sm:$0xff]
      %v305 = vld [vmem:[%s259 + $0x98] sm:$0xff]
      %v306 = vld [vmem:[%s259 + $0xa0] sm:$0xff]
      %v307 = vld [vmem:[%s259 + $0xa8] sm:$0xff]
      %v308 = vld [vmem:[%s259 + $0xb0] sm:$0xff]
      %v309 = vld [vmem:[%s259 + $0xb8] sm:$0xff]
      %v310 = vld [vmem:[%s259 + $0xc0] sm:$0xff]
      %v311 = vld [vmem:[%s259 + $0xc8] sm:$0xff]
      %v312 = vld [vmem:[%s259 + $0xd0] sm:$0xff]
      %v313 = vld [vmem:[%s259 + $0xd8] sm:$0xff]
      %v314 = vld [vmem:[%s259 + $0xe0] sm:$0xff]
      %v315 = vld [vmem:[%s259 + $0xe8] sm:$0xff]
      %v316 = vld [vmem:[%s259 + $0xf0] sm:$0xff]
      %v317 = vld [vmem:[%s259 + $0xf8] sm:$0xff]
      %v319 = vunpack.c.l.b16 %v285
      %v320 = vunpack.c.h.b16 %v285
      %v321 = vpack.c.b16 %v319, %v319
      %v322 = vpack.c.b16 %v320, %v320
      %v357 = vunpack.c.l.b16 %v286
      %v358 = vunpack.c.h.b16 %v286
      %v359 = vunpack.c.l.b16 %v287
      %v360 = vunpack.c.h.b16 %v287
      %v361 = vunpack.c.l.b16 %v288
      %v362 = vunpack.c.h.b16 %v288
      %v363 = vunpack.c.l.b16 %v289
      %v364 = vunpack.c.h.b16 %v289
      %v365 = vunpack.c.l.b16 %v290
      %v366 = vunpack.c.h.b16 %v290
      %v367 = vunpack.c.l.b16 %v291
      %v368 = vunpack.c.h.b16 %v291
      %v369 = vunpack.c.l.b16 %v292
      %v370 = vunpack.c.h.b16 %v292
      %v371 = vunpack.c.l.b16 %v293
      %v372 = vunpack.c.h.b16 %v293
      %v373 = vunpack.c.l.b16 %v294
      %v374 = vunpack.c.h.b16 %v294
      %v375 = vunpack.c.l.b16 %v295
      %v376 = vunpack.c.h.b16 %v295
      %v377 = vunpack.c.l.b16 %v296
      %v378 = vunpack.c.h.b16 %v296
      %v379 = vunpack.c.l.b16 %v297
      %v380 = vunpack.c.h.b16 %v297
      %v381 = vunpack.c.l.b16 %v298
      %v382 = vunpack.c.h.b16 %v298
      %v383 = vunpack.c.l.b16 %v299
      %v384 = vunpack.c.h.b16 %v299
      %v385 = vunpack.c.l.b16 %v300
      %v386 = vunpack.c.h.b16 %v300
      %v387 = vunpack.c.l.b16 %v301
      %v388 = vunpack.c.h.b16 %v301
      %v389 = vunpack.c.l.b16 %v302
      %v390 = vunpack.c.h.b16 %v302
      %v391 = vunpack.c.l.b16 %v303
      %v392 = vunpack.c.h.b16 %v303
      %v393 = vunpack.c.l.b16 %v304
      %v394 = vunpack.c.h.b16 %v304
      %v395 = vunpack.c.l.b16 %v305
      %v396 = vunpack.c.h.b16 %v305
      %v397 = vunpack.c.l.b16 %v306
      %v398 = vunpack.c.h.b16 %v306
      %v399 = vunpack.c.l.b16 %v307
      %v400 = vunpack.c.h.b16 %v307
      %v401 = vunpack.c.l.b16 %v308
      %v402 = vunpack.c.h.b16 %v308
      %v403 = vunpack.c.l.b16 %v309
      %v404 = vunpack.c.h.b16 %v309
      %v405 = vunpack.c.l.b16 %v310
      %v406 = vunpack.c.h.b16 %v310
      %v407 = vunpack.c.l.b16 %v311
      %v408 = vunpack.c.h.b16 %v311
      %v409 = vunpack.c.l.b16 %v312
      %v410 = vunpack.c.h.b16 %v312
      %v411 = vunpack.c.l.b16 %v313
      %v412 = vunpack.c.h.b16 %v313
      %v413 = vunpack.c.l.b16 %v314
      %v414 = vunpack.c.h.b16 %v314
      %v415 = vunpack.c.l.b16 %v315
      %v416 = vunpack.c.h.b16 %v315
      %v417 = vunpack.c.l.b16 %v316
      %v418 = vunpack.c.h.b16 %v316
      %v419 = vunpack.c.l.b16 %v317
      %v420 = vunpack.c.h.b16 %v317
      %v421 = vpack.c.b16 %v359, %v357
      %v422 = vpack.c.b16 %v360, %v358
      %v423 = vpack.c.b16 %v363, %v361
      %v424 = vpack.c.b16 %v364, %v362
      %v425 = vpack.c.b16 %v367, %v365
      %v426 = vpack.c.b16 %v368, %v366
      %v427 = vpack.c.b16 %v371, %v369
      %v428 = vpack.c.b16 %v372, %v370
      %v429 = vpack.c.b16 %v375, %v373
      %v430 = vpack.c.b16 %v376, %v374
      %v431 = vpack.c.b16 %v379, %v377
      %v432 = vpack.c.b16 %v380, %v378
      %v433 = vpack.c.b16 %v383, %v381
      %v434 = vpack.c.b16 %v384, %v382
      %v435 = vpack.c.b16 %v387, %v385
      %v436 = vpack.c.b16 %v388, %v386
      %v437 = vpack.c.b16 %v391, %v389
      %v438 = vpack.c.b16 %v392, %v390
      %v439 = vpack.c.b16 %v395, %v393
      %v440 = vpack.c.b16 %v396, %v394
      %v441 = vpack.c.b16 %v399, %v397
      %v442 = vpack.c.b16 %v400, %v398
      %v443 = vpack.c.b16 %v403, %v401
      %v444 = vpack.c.b16 %v404, %v402
      %v445 = vpack.c.b16 %v407, %v405
      %v446 = vpack.c.b16 %v408, %v406
      %v447 = vpack.c.b16 %v411, %v409
      %v448 = vpack.c.b16 %v412, %v410
      %v449 = vpack.c.b16 %v415, %v413
      %v450 = vpack.c.b16 %v416, %v414
      %v451 = vpack.c.b16 %v419, %v417
      %v452 = vpack.c.b16 %v420, %v418
      %485 = vmatprep.subr.bf16.mxu0 %v436
      %486 = vmatpush1.bf16.msra.mxu0 %v435
      %487 = vmatprep.subr.bf16.mxu0 %v434
      %488 = vmatpush1.bf16.msra.mxu0 %v433
      %489 = vmatprep.subr.bf16.mxu0 %v432
      %490 = vmatpush1.bf16.msra.mxu0 %v431
      %491 = vmatprep.subr.bf16.mxu0 %v430
      %492 = vmatpush1.bf16.msra.mxu0 %v429
      %493 = vmatprep.subr.bf16.mxu0 %v428
      %494 = vmatpush1.bf16.msra.mxu0 %v427
      %495 = vmatprep.subr.bf16.mxu0 %v426
      %496 = vmatpush1.bf16.msra.mxu0 %v425
      %497 = vmatprep.subr.bf16.mxu0 %v424
      %498 = vmatpush1.bf16.msra.mxu0 %v423
      %499 = vmatprep.subr.bf16.mxu0 %v422
      %500 = vmatpush1.bf16.msra.mxu0 %v421
      %501 = vmatprep.subr.bf16.mxu0 %v452
      %502 = vmatpush2.bf16.msra.mxu0 %v451
      %503 = vmatprep.subr.bf16.mxu0 %v450
      %504 = vmatpush2.bf16.msra.mxu0 %v449
      %505 = vmatprep.subr.bf16.mxu0 %v448
      %506 = vmatpush2.bf16.msra.mxu0 %v447
      %507 = vmatprep.subr.bf16.mxu0 %v446
      %508 = vmatpush2.bf16.msra.mxu0 %v445
      %509 = vmatprep.subr.bf16.mxu0 %v444
      %510 = vmatpush2.bf16.msra.mxu0 %v443
      %511 = vmatprep.subr.bf16.mxu0 %v442
      %512 = vmatpush2.bf16.msra.mxu0 %v441
      %513 = vmatprep.subr.bf16.mxu0 %v440
      %514 = vmatpush2.bf16.msra.mxu0 %v439
      %515 = vmatprep.subr.bf16.mxu0 %v438
      %516 = vmatpush2.bf16.msra.mxu0 %v437
      %517 = vmatprep.mubr.bf16.mxu0 %v322
      %518 = vmatmul.mubr.bf16.gmra.mxu0 %v321
      %v519 = vpop.f32.mrf.mxu0
      %v520 = vadd.f32 0.0, %v519
      %v521 = vpop.f32.mrf.mxu0
      %v522 = vadd.f32 0.0, %v521
      %v523 = vpop.f32.mrf.mxu0
      %v524 = vpop.f32.mrf.mxu0
      %525 = vdwg.mxu0
      %v526 = vadd.f32 %v283, %v520
      %v527 = vadd.f32 %v284, %v522
      %528 = vst [vmem:[#allocation2] sm:$0xff] %v526
      %529 = vst [vmem:[#allocation2 + $0x8] sm:$0xff] %v527
      %p530 = scmp.eq.s32.totalorder %s21, 8
      // Predicated region
      $region37: #{forward.19} parent=31 // pred_check
        %p531 = pneg %p530
      $region38: #{forward.19} parent=31 // pred_check_branch
        %533 = sbr.rel (%p531) target = $region40
      $region39: #{forward.19} parent=31 // pred_region
        %v534 = vld [vmem:[#allocation2] sm:$0xff]
        %v535 = vld [vmem:[#allocation2 + $0x8] sm:$0xff]
        %v536 = vld [vmem:[%s265] sm:$0x3]
        %v538 = vlaneseq
        %v539 = vshrl.u32 %v538, 7
        %v540 = vsub.s32 0, %v539
        %v541 = vrot.slane %v536, %v540
        %v542 = vlaneseq
        %v543 = vshrl.u32 %v542, 7
        %v544 = vsub.s32 1, %v543
        %v545 = vrot.slane %v536, %v544
        %v548 = vadd.f32 %v534, %v541
        %v549 = vadd.f32 %v535, %v545
        %v550 = vmax.f32 %v548, 0.0
        %v551 = vmax.f32 %v549, 0.0
        %552 = vst [vmem:[%s275] sm:$0xff] %v550
        %553 = vst [vmem:[%s275 + $0x8] sm:$0xff] %v551
      $region40: #{forward.19} parent=31 // pred_fallthru
        _
      %s554 = smul.u32 2, %s20
      %p555 = scmp.lt.s32.totalorder %s19, 0
      %s556 = scalar_select %p555, %s19, 0
      %p557 = scmp.lt.s32.totalorder %s554, 1
      %s558 = scalar_select %p557, %s554, 1
      %s559 = smul.addr %s556, 2
      %s560 = sadd.s32 %s558, %s559
      %s561 = smul.addr %s560, 8
      %s562 = scalar_lea.vmem %s3, %s561
      // Predicated region
      $region41: #{forward.19} parent=31 // pred_check
        %p563 = pneg %p135
      $region42: #{forward.19} parent=31 // pred_check_branch
        %565 = sbr.rel (%p563) target = $region44
      $region43: #{forward.19} parent=31 // pred_region
        %s566 = smul.u32 2, %s20
      $region44: #{forward.19} parent=31 // pred_fallthru
        _
      // Predicated region
      $region45: #{forward.19} parent=31 // pred_check
        %p567 = pneg %p135
      $region46: #{forward.19} parent=31 // pred_check_branch
        %569 = sbr.rel (%p567) target = $region48
      $region47: #{forward.19} parent=31 // pred_region
        %s570 = smul.u32 2, %s20
        %p571 = scmp.lt.s32.totalorder %s19, 0
        %s572 = scalar_select %p571, %s19, 0
        %p573 = scmp.lt.s32.totalorder %s570, 1
        %s574 = scalar_select %p573, %s570, 1
        %s575 = smul.addr %s572, 2
        %s576 = sadd.s32 %s574, %s575
        %s577 = smul.addr %s576, 8
        %s578 = scalar_lea.vmem %s3, %s577
      $region48: #{forward.19} parent=31 // pred_fallthru
        _
    $region32: #{forward.19} parent=5 // pred_fallthru
      _
    %p579 = scmp.le.s32.totalorder 2, %s9
    // Predicated region
    $region49: #{forward.19} parent=5 // pred_check
      %p580 = pneg %p579
    $region50: #{forward.19} parent=5 // pred_check_branch
      %582 = sbr.rel (%p580) target = $region52
    $region51: #{forward.19} parent=5 // pred_region
      %s583 = ssub.s32 %s9, 2
    $region52: #{forward.19} parent=5 // pred_fallthru
      _
  $region6: #{forward.19} parent=0 // loop_footer
    %s13 = sadd.s32 1, %s9
  $region7: #{forward.19} parent=0 // loop_footer_branch
    %8 = sbr.rel target = $region3
  $region8: #{forward.19} parent=0 // loop_exit
    _

// kernel: forward.20
$region0: #{forward.20}
  #allocation0 [shape = 'u32[]', space=smem, size = 0x4, offset = 0x4, fixed_abs, tag = 'smem constant byte address 0x4 - core index']
  #allocation1 [shape = 'u32[144,128]{1,0:T(1,128)}', space=vmem, size = 0x12000, scoped, tag = 'internal scratch']
  #allocation2 [shape = 'f32[8,256]{1,0:T(8,128)}', space=vmem, size = 0x2000, scoped, tag = 'scratch operand']
  %s0 = inlined_call_operand.vmem [shape: bf16[8,256], index: 0, kind: input, shape index: {}]
  %s1 = inlined_call_operand.vmem [shape: bf16[8,256], index: 1, kind: input, shape index: {}]
  %s2 = inlined_call_operand.vmem [shape: bf16[512,512], index: 2, kind: input, shape index: {}]
  %s3 = inlined_call_operand.vmem [shape: f32[1,512], index: 3, kind: input, shape index: {}]
  %s4 = inlined_call_operand.vmem [shape: f32[8,512], index: 4, kind: output, shape index: {}]
  %s5 = sld [smem:[#allocation0]]
  $region95: #{forward.20} parent=0
    _
  %s7 = ssub.s32 1, %s5
  %s8 = scalar_select 0, %s7, %s5
  $region1: #{forward.20} parent=0
    #allocation3 [shape = 'u8[262144]{0}', space=vmem, size = 0x40000, scoped, tag = 'input window, operand 2']
    loop: start=0, step=1, limit=6
    $region2: #{forward.20} parent=1 // loop_pre_header
      _
    $region3: #{forward.20} parent=1 // loop_header
      %s10 = sphi 0, %s14
      %p11 = scmp.ge.s32.totalorder %s10, 6
      %s17 = sphi 0, %s36
      %s18 = sphi 0, %s32
      %s19 = sphi 0, %s28
      %s20 = sphi 0, %s17
      %s21 = sphi 0, %s18
      %s22 = sphi 0, %s19
      %s23 = sphi 0, %s20
      %s24 = sphi 0, %s21
      %s25 = sphi 0, %s22
      %s39 = sphi 0, %s41
      %s42 = sphi 0, %s39
      %s43 = sphi 0, %s42
      %s59 = sphi 0, %s43
      %s65 = sphi 0, %s67
      %s68 = sphi 0, %s65
      %s69 = sphi 0, %s68
      %s85 = sphi 0, %s69
      %s93 = sphi 0, %s95
      %s96 = sphi 0, %s93
      %s97 = sphi 0, %s96
      %s113 = sphi 0, %s97
      %s119 = sphi 0, %s121
      %s122 = sphi 0, %s119
      %s123 = sphi 0, %s122
      %s139 = sphi 0, %s123
      %s147 = sphi 0, %s149
      %s150 = sphi 0, %s147
      %s151 = sphi 0, %s150
      %s167 = sphi 0, %s151
    $region4: #{forward.20} parent=1 // loop_header_branch
      %13 = sbr.rel (%p11) target = $region8
    $region5: #{forward.20} parent=1 // loop_body
      %s15 = ssub.s32 %s10, 1
      %s16 = ssub.s32 %s10, 2
      %s26 = sadd.s32 1, %s19
      %p27 = scmp.ge.s32.totalorder %s26, 2
      %s28 = scalar_select %p27, 0, %s26
      %s29 = sadd.s32 1, %s18
      %s30 = scalar_select %p27, %s29, %s18
      %p31 = scmp.ge.s32.totalorder %s30, 2
      %s32 = scalar_select %p31, 0, %s30
      %s33 = sadd.s32 1, %s17
      %s34 = scalar_select %p31, %s33, %s17
      %p35 = scmp.ge.s32.totalorder %s34, 1
      %s36 = scalar_select %p35, 0, %s34
      %s37 = ssub.s32 %s17, %s36
      %p38 = scmp.eq.s32.totalorder %s37, 0
      %s40 = sadd.s32 %s39, 1
      %s41 = scalar_select %p38, %s39, %s40
      %p44 = pneg %p38
      %p45 = scmp.eq.s32.totalorder %s10, 3
      %p46 = por %p44, %p45
      %p47 = scmp.ne.s32.totalorder %s39, %s42
      %p48 = scmp.eq.s32.totalorder %s10, 0
      %p49 = por %p47, %p48
      %p50 = scmp.ne.s32.totalorder %s39, %s42
      %p51 = scmp.eq.s32.totalorder %s15, 3
      %p52 = por %p50, %p51
      %p53 = scmp.ne.s32.totalorder %s42, %s43
      %p54 = scmp.eq.s32.totalorder %s15, 0
      %p55 = por %p53, %p54
      %p56 = scmp.ne.s32.totalorder %s42, %s43
      %p57 = scmp.eq.s32.totalorder %s16, 3
      %p58 = por %p56, %p57
      %p60 = scmp.ne.s32.totalorder %s43, %s59
      %p61 = scmp.eq.s32.totalorder %s16, 0
      %p62 = por %p60, %p61
      %s63 = ssub.s32 %s17, %s36
      %p64 = scmp.eq.s32.totalorder %s63, 0
      %s66 = sadd.s32 %s65, 1
      %s67 = scalar_select %p64, %s65, %s66
      %p70 = pneg %p64
      %p71 = scmp.eq.s32.totalorder %s10, 3
      %p72 = por %p70, %p71
      %p73 = scmp.ne.s32.totalorder %s65, %s68
      %p74 = scmp.eq.s32.totalorder %s10, 0
      %p75 = por %p73, %p74
      %p76 = scmp.ne.s32.totalorder %s65, %s68
      %p77 = scmp.eq.s32.totalorder %s15, 3
      %p78 = por %p76, %p77
      %p79 = scmp.ne.s32.totalorder %s68, %s69
      %p80 = scmp.eq.s32.totalorder %s15, 0
      %p81 = por %p79, %p80
      %p82 = scmp.ne.s32.totalorder %s68, %s69
      %p83 = scmp.eq.s32.totalorder %s16, 3
      %p84 = por %p82, %p83
      %p86 = scmp.ne.s32.totalorder %s69, %s85
      %p87 = scmp.eq.s32.totalorder %s16, 0
      %p88 = por %p86, %p87
      %s89 = ssub.s32 %s19, %s28
      %s90 = ssub.s32 %s18, %s32
      %s91 = sor.u32 %s89, %s90
      %p92 = scmp.eq.s32.totalorder %s91, 0
      %s94 = sadd.s32 %s93, 1
      %s95 = scalar_select %p92, %s93, %s94
      %p98 = pneg %p92
      %p99 = scmp.eq.s32.totalorder %s10, 3
      %p100 = por %p98, %p99
      %p101 = scmp.ne.s32.totalorder %s93, %s96
      %p102 = scmp.eq.s32.totalorder %s10, 0
      %p103 = por %p101, %p102
      %p104 = scmp.ne.s32.totalorder %s93, %s96
      %p105 = scmp.eq.s32.totalorder %s15, 3
      %p106 = por %p104, %p105
      %p107 = scmp.ne.s32.totalorder %s96, %s97
      %p108 = scmp.eq.s32.totalorder %s15, 0
      %p109 = por %p107, %p108
      %p110 = scmp.ne.s32.totalorder %s96, %s97
      %p111 = scmp.eq.s32.totalorder %s16, 3
      %p112 = por %p110, %p111
      %p114 = scmp.ne.s32.totalorder %s97, %s113
      %p115 = scmp.eq.s32.totalorder %s16, 0
      %p116 = por %p114, %p115
      %s117 = ssub.s32 %s18, %s32
      %p118 = scmp.eq.s32.totalorder %s117, 0
      %s120 = sadd.s32 %s119, 1
      %s121 = scalar_select %p118, %s119, %s120
      %p124 = pneg %p118
      %p125 = scmp.eq.s32.totalorder %s10, 3
      %p126 = por %p124, %p125
      %p127 = scmp.ne.s32.totalorder %s119, %s122
      %p128 = scmp.eq.s32.totalorder %s10, 0
      %p129 = por %p127, %p128
      %p130 = scmp.ne.s32.totalorder %s119, %s122
      %p131 = scmp.eq.s32.totalorder %s15, 3
      %p132 = por %p130, %p131
      %p133 = scmp.ne.s32.totalorder %s122, %s123
      %p134 = scmp.eq.s32.totalorder %s15, 0
      %p135 = por %p133, %p134
      %p136 = scmp.ne.s32.totalorder %s122, %s123
      %p137 = scmp.eq.s32.totalorder %s16, 3
      %p138 = por %p136, %p137
      %p140 = scmp.ne.s32.totalorder %s123, %s139
      %p141 = scmp.eq.s32.totalorder %s16, 0
      %p142 = por %p140, %p141
      %s143 = ssub.s32 %s17, %s36
      %s144 = ssub.s32 %s18, %s32
      %s145 = sor.u32 %s143, %s144
      %p146 = scmp.eq.s32.totalorder %s145, 0
      %s148 = sadd.s32 %s147, 1
      %s149 = scalar_select %p146, %s147, %s148
      %p152 = pneg %p146
      %p153 = scmp.eq.s32.totalorder %s10, 3
      %p154 = por %p152, %p153
      %p155 = scmp.ne.s32.totalorder %s147, %s150
      %p156 = scmp.eq.s32.totalorder %s10, 0
      %p157 = por %p155, %p156
      %p158 = scmp.ne.s32.totalorder %s147, %s150
      %p159 = scmp.eq.s32.totalorder %s15, 3
      %p160 = por %p158, %p159
      %p161 = scmp.ne.s32.totalorder %s150, %s151
      %p162 = scmp.eq.s32.totalorder %s15, 0
      %p163 = por %p161, %p162
      %p164 = scmp.ne.s32.totalorder %s150, %s151
      %p165 = scmp.eq.s32.totalorder %s16, 3
      %p166 = por %p164, %p165
      %p168 = scmp.ne.s32.totalorder %s151, %s167
      %p169 = scmp.eq.s32.totalorder %s16, 0
      %p170 = por %p168, %p169
      %p171 = scmp.le.s32.totalorder 1, %s10
      %p172 = scmp.lt.s32.totalorder %s10, 5
      %p173 = pnand %p171, %p172
      %p174 = pneg %p173
      // Predicated region
      $region9: #{forward.20} parent=5 // pred_check
        _
      $region10: #{forward.20} parent=5 // pred_check_branch
        %176 = sbr.rel (%p173) target = $region12
      $region11: #{forward.20} parent=5 // pred_region
        %s177 = ssub.s32 %s10, 1
        // Predicated region
        $region13: #{forward.20} parent=11 // pred_check
          %p178 = pneg %p55
        $region14: #{forward.20} parent=11 // pred_check_branch
          %180 = sbr.rel (%p178) target = $region16
        $region15: #{forward.20} parent=11 // pred_region
          %p181 = scmp.lt.s32.totalorder %s20, 0
          %s182 = scalar_select %p181, %s20, 0
          %s183 = smul.addr %s182, 2
          %s184 = smul.addr %s183, 4
          %s185 = scalar_lea.vmem %s0, %s184
        $region16: #{forward.20} parent=11 // pred_fallthru
          _
        // Predicated region
        $region17: #{forward.20} parent=11 // pred_check
          %p186 = pneg %p81
        $region18: #{forward.20} parent=11 // pred_check_branch
          %188 = sbr.rel (%p186) target = $region20
        $region19: #{forward.20} parent=11 // pred_region
          %p189 = scmp.lt.s32.totalorder %s20, 0
          %s190 = scalar_select %p189, %s20, 0
          %s191 = smul.addr %s190, 2
          %s192 = smul.addr %s191, 4
          %s193 = scalar_lea.vmem %s1, %s192
        $region20: #{forward.20} parent=11 // pred_fallthru
          _
      $region12: #{forward.20} parent=5 // pred_fallthru
        _
      %p194 = scmp.lt.s32.totalorder %s10, 4
      // Predicated region
      $region21: #{forward.20} parent=5 // pred_check
        %p195 = pneg %p194
      $region22: #{forward.20} parent=5 // pred_check_branch
        %197 = sbr.rel (%p195) target = $region24
      $region23: #{forward.20} parent=5 // pred_region
        // Predicated region
        $region25: #{forward.20} parent=23 // pred_check
          %p198 = pneg %p103
        $region26: #{forward.20} parent=23 // pred_check_branch
          %200 = sbr.rel (%p198) target = $region28
        $region27: #{forward.20} parent=23 // pred_region
          %s201 = sand.u32 %s93, 1
          %s202 = sand.u32 %s93, 1
          %s203 = smul.addr %s202, 256
          %s204 = scalar_lea.vmem [#allocation3], %s203
          %s205 = smul.u32 32, %s19
          %s206 = smul.u32 2, %s18
          %s207 = smul.addr %s205, 4
          %s208 = sadd.s32 %s206, %s207
          %s209 = smul.addr %s208, 4
          %s210 = scalar_lea.vmem %s2, %s209
          // Predicated region
          $region29: #{forward.20} parent=27 // pred_check
            _
          $region30: #{forward.20} parent=27 // pred_check_branch
            %212 = sbr.rel (0) target = $region32
          $region31: #{forward.20} parent=27 // pred_region
            // Predicated region
            $region33: #{forward.20} parent=31 // pred_check
              _
            $region34: #{forward.20} parent=31 // pred_check_branch
              %214 = sbr.rel (0) target = $region36
            $region35: #{forward.20} parent=31 // pred_region
              // Predicated region
              $region48: #{forward.20} parent=35 // pred_check
                _
              $region49: #{forward.20} parent=35 // pred_check_branch
                %292 = sbr.rel (0) target = $region51
              $region50: #{forward.20} parent=35 // pred_region
                loop: start=0, step=1, limit=1
                $region52: #{forward.20} parent=50 // loop_pre_header
                  _
                $region53: #{forward.20} parent=50 // loop_header
                  %s294 = sphi 0, %s298
                  %p295 = scmp.ge.s32.totalorder %s294, 1
                  %s299 = sphi %s210, %s210
                  %s300 = sphi %s204, %s204
                $region54: #{forward.20} parent=50 // loop_header_branch
                  %297 = sbr.rel (%p295) target = $region58
                $region55: #{forward.20} parent=50 // loop_body
                  %v301 = vld [vmem:[%s299] sm:$0xff]
                  %302 = vst [vmem:[%s300] sm:$0xff] %v301
                  %v303 = vld [vmem:[%s299 + $0x10] sm:$0xff]
                  %304 = vst [vmem:[%s300 + $0x8] sm:$0xff] %v303
                  %v305 = vld [vmem:[%s299 + $0x20] sm:$0xff]
                  %306 = vst [vmem:[%s300 + $0x10] sm:$0xff] %v305
                  %v307 = vld [vmem:[%s299 + $0x30] sm:$0xff]
                  %308 = vst [vmem:[%s300 + $0x18] sm:$0xff] %v307
                  %v309 = vld [vmem:[%s299 + $0x40] sm:$0xff]
                  %310 = vst [vmem:[%s300 + $0x20] sm:$0xff] %v309
                  %v311 = vld [vmem:[%s299 + $0x50] sm:$0xff]
                  %312 = vst [vmem:[%s300 + $0x28] sm:$0xff] %v311
                  %v313 = vld [vmem:[%s299 + $0x60] sm:$0xff]
                  %314 = vst [vmem:[%s300 + $0x30] sm:$0xff] %v313
                  %v315 = vld [vmem:[%s299 + $0x70] sm:$0xff]
                  %316 = vst [vmem:[%s300 + $0x38] sm:$0xff] %v315
                  %v317 = vld [vmem:[%s299 + $0x80] sm:$0xff]
                  %318 = vst [vmem:[%s300 + $0x40] sm:$0xff] %v317
                  %v319 = vld [vmem:[%s299 + $0x90] sm:$0xff]
                  %320 = vst [vmem:[%s300 + $0x48] sm:$0xff] %v319
                  %v321 = vld [vmem:[%s299 + $0xa0] sm:$0xff]
                  %322 = vst [vmem:[%s300 + $0x50] sm:$0xff] %v321
                  %v323 = vld [vmem:[%s299 + $0xb0] sm:$0xff]
                  %324 = vst [vmem:[%s300 + $0x58] sm:$0xff] %v323
                  %v325 = vld [vmem:[%s299 + $0xc0] sm:$0xff]
                  %326 = vst [vmem:[%s300 + $0x60] sm:$0xff] %v325
                  %v327 = vld [vmem:[%s299 + $0xd0] sm:$0xff]
                  %328 = vst [vmem:[%s300 + $0x68] sm:$0xff] %v327
                  %v329 = vld [vmem:[%s299 + $0xe0] sm:$0xff]
                  %330 = vst [vmem:[%s300 + $0x70] sm:$0xff] %v329
                  %v331 = vld [vmem:[%s299 + $0xf0] sm:$0xff]
                  %332 = vst [vmem:[%s300 + $0x78] sm:$0xff] %v331
                  %v333 = vld [vmem:[%s299 + $0x100] sm:$0xff]
                  %334 = vst [vmem:[%s300 + $0x80] sm:$0xff] %v333
                  %v335 = vld [vmem:[%s299 + $0x110] sm:$0xff]
                  %336 = vst [vmem:[%s300 + $0x88] sm:$0xff] %v335
                  %v337 = vld [vmem:[%s299 + $0x120] sm:$0xff]
                  %338 = vst [vmem:[%s300 + $0x90] sm:$0xff] %v337
                  %v339 = vld [vmem:[%s299 + $0x130] sm:$0xff]
                  %340 = vst [vmem:[%s300 + $0x98] sm:$0xff] %v339
                  %v341 = vld [vmem:[%s299 + $0x140] sm:$0xff]
                  %342 = vst [vmem:[%s300 + $0xa0] sm:$0xff] %v341
                  %v343 = vld [vmem:[%s299 + $0x150] sm:$0xff]
                  %344 = vst [vmem:[%s300 + $0xa8] sm:$0xff] %v343
                  %v345 = vld [vmem:[%s299 + $0x160] sm:$0xff]
                  %346 = vst [vmem:[%s300 + $0xb0] sm:$0xff] %v345
                  %v347 = vld [vmem:[%s299 + $0x170] sm:$0xff]
                  %348 = vst [vmem:[%s300 + $0xb8] sm:$0xff] %v347
                  %v349 = vld [vmem:[%s299 + $0x180] sm:$0xff]
                  %350 = vst [vmem:[%s300 + $0xc0] sm:$0xff] %v349
                  %v351 = vld [vmem:[%s299 + $0x190] sm:$0xff]
                  %352 = vst [vmem:[%s300 + $0xc8] sm:$0xff] %v351
                  %v353 = vld [vmem:[%s299 + $0x1a0] sm:$0xff]
                  %354 = vst [vmem:[%s300 + $0xd0] sm:$0xff] %v353
                  %v355 = vld [vmem:[%s299 + $0x1b0] sm:$0xff]
                  %356 = vst [vmem:[%s300 + $0xd8] sm:$0xff] %v355
                  %v357 = vld [vmem:[%s299 + $0x1c0] sm:$0xff]
                  %358 = vst [vmem:[%s300 + $0xe0] sm:$0xff] %v357
                  %v359 = vld [vmem:[%s299 + $0x1d0] sm:$0xff]
                  %360 = vst [vmem:[%s300 + $0xe8] sm:$0xff] %v359
                  %v361 = vld [vmem:[%s299 + $0x1e0] sm:$0xff]
                  %362 = vst [vmem:[%s300 + $0xf0] sm:$0xff] %v361
                  %v363 = vld [vmem:[%s299 + $0x1f0] sm:$0xff]
                  %364 = vst [vmem:[%s300 + $0xf8] sm:$0xff] %v363
                $region56: #{forward.20} parent=50 // loop_footer
                  %s298 = sadd.s32 1, %s294
                $region57: #{forward.20} parent=50 // loop_footer_branch
                  %293 = sbr.rel target = $region53
                $region58: #{forward.20} parent=50 // loop_exit
                  _
              $region51: #{forward.20} parent=35 // pred_fallthru
                _
              // Predicated region
              $region59: #{forward.20} parent=35 // pred_check
                _
              $region60: #{forward.20} parent=35 // pred_check_branch
                %366 = sbr.rel target = $region62
              $region61: #{forward.20} parent=35 // pred_region
                _
              $region62: #{forward.20} parent=35 // pred_fallthru
                _
            $region36: #{forward.20} parent=31 // pred_fallthru
              _
            // Predicated region
            $region37: #{forward.20} parent=31 // pred_check
              _
            $region38: #{forward.20} parent=31 // pred_check_branch
              %216 = sbr.rel target = $region40
            $region39: #{forward.20} parent=31 // pred_region
              %s218 = ssub.s32 256, 1
              loop: start=0, step=1, limit=1
              $region41: #{forward.20} parent=39 // loop_pre_header
                _
              $region42: #{forward.20} parent=39 // loop_header
                %s220 = sphi 0, %s224
                %p221 = scmp.ge.s32.totalorder %s220, 1
                %s225 = sphi %s210, %s210
                %s226 = sphi %s204, %s204
              $region43: #{forward.20} parent=39 // loop_header_branch
                %223 = sbr.rel (%p221) target = $region47
              $region44: #{forward.20} parent=39 // loop_body
                %v227 = vld [vmem:[%s225] sm:%s218]
                %228 = vst [vmem:[%s226] sm:%s218] %v227
                %v229 = vld [vmem:[%s225 + $0x10] sm:%s218]
                %230 = vst [vmem:[%s226 + $0x8] sm:%s218] %v229
                %v231 = vld [vmem:[%s225 + $0x20] sm:%s218]
                %232 = vst [vmem:[%s226 + $0x10] sm:%s218] %v231
                %v233 = vld [vmem:[%s225 + $0x30] sm:%s218]
                %234 = vst [vmem:[%s226 + $0x18] sm:%s218] %v233
                %v235 = vld [vmem:[%s225 + $0x40] sm:%s218]
                %236 = vst [vmem:[%s226 + $0x20] sm:%s218] %v235
                %v237 = vld [vmem:[%s225 + $0x50] sm:%s218]
                %238 = vst [vmem:[%s226 + $0x28] sm:%s218] %v237
                %v239 = vld [vmem:[%s225 + $0x60] sm:%s218]
                %240 = vst [vmem:[%s226 + $0x30] sm:%s218] %v239
                %v241 = vld [vmem:[%s225 + $0x70] sm:%s218]
                %242 = vst [vmem:[%s226 + $0x38] sm:%s218] %v241
                %v243 = vld [vmem:[%s225 + $0x80] sm:%s218]
                %244 = vst [vmem:[%s226 + $0x40] sm:%s218] %v243
                %v245 = vld [vmem:[%s225 + $0x90] sm:%s218]
                %246 = vst [vmem:[%s226 + $0x48] sm:%s218] %v245
                %v247 = vld [vmem:[%s225 + $0xa0] sm:%s218]
                %248 = vst [vmem:[%s226 + $0x50] sm:%s218] %v247
                %v249 = vld [vmem:[%s225 + $0xb0] sm:%s218]
                %250 = vst [vmem:[%s226 + $0x58] sm:%s218] %v249
                %v251 = vld [vmem:[%s225 + $0xc0] sm:%s218]
                %252 = vst [vmem:[%s226 + $0x60] sm:%s218] %v251
                %v253 = vld [vmem:[%s225 + $0xd0] sm:%s218]
                %254 = vst [vmem:[%s226 + $0x68] sm:%s218] %v253
                %v255 = vld [vmem:[%s225 + $0xe0] sm:%s218]
                %256 = vst [vmem:[%s226 + $0x70] sm:%s218] %v255
                %v257 = vld [vmem:[%s225 + $0xf0] sm:%s218]
                %258 = vst [vmem:[%s226 + $0x78] sm:%s218] %v257
                %v259 = vld [vmem:[%s225 + $0x100] sm:%s218]
                %260 = vst [vmem:[%s226 + $0x80] sm:%s218] %v259
                %v261 = vld [vmem:[%s225 + $0x110] sm:%s218]
                %262 = vst [vmem:[%s226 + $0x88] sm:%s218] %v261
                %v263 = vld [vmem:[%s225 + $0x120] sm:%s218]
                %264 = vst [vmem:[%s226 + $0x90] sm:%s218] %v263
                %v265 = vld [vmem:[%s225 + $0x130] sm:%s218]
                %266 = vst [vmem:[%s226 + $0x98] sm:%s218] %v265
                %v267 = vld [vmem:[%s225 + $0x140] sm:%s218]
                %268 = vst [vmem:[%s226 + $0xa0] sm:%s218] %v267
                %v269 = vld [vmem:[%s225 + $0x150] sm:%s218]
                %270 = vst [vmem:[%s226 + $0xa8] sm:%s218] %v269
                %v271 = vld [vmem:[%s225 + $0x160] sm:%s218]
                %272 = vst [vmem:[%s226 + $0xb0] sm:%s218] %v271
                %v273 = vld [vmem:[%s225 + $0x170] sm:%s218]
                %274 = vst [vmem:[%s226 + $0xb8] sm:%s218] %v273
                %v275 = vld [vmem:[%s225 + $0x180] sm:%s218]
                %276 = vst [vmem:[%s226 + $0xc0] sm:%s218] %v275
                %v277 = vld [vmem:[%s225 + $0x190] sm:%s218]
                %278 = vst [vmem:[%s226 + $0xc8] sm:%s218] %v277
                %v279 = vld [vmem:[%s225 + $0x1a0] sm:%s218]
                %280 = vst [vmem:[%s226 + $0xd0] sm:%s218] %v279
                %v281 = vld [vmem:[%s225 + $0x1b0] sm:%s218]
                %282 = vst [vmem:[%s226 + $0xd8] sm:%s218] %v281
                %v283 = vld [vmem:[%s225 + $0x1c0] sm:%s218]
                %284 = vst [vmem:[%s226 + $0xe0] sm:%s218] %v283
                %v285 = vld [vmem:[%s225 + $0x1d0] sm:%s218]
                %286 = vst [vmem:[%s226 + $0xe8] sm:%s218] %v285
                %v287 = vld [vmem:[%s225 + $0x1e0] sm:%s218]
                %288 = vst [vmem:[%s226 + $0xf0] sm:%s218] %v287
                %v289 = vld [vmem:[%s225 + $0x1f0] sm:%s218]
                %290 = vst [vmem:[%s226 + $0xf8] sm:%s218] %v289
              $region45: #{forward.20} parent=39 // loop_footer
                %s224 = sadd.s32 1, %s220
              $region46: #{forward.20} parent=39 // loop_footer_branch
                %219 = sbr.rel target = $region42
              $region47: #{forward.20} parent=39 // loop_exit
                _
            $region40: #{forward.20} parent=31 // pred_fallthru
              _
          $region32: #{forward.20} parent=27 // pred_fallthru
            _
          %367 = vnop
        $region28: #{forward.20} parent=23 // pred_fallthru
          _
        // Predicated region
        $region63: #{forward.20} parent=23 // pred_check
          %p368 = pneg %p129
        $region64: #{forward.20} parent=23 // pred_check_branch
          %370 = sbr.rel (%p368) target = $region66
        $region65: #{forward.20} parent=23 // pred_region
          %s371 = smul.u32 2, %s18
          %p372 = scmp.lt.s32.totalorder %s371, 3
          %s373 = scalar_select %p372, %s371, 3
          %s374 = scalar_lea.vmem %s3, %s373
          %s375 = smul.u32 2, %s18
        $region66: #{forward.20} parent=23 // pred_fallthru
          _
      $region24: #{forward.20} parent=5 // pred_fallthru
        _
      %p376 = scmp.le.s32.totalorder 1, %s10
      %p377 = scmp.lt.s32.totalorder %s10, 5
      %p378 = pnand %p376, %p377
      %p379 = pneg %p378
      // Predicated region
      $region67: #{forward.20} parent=5 // pred_check
        _
      $region68: #{forward.20} parent=5 // pred_check_branch
        %381 = sbr.rel (%p378) target = $region70
      $region69: #{forward.20} parent=5 // pred_region
        %s382 = ssub.s32 %s10, 1
        %s383 = sand.u32 %s96, 1
        %s384 = sand.u32 %s96, 1
        %s385 = smul.addr %s384, 256
        %s386 = scalar_lea.vmem [#allocation3], %s385
        // Predicated region
        $region71: #{forward.20} parent=69 // pred_check
          %p387 = pneg %p109
        $region72: #{forward.20} parent=69 // pred_check_branch
          %389 = sbr.rel (%p387) target = $region74
        $region73: #{forward.20} parent=69 // pred_region
          _
        $region74: #{forward.20} parent=69 // pred_fallthru
          _
        %p390 = scmp.lt.s32.totalorder %s20, 0
        %s391 = scalar_select %p390, %s20, 0
        %s392 = smul.addr %s391, 2
        %s393 = smul.addr %s392, 4
        %s394 = scalar_lea.vmem %s0, %s393
        %p395 = pneg %p55
        %p396 = pneg %p52
        %p397 = scmp.lt.s32.totalorder %s20, 0
        %s398 = scalar_select %p397, %s20, 0
        %s399 = smul.addr %s398, 2
        %s400 = smul.addr %s399, 4
        %s401 = scalar_lea.vmem %s1, %s400
        %p402 = pneg %p81
        %p403 = pneg %p78
        %s404 = sand.u32 %s96, 1
        %s405 = sand.u32 %s96, 1
        %s406 = smul.addr %s405, 256
        %s407 = scalar_lea.vmem [#allocation3], %s406
        %p408 = pneg %p109
        %p409 = pneg %p106
        %s410 = smul.u32 2, %s21
        %p411 = scmp.lt.s32.totalorder %s410, 3
        %s412 = scalar_select %p411, %s410, 3
        %s413 = scalar_lea.vmem %s3, %s412
        %p414 = pneg %p135
        %p415 = pneg %p132
        %p416 = pneg %p163
        %p417 = pneg %p160
        %s418 = smul.u32 2, %s21
        %p419 = scmp.lt.s32.totalorder %s20, 0
        %s420 = scalar_select %p419, %s20, 0
        %p421 = scmp.lt.s32.totalorder %s418, 3
        %s422 = scalar_select %p421, %s418, 3
        %s423 = smul.addr %s420, 4
        %s424 = sadd.s32 %s422, %s423
        %s425 = smul.addr %s424, 8
        %s426 = scalar_lea.vmem %s4, %s425
        %p427 = scmp.lt.s32.totalorder %s20, 0
        %s428 = scalar_select %p427, %s20, 0
        %s429 = smul.addr %s428, 2
        %s430 = smul.addr %s429, 4
        %s431 = scalar_lea.vmem %s0, %s430
        %p432 = scmp.lt.s32.totalorder %s20, 0
        %s433 = scalar_select %p432, %s20, 0
        %s434 = smul.addr %s433, 2
        %s435 = smul.addr %s434, 4
        %s436 = scalar_lea.vmem %s1, %s435
        %s437 = smul.u32 32, %s22
        %s438 = smul.u32 2, %s21
        %s439 = smul.u32 2, %s21
        %p440 = scmp.lt.s32.totalorder %s439, 3
        %s441 = scalar_select %p440, %s439, 3
        %s442 = scalar_lea.vmem %s3, %s441
        %s443 = smul.u32 2, %s21
        %s444 = smul.u32 2, %s21
        %p445 = scmp.lt.s32.totalorder %s20, 0
        %s446 = scalar_select %p445, %s20, 0
        %p447 = scmp.lt.s32.totalorder %s444, 3
        %s448 = scalar_select %p447, %s444, 3
        %s449 = smul.addr %s446, 4
        %s450 = sadd.s32 %s448, %s449
        %s451 = smul.addr %s450, 8
        %s452 = scalar_lea.vmem %s4, %s451
        %s453 = smul.u32 2, %s21
        %p454 = scmp.eq.s32.totalorder %s22, 0
        // Predicated region
        $region75: #{forward.20} parent=69 // pred_check
          %p455 = pneg %p454
        $region76: #{forward.20} parent=69 // pred_check_branch
          %457 = sbr.rel (%p455) target = $region78
        $region77: #{forward.20} parent=69 // pred_region
          %v458 = vld [vmem:[%s431] sm:$0xff]
          %v459 = vld [vmem:[%s386] sm:$0xff]
          %v460 = vld [vmem:[%s386 + $0x8] sm:$0xff]
          %v461 = vld [vmem:[%s386 + $0x10] sm:$0xff]
          %v462 = vld [vmem:[%s386 + $0x18] sm:$0xff]
          %v463 = vld [vmem:[%s386 + $0x20] sm:$0xff]
          %v464 = vld [vmem:[%s386 + $0x28] sm:$0xff]
          %v465 = vld [vmem:[%s386 + $0x30] sm:$0xff]
          %v466 = vld [vmem:[%s386 + $0x38] sm:$0xff]
          %v467 = vld [vmem:[%s386 + $0x40] sm:$0xff]
          %v468 = vld [vmem:[%s386 + $0x48] sm:$0xff]
          %v469 = vld [vmem:[%s386 + $0x50] sm:$0xff]
          %v470 = vld [vmem:[%s386 + $0x58] sm:$0xff]
          %v471 = vld [vmem:[%s386 + $0x60] sm:$0xff]
          %v472 = vld [vmem:[%s386 + $0x68] sm:$0xff]
          %v473 = vld [vmem:[%s386 + $0x70] sm:$0xff]
          %v474 = vld [vmem:[%s386 + $0x78] sm:$0xff]
          %v475 = vld [vmem:[%s386 + $0x80] sm:$0xff]
          %v476 = vld [vmem:[%s386 + $0x88] sm:$0xff]
          %v477 = vld [vmem:[%s386 + $0x90] sm:$0xff]
          %v478 = vld [vmem:[%s386 + $0x98] sm:$0xff]
          %v479 = vld [vmem:[%s386 + $0xa0] sm:$0xff]
          %v480 = vld [vmem:[%s386 + $0xa8] sm:$0xff]
          %v481 = vld [vmem:[%s386 + $0xb0] sm:$0xff]
          %v482 = vld [vmem:[%s386 + $0xb8] sm:$0xff]
          %v483 = vld [vmem:[%s386 + $0xc0] sm:$0xff]
          %v484 = vld [vmem:[%s386 + $0xc8] sm:$0xff]
          %v485 = vld [vmem:[%s386 + $0xd0] sm:$0xff]
          %v486 = vld [vmem:[%s386 + $0xd8] sm:$0xff]
          %v487 = vld [vmem:[%s386 + $0xe0] sm:$0xff]
          %v488 = vld [vmem:[%s386 + $0xe8] sm:$0xff]
          %v489 = vld [vmem:[%s386 + $0xf0] sm:$0xff]
          %v490 = vld [vmem:[%s386 + $0xf8] sm:$0xff]
          %v492 = vunpack.c.l.b16 %v458
          %v493 = vunpack.c.h.b16 %v458
          %v494 = vpack.c.b16 %v492, %v492
          %v495 = vpack.c.b16 %v493, %v493
          %v530 = vunpack.c.l.b16 %v459
          %v531 = vunpack.c.h.b16 %v459
          %v532 = vunpack.c.l.b16 %v460
          %v533 = vunpack.c.h.b16 %v460
          %v534 = vunpack.c.l.b16 %v461
          %v535 = vunpack.c.h.b16 %v461
          %v536 = vunpack.c.l.b16 %v462
          %v537 = vunpack.c.h.b16 %v462
          %v538 = vunpack.c.l.b16 %v463
          %v539 = vunpack.c.h.b16 %v463
          %v540 = vunpack.c.l.b16 %v464
          %v541 = vunpack.c.h.b16 %v464
          %v542 = vunpack.c.l.b16 %v465
          %v543 = vunpack.c.h.b16 %v465
          %v544 = vunpack.c.l.b16 %v466
          %v545 = vunpack.c.h.b16 %v466
          %v546 = vunpack.c.l.b16 %v467
          %v547 = vunpack.c.h.b16 %v467
          %v548 = vunpack.c.l.b16 %v468
          %v549 = vunpack.c.h.b16 %v468
          %v550 = vunpack.c.l.b16 %v469
          %v551 = vunpack.c.h.b16 %v469
          %v552 = vunpack.c.l.b16 %v470
          %v553 = vunpack.c.h.b16 %v470
          %v554 = vunpack.c.l.b16 %v471
          %v555 = vunpack.c.h.b16 %v471
          %v556 = vunpack.c.l.b16 %v472
          %v557 = vunpack.c.h.b16 %v472
          %v558 = vunpack.c.l.b16 %v473
          %v559 = vunpack.c.h.b16 %v473
          %v560 = vunpack.c.l.b16 %v474
          %v561 = vunpack.c.h.b16 %v474
          %v562 = vunpack.c.l.b16 %v475
          %v563 = vunpack.c.h.b16 %v475
          %v564 = vunpack.c.l.b16 %v476
          %v565 = vunpack.c.h.b16 %v476
          %v566 = vunpack.c.l.b16 %v477
          %v567 = vunpack.c.h.b16 %v477
          %v568 = vunpack.c.l.b16 %v478
          %v569 = vunpack.c.h.b16 %v478
          %v570 = vunpack.c.l.b16 %v479
          %v571 = vunpack.c.h.b16 %v479
          %v572 = vunpack.c.l.b16 %v480
          %v573 = vunpack.c.h.b16 %v480
          %v574 = vunpack.c.l.b16 %v481
          %v575 = vunpack.c.h.b16 %v481
          %v576 = vunpack.c.l.b16 %v482
          %v577 = vunpack.c.h.b16 %v482
          %v578 = vunpack.c.l.b16 %v483
          %v579 = vunpack.c.h.b16 %v483
          %v580 = vunpack.c.l.b16 %v484
          %v581 = vunpack.c.h.b16 %v484
          %v582 = vunpack.c.l.b16 %v485
          %v583 = vunpack.c.h.b16 %v485
          %v584 = vunpack.c.l.b16 %v486
          %v585 = vunpack.c.h.b16 %v486
          %v586 = vunpack.c.l.b16 %v487
          %v587 = vunpack.c.h.b16 %v487
          %v588 = vunpack.c.l.b16 %v488
          %v589 = vunpack.c.h.b16 %v488
          %v590 = vunpack.c.l.b16 %v489
          %v591 = vunpack.c.h.b16 %v489
          %v592 = vunpack.c.l.b16 %v490
          %v593 = vunpack.c.h.b16 %v490
          %v594 = vpack.c.b16 %v532, %v530
          %v595 = vpack.c.b16 %v533, %v531
          %v596 = vpack.c.b16 %v536, %v534
          %v597 = vpack.c.b16 %v537, %v535
          %v598 = vpack.c.b16 %v540, %v538
          %v599 = vpack.c.b16 %v541, %v539
          %v600 = vpack.c.b16 %v544, %v542
          %v601 = vpack.c.b16 %v545, %v543
          %v602 = vpack.c.b16 %v548, %v546
          %v603 = vpack.c.b16 %v549, %v547
          %v604 = vpack.c.b16 %v552, %v550
          %v605 = vpack.c.b16 %v553, %v551
          %v606 = vpack.c.b16 %v556, %v554
          %v607 = vpack.c.b16 %v557, %v555
          %v608 = vpack.c.b16 %v560, %v558
          %v609 = vpack.c.b16 %v561, %v559
          %v610 = vpack.c.b16 %v564, %v562
          %v611 = vpack.c.b16 %v565, %v563
          %v612 = vpack.c.b16 %v568, %v566
          %v613 = vpack.c.b16 %v569, %v567
          %v614 = vpack.c.b16 %v572, %v570
          %v615 = vpack.c.b16 %v573, %v571
          %v616 = vpack.c.b16 %v576, %v574
          %v617 = vpack.c.b16 %v577, %v575
          %v618 = vpack.c.b16 %v580, %v578
          %v619 = vpack.c.b16 %v581, %v579
          %v620 = vpack.c.b16 %v584, %v582
          %v621 = vpack.c.b16 %v585, %v583
          %v622 = vpack.c.b16 %v588, %v586
          %v623 = vpack.c.b16 %v589, %v587
          %v624 = vpack.c.b16 %v592, %v590
          %v625 = vpack.c.b16 %v593, %v591
          %658 = vmatprep.subr.bf16.mxu0 %v609
          %659 = vmatpush1.bf16.msra.mxu0 %v608
          %660 = vmatprep.subr.bf16.mxu0 %v607
          %661 = vmatpush1.bf16.msra.mxu0 %v606
          %662 = vmatprep.subr.bf16.mxu0 %v605
          %663 = vmatpush1.bf16.msra.mxu0 %v604
          %664 = vmatprep.subr.bf16.mxu0 %v603
          %665 = vmatpush1.bf16.msra.mxu0 %v602
          %666 = vmatprep.subr.bf16.mxu0 %v601
          %667 = vmatpush1.bf16.msra.mxu0 %v600
          %668 = vmatprep.subr.bf16.mxu0 %v599
          %669 = vmatpush1.bf16.msra.mxu0 %v598
          %670 = vmatprep.subr.bf16.mxu0 %v597
          %671 = vmatpush1.bf16.msra.mxu0 %v596
          %672 = vmatprep.subr.bf16.mxu0 %v595
          %673 = vmatpush1.bf16.msra.mxu0 %v594
          %674 = vmatprep.subr.bf16.mxu0 %v625
          %675 = vmatpush2.bf16.msra.mxu0 %v624
          %676 = vmatprep.subr.bf16.mxu0 %v623
          %677 = vmatpush2.bf16.msra.mxu0 %v622
          %678 = vmatprep.subr.bf16.mxu0 %v621
          %679 = vmatpush2.bf16.msra.mxu0 %v620
          %680 = vmatprep.subr.bf16.mxu0 %v619
          %681 = vmatpush2.bf16.msra.mxu0 %v618
          %682 = vmatprep.subr.bf16.mxu0 %v617
          %683 = vmatpush2.bf16.msra.mxu0 %v616
          %684 = vmatprep.subr.bf16.mxu0 %v615
          %685 = vmatpush2.bf16.msra.mxu0 %v614
          %686 = vmatprep.subr.bf16.mxu0 %v613
          %687 = vmatpush2.bf16.msra.mxu0 %v612
          %688 = vmatprep.subr.bf16.mxu0 %v611
          %689 = vmatpush2.bf16.msra.mxu0 %v610
          %690 = vmatprep.mubr.bf16.mxu0 %v495
          %691 = vmatmul.mubr.bf16.gmra.mxu0 %v494
          %v692 = vpop.f32.mrf.mxu0
          %v693 = vadd.f32 0.0, %v692
          %v694 = vpop.f32.mrf.mxu0
          %v695 = vadd.f32 0.0, %v694
          %v696 = vpop.f32.mrf.mxu0
          %v697 = vpop.f32.mrf.mxu0
          %698 = vdwg.mxu0
          %699 = vst [vmem:[#allocation2] sm:$0xff] %v693
          %700 = vst [vmem:[#allocation2 + $0x8] sm:$0xff] %v695
        $region78: #{forward.20} parent=69 // pred_fallthru
          _
        %p701 = scmp.eq.s32.totalorder %s22, 1
        // Predicated region
        $region79: #{forward.20} parent=69 // pred_check
          %p702 = pneg %p701
        $region80: #{forward.20} parent=69 // pred_check_branch
          %704 = sbr.rel (%p702) target = $region82
        $region81: #{forward.20} parent=69 // pred_region
          %v705 = vld [vmem:[#allocation2] sm:$0xff]
          %v706 = vld [vmem:[#allocation2 + $0x8] sm:$0xff]
          %v707 = vld [vmem:[%s436] sm:$0xff]
          %v708 = vld [vmem:[%s386] sm:$0xff]
          %v709 = vld [vmem:[%s386 + $0x8] sm:$0xff]
          %v710 = vld [vmem:[%s386 + $0x10] sm:$0xff]
          %v711 = vld [vmem:[%s386 + $0x18] sm:$0xff]
          %v712 = vld [vmem:[%s386 + $0x20] sm:$0xff]
          %v713 = vld [vmem:[%s386 + $0x28] sm:$0xff]
          %v714 = vld [vmem:[%s386 + $0x30] sm:$0xff]
          %v715 = vld [vmem:[%s386 + $0x38] sm:$0xff]
          %v716 = vld [vmem:[%s386 + $0x40] sm:$0xff]
          %v717 = vld [vmem:[%s386 + $0x48] sm:$0xff]
          %v718 = vld [vmem:[%s386 + $0x50] sm:$0xff]
          %v719 = vld [vmem:[%s386 + $0x58] sm:$0xff]
          %v720 = vld [vmem:[%s386 + $0x60] sm:$0xff]
          %v721 = vld [vmem:[%s386 + $0x68] sm:$0xff]
          %v722 = vld [vmem:[%s386 + $0x70] sm:$0xff]
          %v723 = vld [vmem:[%s386 + $0x78] sm:$0xff]
          %v724 = vld [vmem:[%s386 + $0x80] sm:$0xff]
          %v725 = vld [vmem:[%s386 + $0x88] sm:$0xff]
          %v726 = vld [vmem:[%s386 + $0x90] sm:$0xff]
          %v727 = vld [vmem:[%s386 + $0x98] sm:$0xff]
          %v728 = vld [vmem:[%s386 + $0xa0] sm:$0xff]
          %v729 = vld [vmem:[%s386 + $0xa8] sm:$0xff]
          %v730 = vld [vmem:[%s386 + $0xb0] sm:$0xff]
          %v731 = vld [vmem:[%s386 + $0xb8] sm:$0xff]
          %v732 = vld [vmem:[%s386 + $0xc0] sm:$0xff]
          %v733 = vld [vmem:[%s386 + $0xc8] sm:$0xff]
          %v734 = vld [vmem:[%s386 + $0xd0] sm:$0xff]
          %v735 = vld [vmem:[%s386 + $0xd8] sm:$0xff]
          %v736 = vld [vmem:[%s386 + $0xe0] sm:$0xff]
          %v737 = vld [vmem:[%s386 + $0xe8] sm:$0xff]
          %v738 = vld [vmem:[%s386 + $0xf0] sm:$0xff]
          %v739 = vld [vmem:[%s386 + $0xf8] sm:$0xff]
          %v741 = vunpack.c.l.b16 %v707
          %v742 = vunpack.c.h.b16 %v707
          %v743 = vpack.c.b16 %v741, %v741
          %v744 = vpack.c.b16 %v742, %v742
          %v779 = vunpack.c.l.b16 %v708
          %v780 = vunpack.c.h.b16 %v708
          %v781 = vunpack.c.l.b16 %v709
          %v782 = vunpack.c.h.b16 %v709
          %v783 = vunpack.c.l.b16 %v710
          %v784 = vunpack.c.h.b16 %v710
          %v785 = vunpack.c.l.b16 %v711
          %v786 = vunpack.c.h.b16 %v711
          %v787 = vunpack.c.l.b16 %v712
          %v788 = vunpack.c.h.b16 %v712
          %v789 = vunpack.c.l.b16 %v713
          %v790 = vunpack.c.h.b16 %v713
          %v791 = vunpack.c.l.b16 %v714
          %v792 = vunpack.c.h.b16 %v714
          %v793 = vunpack.c.l.b16 %v715
          %v794 = vunpack.c.h.b16 %v715
          %v795 = vunpack.c.l.b16 %v716
          %v796 = vunpack.c.h.b16 %v716
          %v797 = vunpack.c.l.b16 %v717
          %v798 = vunpack.c.h.b16 %v717
          %v799 = vunpack.c.l.b16 %v718
          %v800 = vunpack.c.h.b16 %v718
          %v801 = vunpack.c.l.b16 %v719
          %v802 = vunpack.c.h.b16 %v719
          %v803 = vunpack.c.l.b16 %v720
          %v804 = vunpack.c.h.b16 %v720
          %v805 = vunpack.c.l.b16 %v721
          %v806 = vunpack.c.h.b16 %v721
          %v807 = vunpack.c.l.b16 %v722
          %v808 = vunpack.c.h.b16 %v722
          %v809 = vunpack.c.l.b16 %v723
          %v810 = vunpack.c.h.b16 %v723
          %v811 = vunpack.c.l.b16 %v724
          %v812 = vunpack.c.h.b16 %v724
          %v813 = vunpack.c.l.b16 %v725
          %v814 = vunpack.c.h.b16 %v725
          %v815 = vunpack.c.l.b16 %v726
          %v816 = vunpack.c.h.b16 %v726
          %v817 = vunpack.c.l.b16 %v727
          %v818 = vunpack.c.h.b16 %v727
          %v819 = vunpack.c.l.b16 %v728
          %v820 = vunpack.c.h.b16 %v728
          %v821 = vunpack.c.l.b16 %v729
          %v822 = vunpack.c.h.b16 %v729
          %v823 = vunpack.c.l.b16 %v730
          %v824 = vunpack.c.h.b16 %v730
          %v825 = vunpack.c.l.b16 %v731
          %v826 = vunpack.c.h.b16 %v731
          %v827 = vunpack.c.l.b16 %v732
          %v828 = vunpack.c.h.b16 %v732
          %v829 = vunpack.c.l.b16 %v733
          %v830 = vunpack.c.h.b16 %v733
          %v831 = vunpack.c.l.b16 %v734
          %v832 = vunpack.c.h.b16 %v734
          %v833 = vunpack.c.l.b16 %v735
          %v834 = vunpack.c.h.b16 %v735
          %v835 = vunpack.c.l.b16 %v736
          %v836 = vunpack.c.h.b16 %v736
          %v837 = vunpack.c.l.b16 %v737
          %v838 = vunpack.c.h.b16 %v737
          %v839 = vunpack.c.l.b16 %v738
          %v840 = vunpack.c.h.b16 %v738
          %v841 = vunpack.c.l.b16 %v739
          %v842 = vunpack.c.h.b16 %v739
          %v843 = vpack.c.b16 %v781, %v779
          %v844 = vpack.c.b16 %v782, %v780
          %v845 = vpack.c.b16 %v785, %v783
          %v846 = vpack.c.b16 %v786, %v784
          %v847 = vpack.c.b16 %v789, %v787
          %v848 = vpack.c.b16 %v790, %v788
          %v849 = vpack.c.b16 %v793, %v791
          %v850 = vpack.c.b16 %v794, %v792
          %v851 = vpack.c.b16 %v797, %v795
          %v852 = vpack.c.b16 %v798, %v796
          %v853 = vpack.c.b16 %v801, %v799
          %v854 = vpack.c.b16 %v802, %v800
          %v855 = vpack.c.b16 %v805, %v803
          %v856 = vpack.c.b16 %v806, %v804
          %v857 = vpack.c.b16 %v809, %v807
          %v858 = vpack.c.b16 %v810, %v808
          %v859 = vpack.c.b16 %v813, %v811
          %v860 = vpack.c.b16 %v814, %v812
          %v861 = vpack.c.b16 %v817, %v815
          %v862 = vpack.c.b16 %v818, %v816
          %v863 = vpack.c.b16 %v821, %v819
          %v864 = vpack.c.b16 %v822, %v820
          %v865 = vpack.c.b16 %v825, %v823
          %v866 = vpack.c.b16 %v826, %v824
          %v867 = vpack.c.b16 %v829, %v827
          %v868 = vpack.c.b16 %v830, %v828
          %v869 = vpack.c.b16 %v833, %v831
          %v870 = vpack.c.b16 %v834, %v832
          %v871 = vpack.c.b16 %v837, %v835
          %v872 = vpack.c.b16 %v838, %v836
          %v873 = vpack.c.b16 %v841, %v839
          %v874 = vpack.c.b16 %v842, %v840
          %907 = vmatprep.subr.bf16.mxu0 %v858
          %908 = vmatpush1.bf16.msra.mxu0 %v857
          %909 = vmatprep.subr.bf16.mxu0 %v856
          %910 = vmatpush1.bf16.msra.mxu0 %v855
          %911 = vmatprep.subr.bf16.mxu0 %v854
          %912 = vmatpush1.bf16.msra.mxu0 %v853
          %913 = vmatprep.subr.bf16.mxu0 %v852
          %914 = vmatpush1.bf16.msra.mxu0 %v851
          %915 = vmatprep.subr.bf16.mxu0 %v850
          %916 = vmatpush1.bf16.msra.mxu0 %v849
          %917 = vmatprep.subr.bf16.mxu0 %v848
          %918 = vmatpush1.bf16.msra.mxu0 %v847
          %919 = vmatprep.subr.bf16.mxu0 %v846
          %920 = vmatpush1.bf16.msra.mxu0 %v845
          %921 = vmatprep.subr.bf16.mxu0 %v844
          %922 = vmatpush1.bf16.msra.mxu0 %v843
          %923 = vmatprep.subr.bf16.mxu0 %v874
          %924 = vmatpush2.bf16.msra.mxu0 %v873
          %925 = vmatprep.subr.bf16.mxu0 %v872
          %926 = vmatpush2.bf16.msra.mxu0 %v871
          %927 = vmatprep.subr.bf16.mxu0 %v870
          %928 = vmatpush2.bf16.msra.mxu0 %v869
          %929 = vmatprep.subr.bf16.mxu0 %v868
          %930 = vmatpush2.bf16.msra.mxu0 %v867
          %931 = vmatprep.subr.bf16.mxu0 %v866
          %932 = vmatpush2.bf16.msra.mxu0 %v865
          %933 = vmatprep.subr.bf16.mxu0 %v864
          %934 = vmatpush2.bf16.msra.mxu0 %v863
          %935 = vmatprep.subr.bf16.mxu0 %v862
          %936 = vmatpush2.bf16.msra.mxu0 %v861
          %937 = vmatprep.subr.bf16.mxu0 %v860
          %938 = vmatpush2.bf16.msra.mxu0 %v859
          %939 = vmatprep.mubr.bf16.mxu0 %v744
          %940 = vmatmul.mubr.bf16.gmra.mxu0 %v743
          %v941 = vpop.f32.mrf.mxu0
          %v942 = vadd.f32 0.0, %v941
          %v943 = vpop.f32.mrf.mxu0
          %v944 = vadd.f32 0.0, %v943
          %v945 = vpop.f32.mrf.mxu0
          %v946 = vpop.f32.mrf.mxu0
          %947 = vdwg.mxu0
          %v948 = vadd.f32 %v705, %v942
          %v949 = vadd.f32 %v706, %v944
          %v950 = vld [vmem:[%s442] sm:$0x3]
          %v952 = vlaneseq
          %v953 = vshrl.u32 %v952, 7
          %v954 = vsub.s32 0, %v953
          %v955 = vrot.slane %v950, %v954
          %v956 = vlaneseq
          %v957 = vshrl.u32 %v956, 7
          %v958 = vsub.s32 1, %v957
          %v959 = vrot.slane %v950, %v958
          %v962 = vadd.f32 %v948, %v955
          %v963 = vadd.f32 %v949, %v959
          %v964 = vmax.f32 %v962, 0.0
          %v965 = vmax.f32 %v963, 0.0
          %966 = vst [vmem:[%s452] sm:$0xff] %v964
          %967 = vst [vmem:[%s452 + $0x8] sm:$0xff] %v965
        $region82: #{forward.20} parent=69 // pred_fallthru
          _
        %s968 = smul.u32 2, %s21
        %p969 = scmp.lt.s32.totalorder %s20, 0
        %s970 = scalar_select %p969, %s20, 0
        %p971 = scmp.lt.s32.totalorder %s968, 3
        %s972 = scalar_select %p971, %s968, 3
        %s973 = smul.addr %s970, 4
        %s974 = sadd.s32 %s972, %s973
        %s975 = smul.addr %s974, 8
        %s976 = scalar_lea.vmem %s4, %s975
        // Predicated region
        $region83: #{forward.20} parent=69 // pred_check
          %p977 = pneg %p160
        $region84: #{forward.20} parent=69 // pred_check_branch
          %979 = sbr.rel (%p977) target = $region86
        $region85: #{forward.20} parent=69 // pred_region
          %s980 = smul.u32 2, %s21
        $region86: #{forward.20} parent=69 // pred_fallthru
          _
      $region70: #{forward.20} parent=5 // pred_fallthru
        _
      %p981 = scmp.le.s32.totalorder 2, %s10
      // Predicated region
      $region87: #{forward.20} parent=5 // pred_check
        %p982 = pneg %p981
      $region88: #{forward.20} parent=5 // pred_check_branch
        %984 = sbr.rel (%p982) target = $region90
      $region89: #{forward.20} parent=5 // pred_region
        %s985 = ssub.s32 %s10, 2
        // Predicated region
        $region91: #{forward.20} parent=89 // pred_check
          %p986 = pneg %p166
        $region92: #{forward.20} parent=89 // pred_check_branch
          %988 = sbr.rel (%p986) target = $region94
        $region93: #{forward.20} parent=89 // pred_region
          %s989 = smul.u32 2, %s24
          %p990 = scmp.lt.s32.totalorder %s23, 0
          %s991 = scalar_select %p990, %s23, 0
          %p992 = scmp.lt.s32.totalorder %s989, 3
          %s993 = scalar_select %p992, %s989, 3
          %s994 = smul.addr %s991, 4
          %s995 = sadd.s32 %s993, %s994
          %s996 = smul.addr %s995, 8
          %s997 = scalar_lea.vmem %s4, %s996
        $region94: #{forward.20} parent=89 // pred_fallthru
          _
      $region90: #{forward.20} parent=5 // pred_fallthru
        _
    $region6: #{forward.20} parent=1 // loop_footer
      %s14 = sadd.s32 1, %s10
    $region7: #{forward.20} parent=1 // loop_footer_branch
      %9 = sbr.rel target = $region3
    $region8: #{forward.20} parent=1 // loop_exit
      _

// kernel: forward.21
$region0: #{forward.21}
  #allocation0 [shape = 'u32[]', space=smem, size = 0x4, offset = 0x4, fixed_abs, tag = 'smem constant byte address 0x4 - core index']
  #allocation1 [shape = 'u32[144,128]{1,0:T(1,128)}', space=vmem, size = 0x12000, scoped, tag = 'internal scratch']
  #allocation2 [shape = 'f32[8,256]{1,0:T(8,128)}', space=vmem, size = 0x2000, scoped, tag = 'scratch operand']
  %s0 = inlined_call_operand.vmem [shape: bf16[8,4608], index: 0, kind: input, shape index: {}]
  %s1 = inlined_call_operand.vmem [shape: bf16[4608,256], index: 1, kind: input, shape index: {}]
  %s2 = inlined_call_operand.vmem [shape: f32[1,256], index: 2, kind: input, shape index: {}]
  %s3 = inlined_call_operand.vmem [shape: f32[8,256], index: 3, kind: output, shape index: {}]
  %s4 = sld [smem:[#allocation0]]
  $region53: #{forward.21} parent=0
    _
  %s6 = ssub.s32 1, %s4
  %s7 = scalar_select 0, %s6, %s4
  loop: start=0, step=1, limit=20
  $region2: #{forward.21} parent=0 // loop_pre_header
    _
  $region3: #{forward.21} parent=0 // loop_header
    %s9 = sphi 0, %s13
    %p10 = scmp.ge.s32.totalorder %s9, 20
    %s16 = sphi 0, %s35
    %s17 = sphi 0, %s31
    %s18 = sphi 0, %s27
    %s19 = sphi 0, %s16
    %s20 = sphi 0, %s17
    %s21 = sphi 0, %s18
    %s22 = sphi 0, %s19
    %s23 = sphi 0, %s20
    %s24 = sphi 0, %s21
    %s40 = sphi 0, %s42
    %s43 = sphi 0, %s40
    %s44 = sphi 0, %s43
    %s60 = sphi 0, %s44
    %s68 = sphi 0, %s70
    %s71 = sphi 0, %s68
    %s72 = sphi 0, %s71
    %s88 = sphi 0, %s72
    %s94 = sphi 0, %s96
    %s97 = sphi 0, %s94
    %s98 = sphi 0, %s97
    %s114 = sphi 0, %s98
    %s122 = sphi 0, %s124
    %s125 = sphi 0, %s122
    %s126 = sphi 0, %s125
    %s142 = sphi 0, %s126
  $region4: #{forward.21} parent=0 // loop_header_branch
    %12 = sbr.rel (%p10) target = $region8
  $region5: #{forward.21} parent=0 // loop_body
    %s14 = ssub.s32 %s9, 1
    %s15 = ssub.s32 %s9, 2
    %s25 = sadd.s32 1, %s18
    %p26 = scmp.ge.s32.totalorder %s25, 18
    %s27 = scalar_select %p26, 0, %s25
    %s28 = sadd.s32 1, %s17
    %s29 = scalar_select %p26, %s28, %s17
    %p30 = scmp.ge.s32.totalorder %s29, 1
    %s31 = scalar_select %p30, 0, %s29
    %s32 = sadd.s32 1, %s16
    %s33 = scalar_select %p30, %s32, %s16
    %p34 = scmp.ge.s32.totalorder %s33, 1
    %s35 = scalar_select %p34, 0, %s33
    %s36 = ssub.s32 %s16, %s35
    %s37 = ssub.s32 %s18, %s27
    %s38 = sor.u32 %s36, %s37
    %p39 = scmp.eq.s32.totalorder %s38, 0
    %s41 = sadd.s32 %s40, 1
    %s42 = scalar_select %p39, %s40, %s41
    %p45 = pneg %p39
    %p46 = scmp.eq.s32.totalorder %s9, 17
    %p47 = por %p45, %p46
    %p48 = scmp.ne.s32.totalorder %s40, %s43
    %p49 = scmp.eq.s32.totalorder %s9, 0
    %p50 = por %p48, %p49
    %p51 = scmp.ne.s32.totalorder %s40, %s43
    %p52 = scmp.eq.s32.totalorder %s14, 17
    %p53 = por %p51, %p52
    %p54 = scmp.ne.s32.totalorder %s43, %s44
    %p55 = scmp.eq.s32.totalorder %s14, 0
    %p56 = por %p54, %p55
    %p57 = scmp.ne.s32.totalorder %s43, %s44
    %p58 = scmp.eq.s32.totalorder %s15, 17
    %p59 = por %p57, %p58
    %p61 = scmp.ne.s32.totalorder %s44, %s60
    %p62 = scmp.eq.s32.totalorder %s15, 0
    %p63 = por %p61, %p62
    %s64 = ssub.s32 %s18, %s27
    %s65 = ssub.s32 %s17, %s31
    %s66 = sor.u32 %s64, %s65
    %p67 = scmp.eq.s32.totalorder %s66, 0
    %s69 = sadd.s32 %s68, 1
    %s70 = scalar_select %p67, %s68, %s69
    %p73 = pneg %p67
    %p74 = scmp.eq.s32.totalorder %s9, 17
    %p75 = por %p73, %p74
    %p76 = scmp.ne.s32.totalorder %s68, %s71
    %p77 = scmp.eq.s32.totalorder %s9, 0
    %p78 = por %p76, %p77
    %p79 = scmp.ne.s32.totalorder %s68, %s71
    %p80 = scmp.eq.s32.totalorder %s14, 17
    %p81 = por %p79, %p80
    %p82 = scmp.ne.s32.totalorder %s71, %s72
    %p83 = scmp.eq.s32.totalorder %s14, 0
    %p84 = por %p82, %p83
    %p85 = scmp.ne.s32.totalorder %s71, %s72
    %p86 = scmp.eq.s32.totalorder %s15, 17
    %p87 = por %p85, %p86
    %p89 = scmp.ne.s32.totalorder %s72, %s88
    %p90 = scmp.eq.s32.totalorder %s15, 0
    %p91 = por %p89, %p90
    %s92 = ssub.s32 %s17, %s31
    %p93 = scmp.eq.s32.totalorder %s92, 0
    %s95 = sadd.s32 %s94, 1
    %s96 = scalar_select %p93, %s94, %s95
    %p99 = pneg %p93
    %p100 = scmp.eq.s32.totalorder %s9, 17
    %p101 = por %p99, %p100
    %p102 = scmp.ne.s32.totalorder %s94, %s97
    %p103 = scmp.eq.s32.totalorder %s9, 0
    %p104 = por %p102, %p103
    %p105 = scmp.ne.s32.totalorder %s94, %s97
    %p106 = scmp.eq.s32.totalorder %s14, 17
    %p107 = por %p105, %p106
    %p108 = scmp.ne.s32.totalorder %s97, %s98
    %p109 = scmp.eq.s32.totalorder %s14, 0
    %p110 = por %p108, %p109
    %p111 = scmp.ne.s32.totalorder %s97, %s98
    %p112 = scmp.eq.s32.totalorder %s15, 17
    %p113 = por %p111, %p112
    %p115 = scmp.ne.s32.totalorder %s98, %s114
    %p116 = scmp.eq.s32.totalorder %s15, 0
    %p117 = por %p115, %p116
    %s118 = ssub.s32 %s16, %s35
    %s119 = ssub.s32 %s17, %s31
    %s120 = sor.u32 %s118, %s119
    %p121 = scmp.eq.s32.totalorder %s120, 0
    %s123 = sadd.s32 %s122, 1
    %s124 = scalar_select %p121, %s122, %s123
    %p127 = pneg %p121
    %p128 = scmp.eq.s32.totalorder %s9, 17
    %p129 = por %p127, %p128
    %p130 = scmp.ne.s32.totalorder %s122, %s125
    %p131 = scmp.eq.s32.totalorder %s9, 0
    %p132 = por %p130, %p131
    %p133 = scmp.ne.s32.totalorder %s122, %s125
    %p134 = scmp.eq.s32.totalorder %s14, 17
    %p135 = por %p133, %p134
    %p136 = scmp.ne.s32.totalorder %s125, %s126
    %p137 = scmp.eq.s32.totalorder %s14, 0
    %p138 = por %p136, %p137
    %p139 = scmp.ne.s32.totalorder %s125, %s126
    %p140 = scmp.eq.s32.totalorder %s15, 17
    %p141 = por %p139, %p140
    %p143 = scmp.ne.s32.totalorder %s126, %s142
    %p144 = scmp.eq.s32.totalorder %s15, 0
    %p145 = por %p143, %p144
    %p146 = scmp.le.s32.totalorder 1, %s9
    %p147 = scmp.lt.s32.totalorder %s9, 19
    %p148 = pnand %p146, %p147
    %p149 = pneg %p148
    // Predicated region
    $region9: #{forward.21} parent=5 // pred_check
      _
    $region10: #{forward.21} parent=5 // pred_check_branch
      %151 = sbr.rel (%p148) target = $region12
    $region11: #{forward.21} parent=5 // pred_region
      %s152 = ssub.s32 %s9, 1
      // Predicated region
      $region13: #{forward.21} parent=11 // pred_check
        %p153 = pneg %p110
      $region14: #{forward.21} parent=11 // pred_check_branch
        %155 = sbr.rel (%p153) target = $region16
      $region15: #{forward.21} parent=11 // pred_region
        %s156 = smul.u32 2, %s20
        %p157 = scmp.lt.s32.totalorder %s156, 1
        %s158 = scalar_select %p157, %s156, 1
        %s159 = scalar_lea.vmem %s2, %s158
        %s160 = smul.u32 2, %s20
      $region16: #{forward.21} parent=11 // pred_fallthru
        _
    $region12: #{forward.21} parent=5 // pred_fallthru
      _
    %p161 = scmp.lt.s32.totalorder %s9, 18
    // Predicated region
    $region17: #{forward.21} parent=5 // pred_check
      %p162 = pneg %p161
    $region18: #{forward.21} parent=5 // pred_check_branch
      %164 = sbr.rel (%p162) target = $region20
    $region19: #{forward.21} parent=5 // pred_region
      // Predicated region
      $region21: #{forward.21} parent=19 // pred_check
        %p165 = pneg %p50
      $region22: #{forward.21} parent=19 // pred_check_branch
        %167 = sbr.rel (%p165) target = $region24
      $region23: #{forward.21} parent=19 // pred_region
        %s168 = smul.u32 2, %s18
        %p169 = scmp.lt.s32.totalorder %s16, 0
        %s170 = scalar_select %p169, %s16, 0
        %p171 = scmp.lt.s32.totalorder %s168, 35
        %s172 = scalar_select %p171, %s168, 35
        %s173 = smul.addr %s170, 36
        %s174 = sadd.s32 %s172, %s173
        %s175 = smul.addr %s174, 4
        %s176 = scalar_lea.vmem %s0, %s175
        %s177 = smul.u32 2, %s18
      $region24: #{forward.21} parent=19 // pred_fallthru
        _
      // Predicated region
      $region25: #{forward.21} parent=19 // pred_check
        %p178 = pneg %p78
      $region26: #{forward.21} parent=19 // pred_check_branch
        %180 = sbr.rel (%p178) target = $region28
      $region27: #{forward.21} parent=19 // pred_region
        %s181 = smul.u32 32, %s18
        %s182 = smul.u32 2, %s17
        %p183 = scmp.lt.s32.totalorder %s181, 575
        %s184 = scalar_select %p183, %s181, 575
        %p185 = scmp.lt.s32.totalorder %s182, 1
        %s186 = scalar_select %p185, %s182, 1
        %s187 = smul.addr %s184, 2
        %s188 = sadd.s32 %s186, %s187
        %s189 = smul.addr %s188, 4
        %s190 = scalar_lea.vmem %s1, %s189
        %s191 = smul.u32 32, %s18
        %s192 = smul.u32 2, %s17
      $region28: #{forward.21} parent=19 // pred_fallthru
        _
    $region20: #{forward.21} parent=5 // pred_fallthru
      _
    %p193 = scmp.le.s32.totalorder 1, %s9
    %p194 = scmp.lt.s32.totalorder %s9, 19
    %p195 = pnand %p193, %p194
    %p196 = pneg %p195
    // Predicated region
    $region29: #{forward.21} parent=5 // pred_check
      _
    $region30: #{forward.21} parent=5 // pred_check_branch
      %198 = sbr.rel (%p195) target = $region32
    $region31: #{forward.21} parent=5 // pred_region
      %s199 = ssub.s32 %s9, 1
      %s200 = smul.u32 2, %s21
      %p201 = scmp.lt.s32.totalorder %s19, 0
      %s202 = scalar_select %p201, %s19, 0
      %p203 = scmp.lt.s32.totalorder %s200, 35
      %s204 = scalar_select %p203, %s200, 35
      %s205 = smul.addr %s202, 36
      %s206 = sadd.s32 %s204, %s205
      %s207 = smul.addr %s206, 4
      %s208 = scalar_lea.vmem %s0, %s207
      %p209 = pneg %p56
      %p210 = pneg %p53
      %s211 = smul.u32 32, %s21
      %s212 = smul.u32 2, %s20
      %p213 = scmp.lt.s32.totalorder %s211, 575
      %s214 = scalar_select %p213, %s211, 575
      %p215 = scmp.lt.s32.totalorder %s212, 1
      %s216 = scalar_select %p215, %s212, 1
      %s217 = smul.addr %s214, 2
      %s218 = sadd.s32 %s216, %s217
      %s219 = smul.addr %s218, 4
      %s220 = scalar_lea.vmem %s1, %s219
      %p221 = pneg %p84
      %p222 = pneg %p81
      %s223 = smul.u32 2, %s20
      %p224 = scmp.lt.s32.totalorder %s223, 1
      %s225 = scalar_select %p224, %s223, 1
      %s226 = scalar_lea.vmem %s2, %s225
      %p227 = pneg %p110
      %p228 = pneg %p107
      %p229 = pneg %p138
      %p230 = pneg %p135
      %s231 = smul.u32 2, %s20
      %p232 = scmp.lt.s32.totalorder %s19, 0
      %s233 = scalar_select %p232, %s19, 0
      %p234 = scmp.lt.s32.totalorder %s231, 1
      %s235 = scalar_select %p234, %s231, 1
      %s236 = smul.addr %s233, 2
      %s237 = sadd.s32 %s235, %s236
      %s238 = smul.addr %s237, 8
      %s239 = scalar_lea.vmem %s3, %s238
      %s240 = smul.u32 2, %s21
      %p241 = scmp.lt.s32.totalorder %s19, 0
      %s242 = scalar_select %p241, %s19, 0
      %p243 = scmp.lt.s32.totalorder %s240, 35
      %s244 = scalar_select %p243, %s240, 35
      %s245 = smul.addr %s242, 36
      %s246 = sadd.s32 %s244, %s245
      %s247 = smul.addr %s246, 4
      %s248 = scalar_lea.vmem %s0, %s247
      %s249 = smul.u32 2, %s21
      %s250 = smul.u32 32, %s21
      %s251 = smul.u32 2, %s20
      %p252 = scmp.lt.s32.totalorder %s250, 575
      %s253 = scalar_select %p252, %s250, 575
      %p254 = scmp.lt.s32.totalorder %s251, 1
      %s255 = scalar_select %p254, %s251, 1
      %s256 = smul.addr %s253, 2
      %s257 = sadd.s32 %s255, %s256
      %s258 = smul.addr %s257, 4
      %s259 = scalar_lea.vmem %s1, %s258
      %s260 = smul.u32 32, %s21
      %s261 = smul.u32 2, %s20
      %s262 = smul.u32 2, %s20
      %p263 = scmp.lt.s32.totalorder %s262, 1
      %s264 = scalar_select %p263, %s262, 1
      %s265 = scalar_lea.vmem %s2, %s264
      %s266 = smul.u32 2, %s20
      %s267 = smul.u32 2, %s20
      %p268 = scmp.lt.s32.totalorder %s19, 0
      %s269 = scalar_select %p268, %s19, 0
      %p270 = scmp.lt.s32.totalorder %s267, 1
      %s271 = scalar_select %p270, %s267, 1
      %s272 = smul.addr %s269, 2
      %s273 = sadd.s32 %s271, %s272
      %s274 = smul.addr %s273, 8
      %s275 = scalar_lea.vmem %s3, %s274
      %s276 = smul.u32 2, %s20
      %p277 = scmp.eq.s32.totalorder %s21, 0
      // Predicated region
      $region33: #{forward.21} parent=31 // pred_check
        %p278 = pneg %p277
      $region34: #{forward.21} parent=31 // pred_check_branch
        %280 = sbr.rel (%p278) target = $region36
      $region35: #{forward.21} parent=31 // pred_region
        %281 = vst [vmem:[#allocation2] sm:$0xff] 0.0
        %282 = vst [vmem:[#allocation2 + $0x8] sm:$0xff] 0.0
      $region36: #{forward.21} parent=31 // pred_fallthru
        _
      %v283 = vld [vmem:[#allocation2] sm:$0xff]
      %v284 = vld [vmem:[#allocation2 + $0x8] sm:$0xff]
      %v285 = vld [vmem:[%s248] sm:$0xff]
      %v286 = vld [vmem:[%s259] sm:$0xff]
      %v287 = vld [vmem:[%s259 + $0x8] sm:$0xff]
      %v288 = vld [vmem:[%s259 + $0x10] sm:$0xff]
      %v289 = vld [vmem:[%s259 + $0x18] sm:$0xff]
      %v290 = vld [vmem:[%s259 + $0x20] sm:$0xff]
      %v291 = vld [vmem:[%s259 + $0x28] sm:$0xff]
      %v292 = vld [vmem:[%s259 + $0x30] sm:$0xff]
      %v293 = vld [vmem:[%s259 + $0x38] sm:$0xff]
      %v294 = vld [vmem:[%s259 + $0x40] sm:$0xff]
      %v295 = vld [vmem:[%s259 + $0x48] sm:$0xff]
      %v296 = vld [vmem:[%s259 + $0x50] sm:$0xff]
      %v297 = vld [vmem:[%s259 + $0x58] sm:$0xff]
      %v298 = vld [vmem:[%s259 + $0x60] sm:$0xff]
      %v299 = vld [vmem:[%s259 + $0x68] sm:$0xff]
      %v300 = vld [vmem:[%s259 + $0x70] sm:$0xff]
      %v301 = vld [vmem:[%s259 + $0x78] sm:$0xff]
      %v302 = vld [vmem:[%s259 + $0x80] sm:$0xff]
      %v303 = vld [vmem:[%s259 + $0x88] sm:$0xff]
      %v304 = vld [vmem:[%s259 + $0x90] sm:$0xff]
      %v305 = vld [vmem:[%s259 + $0x98] sm:$0xff]
      %v306 = vld [vmem:[%s259 + $0xa0] sm:$0xff]
      %v307 = vld [vmem:[%s259 + $0xa8] sm:$0xff]
      %v308 = vld [vmem:[%s259 + $0xb0] sm:$0xff]
      %v309 = vld [vmem:[%s259 + $0xb8] sm:$0xff]
      %v310 = vld [vmem:[%s259 + $0xc0] sm:$0xff]
      %v311 = vld [vmem:[%s259 + $0xc8] sm:$0xff]
      %v312 = vld [vmem:[%s259 + $0xd0] sm:$0xff]
      %v313 = vld [vmem:[%s259 + $0xd8] sm:$0xff]
      %v314 = vld [vmem:[%s259 + $0xe0] sm:$0xff]
      %v315 = vld [vmem:[%s259 + $0xe8] sm:$0xff]
      %v316 = vld [vmem:[%s259 + $0xf0] sm:$0xff]
      %v317 = vld [vmem:[%s259 + $0xf8] sm:$0xff]
      %v319 = vunpack.c.l.b16 %v285
      %v320 = vunpack.c.h.b16 %v285
      %v321 = vpack.c.b16 %v319, %v319
      %v322 = vpack.c.b16 %v320, %v320
      %v357 = vunpack.c.l.b16 %v286
      %v358 = vunpack.c.h.b16 %v286
      %v359 = vunpack.c.l.b16 %v287
      %v360 = vunpack.c.h.b16 %v287
      %v361 = vunpack.c.l.b16 %v288
      %v362 = vunpack.c.h.b16 %v288
      %v363 = vunpack.c.l.b16 %v289
      %v364 = vunpack.c.h.b16 %v289
      %v365 = vunpack.c.l.b16 %v290
      %v366 = vunpack.c.h.b16 %v290
      %v367 = vunpack.c.l.b16 %v291
      %v368 = vunpack.c.h.b16 %v291
      %v369 = vunpack.c.l.b16 %v292
      %v370 = vunpack.c.h.b16 %v292
      %v371 = vunpack.c.l.b16 %v293
      %v372 = vunpack.c.h.b16 %v293
      %v373 = vunpack.c.l.b16 %v294
      %v374 = vunpack.c.h.b16 %v294
      %v375 = vunpack.c.l.b16 %v295
      %v376 = vunpack.c.h.b16 %v295
      %v377 = vunpack.c.l.b16 %v296
      %v378 = vunpack.c.h.b16 %v296
      %v379 = vunpack.c.l.b16 %v297
      %v380 = vunpack.c.h.b16 %v297
      %v381 = vunpack.c.l.b16 %v298
      %v382 = vunpack.c.h.b16 %v298
      %v383 = vunpack.c.l.b16 %v299
      %v384 = vunpack.c.h.b16 %v299
      %v385 = vunpack.c.l.b16 %v300
      %v386 = vunpack.c.h.b16 %v300
      %v387 = vunpack.c.l.b16 %v301
      %v388 = vunpack.c.h.b16 %v301
      %v389 = vunpack.c.l.b16 %v302
      %v390 = vunpack.c.h.b16 %v302
      %v391 = vunpack.c.l.b16 %v303
      %v392 = vunpack.c.h.b16 %v303
      %v393 = vunpack.c.l.b16 %v304
      %v394 = vunpack.c.h.b16 %v304
      %v395 = vunpack.c.l.b16 %v305
      %v396 = vunpack.c.h.b16 %v305
      %v397 = vunpack.c.l.b16 %v306
      %v398 = vunpack.c.h.b16 %v306
      %v399 = vunpack.c.l.b16 %v307
      %v400 = vunpack.c.h.b16 %v307
      %v401 = vunpack.c.l.b16 %v308
      %v402 = vunpack.c.h.b16 %v308
      %v403 = vunpack.c.l.b16 %v309
      %v404 = vunpack.c.h.b16 %v309
      %v405 = vunpack.c.l.b16 %v310
      %v406 = vunpack.c.h.b16 %v310
      %v407 = vunpack.c.l.b16 %v311
      %v408 = vunpack.c.h.b16 %v311
      %v409 = vunpack.c.l.b16 %v312
      %v410 = vunpack.c.h.b16 %v312
      %v411 = vunpack.c.l.b16 %v313
      %v412 = vunpack.c.h.b16 %v313
      %v413 = vunpack.c.l.b16 %v314
      %v414 = vunpack.c.h.b16 %v314
      %v415 = vunpack.c.l.b16 %v315
      %v416 = vunpack.c.h.b16 %v315
      %v417 = vunpack.c.l.b16 %v316
      %v418 = vunpack.c.h.b16 %v316
      %v419 = vunpack.c.l.b16 %v317
      %v420 = vunpack.c.h.b16 %v317
      %v421 = vpack.c.b16 %v359, %v357
      %v422 = vpack.c.b16 %v360, %v358
      %v423 = vpack.c.b16 %v363, %v361
      %v424 = vpack.c.b16 %v364, %v362
      %v425 = vpack.c.b16 %v367, %v365
      %v426 = vpack.c.b16 %v368, %v366
      %v427 = vpack.c.b16 %v371, %v369
      %v428 = vpack.c.b16 %v372, %v370
      %v429 = vpack.c.b16 %v375, %v373
      %v430 = vpack.c.b16 %v376, %v374
      %v431 = vpack.c.b16 %v379, %v377
      %v432 = vpack.c.b16 %v380, %v378
      %v433 = vpack.c.b16 %v383, %v381
      %v434 = vpack.c.b16 %v384, %v382
      %v435 = vpack.c.b16 %v387, %v385
      %v436 = vpack.c.b16 %v388, %v386
      %v437 = vpack.c.b16 %v391, %v389
      %v438 = vpack.c.b16 %v392, %v390
      %v439 = vpack.c.b16 %v395, %v393
      %v440 = vpack.c.b16 %v396, %v394
      %v441 = vpack.c.b16 %v399, %v397
      %v442 = vpack.c.b16 %v400, %v398
      %v443 = vpack.c.b16 %v403, %v401
      %v444 = vpack.c.b16 %v404, %v402
      %v445 = vpack.c.b16 %v407, %v405
      %v446 = vpack.c.b16 %v408, %v406
      %v447 = vpack.c.b16 %v411, %v409
      %v448 = vpack.c.b16 %v412, %v410
      %v449 = vpack.c.b16 %v415, %v413
      %v450 = vpack.c.b16 %v416, %v414
      %v451 = vpack.c.b16 %v419, %v417
      %v452 = vpack.c.b16 %v420, %v418
      %485 = vmatprep.subr.bf16.mxu0 %v436
      %486 = vmatpush1.bf16.msra.mxu0 %v435
      %487 = vmatprep.subr.bf16.mxu0 %v434
      %488 = vmatpush1.bf16.msra.mxu0 %v433
      %489 = vmatprep.subr.bf16.mxu0 %v432
      %490 = vmatpush1.bf16.msra.mxu0 %v431
      %491 = vmatprep.subr.bf16.mxu0 %v430
      %492 = vmatpush1.bf16.msra.mxu0 %v429
      %493 = vmatprep.subr.bf16.mxu0 %v428
      %494 = vmatpush1.bf16.msra.mxu0 %v427
      %495 = vmatprep.subr.bf16.mxu0 %v426
      %496 = vmatpush1.bf16.msra.mxu0 %v425
      %497 = vmatprep.subr.bf16.mxu0 %v424
      %498 = vmatpush1.bf16.msra.mxu0 %v423
      %499 = vmatprep.subr.bf16.mxu0 %v422
      %500 = vmatpush1.bf16.msra.mxu0 %v421
      %501 = vmatprep.subr.bf16.mxu0 %v452
      %502 = vmatpush2.bf16.msra.mxu0 %v451
      %503 = vmatprep.subr.bf16.mxu0 %v450
      %504 = vmatpush2.bf16.msra.mxu0 %v449
      %505 = vmatprep.subr.bf16.mxu0 %v448
      %506 = vmatpush2.bf16.msra.mxu0 %v447
      %507 = vmatprep.subr.bf16.mxu0 %v446
      %508 = vmatpush2.bf16.msra.mxu0 %v445
      %509 = vmatprep.subr.bf16.mxu0 %v444
      %510 = vmatpush2.bf16.msra.mxu0 %v443
      %511 = vmatprep.subr.bf16.mxu0 %v442
      %512 = vmatpush2.bf16.msra.mxu0 %v441
      %513 = vmatprep.subr.bf16.mxu0 %v440
      %514 = vmatpush2.bf16.msra.mxu0 %v439
      %515 = vmatprep.subr.bf16.mxu0 %v438
      %516 = vmatpush2.bf16.msra.mxu0 %v437
      %517 = vmatprep.mubr.bf16.mxu0 %v322
      %518 = vmatmul.mubr.bf16.gmra.mxu0 %v321
      %v519 = vpop.f32.mrf.mxu0
      %v520 = vadd.f32 0.0, %v519
      %v521 = vpop.f32.mrf.mxu0
      %v522 = vadd.f32 0.0, %v521
      %v523 = vpop.f32.mrf.mxu0
      %v524 = vpop.f32.mrf.mxu0
      %525 = vdwg.mxu0
      %v526 = vadd.f32 %v283, %v520
      %v527 = vadd.f32 %v284, %v522
      %528 = vst [vmem:[#allocation2] sm:$0xff] %v526
      %529 = vst [vmem:[#allocation2 + $0x8] sm:$0xff] %v527
      %p530 = scmp.eq.s32.totalorder %s21, 17
      // Predicated region
      $region37: #{forward.21} parent=31 // pred_check
        %p531 = pneg %p530
      $region38: #{forward.21} parent=31 // pred_check_branch
        %533 = sbr.rel (%p531) target = $region40
      $region39: #{forward.21} parent=31 // pred_region
        %v534 = vld [vmem:[#allocation2] sm:$0xff]
        %v535 = vld [vmem:[#allocation2 + $0x8] sm:$0xff]
        %v536 = vld [vmem:[%s265] sm:$0x3]
        %v538 = vlaneseq
        %v539 = vshrl.u32 %v538, 7
        %v540 = vsub.s32 0, %v539
        %v541 = vrot.slane %v536, %v540
        %v542 = vlaneseq
        %v543 = vshrl.u32 %v542, 7
        %v544 = vsub.s32 1, %v543
        %v545 = vrot.slane %v536, %v544
        %v548 = vadd.f32 %v534, %v541
        %v549 = vadd.f32 %v535, %v545
        %v550 = vmax.f32 %v548, 0.0
        %v551 = vmax.f32 %v549, 0.0
        %552 = vst [vmem:[%s275] sm:$0xff] %v550
        %553 = vst [vmem:[%s275 + $0x8] sm:$0xff] %v551
      $region40: #{forward.21} parent=31 // pred_fallthru
        _
      %s554 = smul.u32 2, %s20
      %p555 = scmp.lt.s32.totalorder %s19, 0
      %s556 = scalar_select %p555, %s19, 0
      %p557 = scmp.lt.s32.totalorder %s554, 1
      %s558 = scalar_select %p557, %s554, 1
      %s559 = smul.addr %s556, 2
      %s560 = sadd.s32 %s558, %s559
      %s561 = smul.addr %s560, 8
      %s562 = scalar_lea.vmem %s3, %s561
      // Predicated region
      $region41: #{forward.21} parent=31 // pred_check
        %p563 = pneg %p135
      $region42: #{forward.21} parent=31 // pred_check_branch
        %565 = sbr.rel (%p563) target = $region44
      $region43: #{forward.21} parent=31 // pred_region
        %s566 = smul.u32 2, %s20
      $region44: #{forward.21} parent=31 // pred_fallthru
        _
      // Predicated region
      $region45: #{forward.21} parent=31 // pred_check
        %p567 = pneg %p135
      $region46: #{forward.21} parent=31 // pred_check_branch
        %569 = sbr.rel (%p567) target = $region48
      $region47: #{forward.21} parent=31 // pred_region
        %s570 = smul.u32 2, %s20
        %p571 = scmp.lt.s32.totalorder %s19, 0
        %s572 = scalar_select %p571, %s19, 0
        %p573 = scmp.lt.s32.totalorder %s570, 1
        %s574 = scalar_select %p573, %s570, 1
        %s575 = smul.addr %s572, 2
        %s576 = sadd.s32 %s574, %s575
        %s577 = smul.addr %s576, 8
        %s578 = scalar_lea.vmem %s3, %s577
      $region48: #{forward.21} parent=31 // pred_fallthru
        _
    $region32: #{forward.21} parent=5 // pred_fallthru
      _
    %p579 = scmp.le.s32.totalorder 2, %s9
    // Predicated region
    $region49: #{forward.21} parent=5 // pred_check
      %p580 = pneg %p579
    $region50: #{forward.21} parent=5 // pred_check_branch
      %582 = sbr.rel (%p580) target = $region52
    $region51: #{forward.21} parent=5 // pred_region
      %s583 = ssub.s32 %s9, 2
    $region52: #{forward.21} parent=5 // pred_fallthru
      _
  $region6: #{forward.21} parent=0 // loop_footer
    %s13 = sadd.s32 1, %s9
  $region7: #{forward.21} parent=0 // loop_footer_branch
    %8 = sbr.rel target = $region3
  $region8: #{forward.21} parent=0 // loop_exit
    _

// kernel: forward.22
$region0: #{forward.22}
  #allocation0 [shape = 'u32[]', space=smem, size = 0x4, offset = 0x4, fixed_abs, tag = 'smem constant byte address 0x4 - core index']
  #allocation1 [shape = 'u32[144,128]{1,0:T(1,128)}', space=vmem, size = 0x12000, scoped, tag = 'internal scratch']
  #allocation2 [shape = 'f32[8,128]{1,0:T(8,128)}', space=vmem, size = 0x1000, scoped, tag = 'scratch operand']
  %s0 = inlined_call_operand.vmem [shape: bf16[8,256], index: 0, kind: input, shape index: {}]
  %s1 = inlined_call_operand.vmem [shape: bf16[256,128], index: 1, kind: input, shape index: {}]
  %s2 = inlined_call_operand.vmem [shape: f32[1,128], index: 2, kind: input, shape index: {}]
  %s3 = inlined_call_operand.vmem [shape: f32[8,128], index: 3, kind: output, shape index: {}]
  %s4 = sld [smem:[#allocation0]]
  $region30: #{forward.22} parent=0
    _
  %s6 = ssub.s32 1, %s4
  %s7 = scalar_select 0, %s6, %s4
  // Predicated region
  $region2: #{forward.22} parent=0 // pred_check
    _
  $region3: #{forward.22} parent=0 // pred_check_branch
    %9 = sbr.rel (0) target = $region5
  $region4: #{forward.22} parent=0 // pred_region
    _
  $region5: #{forward.22} parent=0 // pred_fallthru
    _
  // Predicated region
  $region6: #{forward.22} parent=0 // pred_check
    _
  $region7: #{forward.22} parent=0 // pred_check_branch
    %11 = sbr.rel (0) target = $region9
  $region8: #{forward.22} parent=0 // pred_region
    _
  $region9: #{forward.22} parent=0 // pred_fallthru
    _
  // Predicated region
  $region10: #{forward.22} parent=0 // pred_check
    _
  $region11: #{forward.22} parent=0 // pred_check_branch
    %13 = sbr.rel (0) target = $region13
  $region12: #{forward.22} parent=0 // pred_region
    _
  $region13: #{forward.22} parent=0 // pred_fallthru
    _
  %p15 = scmp.eq.s32.totalorder 0, 0
  // Predicated region
  $region14: #{forward.22} parent=0 // pred_check
    %p16 = pneg %p15
  $region15: #{forward.22} parent=0 // pred_check_branch
    %18 = sbr.rel (%p16) target = $region17
  $region16: #{forward.22} parent=0 // pred_region
    %19 = vst [vmem:[#allocation2] sm:$0xff] 0.0
  $region17: #{forward.22} parent=0 // pred_fallthru
    _
  %v20 = vld [vmem:[#allocation2] sm:$0xff]
  %v21 = vld [vmem:[%s0] sm:$0xff]
  %v22 = vld [vmem:[%s1] sm:$0xf]
  %v23 = vld [vmem:[%s1 + $0x4] sm:$0xf]
  %v24 = vld [vmem:[%s1 + $0x8] sm:$0xf]
  %v25 = vld [vmem:[%s1 + $0xc] sm:$0xf]
  %v26 = vld [vmem:[%s1 + $0x10] sm:$0xf]
  %v27 = vld [vmem:[%s1 + $0x14] sm:$0xf]
  %v28 = vld [vmem:[%s1 + $0x18] sm:$0xf]
  %v29 = vld [vmem:[%s1 + $0x1c] sm:$0xf]
  %v30 = vld [vmem:[%s1 + $0x20] sm:$0xf]
  %v31 = vld [vmem:[%s1 + $0x24] sm:$0xf]
  %v32 = vld [vmem:[%s1 + $0x28] sm:$0xf]
  %v33 = vld [vmem:[%s1 + $0x2c] sm:$0xf]
  %v34 = vld [vmem:[%s1 + $0x30] sm:$0xf]
  %v35 = vld [vmem:[%s1 + $0x34] sm:$0xf]
  %v36 = vld [vmem:[%s1 + $0x38] sm:$0xf]
  %v37 = vld [vmem:[%s1 + $0x3c] sm:$0xf]
  %v38 = vld [vmem:[%s1 + $0x40] sm:$0xf]
  %v39 = vld [vmem:[%s1 + $0x44] sm:$0xf]
  %v40 = vld [vmem:[%s1 + $0x48] sm:$0xf]
  %v41 = vld [vmem:[%s1 + $0x4c] sm:$0xf]
  %v42 = vld [vmem:[%s1 + $0x50] sm:$0xf]
  %v43 = vld [vmem:[%s1 + $0x54] sm:$0xf]
  %v44 = vld [vmem:[%s1 + $0x58] sm:$0xf]
  %v45 = vld [vmem:[%s1 + $0x5c] sm:$0xf]
  %v46 = vld [vmem:[%s1 + $0x60] sm:$0xf]
  %v47 = vld [vmem:[%s1 + $0x64] sm:$0xf]
  %v48 = vld [vmem:[%s1 + $0x68] sm:$0xf]
  %v49 = vld [vmem:[%s1 + $0x6c] sm:$0xf]
  %v50 = vld [vmem:[%s1 + $0x70] sm:$0xf]
  %v51 = vld [vmem:[%s1 + $0x74] sm:$0xf]
  %v52 = vld [vmem:[%s1 + $0x78] sm:$0xf]
  %v53 = vld [vmem:[%s1 + $0x7c] sm:$0xf]
  %v55 = vunpack.c.l.b16 %v21
  %v56 = vunpack.c.h.b16 %v21
  %v57 = vpack.c.b16 %v55, %v55
  %v58 = vpack.c.b16 %v56, %v56
  %v93 = vunpack.c.l.b16 %v22
  %v94 = vunpack.c.l.b16 %v23
  %v95 = vunpack.c.l.b16 %v24
  %v96 = vunpack.c.l.b16 %v25
  %v97 = vunpack.c.l.b16 %v26
  %v98 = vunpack.c.l.b16 %v27
  %v99 = vunpack.c.l.b16 %v28
  %v100 = vunpack.c.l.b16 %v29
  %v101 = vunpack.c.l.b16 %v30
  %v102 = vunpack.c.l.b16 %v31
  %v103 = vunpack.c.l.b16 %v32
  %v104 = vunpack.c.l.b16 %v33
  %v105 = vunpack.c.l.b16 %v34
  %v106 = vunpack.c.l.b16 %v35
  %v107 = vunpack.c.l.b16 %v36
  %v108 = vunpack.c.l.b16 %v37
  %v109 = vunpack.c.l.b16 %v38
  %v110 = vunpack.c.l.b16 %v39
  %v111 = vunpack.c.l.b16 %v40
  %v112 = vunpack.c.l.b16 %v41
  %v113 = vunpack.c.l.b16 %v42
  %v114 = vunpack.c.l.b16 %v43
  %v115 = vunpack.c.l.b16 %v44
  %v116 = vunpack.c.l.b16 %v45
  %v117 = vunpack.c.l.b16 %v46
  %v118 = vunpack.c.l.b16 %v47
  %v119 = vunpack.c.l.b16 %v48
  %v120 = vunpack.c.l.b16 %v49
  %v121 = vunpack.c.l.b16 %v50
  %v122 = vunpack.c.l.b16 %v51
  %v123 = vunpack.c.l.b16 %v52
  %v124 = vunpack.c.l.b16 %v53
  %v125 = vpack.c.b16 %v94, %v93
  %v126 = vpack.c.b16 %v96, %v95
  %v127 = vpack.c.b16 %v98, %v97
  %v128 = vpack.c.b16 %v100, %v99
  %v129 = vpack.c.b16 %v102, %v101
  %v130 = vpack.c.b16 %v104, %v103
  %v131 = vpack.c.b16 %v106, %v105
  %v132 = vpack.c.b16 %v108, %v107
  %v133 = vpack.c.b16 %v110, %v109
  %v134 = vpack.c.b16 %v112, %v111
  %v135 = vpack.c.b16 %v114, %v113
  %v136 = vpack.c.b16 %v116, %v115
  %v137 = vpack.c.b16 %v118, %v117
  %v138 = vpack.c.b16 %v120, %v119
  %v139 = vpack.c.b16 %v122, %v121
  %v140 = vpack.c.b16 %v124, %v123
  %157 = vmatprep.subr.bf16.mxu0 0
  %158 = vmatpush1.bf16.msra.mxu0 %v132
  %159 = vmatprep.subr.bf16.mxu0 0
  %160 = vmatpush1.bf16.msra.mxu0 %v131
  %161 = vmatprep.subr.bf16.mxu0 0
  %162 = vmatpush1.bf16.msra.mxu0 %v130
  %163 = vmatprep.subr.bf16.mxu0 0
  %164 = vmatpush1.bf16.msra.mxu0 %v129
  %165 = vmatprep.subr.bf16.mxu0 0
  %166 = vmatpush1.bf16.msra.mxu0 %v128
  %167 = vmatprep.subr.bf16.mxu0 0
  %168 = vmatpush1.bf16.msra.mxu0 %v127
  %169 = vmatprep.subr.bf16.mxu0 0
  %170 = vmatpush1.bf16.msra.mxu0 %v126
  %171 = vmatprep.subr.bf16.mxu0 0
  %172 = vmatpush1.bf16.msra.mxu0 %v125
  %173 = vmatprep.subr.bf16.mxu0 0
  %174 = vmatpush2.bf16.msra.mxu0 %v140
  %175 = vmatprep.subr.bf16.mxu0 0
  %176 = vmatpush2.bf16.msra.mxu0 %v139
  %177 = vmatprep.subr.bf16.mxu0 0
  %178 = vmatpush2.bf16.msra.mxu0 %v138
  %179 = vmatprep.subr.bf16.mxu0 0
  %180 = vmatpush2.bf16.msra.mxu0 %v137
  %181 = vmatprep.subr.bf16.mxu0 0
  %182 = vmatpush2.bf16.msra.mxu0 %v136
  %183 = vmatprep.subr.bf16.mxu0 0
  %184 = vmatpush2.bf16.msra.mxu0 %v135
  %185 = vmatprep.subr.bf16.mxu0 0
  %186 = vmatpush2.bf16.msra.mxu0 %v134
  %187 = vmatprep.subr.bf16.mxu0 0
  %188 = vmatpush2.bf16.msra.mxu0 %v133
  %189 = vmatprep.mubr.bf16.mxu0 %v58
  %190 = vmatmul.mubr.bf16.gmra.mxu0 %v57
  %v191 = vpop.f32.mrf.mxu0
  %v192 = vadd.f32 0.0, %v191
  %v193 = vpop.f32.mrf.mxu0
  %v194 = vpop.f32.mrf.mxu0
  %v195 = vpop.f32.mrf.mxu0
  %196 = vdwg.mxu0
  %v197 = vadd.f32 %v20, %v192
  %198 = vst [vmem:[#allocation2] sm:$0xff] %v197
  // Predicated region
  $region18: #{forward.22} parent=0 // pred_check
    %p199 = pneg %p15
  $region19: #{forward.22} parent=0 // pred_check_branch
    %201 = sbr.rel (%p199) target = $region21
  $region20: #{forward.22} parent=0 // pred_region
    %v202 = vld [vmem:[#allocation2] sm:$0xff]
    %v203 = vld [vmem:[%s2] sm:$0x1]
    %v205 = vlaneseq
    %v206 = vshrl.u32 %v205, 7
    %v207 = vsub.s32 0, %v206
    %v208 = vrot.slane %v203, %v207
    %v210 = vadd.f32 %v202, %v208
    %211 = vst [vmem:[%s3] sm:$0xff] %v210
  $region21: #{forward.22} parent=0 // pred_fallthru
    _
  // Predicated region
  $region22: #{forward.22} parent=0 // pred_check
    _
  $region23: #{forward.22} parent=0 // pred_check_branch
    %213 = sbr.rel (0) target = $region25
  $region24: #{forward.22} parent=0 // pred_region
    _
  $region25: #{forward.22} parent=0 // pred_fallthru
    _
  // Predicated region
  $region26: #{forward.22} parent=0 // pred_check
    _
  $region27: #{forward.22} parent=0 // pred_check_branch
    %215 = sbr.rel (0) target = $region29
  $region28: #{forward.22} parent=0 // pred_region
    _
  $region29: #{forward.22} parent=0 // pred_fallthru
    _

// kernel: forward.23
$region0: #{forward.23}
  #allocation0 [shape = 'u32[]', space=smem, size = 0x4, offset = 0x4, fixed_abs, tag = 'smem constant byte address 0x4 - core index']
  #allocation1 [shape = 'u32[144,128]{1,0:T(1,128)}', space=vmem, size = 0x12000, scoped, tag = 'internal scratch']
  %s0 = inlined_call_operand.vmem [shape: f32[2,4,128], index: 0, kind: input, shape index: {}]
  %s1 = inlined_call_operand.vmem [shape: f32[1,4,2], index: 1, kind: input, shape index: {}]
  %s2 = inlined_call_operand.vmem [shape: f32[2,4,128], index: 2, kind: output, shape index: {}]
  %s3 = sld [smem:[#allocation0]]
  $region18: #{forward.23} parent=0
    _
  %s5 = ssub.s32 1, %s3
  %s6 = scalar_select 0, %s5, %s3
  // Predicated region
  $region2: #{forward.23} parent=0 // pred_check
    _
  $region3: #{forward.23} parent=0 // pred_check_branch
    %8 = sbr.rel (0) target = $region5
  $region4: #{forward.23} parent=0 // pred_region
    _
  $region5: #{forward.23} parent=0 // pred_fallthru
    _
  // Predicated region
  $region6: #{forward.23} parent=0 // pred_check
    _
  $region7: #{forward.23} parent=0 // pred_check_branch
    %10 = sbr.rel (0) target = $region9
  $region8: #{forward.23} parent=0 // pred_region
    _
  $region9: #{forward.23} parent=0 // pred_fallthru
    _
  %v11 = vld [vmem:[%s0] sm:$0xf]
  %v12 = vld [vmem:[%s0 + $0x4] sm:$0xf]
  %v13 = vsub.f32 0.0, %v11
  %v14 = vsub.f32 0.0, %v12
  %v15 = vmul.f32 %v13, 1.442695
  %v16 = vpow.pop %v15
  %v17 = vmul.f32 %v14, 1.442695
  %v18 = vpow.pop %v17
  %v19 = vadd.f32 %v16, 1.0
  %v20 = vadd.f32 %v18, 1.0
  %v21 = vrcp.pop %v19
  %v22 = vrcp.pop %v20
  %vm23 = vcmask 166920
  %v24 = vsel %vm23, %v11, -inf
  %25 = vmax.xlane.f32.xlu0 %v24
  %v26 = vpop.xlane.xlu0 %25
  %v27 = vsel %vm23, %v12, -inf
  %28 = vmax.xlane.f32.xlu0 %v27
  %v29 = vpop.xlane.xlu0 %28
  %v30 = vsub.f32 %v11, %v26
  %v31 = vsub.f32 %v12, %v29
  %v32 = vmul.f32 %v30, 1.442695
  %v33 = vpow.pop %v32
  %v34 = vmul.f32 %v31, 1.442695
  %v35 = vpow.pop %v34
  %38 = vrot.lane.b32.xlu0 %v33, 127
  %v39 = vpop.permute.xlu0 %38
  %40 = vrot.lane.b32.xlu0 %v35, 127
  %v41 = vpop.permute.xlu0 %40
  %vm44 = vcmask 158720
  %v45 = vsel %vm44, %v39, 0.0
  %46 = vadd.xlane.f32.xlu0 %v45
  %v47 = vpop.xlane.xlu0 %46
  %v48 = vsel %vm44, %v41, 0.0
  %49 = vadd.xlane.f32.xlu0 %v48
  %v50 = vpop.xlane.xlu0 %49
  %v51 = vrcp.pop %v47
  %v52 = vrcp.pop %v50
  %v53 = vmul.f32 %v33, %v51
  %v54 = vmul.f32 %v35, %v52
  %56 = vset.pattern.permute.xlu0 0
  %57 = vperm.xlu0 %56, %v21
  %v58 = vpop.permute.xlu0 %57
  %61 = vset.pattern.permute.xlu0 0
  %62 = vperm.xlu0 %61, %v22
  %v63 = vpop.permute.xlu0 %62
  %v65 = vmul.f32 %v58, %v53
  %v66 = vmul.f32 %v63, %v54
  %v67 = vld [vmem:[%s1] sm:$0xf]
  %68 = vrot.lane.b32.xlu0 %v21, 107
  %v69 = vpop.permute.xlu0 %68
  %70 = vrot.lane.b32.xlu0 %v22, 107
  %v71 = vpop.permute.xlu0 %70
  %v74 = vadd.f32 %v67, %v69
  %v75 = vadd.f32 %v67, %v71
  %v76 = vmul.f32 %v74, 32.0
  %v77 = vmul.f32 %v75, 32.0
  %v78 = vmul.f32 %v11, 1.442695
  %v79 = vpow.pop %v78
  %v80 = vmul.f32 %v12, 1.442695
  %v81 = vpow.pop %v80
  %v82 = vmul.f32 %v79, 32.0
  %v83 = vmul.f32 %v81, 32.0
  %v84 = vmul.f32 %v82, 0.5
  %v85 = vmul.f32 %v83, 0.5
  %88 = vrot.lane.b32.xlu0 %v84, 105
  %v89 = vpop.permute.xlu0 %88
  %90 = vrot.lane.b32.xlu0 %v85, 105
  %v91 = vpop.permute.xlu0 %90
  %v94 = vsub.f32 %v76, %v89
  %v95 = vsub.f32 %v77, %v91
  %v96 = vadd.f32 %v76, %v89
  %v97 = vadd.f32 %v77, %v91
  %100 = vrot.lane.b32.xlu0 %v96, 2
  %v101 = vpop.permute.xlu0 %100
  %102 = vrot.lane.b32.xlu0 %v97, 2
  %v103 = vpop.permute.xlu0 %102
  %vm106 = vcmask 15360
  %v107 = vsel %vm106, %v94, %v101
  %v108 = vsel %vm106, %v95, %v103
  %111 = vrot.lane.b32.xlu0 %v65, 127
  %v112 = vpop.permute.xlu0 %111
  %113 = vrot.lane.b32.xlu0 %v66, 127
  %v114 = vpop.permute.xlu0 %113
  %119 = vrot.lane.b32.xlu0 %v107, 20
  %v120 = vpop.permute.xlu0 %119
  %121 = vrot.lane.b32.xlu0 %v108, 20
  %v122 = vpop.permute.xlu0 %121
  %vm125 = vcmask 162816
  %v126 = vsel %vm125, %v112, %v120
  %v127 = vsel %vm125, %v114, %v122
  %vm128 = vcmask 195584
  %v129 = vsel %vm128, %v126, 0.0
  %v130 = vsel %vm128, %v127, 0.0
  %131 = vst [vmem:[%s2] sm:$0xf] %v129
  %132 = vst [vmem:[%s2 + $0x4] sm:$0xf] %v130
  // Predicated region
  $region10: #{forward.23} parent=0 // pred_check
    _
  $region11: #{forward.23} parent=0 // pred_check_branch
    %134 = sbr.rel (0) target = $region13
  $region12: #{forward.23} parent=0 // pred_region
    _
  $region13: #{forward.23} parent=0 // pred_fallthru
    _
  // Predicated region
  $region14: #{forward.23} parent=0 // pred_check
    _
  $region15: #{forward.23} parent=0 // pred_check_branch
    %136 = sbr.rel (0) target = $region17
  $region16: #{forward.23} parent=0 // pred_region
    _
  $region17: #{forward.23} parent=0 // pred_fallthru
    _

</llo_original>
